<compile_context>
chip_gen: v7x
topology: tpu7x:2x2x1
jax: 0.10.0
libtpu: 0.0.40
codegen_flags: <defaults>
</compile_context>

<pallas_src>
import numpy as np
import jax
import jax.numpy as jnp
from jax.experimental import pallas as pl
from jax.experimental.pallas import tpu as pltpu

# ----------------------------- configuration --------------------------------
BATCH = 2
CHANNELS = 4
H = 8
W = 8                       # input_size = (H, W); H == W assumed below
HW = H * W
DIM = 32                    # transformer model dim
HEADS = 2
DIM_HEAD = 16
INNER = HEADS * DIM_HEAD    # 32
MLP_DIM = 64
LN_EPS = 1e-5
ATTN_SCALE = DIM_HEAD ** (-0.5)
_INV_SQRT2 = 0.7071067811865476

SEQ = H + 1                            # tokens per separable sequence (cls + 8)
NUM_GROUPS = BATCH * W                 # 16 sequences per stage (== BATCH * H)
NUM_SPATIAL = BATCH * HW               # 128 spatial tokens, canonical (b, h, w) order
NUM_TOKENS = NUM_GROUPS + NUM_SPATIAL  # 144 = 16 cls rows + 128 spatial rows
NEG_INF = -1e30

assert H == W, "fused kernel assumes a square spatial input"


# ----------------------- host-side constant matrices -------------------------
def _build_constants():
    tok = np.arange(NUM_TOKENS)
    is_cls = tok < NUM_GROUPS
    sp = np.maximum(tok - NUM_GROUPS, 0)
    b_i = sp // HW
    h_i = (sp // W) % H
    w_i = sp % W

    def bias(group_on_w):
        # Block-diagonal additive mask making the dense (144,144) softmax equal
        # to 16 independent per-sequence softmaxes.  cls row i is sequence i;
        # spatial token (b,h,w) belongs to sequence b*8 + (w or h).
        inner = w_i if group_on_w else h_i
        gid = np.where(is_cls, tok, b_i * W + inner)
        same = gid[:, None] == gid[None, :]
        return np.where(same, 0.0, NEG_INF).astype(np.float32)

    def pos_sel(index_on_w):
        # (144, 9) one-hot selector: cls rows pick pos[0]; spatial token (b,h,w)
        # picks pos[1+h] (stage 1) or pos[1+w] (stage 2).
        idx = np.where(is_cls, 0, 1 + (w_i if index_on_w else h_i))
        sel = np.zeros((NUM_TOKENS, SEQ), np.float32)
        sel[np.arange(NUM_TOKENS), idx] = 1.0
        return sel

    g = np.arange(NUM_GROUPS)
    # new cls for stage-2 sequence (b,h) = mean over w of stage-1 cls outputs of batch b
    cls_mix = np.where((g[:, None] // W) == (g[None, :] // W), 1.0 / W, 0.0).astype(np.float32)
    # final cls for batch b = mean over h of stage-2 cls outputs of batch b
    cls_red = np.where((g[None, :] // W) == np.arange(BATCH)[:, None], 1.0 / H, 0.0).astype(np.float32)
    eye = np.eye(DIM, dtype=np.float32)
    return bias(True), bias(False), pos_sel(False), pos_sel(True), cls_mix, cls_red, eye


BIAS_H, BIAS_W, POS_SEL_H, POS_SEL_W, CLS_MIX, CLS_REDUCE, EYE_DIM = _build_constants()


# ------------------------------ kernel helpers -------------------------------
def _layernorm(x, gamma, beta):
    mu = jnp.mean(x, axis=-1, keepdims=True)
    var = jnp.mean((x - mu) ** 2, axis=-1, keepdims=True)
    return (x - mu) * jax.lax.rsqrt(var + LN_EPS) * gamma + beta


def _transformer_stage(tokens, bias_ref, params):
    """One depth-1 PreNorm transformer layer over all 16 sequences at once."""
    (ln1_g, ln1_b, w_qkv, w_o, b_o,
     ln2_g, ln2_b, w1, b1, w2, b2) = params

    # ---- PreNorm + multi-head attention (masked dense over all 144 tokens) ----
    xn = _layernorm(tokens, ln1_g, ln1_b)
    qkv = jnp.dot(xn, w_qkv, preferred_element_type=jnp.float32)      # (T, 3*INNER)

    attn_proj = jnp.broadcast_to(b_o, (NUM_TOKENS, DIM))
    for hh in range(HEADS):                                            # static unroll (2)
        q = qkv[:, hh * DIM_HEAD:(hh + 1) * DIM_HEAD]
        k = qkv[:, INNER + hh * DIM_HEAD:INNER + (hh + 1) * DIM_HEAD]
        v = qkv[:, 2 * INNER + hh * DIM_HEAD:2 * INNER + (hh + 1) * DIM_HEAD]
        scores = jax.lax.dot_general(q, k, (((1,), (1,)), ((), ())),
                                     preferred_element_type=jnp.float32)   # (T, T)
        # bias read from VMEM per head keeps its live range short
        scores = scores * ATTN_SCALE + bias_ref[...]
        scores = scores - jnp.max(scores, axis=-1, keepdims=True)
        p = jnp.exp(scores)
        attn = p / jnp.sum(p, axis=-1, keepdims=True)                  # exact softmax
        head_out = jnp.dot(attn, v, preferred_element_type=jnp.float32)  # (T, 16)
        # fold the head-concat into w_o: contract with the head's sublane slice
        attn_proj = attn_proj + jnp.dot(
            head_out, w_o[hh * DIM_HEAD:(hh + 1) * DIM_HEAD, :],
            preferred_element_type=jnp.float32)
    tokens = tokens + attn_proj

    # ---- PreNorm + feed-forward (exact erf GELU, nn.GELU default) -------------
    xn2 = _layernorm(tokens, ln2_g, ln2_b)
    hid = jnp.dot(xn2, w1, preferred_element_type=jnp.float32) + b1
    hid = 0.5 * hid * (1.0 + jax.lax.erf(hid * _INV_SQRT2))
    return tokens + jnp.dot(hid, w2, preferred_element_type=jnp.float32) + b2


# ------------------------------ fused kernel ----------------------------------
def septr_fused_kernel(x_ref, cls_ref, pos_h_ref, pos_w_ref, wp_ref, bp_ref,
                       sel_h_ref, sel_w_ref, bias_h_ref, bias_w_ref,
                       cls_mix_ref, cls_red_ref, eye_ref, *rest):
    """Whole SepTrBlock forward, fully VMEM-resident, single invocation."""
    tr_h = tuple(r[...] for r in rest[0:11])
    tr_w = tuple(r[...] for r in rest[11:22])
    spatial_out_ref, cls_out_ref = rest[22], rest[23]

    # ---- input projection Linear(channels, dim), per batch --------------------
    # x_ref is (B*C, H*W): the free reshape of NCHW.  Contract C (dim 0 of both
    # operands) directly on the MXU — no in-kernel transpose of x.
    wp = wp_ref[...]
    bp = bp_ref[...]
    projs = []
    for b in range(BATCH):
        xb = x_ref[b * CHANNELS:(b + 1) * CHANNELS, :]                 # (C, HW)
        pb = jax.lax.dot_general(xb, wp, (((0,), (0,)), ((), ())),
                                 preferred_element_type=jnp.float32) + bp  # (HW, DIM)
        projs.append(pb)

    # ---- stage 1: transformer along H (sequences = (b, w)) --------------------
    cls0 = jnp.broadcast_to(cls_ref[...], (NUM_GROUPS, DIM))
    tokens = jnp.concatenate([cls0] + projs, axis=0)                   # (T, DIM)
    tokens = tokens + jnp.dot(sel_h_ref[...], pos_h_ref[...],
                              preferred_element_type=jnp.float32)
    tokens = _transformer_stage(tokens, bias_h_ref, tr_h)

    # ---- hand-off: new cls per (b, h) = mean over w of stage-1 cls outputs ----
    new_cls = jnp.dot(cls_mix_ref[...], tokens[:NUM_GROUPS, :],
                      preferred_element_type=jnp.float32)              # (G, DIM)
    tokens = jnp.concatenate([new_cls, tokens[NUM_GROUPS:, :]], axis=0)

    # ---- stage 2: transformer along W (sequences = (b, h)) --------------------
    tokens = tokens + jnp.dot(sel_w_ref[...], pos_w_ref[...],
                              preferred_element_type=jnp.float32)
    tokens = _transformer_stage(tokens, bias_w_ref, tr_w)

    # ---- outputs ---------------------------------------------------------------
    # Spatial output laid out as (B*DIM, H*W) so the wrapper reshape to
    # (B, DIM, H, W) is free.  Per-batch transpose is done on the MXU with an
    # identity matmul (eye @ spatial_b^T) to avoid an XLU transpose.
    eye = eye_ref[...]
    for b in range(BATCH):
        sp_b = tokens[NUM_GROUPS + b * HW:NUM_GROUPS + (b + 1) * HW, :]   # (HW, DIM)
        out_b = jax.lax.dot_general(eye, sp_b, (((1,), (1,)), ((), ())),
                                    preferred_element_type=jnp.float32)  # (DIM, HW)
        spatial_out_ref[b * DIM:(b + 1) * DIM, :] = out_b

    cls_out_ref[...] = jnp.dot(cls_red_ref[...], tokens[:NUM_GROUPS, :],
                               preferred_element_type=jnp.float32)        # (B, DIM)


# ------------------------------ wrapper ---------------------------------------
def _flatten_tr(p):
    return (p["ln1_g"], p["ln1_b"], p["w_qkv"], p["w_o"], p["b_o"],
            p["ln2_g"], p["ln2_b"], p["w1"], p["b1"], p["w2"], p["b2"])


def septr_block_forward(x, cls_token, params):
    """x: (B, C, H, W) NCHW, cls_token: (1, 1, 1, DIM)
    -> ((B, DIM, H, W), (B, 1, 1, DIM))."""
    assert x.shape == (BATCH, CHANNELS, H, W)
    # avg_pool / upsample / reconstruction are Identity for this configuration.

    x_flat = x.reshape(BATCH * CHANNELS, HW).astype(jnp.float32)   # free reshape (no transpose)
    cls2d = cls_token.reshape(1, DIM).astype(jnp.float32)
    pos_h = params["pos_h"].reshape(SEQ, DIM)
    pos_w = params["pos_w"].reshape(SEQ, DIM)

    consts = (jnp.asarray(POS_SEL_H), jnp.asarray(POS_SEL_W),
              jnp.asarray(BIAS_H), jnp.asarray(BIAS_W),
              jnp.asarray(CLS_MIX), jnp.asarray(CLS_REDUCE),
              jnp.asarray(EYE_DIM))

    args = (x_flat, cls2d, pos_h, pos_w, params["proj_w"], params["proj_b"],
            *consts, *_flatten_tr(params["tr_h"]), *_flatten_tr(params["tr_w"]))

    vmem_spec = pl.BlockSpec(memory_space=pltpu.MemorySpace.VMEM)
    spatial_out, cls_out = pl.pallas_call(
        septr_fused_kernel,
        out_shape=(jax.ShapeDtypeStruct((BATCH * DIM, HW), jnp.float32),
                   jax.ShapeDtypeStruct((BATCH, DIM), jnp.float32)),
        in_specs=[vmem_spec] * len(args),
        out_specs=(vmem_spec, vmem_spec),
        cost_estimate=pl.CostEstimate(flops=11_000_000,
                                      transcendentals=120_000,
                                      bytes_accessed=300_000),
    )(*args)

    x_out = spatial_out.reshape(BATCH, DIM, H, W)    # free reshape, no XLA transpose
    cls_out = cls_out[:, None, None, :]              # (B, 1, 1, DIM)
    return x_out, cls_out


# ------------------------------ parameters ------------------------------------
def init_params(key):
    def tr_params(k):
        k1, k2, k3, k4 = jax.random.split(k, 4)
        return dict(
            ln1_g=jnp.ones((1, DIM), jnp.float32),
            ln1_b=jnp.zeros((1, DIM), jnp.float32),
            w_qkv=0.02 * jax.random.normal(k1, (DIM, 3 * INNER), jnp.float32),
            w_o=0.02 * jax.random.normal(k2, (INNER, DIM), jnp.float32),
            b_o=jnp.zeros((1, DIM), jnp.float32),
            ln2_g=jnp.ones((1, DIM), jnp.float32),
            ln2_b=jnp.zeros((1, DIM), jnp.float32),
            w1=0.02 * jax.random.normal(k3, (DIM, MLP_DIM), jnp.float32),
            b1=jnp.zeros((1, MLP_DIM), jnp.float32),
            w2=0.02 * jax.random.normal(k4, (MLP_DIM, DIM), jnp.float32),
            b2=jnp.zeros((1, DIM), jnp.float32),
        )

    kp, kph, kpw, kth, ktw = jax.random.split(key, 5)
    return dict(
        proj_w=0.02 * jax.random.normal(kp, (CHANNELS, DIM), jnp.float32),
        proj_b=jnp.zeros((1, DIM), jnp.float32),
        pos_h=jax.random.normal(kph, (1, 1, H + 1, DIM), jnp.float32),
        pos_w=jax.random.normal(kpw, (1, 1, W + 1, DIM), jnp.float32),
        tr_h=tr_params(kth),
        tr_w=tr_params(ktw),
    )


# ------------------------------ main -------------------------------------------
if __name__ == "__main__":
    key = jax.random.PRNGKey(0)
    kx, kc, kp = jax.random.split(key, 3)

    x = jax.random.normal(kx, (BATCH, CHANNELS, H, W), dtype=jnp.float32)
    cls_token = jax.random.normal(kc, (1, 1, 1, DIM), dtype=jnp.float32)
    params = init_params(kp)

    fwd = jax.jit(septr_block_forward)
    x_out, cls_out = fwd(x, cls_token, params)
    jax.block_until_ready((x_out, cls_out))

    assert x_out.shape == (BATCH, DIM, H, W), x_out.shape
    assert cls_out.shape == (BATCH, 1, 1, DIM), cls_out.shape
    assert bool(jnp.all(jnp.isfinite(x_out))) and bool(jnp.all(jnp.isfinite(cls_out)))
    print("KERNEL_OK")
</pallas_src>

<mosaic_0001>
module attributes {stable_mosaic.version = 11 : i64} {
  func.func @septr_fused_kernel(%arg0: memref<8x64xf32, #tpu.memory_space<vmem>>, %arg1: memref<1x32xf32, #tpu.memory_space<vmem>>, %arg2: memref<9x32xf32, #tpu.memory_space<vmem>>, %arg3: memref<9x32xf32, #tpu.memory_space<vmem>>, %arg4: memref<4x32xf32, #tpu.memory_space<vmem>>, %arg5: memref<1x32xf32, #tpu.memory_space<vmem>>, %arg6: memref<144x9xf32, #tpu.memory_space<vmem>>, %arg7: memref<144x9xf32, #tpu.memory_space<vmem>>, %arg8: memref<144x144xf32, #tpu.memory_space<vmem>>, %arg9: memref<144x144xf32, #tpu.memory_space<vmem>>, %arg10: memref<16x16xf32, #tpu.memory_space<vmem>>, %arg11: memref<2x16xf32, #tpu.memory_space<vmem>>, %arg12: memref<32x32xf32, #tpu.memory_space<vmem>>, %arg13: memref<1x32xf32, #tpu.memory_space<vmem>>, %arg14: memref<1x32xf32, #tpu.memory_space<vmem>>, %arg15: memref<32x96xf32, #tpu.memory_space<vmem>>, %arg16: memref<32x32xf32, #tpu.memory_space<vmem>>, %arg17: memref<1x32xf32, #tpu.memory_space<vmem>>, %arg18: memref<1x32xf32, #tpu.memory_space<vmem>>, %arg19: memref<1x32xf32, #tpu.memory_space<vmem>>, %arg20: memref<32x64xf32, #tpu.memory_space<vmem>>, %arg21: memref<1x64xf32, #tpu.memory_space<vmem>>, %arg22: memref<64x32xf32, #tpu.memory_space<vmem>>, %arg23: memref<1x32xf32, #tpu.memory_space<vmem>>, %arg24: memref<1x32xf32, #tpu.memory_space<vmem>>, %arg25: memref<1x32xf32, #tpu.memory_space<vmem>>, %arg26: memref<32x96xf32, #tpu.memory_space<vmem>>, %arg27: memref<32x32xf32, #tpu.memory_space<vmem>>, %arg28: memref<1x32xf32, #tpu.memory_space<vmem>>, %arg29: memref<1x32xf32, #tpu.memory_space<vmem>>, %arg30: memref<1x32xf32, #tpu.memory_space<vmem>>, %arg31: memref<32x64xf32, #tpu.memory_space<vmem>>, %arg32: memref<1x64xf32, #tpu.memory_space<vmem>>, %arg33: memref<64x32xf32, #tpu.memory_space<vmem>>, %arg34: memref<1x32xf32, #tpu.memory_space<vmem>>, %arg35: memref<64x64xf32, #tpu.memory_space<vmem>>, %arg36: memref<2x32xf32, #tpu.memory_space<vmem>>) attributes {dimension_semantics = [], scalar_prefetch = 0 : i64, scratch_operands = 0 : i64, tpu.core_type = #tpu.core_type<tc>} {
    %c0 = arith.constant 0 : index
    %c0_0 = arith.constant 0 : index
    %0 = vector.load %arg13[%c0, %c0_0] : memref<1x32xf32, #tpu.memory_space<vmem>>, vector<1x32xf32>
    %c0_1 = arith.constant 0 : index
    %c0_2 = arith.constant 0 : index
    %1 = vector.load %arg14[%c0_1, %c0_2] : memref<1x32xf32, #tpu.memory_space<vmem>>, vector<1x32xf32>
    %c0_3 = arith.constant 0 : index
    %c0_4 = arith.constant 0 : index
    %2 = vector.load %arg15[%c0_3, %c0_4] : memref<32x96xf32, #tpu.memory_space<vmem>>, vector<32x96xf32>
    %c0_5 = arith.constant 0 : index
    %c0_6 = arith.constant 0 : index
    %3 = vector.load %arg16[%c0_5, %c0_6] : memref<32x32xf32, #tpu.memory_space<vmem>>, vector<32x32xf32>
    %c0_7 = arith.constant 0 : index
    %c0_8 = arith.constant 0 : index
    %4 = vector.load %arg17[%c0_7, %c0_8] : memref<1x32xf32, #tpu.memory_space<vmem>>, vector<1x32xf32>
    %c0_9 = arith.constant 0 : index
    %c0_10 = arith.constant 0 : index
    %5 = vector.load %arg18[%c0_9, %c0_10] : memref<1x32xf32, #tpu.memory_space<vmem>>, vector<1x32xf32>
    %c0_11 = arith.constant 0 : index
    %c0_12 = arith.constant 0 : index
    %6 = vector.load %arg19[%c0_11, %c0_12] : memref<1x32xf32, #tpu.memory_space<vmem>>, vector<1x32xf32>
    %c0_13 = arith.constant 0 : index
    %c0_14 = arith.constant 0 : index
    %7 = vector.load %arg20[%c0_13, %c0_14] : memref<32x64xf32, #tpu.memory_space<vmem>>, vector<32x64xf32>
    %c0_15 = arith.constant 0 : index
    %c0_16 = arith.constant 0 : index
    %8 = vector.load %arg21[%c0_15, %c0_16] : memref<1x64xf32, #tpu.memory_space<vmem>>, vector<1x64xf32>
    %c0_17 = arith.constant 0 : index
    %c0_18 = arith.constant 0 : index
    %9 = vector.load %arg22[%c0_17, %c0_18] : memref<64x32xf32, #tpu.memory_space<vmem>>, vector<64x32xf32>
    %c0_19 = arith.constant 0 : index
    %c0_20 = arith.constant 0 : index
    %10 = vector.load %arg23[%c0_19, %c0_20] : memref<1x32xf32, #tpu.memory_space<vmem>>, vector<1x32xf32>
    %c0_21 = arith.constant 0 : index
    %c0_22 = arith.constant 0 : index
    %11 = vector.load %arg24[%c0_21, %c0_22] : memref<1x32xf32, #tpu.memory_space<vmem>>, vector<1x32xf32>
    %c0_23 = arith.constant 0 : index
    %c0_24 = arith.constant 0 : index
    %12 = vector.load %arg25[%c0_23, %c0_24] : memref<1x32xf32, #tpu.memory_space<vmem>>, vector<1x32xf32>
    %c0_25 = arith.constant 0 : index
    %c0_26 = arith.constant 0 : index
    %13 = vector.load %arg26[%c0_25, %c0_26] : memref<32x96xf32, #tpu.memory_space<vmem>>, vector<32x96xf32>
    %c0_27 = arith.constant 0 : index
    %c0_28 = arith.constant 0 : index
    %14 = vector.load %arg27[%c0_27, %c0_28] : memref<32x32xf32, #tpu.memory_space<vmem>>, vector<32x32xf32>
    %c0_29 = arith.constant 0 : index
    %c0_30 = arith.constant 0 : index
    %15 = vector.load %arg28[%c0_29, %c0_30] : memref<1x32xf32, #tpu.memory_space<vmem>>, vector<1x32xf32>
    %c0_31 = arith.constant 0 : index
    %c0_32 = arith.constant 0 : index
    %16 = vector.load %arg29[%c0_31, %c0_32] : memref<1x32xf32, #tpu.memory_space<vmem>>, vector<1x32xf32>
    %c0_33 = arith.constant 0 : index
    %c0_34 = arith.constant 0 : index
    %17 = vector.load %arg30[%c0_33, %c0_34] : memref<1x32xf32, #tpu.memory_space<vmem>>, vector<1x32xf32>
    %c0_35 = arith.constant 0 : index
    %c0_36 = arith.constant 0 : index
    %18 = vector.load %arg31[%c0_35, %c0_36] : memref<32x64xf32, #tpu.memory_space<vmem>>, vector<32x64xf32>
    %c0_37 = arith.constant 0 : index
    %c0_38 = arith.constant 0 : index
    %19 = vector.load %arg32[%c0_37, %c0_38] : memref<1x64xf32, #tpu.memory_space<vmem>>, vector<1x64xf32>
    %c0_39 = arith.constant 0 : index
    %c0_40 = arith.constant 0 : index
    %20 = vector.load %arg33[%c0_39, %c0_40] : memref<64x32xf32, #tpu.memory_space<vmem>>, vector<64x32xf32>
    %c0_41 = arith.constant 0 : index
    %c0_42 = arith.constant 0 : index
    %21 = vector.load %arg34[%c0_41, %c0_42] : memref<1x32xf32, #tpu.memory_space<vmem>>, vector<1x32xf32>
    %c0_43 = arith.constant 0 : index
    %c0_44 = arith.constant 0 : index
    %22 = vector.load %arg4[%c0_43, %c0_44] : memref<4x32xf32, #tpu.memory_space<vmem>>, vector<4x32xf32>
    %c0_45 = arith.constant 0 : index
    %c0_46 = arith.constant 0 : index
    %23 = vector.load %arg5[%c0_45, %c0_46] : memref<1x32xf32, #tpu.memory_space<vmem>>, vector<1x32xf32>
    %c0_47 = arith.constant 0 : index
    %c0_48 = arith.constant 0 : index
    %24 = vector.load %arg0[%c0_47, %c0_48] : memref<8x64xf32, #tpu.memory_space<vmem>>, vector<4x64xf32>
    %cst = arith.constant dense<0.000000e+00> : vector<64x32xf32>
    %25 = tpu.matmul %24, %22, %cst {dimension_numbers = #tpu.dot_dimension_numbers<[0], [0], [1], [1], [0, 1, 1, 1], [], []>} : vector<4x64xf32>, vector<4x32xf32>, vector<64x32xf32> -> vector<64x32xf32>
    %26 = vector.broadcast %23 : vector<1x32xf32> to vector<64x32xf32>
    %27 = arith.addf %25, %26 : vector<64x32xf32>
    %c4 = arith.constant 4 : index
    %c0_49 = arith.constant 0 : index
    %28 = vector.load %arg0[%c4, %c0_49] : memref<8x64xf32, #tpu.memory_space<vmem>>, vector<4x64xf32>
    %cst_50 = arith.constant dense<0.000000e+00> : vector<64x32xf32>
    %29 = tpu.matmul %28, %22, %cst_50 {dimension_numbers = #tpu.dot_dimension_numbers<[0], [0], [1], [1], [0, 1, 1, 1], [], []>} : vector<4x64xf32>, vector<4x32xf32>, vector<64x32xf32> -> vector<64x32xf32>
    %30 = vector.broadcast %23 : vector<1x32xf32> to vector<64x32xf32>
    %31 = arith.addf %29, %30 : vector<64x32xf32>
    %c0_51 = arith.constant 0 : index
    %c0_52 = arith.constant 0 : index
    %32 = vector.load %arg1[%c0_51, %c0_52] : memref<1x32xf32, #tpu.memory_space<vmem>>, vector<1x32xf32>
    %33 = vector.shape_cast %32 : vector<1x32xf32> to vector<1x32xf32>
    %34 = vector.broadcast %33 : vector<1x32xf32> to vector<16x32xf32>
    %35 = tpu.concatenate %34, %27, %31 in 0 : vector<16x32xf32>, vector<64x32xf32>, vector<64x32xf32> -> vector<144x32xf32>
    %c0_53 = arith.constant 0 : index
    %c0_54 = arith.constant 0 : index
    %36 = vector.load %arg6[%c0_53, %c0_54] : memref<144x9xf32, #tpu.memory_space<vmem>>, vector<144x9xf32>
    %c0_55 = arith.constant 0 : index
    %c0_56 = arith.constant 0 : index
    %37 = vector.load %arg2[%c0_55, %c0_56] : memref<9x32xf32, #tpu.memory_space<vmem>>, vector<9x32xf32>
    %cst_57 = arith.constant dense<0.000000e+00> : vector<144x32xf32>
    %38 = tpu.matmul %36, %37, %cst_57 {dimension_numbers = #tpu.dot_dimension_numbers<[1], [0], [0], [1], [0, 0, 1, 1], [], []>} : vector<144x9xf32>, vector<9x32xf32>, vector<144x32xf32> -> vector<144x32xf32>
    %39 = arith.addf %35, %38 : vector<144x32xf32>
    %cst_58 = arith.constant dense<0.000000e+00> : vector<144xf32>
    %40 = vector.multi_reduction <add>, %39, %cst_58 [1] : vector<144x32xf32> to vector<144xf32>
    %41 = vector.shape_cast %40 : vector<144xf32> to vector<144x1xf32>
    %cst_59 = arith.constant 3.200000e+01 : f32
    %42 = vector.broadcast %cst_59 : f32 to vector<144x1xf32>
    %43 = arith.divf %41, %42 : vector<144x1xf32>
    %44 = vector.broadcast %43 : vector<144x1xf32> to vector<144x32xf32>
    %45 = arith.subf %39, %44 : vector<144x32xf32>
    %46 = arith.mulf %45, %45 : vector<144x32xf32>
    %cst_60 = arith.constant dense<0.000000e+00> : vector<144xf32>
    %47 = vector.multi_reduction <add>, %46, %cst_60 [1] : vector<144x32xf32> to vector<144xf32>
    %48 = vector.shape_cast %47 : vector<144xf32> to vector<144x1xf32>
    %cst_61 = arith.constant 3.200000e+01 : f32
    %49 = vector.broadcast %cst_61 : f32 to vector<144x1xf32>
    %50 = arith.divf %48, %49 : vector<144x1xf32>
    %51 = vector.broadcast %43 : vector<144x1xf32> to vector<144x32xf32>
    %52 = arith.subf %39, %51 : vector<144x32xf32>
    %cst_62 = arith.constant 9.99999974E-6 : f32
    %53 = vector.broadcast %cst_62 : f32 to vector<144x1xf32>
    %54 = arith.addf %50, %53 : vector<144x1xf32>
    %55 = math.rsqrt %54 : vector<144x1xf32>
    %56 = vector.broadcast %55 : vector<144x1xf32> to vector<144x32xf32>
    %57 = arith.mulf %52, %56 : vector<144x32xf32>
    %58 = vector.broadcast %0 : vector<1x32xf32> to vector<144x32xf32>
    %59 = arith.mulf %57, %58 : vector<144x32xf32>
    %60 = vector.broadcast %1 : vector<1x32xf32> to vector<144x32xf32>
    %61 = arith.addf %59, %60 : vector<144x32xf32>
    %cst_63 = arith.constant dense<0.000000e+00> : vector<144x96xf32>
    %62 = tpu.matmul %61, %2, %cst_63 {dimension_numbers = #tpu.dot_dimension_numbers<[1], [0], [0], [1], [0, 0, 1, 1], [], []>} : vector<144x32xf32>, vector<32x96xf32>, vector<144x96xf32> -> vector<144x96xf32>
    %63 = vector.shape_cast %4 : vector<1x32xf32> to vector<1x32xf32>
    %64 = vector.broadcast %63 : vector<1x32xf32> to vector<144x32xf32>
    %65 = vector.extract_strided_slice %62 {offsets = [0, 0], sizes = [144, 16], strides = [1, 1]} : vector<144x96xf32> to vector<144x16xf32>
    %66 = vector.extract_strided_slice %62 {offsets = [0, 32], sizes = [144, 16], strides = [1, 1]} : vector<144x96xf32> to vector<144x16xf32>
    %67 = vector.extract_strided_slice %62 {offsets = [0, 64], sizes = [144, 16], strides = [1, 1]} : vector<144x96xf32> to vector<144x16xf32>
    %cst_64 = arith.constant dense<0.000000e+00> : vector<144x144xf32>
    %68 = tpu.matmul %65, %66, %cst_64 {dimension_numbers = #tpu.dot_dimension_numbers<[1], [1], [0], [0], [0, 0, 1, 0], [], []>} : vector<144x16xf32>, vector<144x16xf32>, vector<144x144xf32> -> vector<144x144xf32>
    %cst_65 = arith.constant 2.500000e-01 : f32
    %69 = vector.broadcast %cst_65 : f32 to vector<144x144xf32>
    %70 = arith.mulf %68, %69 : vector<144x144xf32>
    %c0_66 = arith.constant 0 : index
    %c0_67 = arith.constant 0 : index
    %71 = vector.load %arg8[%c0_66, %c0_67] : memref<144x144xf32, #tpu.memory_space<vmem>>, vector<144x144xf32>
    %72 = arith.addf %70, %71 : vector<144x144xf32>
    %cst_68 = arith.constant dense<0xFF800000> : vector<144xf32>
    %73 = vector.multi_reduction <maximumf>, %72, %cst_68 [1] : vector<144x144xf32> to vector<144xf32>
    %74 = vector.shape_cast %73 : vector<144xf32> to vector<144x1xf32>
    %75 = vector.broadcast %74 : vector<144x1xf32> to vector<144x144xf32>
    %76 = arith.subf %72, %75 : vector<144x144xf32>
    %77 = math.exp %76 : vector<144x144xf32>
    %cst_69 = arith.constant dense<0.000000e+00> : vector<144xf32>
    %78 = vector.multi_reduction <add>, %77, %cst_69 [1] : vector<144x144xf32> to vector<144xf32>
    %79 = vector.shape_cast %78 : vector<144xf32> to vector<144x1xf32>
    %80 = vector.broadcast %79 : vector<144x1xf32> to vector<144x144xf32>
    %81 = arith.divf %77, %80 : vector<144x144xf32>
    %cst_70 = arith.constant dense<0.000000e+00> : vector<144x16xf32>
    %82 = tpu.matmul %81, %67, %cst_70 {dimension_numbers = #tpu.dot_dimension_numbers<[1], [0], [0], [1], [0, 0, 1, 1], [], []>} : vector<144x144xf32>, vector<144x16xf32>, vector<144x16xf32> -> vector<144x16xf32>
    %83 = vector.extract_strided_slice %3 {offsets = [0, 0], sizes = [16, 32], strides = [1, 1]} : vector<32x32xf32> to vector<16x32xf32>
    %cst_71 = arith.constant dense<0.000000e+00> : vector<144x32xf32>
    %84 = tpu.matmul %82, %83, %cst_71 {dimension_numbers = #tpu.dot_dimension_numbers<[1], [0], [0], [1], [0, 0, 1, 1], [], []>} : vector<144x16xf32>, vector<16x32xf32>, vector<144x32xf32> -> vector<144x32xf32>
    %85 = arith.addf %64, %84 : vector<144x32xf32>
    %86 = vector.extract_strided_slice %62 {offsets = [0, 16], sizes = [144, 16], strides = [1, 1]} : vector<144x96xf32> to vector<144x16xf32>
    %87 = vector.extract_strided_slice %62 {offsets = [0, 48], sizes = [144, 16], strides = [1, 1]} : vector<144x96xf32> to vector<144x16xf32>
    %88 = vector.extract_strided_slice %62 {offsets = [0, 80], sizes = [144, 16], strides = [1, 1]} : vector<144x96xf32> to vector<144x16xf32>
    %cst_72 = arith.constant dense<0.000000e+00> : vector<144x144xf32>
    %89 = tpu.matmul %86, %87, %cst_72 {dimension_numbers = #tpu.dot_dimension_numbers<[1], [1], [0], [0], [0, 0, 1, 0], [], []>} : vector<144x16xf32>, vector<144x16xf32>, vector<144x144xf32> -> vector<144x144xf32>
    %cst_73 = arith.constant 2.500000e-01 : f32
    %90 = vector.broadcast %cst_73 : f32 to vector<144x144xf32>
    %91 = arith.mulf %89, %90 : vector<144x144xf32>
    %c0_74 = arith.constant 0 : index
    %c0_75 = arith.constant 0 : index
    %92 = vector.load %arg8[%c0_74, %c0_75] : memref<144x144xf32, #tpu.memory_space<vmem>>, vector<144x144xf32>
    %93 = arith.addf %91, %92 : vector<144x144xf32>
    %cst_76 = arith.constant dense<0xFF800000> : vector<144xf32>
    %94 = vector.multi_reduction <maximumf>, %93, %cst_76 [1] : vector<144x144xf32> to vector<144xf32>
    %95 = vector.shape_cast %94 : vector<144xf32> to vector<144x1xf32>
    %96 = vector.broadcast %95 : vector<144x1xf32> to vector<144x144xf32>
    %97 = arith.subf %93, %96 : vector<144x144xf32>
    %98 = math.exp %97 : vector<144x144xf32>
    %cst_77 = arith.constant dense<0.000000e+00> : vector<144xf32>
    %99 = vector.multi_reduction <add>, %98, %cst_77 [1] : vector<144x144xf32> to vector<144xf32>
    %100 = vector.shape_cast %99 : vector<144xf32> to vector<144x1xf32>
    %101 = vector.broadcast %100 : vector<144x1xf32> to vector<144x144xf32>
    %102 = arith.divf %98, %101 : vector<144x144xf32>
    %cst_78 = arith.constant dense<0.000000e+00> : vector<144x16xf32>
    %103 = tpu.matmul %102, %88, %cst_78 {dimension_numbers = #tpu.dot_dimension_numbers<[1], [0], [0], [1], [0, 0, 1, 1], [], []>} : vector<144x144xf32>, vector<144x16xf32>, vector<144x16xf32> -> vector<144x16xf32>
    %104 = vector.extract_strided_slice %3 {offsets = [16, 0], sizes = [16, 32], strides = [1, 1]} : vector<32x32xf32> to vector<16x32xf32>
    %cst_79 = arith.constant dense<0.000000e+00> : vector<144x32xf32>
    %105 = tpu.matmul %103, %104, %cst_79 {dimension_numbers = #tpu.dot_dimension_numbers<[1], [0], [0], [1], [0, 0, 1, 1], [], []>} : vector<144x16xf32>, vector<16x32xf32>, vector<144x32xf32> -> vector<144x32xf32>
    %106 = arith.addf %85, %105 : vector<144x32xf32>
    %107 = arith.addf %39, %106 : vector<144x32xf32>
    %cst_80 = arith.constant dense<0.000000e+00> : vector<144xf32>
    %108 = vector.multi_reduction <add>, %107, %cst_80 [1] : vector<144x32xf32> to vector<144xf32>
    %109 = vector.shape_cast %108 : vector<144xf32> to vector<144x1xf32>
    %cst_81 = arith.constant 3.200000e+01 : f32
    %110 = vector.broadcast %cst_81 : f32 to vector<144x1xf32>
    %111 = arith.divf %109, %110 : vector<144x1xf32>
    %112 = vector.broadcast %111 : vector<144x1xf32> to vector<144x32xf32>
    %113 = arith.subf %107, %112 : vector<144x32xf32>
    %114 = arith.mulf %113, %113 : vector<144x32xf32>
    %cst_82 = arith.constant dense<0.000000e+00> : vector<144xf32>
    %115 = vector.multi_reduction <add>, %114, %cst_82 [1] : vector<144x32xf32> to vector<144xf32>
    %116 = vector.shape_cast %115 : vector<144xf32> to vector<144x1xf32>
    %cst_83 = arith.constant 3.200000e+01 : f32
    %117 = vector.broadcast %cst_83 : f32 to vector<144x1xf32>
    %118 = arith.divf %116, %117 : vector<144x1xf32>
    %119 = vector.broadcast %111 : vector<144x1xf32> to vector<144x32xf32>
    %120 = arith.subf %107, %119 : vector<144x32xf32>
    %cst_84 = arith.constant 9.99999974E-6 : f32
    %121 = vector.broadcast %cst_84 : f32 to vector<144x1xf32>
    %122 = arith.addf %118, %121 : vector<144x1xf32>
    %123 = math.rsqrt %122 : vector<144x1xf32>
    %124 = vector.broadcast %123 : vector<144x1xf32> to vector<144x32xf32>
    %125 = arith.mulf %120, %124 : vector<144x32xf32>
    %126 = vector.broadcast %5 : vector<1x32xf32> to vector<144x32xf32>
    %127 = arith.mulf %125, %126 : vector<144x32xf32>
    %128 = vector.broadcast %6 : vector<1x32xf32> to vector<144x32xf32>
    %129 = arith.addf %127, %128 : vector<144x32xf32>
    %cst_85 = arith.constant dense<0.000000e+00> : vector<144x64xf32>
    %130 = tpu.matmul %129, %7, %cst_85 {dimension_numbers = #tpu.dot_dimension_numbers<[1], [0], [0], [1], [0, 0, 1, 1], [], []>} : vector<144x32xf32>, vector<32x64xf32>, vector<144x64xf32> -> vector<144x64xf32>
    %131 = vector.broadcast %8 : vector<1x64xf32> to vector<144x64xf32>
    %132 = arith.addf %130, %131 : vector<144x64xf32>
    %cst_86 = arith.constant 5.000000e-01 : f32
    %133 = vector.broadcast %cst_86 : f32 to vector<144x64xf32>
    %134 = arith.mulf %133, %132 : vector<144x64xf32>
    %cst_87 = arith.constant 0.707106769 : f32
    %135 = vector.broadcast %cst_87 : f32 to vector<144x64xf32>
    %136 = arith.mulf %132, %135 : vector<144x64xf32>
    %137 = math.erf %136 : vector<144x64xf32>
    %cst_88 = arith.constant 1.000000e+00 : f32
    %138 = vector.broadcast %cst_88 : f32 to vector<144x64xf32>
    %139 = arith.addf %138, %137 : vector<144x64xf32>
    %140 = arith.mulf %134, %139 : vector<144x64xf32>
    %cst_89 = arith.constant dense<0.000000e+00> : vector<144x32xf32>
    %141 = tpu.matmul %140, %9, %cst_89 {dimension_numbers = #tpu.dot_dimension_numbers<[1], [0], [0], [1], [0, 0, 1, 1], [], []>} : vector<144x64xf32>, vector<64x32xf32>, vector<144x32xf32> -> vector<144x32xf32>
    %142 = arith.addf %107, %141 : vector<144x32xf32>
    %143 = vector.broadcast %10 : vector<1x32xf32> to vector<144x32xf32>
    %144 = arith.addf %142, %143 : vector<144x32xf32>
    %c0_90 = arith.constant 0 : index
    %c0_91 = arith.constant 0 : index
    %145 = vector.load %arg10[%c0_90, %c0_91] : memref<16x16xf32, #tpu.memory_space<vmem>>, vector<16x16xf32>
    %146 = vector.extract_strided_slice %144 {offsets = [0, 0], sizes = [16, 32], strides = [1, 1]} : vector<144x32xf32> to vector<16x32xf32>
    %cst_92 = arith.constant dense<0.000000e+00> : vector<16x32xf32>
    %147 = tpu.matmul %145, %146, %cst_92 {dimension_numbers = #tpu.dot_dimension_numbers<[1], [0], [0], [1], [0, 0, 1, 1], [], []>} : vector<16x16xf32>, vector<16x32xf32>, vector<16x32xf32> -> vector<16x32xf32>
    %148 = vector.extract_strided_slice %144 {offsets = [16, 0], sizes = [128, 32], strides = [1, 1]} : vector<144x32xf32> to vector<128x32xf32>
    %149 = tpu.concatenate %147, %148 in 0 : vector<16x32xf32>, vector<128x32xf32> -> vector<144x32xf32>
    %c0_93 = arith.constant 0 : index
    %c0_94 = arith.constant 0 : index
    %150 = vector.load %arg7[%c0_93, %c0_94] : memref<144x9xf32, #tpu.memory_space<vmem>>, vector<144x9xf32>
    %c0_95 = arith.constant 0 : index
    %c0_96 = arith.constant 0 : index
    %151 = vector.load %arg3[%c0_95, %c0_96] : memref<9x32xf32, #tpu.memory_space<vmem>>, vector<9x32xf32>
    %cst_97 = arith.constant dense<0.000000e+00> : vector<144x32xf32>
    %152 = tpu.matmul %150, %151, %cst_97 {dimension_numbers = #tpu.dot_dimension_numbers<[1], [0], [0], [1], [0, 0, 1, 1], [], []>} : vector<144x9xf32>, vector<9x32xf32>, vector<144x32xf32> -> vector<144x32xf32>
    %153 = arith.addf %149, %152 : vector<144x32xf32>
    %cst_98 = arith.constant dense<0.000000e+00> : vector<144xf32>
    %154 = vector.multi_reduction <add>, %153, %cst_98 [1] : vector<144x32xf32> to vector<144xf32>
    %155 = vector.shape_cast %154 : vector<144xf32> to vector<144x1xf32>
    %cst_99 = arith.constant 3.200000e+01 : f32
    %156 = vector.broadcast %cst_99 : f32 to vector<144x1xf32>
    %157 = arith.divf %155, %156 : vector<144x1xf32>
    %158 = vector.broadcast %157 : vector<144x1xf32> to vector<144x32xf32>
    %159 = arith.subf %153, %158 : vector<144x32xf32>
    %160 = arith.mulf %159, %159 : vector<144x32xf32>
    %cst_100 = arith.constant dense<0.000000e+00> : vector<144xf32>
    %161 = vector.multi_reduction <add>, %160, %cst_100 [1] : vector<144x32xf32> to vector<144xf32>
    %162 = vector.shape_cast %161 : vector<144xf32> to vector<144x1xf32>
    %cst_101 = arith.constant 3.200000e+01 : f32
    %163 = vector.broadcast %cst_101 : f32 to vector<144x1xf32>
    %164 = arith.divf %162, %163 : vector<144x1xf32>
    %165 = vector.broadcast %157 : vector<144x1xf32> to vector<144x32xf32>
    %166 = arith.subf %153, %165 : vector<144x32xf32>
    %cst_102 = arith.constant 9.99999974E-6 : f32
    %167 = vector.broadcast %cst_102 : f32 to vector<144x1xf32>
    %168 = arith.addf %164, %167 : vector<144x1xf32>
    %169 = math.rsqrt %168 : vector<144x1xf32>
    %170 = vector.broadcast %169 : vector<144x1xf32> to vector<144x32xf32>
    %171 = arith.mulf %166, %170 : vector<144x32xf32>
    %172 = vector.broadcast %11 : vector<1x32xf32> to vector<144x32xf32>
    %173 = arith.mulf %171, %172 : vector<144x32xf32>
    %174 = vector.broadcast %12 : vector<1x32xf32> to vector<144x32xf32>
    %175 = arith.addf %173, %174 : vector<144x32xf32>
    %cst_103 = arith.constant dense<0.000000e+00> : vector<144x96xf32>
    %176 = tpu.matmul %175, %13, %cst_103 {dimension_numbers = #tpu.dot_dimension_numbers<[1], [0], [0], [1], [0, 0, 1, 1], [], []>} : vector<144x32xf32>, vector<32x96xf32>, vector<144x96xf32> -> vector<144x96xf32>
    %177 = vector.shape_cast %15 : vector<1x32xf32> to vector<1x32xf32>
    %178 = vector.broadcast %177 : vector<1x32xf32> to vector<144x32xf32>
    %179 = vector.extract_strided_slice %176 {offsets = [0, 0], sizes = [144, 16], strides = [1, 1]} : vector<144x96xf32> to vector<144x16xf32>
    %180 = vector.extract_strided_slice %176 {offsets = [0, 32], sizes = [144, 16], strides = [1, 1]} : vector<144x96xf32> to vector<144x16xf32>
    %181 = vector.extract_strided_slice %176 {offsets = [0, 64], sizes = [144, 16], strides = [1, 1]} : vector<144x96xf32> to vector<144x16xf32>
    %cst_104 = arith.constant dense<0.000000e+00> : vector<144x144xf32>
    %182 = tpu.matmul %179, %180, %cst_104 {dimension_numbers = #tpu.dot_dimension_numbers<[1], [1], [0], [0], [0, 0, 1, 0], [], []>} : vector<144x16xf32>, vector<144x16xf32>, vector<144x144xf32> -> vector<144x144xf32>
    %cst_105 = arith.constant 2.500000e-01 : f32
    %183 = vector.broadcast %cst_105 : f32 to vector<144x144xf32>
    %184 = arith.mulf %182, %183 : vector<144x144xf32>
    %c0_106 = arith.constant 0 : index
    %c0_107 = arith.constant 0 : index
    %185 = vector.load %arg9[%c0_106, %c0_107] : memref<144x144xf32, #tpu.memory_space<vmem>>, vector<144x144xf32>
    %186 = arith.addf %184, %185 : vector<144x144xf32>
    %cst_108 = arith.constant dense<0xFF800000> : vector<144xf32>
    %187 = vector.multi_reduction <maximumf>, %186, %cst_108 [1] : vector<144x144xf32> to vector<144xf32>
    %188 = vector.shape_cast %187 : vector<144xf32> to vector<144x1xf32>
    %189 = vector.broadcast %188 : vector<144x1xf32> to vector<144x144xf32>
    %190 = arith.subf %186, %189 : vector<144x144xf32>
    %191 = math.exp %190 : vector<144x144xf32>
    %cst_109 = arith.constant dense<0.000000e+00> : vector<144xf32>
    %192 = vector.multi_reduction <add>, %191, %cst_109 [1] : vector<144x144xf32> to vector<144xf32>
    %193 = vector.shape_cast %192 : vector<144xf32> to vector<144x1xf32>
    %194 = vector.broadcast %193 : vector<144x1xf32> to vector<144x144xf32>
    %195 = arith.divf %191, %194 : vector<144x144xf32>
    %cst_110 = arith.constant dense<0.000000e+00> : vector<144x16xf32>
    %196 = tpu.matmul %195, %181, %cst_110 {dimension_numbers = #tpu.dot_dimension_numbers<[1], [0], [0], [1], [0, 0, 1, 1], [], []>} : vector<144x144xf32>, vector<144x16xf32>, vector<144x16xf32> -> vector<144x16xf32>
    %197 = vector.extract_strided_slice %14 {offsets = [0, 0], sizes = [16, 32], strides = [1, 1]} : vector<32x32xf32> to vector<16x32xf32>
    %cst_111 = arith.constant dense<0.000000e+00> : vector<144x32xf32>
    %198 = tpu.matmul %196, %197, %cst_111 {dimension_numbers = #tpu.dot_dimension_numbers<[1], [0], [0], [1], [0, 0, 1, 1], [], []>} : vector<144x16xf32>, vector<16x32xf32>, vector<144x32xf32> -> vector<144x32xf32>
    %199 = arith.addf %178, %198 : vector<144x32xf32>
    %200 = vector.extract_strided_slice %176 {offsets = [0, 16], sizes = [144, 16], strides = [1, 1]} : vector<144x96xf32> to vector<144x16xf32>
    %201 = vector.extract_strided_slice %176 {offsets = [0, 48], sizes = [144, 16], strides = [1, 1]} : vector<144x96xf32> to vector<144x16xf32>
    %202 = vector.extract_strided_slice %176 {offsets = [0, 80], sizes = [144, 16], strides = [1, 1]} : vector<144x96xf32> to vector<144x16xf32>
    %cst_112 = arith.constant dense<0.000000e+00> : vector<144x144xf32>
    %203 = tpu.matmul %200, %201, %cst_112 {dimension_numbers = #tpu.dot_dimension_numbers<[1], [1], [0], [0], [0, 0, 1, 0], [], []>} : vector<144x16xf32>, vector<144x16xf32>, vector<144x144xf32> -> vector<144x144xf32>
    %cst_113 = arith.constant 2.500000e-01 : f32
    %204 = vector.broadcast %cst_113 : f32 to vector<144x144xf32>
    %205 = arith.mulf %203, %204 : vector<144x144xf32>
    %c0_114 = arith.constant 0 : index
    %c0_115 = arith.constant 0 : index
    %206 = vector.load %arg9[%c0_114, %c0_115] : memref<144x144xf32, #tpu.memory_space<vmem>>, vector<144x144xf32>
    %207 = arith.addf %205, %206 : vector<144x144xf32>
    %cst_116 = arith.constant dense<0xFF800000> : vector<144xf32>
    %208 = vector.multi_reduction <maximumf>, %207, %cst_116 [1] : vector<144x144xf32> to vector<144xf32>
    %209 = vector.shape_cast %208 : vector<144xf32> to vector<144x1xf32>
    %210 = vector.broadcast %209 : vector<144x1xf32> to vector<144x144xf32>
    %211 = arith.subf %207, %210 : vector<144x144xf32>
    %212 = math.exp %211 : vector<144x144xf32>
    %cst_117 = arith.constant dense<0.000000e+00> : vector<144xf32>
    %213 = vector.multi_reduction <add>, %212, %cst_117 [1] : vector<144x144xf32> to vector<144xf32>
    %214 = vector.shape_cast %213 : vector<144xf32> to vector<144x1xf32>
    %215 = vector.broadcast %214 : vector<144x1xf32> to vector<144x144xf32>
    %216 = arith.divf %212, %215 : vector<144x144xf32>
    %cst_118 = arith.constant dense<0.000000e+00> : vector<144x16xf32>
    %217 = tpu.matmul %216, %202, %cst_118 {dimension_numbers = #tpu.dot_dimension_numbers<[1], [0], [0], [1], [0, 0, 1, 1], [], []>} : vector<144x144xf32>, vector<144x16xf32>, vector<144x16xf32> -> vector<144x16xf32>
    %218 = vector.extract_strided_slice %14 {offsets = [16, 0], sizes = [16, 32], strides = [1, 1]} : vector<32x32xf32> to vector<16x32xf32>
    %cst_119 = arith.constant dense<0.000000e+00> : vector<144x32xf32>
    %219 = tpu.matmul %217, %218, %cst_119 {dimension_numbers = #tpu.dot_dimension_numbers<[1], [0], [0], [1], [0, 0, 1, 1], [], []>} : vector<144x16xf32>, vector<16x32xf32>, vector<144x32xf32> -> vector<144x32xf32>
    %220 = arith.addf %199, %219 : vector<144x32xf32>
    %221 = arith.addf %153, %220 : vector<144x32xf32>
    %cst_120 = arith.constant dense<0.000000e+00> : vector<144xf32>
    %222 = vector.multi_reduction <add>, %221, %cst_120 [1] : vector<144x32xf32> to vector<144xf32>
    %223 = vector.shape_cast %222 : vector<144xf32> to vector<144x1xf32>
    %cst_121 = arith.constant 3.200000e+01 : f32
    %224 = vector.broadcast %cst_121 : f32 to vector<144x1xf32>
    %225 = arith.divf %223, %224 : vector<144x1xf32>
    %226 = vector.broadcast %225 : vector<144x1xf32> to vector<144x32xf32>
    %227 = arith.subf %221, %226 : vector<144x32xf32>
    %228 = arith.mulf %227, %227 : vector<144x32xf32>
    %cst_122 = arith.constant dense<0.000000e+00> : vector<144xf32>
    %229 = vector.multi_reduction <add>, %228, %cst_122 [1] : vector<144x32xf32> to vector<144xf32>
    %230 = vector.shape_cast %229 : vector<144xf32> to vector<144x1xf32>
    %cst_123 = arith.constant 3.200000e+01 : f32
    %231 = vector.broadcast %cst_123 : f32 to vector<144x1xf32>
    %232 = arith.divf %230, %231 : vector<144x1xf32>
    %233 = vector.broadcast %225 : vector<144x1xf32> to vector<144x32xf32>
    %234 = arith.subf %221, %233 : vector<144x32xf32>
    %cst_124 = arith.constant 9.99999974E-6 : f32
    %235 = vector.broadcast %cst_124 : f32 to vector<144x1xf32>
    %236 = arith.addf %232, %235 : vector<144x1xf32>
    %237 = math.rsqrt %236 : vector<144x1xf32>
    %238 = vector.broadcast %237 : vector<144x1xf32> to vector<144x32xf32>
    %239 = arith.mulf %234, %238 : vector<144x32xf32>
    %240 = vector.broadcast %16 : vector<1x32xf32> to vector<144x32xf32>
    %241 = arith.mulf %239, %240 : vector<144x32xf32>
    %242 = vector.broadcast %17 : vector<1x32xf32> to vector<144x32xf32>
    %243 = arith.addf %241, %242 : vector<144x32xf32>
    %cst_125 = arith.constant dense<0.000000e+00> : vector<144x64xf32>
    %244 = tpu.matmul %243, %18, %cst_125 {dimension_numbers = #tpu.dot_dimension_numbers<[1], [0], [0], [1], [0, 0, 1, 1], [], []>} : vector<144x32xf32>, vector<32x64xf32>, vector<144x64xf32> -> vector<144x64xf32>
    %245 = vector.broadcast %19 : vector<1x64xf32> to vector<144x64xf32>
    %246 = arith.addf %244, %245 : vector<144x64xf32>
    %cst_126 = arith.constant 5.000000e-01 : f32
    %247 = vector.broadcast %cst_126 : f32 to vector<144x64xf32>
    %248 = arith.mulf %247, %246 : vector<144x64xf32>
    %cst_127 = arith.constant 0.707106769 : f32
    %249 = vector.broadcast %cst_127 : f32 to vector<144x64xf32>
    %250 = arith.mulf %246, %249 : vector<144x64xf32>
    %251 = math.erf %250 : vector<144x64xf32>
    %cst_128 = arith.constant 1.000000e+00 : f32
    %252 = vector.broadcast %cst_128 : f32 to vector<144x64xf32>
    %253 = arith.addf %252, %251 : vector<144x64xf32>
    %254 = arith.mulf %248, %253 : vector<144x64xf32>
    %cst_129 = arith.constant dense<0.000000e+00> : vector<144x32xf32>
    %255 = tpu.matmul %254, %20, %cst_129 {dimension_numbers = #tpu.dot_dimension_numbers<[1], [0], [0], [1], [0, 0, 1, 1], [], []>} : vector<144x64xf32>, vector<64x32xf32>, vector<144x32xf32> -> vector<144x32xf32>
    %256 = arith.addf %221, %255 : vector<144x32xf32>
    %257 = vector.broadcast %21 : vector<1x32xf32> to vector<144x32xf32>
    %258 = arith.addf %256, %257 : vector<144x32xf32>
    %c0_130 = arith.constant 0 : index
    %c0_131 = arith.constant 0 : index
    %259 = vector.load %arg12[%c0_130, %c0_131] : memref<32x32xf32, #tpu.memory_space<vmem>>, vector<32x32xf32>
    %260 = vector.extract_strided_slice %258 {offsets = [16, 0], sizes = [64, 32], strides = [1, 1]} : vector<144x32xf32> to vector<64x32xf32>
    %cst_132 = arith.constant dense<0.000000e+00> : vector<32x64xf32>
    %261 = tpu.matmul %259, %260, %cst_132 {dimension_numbers = #tpu.dot_dimension_numbers<[1], [1], [0], [0], [0, 0, 1, 0], [], []>} : vector<32x32xf32>, vector<64x32xf32>, vector<32x64xf32> -> vector<32x64xf32>
    %c0_133 = arith.constant 0 : index
    %c0_134 = arith.constant 0 : index
    %262 = vector.load %arg35[%c0_133, %c0_134] : memref<64x64xf32, #tpu.memory_space<vmem>>, vector<32x64xf32>
    tpu.vector_store %arg35[%c0_133, %c0_134], %261 {strides = array<i32>} : memref<64x64xf32, #tpu.memory_space<vmem>>, vector<32x64xf32>,
    %263 = vector.extract_strided_slice %258 {offsets = [80, 0], sizes = [64, 32], strides = [1, 1]} : vector<144x32xf32> to vector<64x32xf32>
    %cst_135 = arith.constant dense<0.000000e+00> : vector<32x64xf32>
    %264 = tpu.matmul %259, %263, %cst_135 {dimension_numbers = #tpu.dot_dimension_numbers<[1], [1], [0], [0], [0, 0, 1, 0], [], []>} : vector<32x32xf32>, vector<64x32xf32>, vector<32x64xf32> -> vector<32x64xf32>
    %c32 = arith.constant 32 : index
    %c0_136 = arith.constant 0 : index
    %265 = vector.load %arg35[%c32, %c0_136] : memref<64x64xf32, #tpu.memory_space<vmem>>, vector<32x64xf32>
    tpu.vector_store %arg35[%c32, %c0_136], %264 {strides = array<i32>} : memref<64x64xf32, #tpu.memory_space<vmem>>, vector<32x64xf32>,
    %c0_137 = arith.constant 0 : index
    %c0_138 = arith.constant 0 : index
    %266 = vector.load %arg11[%c0_137, %c0_138] : memref<2x16xf32, #tpu.memory_space<vmem>>, vector<2x16xf32>
    %267 = vector.extract_strided_slice %258 {offsets = [0, 0], sizes = [16, 32], strides = [1, 1]} : vector<144x32xf32> to vector<16x32xf32>
    %cst_139 = arith.constant dense<0.000000e+00> : vector<2x32xf32>
    %268 = tpu.matmul %266, %267, %cst_139 {dimension_numbers = #tpu.dot_dimension_numbers<[1], [0], [0], [1], [0, 0, 1, 1], [], []>} : vector<2x16xf32>, vector<16x32xf32>, vector<2x32xf32> -> vector<2x32xf32>
    %c0_140 = arith.constant 0 : index
    %c0_141 = arith.constant 0 : index
    %269 = vector.load %arg36[%c0_140, %c0_141] : memref<2x32xf32, #tpu.memory_space<vmem>>, vector<2x32xf32>
    tpu.vector_store %arg36[%c0_140, %c0_141], %268 {strides = array<i32>} : memref<2x32xf32, #tpu.memory_space<vmem>>, vector<2x32xf32>,
    return
  }
}

</mosaic_0001>

<llo_original>
// kernel: septr_block_forward.1
$region0: #{septr_block_forward.1}
  #allocation0 [shape = 'u32[]', space=smem, size = 0x4, offset = 0x4, fixed_abs, tag = 'smem constant byte address 0x4 - core index']
  #allocation1 [shape = 'u32[144,128]{1,0:T(1,128)}', space=vmem, size = 0x12000, scoped, tag = 'internal scratch']
  %s0 = inlined_call_operand.smem [shape: u32[37], index: -1, kind: input, shape index: {}]
  %s1 = sld [smem:[%s0]]
  %s2 = scalar_lea.smem %s0, 1
  %s3 = sld [smem:[%s2]]
  %s4 = scalar_lea.smem %s0, 2
  %s5 = sld [smem:[%s4]]
  %s6 = scalar_lea.smem %s0, 3
  %s7 = sld [smem:[%s6]]
  %s8 = scalar_lea.smem %s0, 4
  %s9 = sld [smem:[%s8]]
  %s10 = scalar_lea.smem %s0, 5
  %s11 = sld [smem:[%s10]]
  %s12 = scalar_lea.smem %s0, 6
  %s13 = sld [smem:[%s12]]
  %s14 = scalar_lea.smem %s0, 7
  %s15 = sld [smem:[%s14]]
  %s16 = scalar_lea.smem %s0, 8
  %s17 = sld [smem:[%s16]]
  %s18 = scalar_lea.smem %s0, 9
  %s19 = sld [smem:[%s18]]
  %s20 = scalar_lea.smem %s0, 10
  %s21 = sld [smem:[%s20]]
  %s22 = scalar_lea.smem %s0, 11
  %s23 = sld [smem:[%s22]]
  %s24 = scalar_lea.smem %s0, 12
  %s25 = sld [smem:[%s24]]
  %s26 = scalar_lea.smem %s0, 13
  %s27 = sld [smem:[%s26]]
  %s28 = scalar_lea.smem %s0, 14
  %s29 = sld [smem:[%s28]]
  %s30 = scalar_lea.smem %s0, 15
  %s31 = sld [smem:[%s30]]
  %s32 = scalar_lea.smem %s0, 16
  %s33 = sld [smem:[%s32]]
  %s34 = scalar_lea.smem %s0, 17
  %s35 = sld [smem:[%s34]]
  %s36 = scalar_lea.smem %s0, 18
  %s37 = sld [smem:[%s36]]
  %s38 = scalar_lea.smem %s0, 19
  %s39 = sld [smem:[%s38]]
  %s40 = scalar_lea.smem %s0, 20
  %s41 = sld [smem:[%s40]]
  %s42 = scalar_lea.smem %s0, 21
  %s43 = sld [smem:[%s42]]
  %s44 = scalar_lea.smem %s0, 22
  %s45 = sld [smem:[%s44]]
  %s46 = scalar_lea.smem %s0, 23
  %s47 = sld [smem:[%s46]]
  %s48 = scalar_lea.smem %s0, 24
  %s49 = sld [smem:[%s48]]
  %s50 = scalar_lea.smem %s0, 25
  %s51 = sld [smem:[%s50]]
  %s52 = scalar_lea.smem %s0, 26
  %s53 = sld [smem:[%s52]]
  %s54 = scalar_lea.smem %s0, 27
  %s55 = sld [smem:[%s54]]
  %s56 = scalar_lea.smem %s0, 28
  %s57 = sld [smem:[%s56]]
  %s58 = scalar_lea.smem %s0, 29
  %s59 = sld [smem:[%s58]]
  %s60 = scalar_lea.smem %s0, 30
  %s61 = sld [smem:[%s60]]
  %s62 = scalar_lea.smem %s0, 31
  %s63 = sld [smem:[%s62]]
  %s64 = scalar_lea.smem %s0, 32
  %s65 = sld [smem:[%s64]]
  %s66 = scalar_lea.smem %s0, 33
  %s67 = sld [smem:[%s66]]
  %s68 = scalar_lea.smem %s0, 34
  %s69 = sld [smem:[%s68]]
  %s70 = scalar_lea.smem %s0, 35
  %s71 = sld [smem:[%s70]]
  %s72 = scalar_lea.smem %s0, 36
  %s73 = sld [smem:[%s72]]
  %74 = xla_tuple %s71, %s73
  %s75 = sld [smem:[#allocation0]]
  $region246: #{septr_block_forward.1} parent=0
    _
  %s77 = ssub.s32 1, %s75
  %s78 = scalar_select 0, %s77, %s75
  $region1: #{septr_block_forward.1} parent=0
    #allocation2 [shape = 'u8[73728]{0}', space=vmem, size = 0x12000, scoped, tag = 'input window, operand 6, single buffered']
    #allocation3 [shape = 's32[1]{0}', space=sflag, size = 0x4, scoped, tag = 'scoped memory for septr_block_forward.1']
    #allocation4 [shape = 's32[1]{0}', space=sflag, size = 0x4, scoped, tag = 'scoped memory for septr_block_forward.1']
    #allocation5 [shape = 'u8[147456]{0}', space=vmem, size = 0x24000, scoped, tag = 'input window, operand 8, single buffered']
    #allocation6 [shape = 's32[1]{0}', space=sflag, size = 0x4, scoped, tag = 'scoped memory for septr_block_forward.1']
    #allocation7 [shape = 'u8[8192]{0}', space=vmem, size = 0x2000, scoped, tag = 'input window, operand 10, single buffered']
    #allocation8 [shape = 'u8[16384]{0}', space=vmem, size = 0x4000, scoped, tag = 'input window, operand 12, single buffered']
    #allocation9 [shape = 's32[1]{0}', space=sflag, size = 0x4, scoped, tag = 'scoped memory for septr_block_forward.1']
    #allocation10 [shape = 'u8[16384]{0}', space=vmem, size = 0x4000, scoped, tag = 'input window, operand 15, single buffered']
    #allocation11 [shape = 'u8[16384]{0}', space=vmem, size = 0x4000, scoped, tag = 'input window, operand 16, single buffered']
    #allocation12 [shape = 's32[1]{0}', space=sflag, size = 0x4, scoped, tag = 'scoped memory for septr_block_forward.1']
    #allocation13 [shape = 'u8[512]{0}', space=vmem, size = 0x400, scoped, tag = 'input window, operand 17, single buffered']
    #allocation14 [shape = 'u8[512]{0}', space=vmem, size = 0x400, scoped, tag = 'input window, operand 18, single buffered']
    #allocation15 [shape = 's32[1]{0}', space=sflag, size = 0x4, scoped, tag = 'scoped memory for septr_block_forward.1']
    #allocation16 [shape = 'u8[512]{0}', space=vmem, size = 0x400, scoped, tag = 'input window, operand 19, single buffered']
    #allocation17 [shape = 'u8[16384]{0}', space=vmem, size = 0x4000, scoped, tag = 'input window, operand 20, single buffered']
    #allocation18 [shape = 's32[1]{0}', space=sflag, size = 0x4, scoped, tag = 'scoped memory for septr_block_forward.1']
    #allocation19 [shape = 'u8[512]{0}', space=vmem, size = 0x400, scoped, tag = 'input window, operand 21, single buffered']
    #allocation20 [shape = 'u8[512]{0}', space=vmem, size = 0x400, scoped, tag = 'input window, operand 23, single buffered']
    #allocation21 [shape = 's32[1]{0}', space=sflag, size = 0x4, scoped, tag = 'scoped memory for septr_block_forward.1']
    #allocation22 [shape = 'u8[512]{0}', space=vmem, size = 0x400, scoped, tag = 'input window, operand 24, single buffered']
    #allocation23 [shape = 'u8[512]{0}', space=vmem, size = 0x400, scoped, tag = 'input window, operand 25, single buffered']
    #allocation24 [shape = 's32[1]{0}', space=sflag, size = 0x4, scoped, tag = 'scoped memory for septr_block_forward.1']
    #allocation25 [shape = 'u8[16384]{0}', space=vmem, size = 0x4000, scoped, tag = 'input window, operand 26, single buffered']
    #allocation26 [shape = 'u8[16384]{0}', space=vmem, size = 0x4000, scoped, tag = 'input window, operand 27, single buffered']
    #allocation27 [shape = 's32[1]{0}', space=sflag, size = 0x4, scoped, tag = 'scoped memory for septr_block_forward.1']
    #allocation28 [shape = 'u8[512]{0}', space=vmem, size = 0x400, scoped, tag = 'input window, operand 28, single buffered']
    #allocation29 [shape = 'u8[512]{0}', space=vmem, size = 0x400, scoped, tag = 'input window, operand 29, single buffered']
    #allocation30 [shape = 's32[1]{0}', space=sflag, size = 0x4, scoped, tag = 'scoped memory for septr_block_forward.1']
    #allocation31 [shape = 'u8[512]{0}', space=vmem, size = 0x400, scoped, tag = 'input window, operand 30, single buffered']
    #allocation32 [shape = 'u8[16384]{0}', space=vmem, size = 0x4000, scoped, tag = 'input window, operand 31, single buffered']
    #allocation33 [shape = 's32[1]{0}', space=sflag, size = 0x4, scoped, tag = 'scoped memory for septr_block_forward.1']
    #allocation34 [shape = 'u8[512]{0}', space=vmem, size = 0x400, scoped, tag = 'input window, operand 32, single buffered']
    #allocation35 [shape = 'u8[512]{0}', space=vmem, size = 0x400, scoped, tag = 'input window, operand 34, single buffered']
    #allocation36 [shape = 's32[1]{0}', space=sflag, size = 0x4, scoped, tag = 'scoped memory for septr_block_forward.1']
    #allocation37 [shape = 'u8[1024]{0}', space=vmem, size = 0x400, scoped, tag = 'output window, operand 1, single buffered']
    %79 = vsyncpa [#allocation3], 0
    %80 = vsyncpa [#allocation6], 0
    %81 = vsyncpa [#allocation9], 0
    %82 = vsyncpa [#allocation12], 0
    %83 = vsyncpa [#allocation15], 0
    %84 = vsyncpa [#allocation18], 0
    %85 = vsyncpa [#allocation21], 0
    %86 = vsyncpa [#allocation24], 0
    %87 = vsyncpa [#allocation27], 0
    %88 = vsyncpa [#allocation30], 0
    %89 = vsyncpa [#allocation33], 0
    %90 = vsyncpa [#allocation36], 0
    %91 = vsyncpa [#allocation4], 0
    // Predicated region
    $region2: #{septr_block_forward.1} parent=1 // pred_check
      _
    $region3: #{septr_block_forward.1} parent=1 // pred_check_branch
      %93 = sbr.rel (0) target = $region5
    $region4: #{septr_block_forward.1} parent=1 // pred_region
      _
    $region5: #{septr_block_forward.1} parent=1 // pred_fallthru
      _
    // Predicated region
    $region6: #{septr_block_forward.1} parent=1 // pred_check
      _
    $region7: #{septr_block_forward.1} parent=1 // pred_check_branch
      %95 = sbr.rel (0) target = $region9
    $region8: #{septr_block_forward.1} parent=1 // pred_region
      _
    $region9: #{septr_block_forward.1} parent=1 // pred_fallthru
      _
    // Predicated region
    $region10: #{septr_block_forward.1} parent=1 // pred_check
      _
    $region11: #{septr_block_forward.1} parent=1 // pred_check_branch
      %97 = sbr.rel (0) target = $region13
    $region12: #{septr_block_forward.1} parent=1 // pred_region
      _
    $region13: #{septr_block_forward.1} parent=1 // pred_fallthru
      _
    // Predicated region
    $region14: #{septr_block_forward.1} parent=1 // pred_check
      _
    $region15: #{septr_block_forward.1} parent=1 // pred_check_branch
      %99 = sbr.rel (0) target = $region17
    $region16: #{septr_block_forward.1} parent=1 // pred_region
      _
    $region17: #{septr_block_forward.1} parent=1 // pred_fallthru
      _
    // Predicated region
    $region18: #{septr_block_forward.1} parent=1 // pred_check
      _
    $region19: #{septr_block_forward.1} parent=1 // pred_check_branch
      %101 = sbr.rel (0) target = $region21
    $region20: #{septr_block_forward.1} parent=1 // pred_region
      _
    $region21: #{septr_block_forward.1} parent=1 // pred_fallthru
      _
    // Predicated region
    $region22: #{septr_block_forward.1} parent=1 // pred_check
      _
    $region23: #{septr_block_forward.1} parent=1 // pred_check_branch
      %103 = sbr.rel (0) target = $region25
    $region24: #{septr_block_forward.1} parent=1 // pred_region
      _
    $region25: #{septr_block_forward.1} parent=1 // pred_fallthru
      _
    // Predicated region
    $region26: #{septr_block_forward.1} parent=1 // pred_check
      _
    $region27: #{septr_block_forward.1} parent=1 // pred_check_branch
      %105 = sbr.rel (0) target = $region29
    $region28: #{septr_block_forward.1} parent=1 // pred_region
      %s107 = ssub.s32 2304, 2304
      %108 = vsyncadd [#allocation3], %s107
      %s109 = sshll.u32 [#allocation2], 4
      %s110 = int_to_ptr.vmem [resolvable:$true] %s109
      %115 = dma.hbm_to_vmem [thread:$0]  %s13, 2304, %s110, [#allocation3], 128, 128, 8
    $region29: #{septr_block_forward.1} parent=1 // pred_fallthru
      _
    // Predicated region
    $region30: #{septr_block_forward.1} parent=1 // pred_check
      _
    $region31: #{septr_block_forward.1} parent=1 // pred_check_branch
      %117 = sbr.rel (0) target = $region33
    $region32: #{septr_block_forward.1} parent=1 // pred_region
      _
    $region33: #{septr_block_forward.1} parent=1 // pred_fallthru
      _
    // Predicated region
    $region34: #{septr_block_forward.1} parent=1 // pred_check
      _
    $region35: #{septr_block_forward.1} parent=1 // pred_check_branch
      %119 = sbr.rel (0) target = $region37
    $region36: #{septr_block_forward.1} parent=1 // pred_region
      %s121 = ssub.s32 4608, 4608
      %122 = vsyncadd [#allocation6], %s121
      %s123 = sshll.u32 [#allocation5], 4
      %s124 = int_to_ptr.vmem [resolvable:$true] %s123
      %129 = dma.hbm_to_vmem [thread:$0]  %s17, 4608, %s124, [#allocation6], 256, 256, 16
    $region37: #{septr_block_forward.1} parent=1 // pred_fallthru
      _
    // Predicated region
    $region38: #{septr_block_forward.1} parent=1 // pred_check
      _
    $region39: #{septr_block_forward.1} parent=1 // pred_check_branch
      %131 = sbr.rel (0) target = $region41
    $region40: #{septr_block_forward.1} parent=1 // pred_region
      _
    $region41: #{septr_block_forward.1} parent=1 // pred_fallthru
      _
    // Predicated region
    $region42: #{septr_block_forward.1} parent=1 // pred_check
      _
    $region43: #{septr_block_forward.1} parent=1 // pred_check_branch
      %133 = sbr.rel (0) target = $region45
    $region44: #{septr_block_forward.1} parent=1 // pred_region
      %s135 = ssub.s32 256, 256
      %136 = vsyncadd [#allocation6], %s135
      %s137 = sshll.u32 [#allocation7], 4
      %s138 = int_to_ptr.vmem [resolvable:$true] %s137
      %143 = dma.hbm_to_vmem [thread:$0]  %s21, 256, %s138, [#allocation6], 128, 128, 8
    $region45: #{septr_block_forward.1} parent=1 // pred_fallthru
      _
    // Predicated region
    $region46: #{septr_block_forward.1} parent=1 // pred_check
      _
    $region47: #{septr_block_forward.1} parent=1 // pred_check_branch
      %145 = sbr.rel (0) target = $region49
    $region48: #{septr_block_forward.1} parent=1 // pred_region
      _
    $region49: #{septr_block_forward.1} parent=1 // pred_fallthru
      _
    // Predicated region
    $region50: #{septr_block_forward.1} parent=1 // pred_check
      _
    $region51: #{septr_block_forward.1} parent=1 // pred_check_branch
      %147 = sbr.rel (0) target = $region53
    $region52: #{septr_block_forward.1} parent=1 // pred_region
      %s149 = ssub.s32 512, 512
      %150 = vsyncadd [#allocation9], %s149
      %s151 = sshll.u32 [#allocation8], 4
      %s152 = int_to_ptr.vmem [resolvable:$true] %s151
      %157 = dma.hbm_to_vmem [thread:$0]  %s25, 512, %s152, [#allocation9], 128, 128, 8
    $region53: #{septr_block_forward.1} parent=1 // pred_fallthru
      _
    // Predicated region
    $region54: #{septr_block_forward.1} parent=1 // pred_check
      _
    $region55: #{septr_block_forward.1} parent=1 // pred_check_branch
      %159 = sbr.rel (0) target = $region57
    $region56: #{septr_block_forward.1} parent=1 // pred_region
      _
    $region57: #{septr_block_forward.1} parent=1 // pred_fallthru
      _
    // Predicated region
    $region58: #{septr_block_forward.1} parent=1 // pred_check
      _
    $region59: #{septr_block_forward.1} parent=1 // pred_check_branch
      %161 = sbr.rel (0) target = $region61
    $region60: #{septr_block_forward.1} parent=1 // pred_region
      _
    $region61: #{septr_block_forward.1} parent=1 // pred_fallthru
      _
    // Predicated region
    $region62: #{septr_block_forward.1} parent=1 // pred_check
      _
    $region63: #{septr_block_forward.1} parent=1 // pred_check_branch
      %163 = sbr.rel (0) target = $region65
    $region64: #{septr_block_forward.1} parent=1 // pred_region
      %s165 = ssub.s32 512, 512
      %166 = vsyncadd [#allocation9], %s165
      %s167 = sshll.u32 [#allocation10], 4
      %s168 = int_to_ptr.vmem [resolvable:$true] %s167
      %173 = dma.hbm_to_vmem [thread:$0]  %s31, 512, %s168, [#allocation9], 128, 128, 8
    $region65: #{septr_block_forward.1} parent=1 // pred_fallthru
      _
    // Predicated region
    $region66: #{septr_block_forward.1} parent=1 // pred_check
      _
    $region67: #{septr_block_forward.1} parent=1 // pred_check_branch
      %175 = sbr.rel (0) target = $region69
    $region68: #{septr_block_forward.1} parent=1 // pred_region
      %s177 = ssub.s32 512, 512
      %178 = vsyncadd [#allocation12], %s177
      %s179 = sshll.u32 [#allocation11], 4
      %s180 = int_to_ptr.vmem [resolvable:$true] %s179
      %185 = dma.hbm_to_vmem [thread:$0]  %s33, 512, %s180, [#allocation12], 128, 128, 8
    $region69: #{septr_block_forward.1} parent=1 // pred_fallthru
      _
    // Predicated region
    $region70: #{septr_block_forward.1} parent=1 // pred_check
      _
    $region71: #{septr_block_forward.1} parent=1 // pred_check_branch
      %187 = sbr.rel (0) target = $region73
    $region72: #{septr_block_forward.1} parent=1 // pred_region
      %s189 = ssub.s32 16, 16
      %190 = vsyncadd [#allocation12], %s189
      %s192 = sshll.u32 [#allocation13], 4
      %s193 = int_to_ptr.vmem [resolvable:$true] %s192
      %195 = dma.hbm_to_vmem [thread:$0]  %s35, 16, %s193, [#allocation12]
    $region73: #{septr_block_forward.1} parent=1 // pred_fallthru
      _
    // Predicated region
    $region74: #{septr_block_forward.1} parent=1 // pred_check
      _
    $region75: #{septr_block_forward.1} parent=1 // pred_check_branch
      %197 = sbr.rel (0) target = $region77
    $region76: #{septr_block_forward.1} parent=1 // pred_region
      %s199 = ssub.s32 16, 16
      %200 = vsyncadd [#allocation15], %s199
      %s202 = sshll.u32 [#allocation14], 4
      %s203 = int_to_ptr.vmem [resolvable:$true] %s202
      %205 = dma.hbm_to_vmem [thread:$0]  %s37, 16, %s203, [#allocation15]
    $region77: #{septr_block_forward.1} parent=1 // pred_fallthru
      _
    // Predicated region
    $region78: #{septr_block_forward.1} parent=1 // pred_check
      _
    $region79: #{septr_block_forward.1} parent=1 // pred_check_branch
      %207 = sbr.rel (0) target = $region81
    $region80: #{septr_block_forward.1} parent=1 // pred_region
      %s209 = ssub.s32 16, 16
      %210 = vsyncadd [#allocation15], %s209
      %s212 = sshll.u32 [#allocation16], 4
      %s213 = int_to_ptr.vmem [resolvable:$true] %s212
      %215 = dma.hbm_to_vmem [thread:$0]  %s39, 16, %s213, [#allocation15]
    $region81: #{septr_block_forward.1} parent=1 // pred_fallthru
      _
    // Predicated region
    $region82: #{septr_block_forward.1} parent=1 // pred_check
      _
    $region83: #{septr_block_forward.1} parent=1 // pred_check_branch
      %217 = sbr.rel (0) target = $region85
    $region84: #{septr_block_forward.1} parent=1 // pred_region
      %s219 = ssub.s32 512, 512
      %220 = vsyncadd [#allocation18], %s219
      %s221 = sshll.u32 [#allocation17], 4
      %s222 = int_to_ptr.vmem [resolvable:$true] %s221
      %227 = dma.hbm_to_vmem [thread:$0]  %s41, 512, %s222, [#allocation18], 128, 128, 8
    $region85: #{septr_block_forward.1} parent=1 // pred_fallthru
      _
    // Predicated region
    $region86: #{septr_block_forward.1} parent=1 // pred_check
      _
    $region87: #{septr_block_forward.1} parent=1 // pred_check_branch
      %229 = sbr.rel (0) target = $region89
    $region88: #{septr_block_forward.1} parent=1 // pred_region
      %s231 = ssub.s32 16, 16
      %232 = vsyncadd [#allocation18], %s231
      %s234 = sshll.u32 [#allocation19], 4
      %s235 = int_to_ptr.vmem [resolvable:$true] %s234
      %237 = dma.hbm_to_vmem [thread:$0]  %s43, 16, %s235, [#allocation18]
    $region89: #{septr_block_forward.1} parent=1 // pred_fallthru
      _
    // Predicated region
    $region90: #{septr_block_forward.1} parent=1 // pred_check
      _
    $region91: #{septr_block_forward.1} parent=1 // pred_check_branch
      %239 = sbr.rel (0) target = $region93
    $region92: #{septr_block_forward.1} parent=1 // pred_region
      _
    $region93: #{septr_block_forward.1} parent=1 // pred_fallthru
      _
    // Predicated region
    $region94: #{septr_block_forward.1} parent=1 // pred_check
      _
    $region95: #{septr_block_forward.1} parent=1 // pred_check_branch
      %241 = sbr.rel (0) target = $region97
    $region96: #{septr_block_forward.1} parent=1 // pred_region
      %s243 = ssub.s32 16, 16
      %244 = vsyncadd [#allocation21], %s243
      %s246 = sshll.u32 [#allocation20], 4
      %s247 = int_to_ptr.vmem [resolvable:$true] %s246
      %249 = dma.hbm_to_vmem [thread:$0]  %s47, 16, %s247, [#allocation21]
    $region97: #{septr_block_forward.1} parent=1 // pred_fallthru
      _
    // Predicated region
    $region98: #{septr_block_forward.1} parent=1 // pred_check
      _
    $region99: #{septr_block_forward.1} parent=1 // pred_check_branch
      %251 = sbr.rel (0) target = $region101
    $region100: #{septr_block_forward.1} parent=1 // pred_region
      %s253 = ssub.s32 16, 16
      %254 = vsyncadd [#allocation21], %s253
      %s256 = sshll.u32 [#allocation22], 4
      %s257 = int_to_ptr.vmem [resolvable:$true] %s256
      %259 = dma.hbm_to_vmem [thread:$0]  %s49, 16, %s257, [#allocation21]
    $region101: #{septr_block_forward.1} parent=1 // pred_fallthru
      _
    // Predicated region
    $region102: #{septr_block_forward.1} parent=1 // pred_check
      _
    $region103: #{septr_block_forward.1} parent=1 // pred_check_branch
      %261 = sbr.rel (0) target = $region105
    $region104: #{septr_block_forward.1} parent=1 // pred_region
      %s263 = ssub.s32 16, 16
      %264 = vsyncadd [#allocation24], %s263
      %s266 = sshll.u32 [#allocation23], 4
      %s267 = int_to_ptr.vmem [resolvable:$true] %s266
      %269 = dma.hbm_to_vmem [thread:$0]  %s51, 16, %s267, [#allocation24]
    $region105: #{septr_block_forward.1} parent=1 // pred_fallthru
      _
    // Predicated region
    $region106: #{septr_block_forward.1} parent=1 // pred_check
      _
    $region107: #{septr_block_forward.1} parent=1 // pred_check_branch
      %271 = sbr.rel (0) target = $region109
    $region108: #{septr_block_forward.1} parent=1 // pred_region
      %s273 = ssub.s32 512, 512
      %274 = vsyncadd [#allocation24], %s273
      %s275 = sshll.u32 [#allocation25], 4
      %s276 = int_to_ptr.vmem [resolvable:$true] %s275
      %281 = dma.hbm_to_vmem [thread:$0]  %s53, 512, %s276, [#allocation24], 128, 128, 8
    $region109: #{septr_block_forward.1} parent=1 // pred_fallthru
      _
    // Predicated region
    $region110: #{septr_block_forward.1} parent=1 // pred_check
      _
    $region111: #{septr_block_forward.1} parent=1 // pred_check_branch
      %283 = sbr.rel (0) target = $region113
    $region112: #{septr_block_forward.1} parent=1 // pred_region
      %s285 = ssub.s32 512, 512
      %286 = vsyncadd [#allocation27], %s285
      %s287 = sshll.u32 [#allocation26], 4
      %s288 = int_to_ptr.vmem [resolvable:$true] %s287
      %293 = dma.hbm_to_vmem [thread:$0]  %s55, 512, %s288, [#allocation27], 128, 128, 8
    $region113: #{septr_block_forward.1} parent=1 // pred_fallthru
      _
    // Predicated region
    $region114: #{septr_block_forward.1} parent=1 // pred_check
      _
    $region115: #{septr_block_forward.1} parent=1 // pred_check_branch
      %295 = sbr.rel (0) target = $region117
    $region116: #{septr_block_forward.1} parent=1 // pred_region
      %s297 = ssub.s32 16, 16
      %298 = vsyncadd [#allocation27], %s297
      %s300 = sshll.u32 [#allocation28], 4
      %s301 = int_to_ptr.vmem [resolvable:$true] %s300
      %303 = dma.hbm_to_vmem [thread:$0]  %s57, 16, %s301, [#allocation27]
    $region117: #{septr_block_forward.1} parent=1 // pred_fallthru
      _
    // Predicated region
    $region118: #{septr_block_forward.1} parent=1 // pred_check
      _
    $region119: #{septr_block_forward.1} parent=1 // pred_check_branch
      %305 = sbr.rel (0) target = $region121
    $region120: #{septr_block_forward.1} parent=1 // pred_region
      %s307 = ssub.s32 16, 16
      %308 = vsyncadd [#allocation30], %s307
      %s310 = sshll.u32 [#allocation29], 4
      %s311 = int_to_ptr.vmem [resolvable:$true] %s310
      %313 = dma.hbm_to_vmem [thread:$0]  %s59, 16, %s311, [#allocation30]
    $region121: #{septr_block_forward.1} parent=1 // pred_fallthru
      _
    // Predicated region
    $region122: #{septr_block_forward.1} parent=1 // pred_check
      _
    $region123: #{septr_block_forward.1} parent=1 // pred_check_branch
      %315 = sbr.rel (0) target = $region125
    $region124: #{septr_block_forward.1} parent=1 // pred_region
      %s317 = ssub.s32 16, 16
      %318 = vsyncadd [#allocation30], %s317
      %s320 = sshll.u32 [#allocation31], 4
      %s321 = int_to_ptr.vmem [resolvable:$true] %s320
      %323 = dma.hbm_to_vmem [thread:$0]  %s61, 16, %s321, [#allocation30]
    $region125: #{septr_block_forward.1} parent=1 // pred_fallthru
      _
    // Predicated region
    $region126: #{septr_block_forward.1} parent=1 // pred_check
      _
    $region127: #{septr_block_forward.1} parent=1 // pred_check_branch
      %325 = sbr.rel (0) target = $region129
    $region128: #{septr_block_forward.1} parent=1 // pred_region
      %s327 = ssub.s32 512, 512
      %328 = vsyncadd [#allocation33], %s327
      %s329 = sshll.u32 [#allocation32], 4
      %s330 = int_to_ptr.vmem [resolvable:$true] %s329
      %335 = dma.hbm_to_vmem [thread:$0]  %s63, 512, %s330, [#allocation33], 128, 128, 8
    $region129: #{septr_block_forward.1} parent=1 // pred_fallthru
      _
    // Predicated region
    $region130: #{septr_block_forward.1} parent=1 // pred_check
      _
    $region131: #{septr_block_forward.1} parent=1 // pred_check_branch
      %337 = sbr.rel (0) target = $region133
    $region132: #{septr_block_forward.1} parent=1 // pred_region
      %s339 = ssub.s32 16, 16
      %340 = vsyncadd [#allocation33], %s339
      %s342 = sshll.u32 [#allocation34], 4
      %s343 = int_to_ptr.vmem [resolvable:$true] %s342
      %345 = dma.hbm_to_vmem [thread:$0]  %s65, 16, %s343, [#allocation33]
    $region133: #{septr_block_forward.1} parent=1 // pred_fallthru
      _
    // Predicated region
    $region134: #{septr_block_forward.1} parent=1 // pred_check
      _
    $region135: #{septr_block_forward.1} parent=1 // pred_check_branch
      %347 = sbr.rel (0) target = $region137
    $region136: #{septr_block_forward.1} parent=1 // pred_region
      _
    $region137: #{septr_block_forward.1} parent=1 // pred_fallthru
      _
    // Predicated region
    $region138: #{septr_block_forward.1} parent=1 // pred_check
      _
    $region139: #{septr_block_forward.1} parent=1 // pred_check_branch
      %349 = sbr.rel (0) target = $region141
    $region140: #{septr_block_forward.1} parent=1 // pred_region
      %s351 = ssub.s32 16, 16
      %352 = vsyncadd [#allocation36], %s351
      %s354 = sshll.u32 [#allocation35], 4
      %s355 = int_to_ptr.vmem [resolvable:$true] %s354
      %357 = dma.hbm_to_vmem [thread:$0]  %s69, 16, %s355, [#allocation36]
    $region141: #{septr_block_forward.1} parent=1 // pred_fallthru
      _
    // Predicated region
    $region142: #{septr_block_forward.1} parent=1 // pred_check
      _
    $region143: #{septr_block_forward.1} parent=1 // pred_check_branch
      %359 = sbr.rel (0) target = $region145
    $region144: #{septr_block_forward.1} parent=1 // pred_region
      %360 = dma.done [#allocation3], 2304
    $region145: #{septr_block_forward.1} parent=1 // pred_fallthru
      _
    // Predicated region
    $region146: #{septr_block_forward.1} parent=1 // pred_check
      _
    $region147: #{septr_block_forward.1} parent=1 // pred_check_branch
      %362 = sbr.rel (0) target = $region149
    $region148: #{septr_block_forward.1} parent=1 // pred_region
      %363 = dma.done [#allocation6], 4608
    $region149: #{septr_block_forward.1} parent=1 // pred_fallthru
      _
    // Predicated region
    $region150: #{septr_block_forward.1} parent=1 // pred_check
      _
    $region151: #{septr_block_forward.1} parent=1 // pred_check_branch
      %365 = sbr.rel (0) target = $region153
    $region152: #{septr_block_forward.1} parent=1 // pred_region
      %366 = dma.done [#allocation6], 256
    $region153: #{septr_block_forward.1} parent=1 // pred_fallthru
      _
    // Predicated region
    $region154: #{septr_block_forward.1} parent=1 // pred_check
      _
    $region155: #{septr_block_forward.1} parent=1 // pred_check_branch
      %368 = sbr.rel (0) target = $region157
    $region156: #{septr_block_forward.1} parent=1 // pred_region
      %369 = dma.done [#allocation9], 512
    $region157: #{septr_block_forward.1} parent=1 // pred_fallthru
      _
    // Predicated region
    $region158: #{septr_block_forward.1} parent=1 // pred_check
      _
    $region159: #{septr_block_forward.1} parent=1 // pred_check_branch
      %371 = sbr.rel (0) target = $region161
    $region160: #{septr_block_forward.1} parent=1 // pred_region
      %372 = dma.done [#allocation9], 512
    $region161: #{septr_block_forward.1} parent=1 // pred_fallthru
      _
    // Predicated region
    $region162: #{septr_block_forward.1} parent=1 // pred_check
      _
    $region163: #{septr_block_forward.1} parent=1 // pred_check_branch
      %374 = sbr.rel (0) target = $region165
    $region164: #{septr_block_forward.1} parent=1 // pred_region
      %375 = dma.done [#allocation12], 512
    $region165: #{septr_block_forward.1} parent=1 // pred_fallthru
      _
    // Predicated region
    $region166: #{septr_block_forward.1} parent=1 // pred_check
      _
    $region167: #{septr_block_forward.1} parent=1 // pred_check_branch
      %377 = sbr.rel (0) target = $region169
    $region168: #{septr_block_forward.1} parent=1 // pred_region
      %378 = dma.done [#allocation12], 16
    $region169: #{septr_block_forward.1} parent=1 // pred_fallthru
      _
    // Predicated region
    $region170: #{septr_block_forward.1} parent=1 // pred_check
      _
    $region171: #{septr_block_forward.1} parent=1 // pred_check_branch
      %380 = sbr.rel (0) target = $region173
    $region172: #{septr_block_forward.1} parent=1 // pred_region
      %381 = dma.done [#allocation15], 16
    $region173: #{septr_block_forward.1} parent=1 // pred_fallthru
      _
    // Predicated region
    $region174: #{septr_block_forward.1} parent=1 // pred_check
      _
    $region175: #{septr_block_forward.1} parent=1 // pred_check_branch
      %383 = sbr.rel (0) target = $region177
    $region176: #{septr_block_forward.1} parent=1 // pred_region
      %384 = dma.done [#allocation15], 16
    $region177: #{septr_block_forward.1} parent=1 // pred_fallthru
      _
    // Predicated region
    $region178: #{septr_block_forward.1} parent=1 // pred_check
      _
    $region179: #{septr_block_forward.1} parent=1 // pred_check_branch
      %386 = sbr.rel (0) target = $region181
    $region180: #{septr_block_forward.1} parent=1 // pred_region
      %387 = dma.done [#allocation18], 512
    $region181: #{septr_block_forward.1} parent=1 // pred_fallthru
      _
    // Predicated region
    $region182: #{septr_block_forward.1} parent=1 // pred_check
      _
    $region183: #{septr_block_forward.1} parent=1 // pred_check_branch
      %389 = sbr.rel (0) target = $region185
    $region184: #{septr_block_forward.1} parent=1 // pred_region
      %390 = dma.done [#allocation18], 16
    $region185: #{septr_block_forward.1} parent=1 // pred_fallthru
      _
    // Predicated region
    $region186: #{septr_block_forward.1} parent=1 // pred_check
      _
    $region187: #{septr_block_forward.1} parent=1 // pred_check_branch
      %392 = sbr.rel (0) target = $region189
    $region188: #{septr_block_forward.1} parent=1 // pred_region
      %393 = dma.done [#allocation21], 16
    $region189: #{septr_block_forward.1} parent=1 // pred_fallthru
      _
    // Predicated region
    $region190: #{septr_block_forward.1} parent=1 // pred_check
      _
    $region191: #{septr_block_forward.1} parent=1 // pred_check_branch
      %395 = sbr.rel (0) target = $region193
    $region192: #{septr_block_forward.1} parent=1 // pred_region
      %396 = dma.done [#allocation21], 16
    $region193: #{septr_block_forward.1} parent=1 // pred_fallthru
      _
    // Predicated region
    $region194: #{septr_block_forward.1} parent=1 // pred_check
      _
    $region195: #{septr_block_forward.1} parent=1 // pred_check_branch
      %398 = sbr.rel (0) target = $region197
    $region196: #{septr_block_forward.1} parent=1 // pred_region
      %399 = dma.done [#allocation24], 16
    $region197: #{septr_block_forward.1} parent=1 // pred_fallthru
      _
    // Predicated region
    $region198: #{septr_block_forward.1} parent=1 // pred_check
      _
    $region199: #{septr_block_forward.1} parent=1 // pred_check_branch
      %401 = sbr.rel (0) target = $region201
    $region200: #{septr_block_forward.1} parent=1 // pred_region
      %402 = dma.done [#allocation24], 512
    $region201: #{septr_block_forward.1} parent=1 // pred_fallthru
      _
    // Predicated region
    $region202: #{septr_block_forward.1} parent=1 // pred_check
      _
    $region203: #{septr_block_forward.1} parent=1 // pred_check_branch
      %404 = sbr.rel (0) target = $region205
    $region204: #{septr_block_forward.1} parent=1 // pred_region
      %405 = dma.done [#allocation27], 512
    $region205: #{septr_block_forward.1} parent=1 // pred_fallthru
      _
    // Predicated region
    $region206: #{septr_block_forward.1} parent=1 // pred_check
      _
    $region207: #{septr_block_forward.1} parent=1 // pred_check_branch
      %407 = sbr.rel (0) target = $region209
    $region208: #{septr_block_forward.1} parent=1 // pred_region
      %408 = dma.done [#allocation27], 16
    $region209: #{septr_block_forward.1} parent=1 // pred_fallthru
      _
    // Predicated region
    $region210: #{septr_block_forward.1} parent=1 // pred_check
      _
    $region211: #{septr_block_forward.1} parent=1 // pred_check_branch
      %410 = sbr.rel (0) target = $region213
    $region212: #{septr_block_forward.1} parent=1 // pred_region
      %411 = dma.done [#allocation30], 16
    $region213: #{septr_block_forward.1} parent=1 // pred_fallthru
      _
    // Predicated region
    $region214: #{septr_block_forward.1} parent=1 // pred_check
      _
    $region215: #{septr_block_forward.1} parent=1 // pred_check_branch
      %413 = sbr.rel (0) target = $region217
    $region216: #{septr_block_forward.1} parent=1 // pred_region
      %414 = dma.done [#allocation30], 16
    $region217: #{septr_block_forward.1} parent=1 // pred_fallthru
      _
    // Predicated region
    $region218: #{septr_block_forward.1} parent=1 // pred_check
      _
    $region219: #{septr_block_forward.1} parent=1 // pred_check_branch
      %416 = sbr.rel (0) target = $region221
    $region220: #{septr_block_forward.1} parent=1 // pred_region
      %417 = dma.done [#allocation33], 512
    $region221: #{septr_block_forward.1} parent=1 // pred_fallthru
      _
    // Predicated region
    $region222: #{septr_block_forward.1} parent=1 // pred_check
      _
    $region223: #{septr_block_forward.1} parent=1 // pred_check_branch
      %419 = sbr.rel (0) target = $region225
    $region224: #{septr_block_forward.1} parent=1 // pred_region
      %420 = dma.done [#allocation33], 16
    $region225: #{septr_block_forward.1} parent=1 // pred_fallthru
      _
    // Predicated region
    $region226: #{septr_block_forward.1} parent=1 // pred_check
      _
    $region227: #{septr_block_forward.1} parent=1 // pred_check_branch
      %422 = sbr.rel (0) target = $region229
    $region228: #{septr_block_forward.1} parent=1 // pred_region
      %423 = dma.done [#allocation36], 16
    $region229: #{septr_block_forward.1} parent=1 // pred_fallthru
      _
    %v424 = vld [vmem:[%s27] sm:$0x1]
    %v425 = vld [vmem:[%s29] sm:$0x1]
    %v426 = vld [vmem:[#allocation10] sm:$0xff]
    %v427 = vld [vmem:[#allocation10 + $0x8] sm:$0xff]
    %v428 = vld [vmem:[#allocation10 + $0x10] sm:$0xff]
    %v429 = vld [vmem:[#allocation10 + $0x18] sm:$0xff]
    %v430 = vld [vmem:[#allocation11] sm:$0xff]
    %v431 = vld [vmem:[#allocation11 + $0x8] sm:$0xff]
    %v432 = vld [vmem:[#allocation11 + $0x10] sm:$0xff]
    %v433 = vld [vmem:[#allocation11 + $0x18] sm:$0xff]
    %v434 = vld [vmem:[#allocation13] sm:$0x1]
    %v435 = vld [vmem:[#allocation14] sm:$0x1]
    %v436 = vld [vmem:[#allocation16] sm:$0x1]
    %v437 = vld [vmem:[#allocation17] sm:$0xff]
    %v438 = vld [vmem:[#allocation17 + $0x8] sm:$0xff]
    %v439 = vld [vmem:[#allocation17 + $0x10] sm:$0xff]
    %v440 = vld [vmem:[#allocation17 + $0x18] sm:$0xff]
    %v441 = vld [vmem:[#allocation19] sm:$0x1]
    %v442 = vld [vmem:[%s45] sm:$0xff]
    %v443 = vld [vmem:[%s45 + $0x8] sm:$0xff]
    %v444 = vld [vmem:[%s45 + $0x10] sm:$0xff]
    %v445 = vld [vmem:[%s45 + $0x18] sm:$0xff]
    %v446 = vld [vmem:[%s45 + $0x20] sm:$0xff]
    %v447 = vld [vmem:[%s45 + $0x28] sm:$0xff]
    %v448 = vld [vmem:[%s45 + $0x30] sm:$0xff]
    %v449 = vld [vmem:[%s45 + $0x38] sm:$0xff]
    %v450 = vld [vmem:[#allocation20] sm:$0x1]
    %v451 = vld [vmem:[#allocation22] sm:$0x1]
    %v452 = vld [vmem:[#allocation23] sm:$0x1]
    %v453 = vld [vmem:[#allocation25] sm:$0xff]
    %v454 = vld [vmem:[#allocation25 + $0x8] sm:$0xff]
    %v455 = vld [vmem:[#allocation25 + $0x10] sm:$0xff]
    %v456 = vld [vmem:[#allocation25 + $0x18] sm:$0xff]
    %v457 = vld [vmem:[#allocation26] sm:$0xff]
    %v458 = vld [vmem:[#allocation26 + $0x8] sm:$0xff]
    %v459 = vld [vmem:[#allocation26 + $0x10] sm:$0xff]
    %v460 = vld [vmem:[#allocation26 + $0x18] sm:$0xff]
    %v461 = vld [vmem:[#allocation28] sm:$0x1]
    %v462 = vld [vmem:[#allocation29] sm:$0x1]
    %v463 = vld [vmem:[#allocation31] sm:$0x1]
    %v464 = vld [vmem:[#allocation32] sm:$0xff]
    %v465 = vld [vmem:[#allocation32 + $0x8] sm:$0xff]
    %v466 = vld [vmem:[#allocation32 + $0x10] sm:$0xff]
    %v467 = vld [vmem:[#allocation32 + $0x18] sm:$0xff]
    %v468 = vld [vmem:[#allocation34] sm:$0x1]
    %v469 = vld [vmem:[%s67] sm:$0xff]
    %v470 = vld [vmem:[%s67 + $0x8] sm:$0xff]
    %v471 = vld [vmem:[%s67 + $0x10] sm:$0xff]
    %v472 = vld [vmem:[%s67 + $0x18] sm:$0xff]
    %v473 = vld [vmem:[%s67 + $0x20] sm:$0xff]
    %v474 = vld [vmem:[%s67 + $0x28] sm:$0xff]
    %v475 = vld [vmem:[%s67 + $0x30] sm:$0xff]
    %v476 = vld [vmem:[%s67 + $0x38] sm:$0xff]
    %v477 = vld [vmem:[#allocation35] sm:$0x1]
    %v478 = vld [vmem:[%s9] sm:$0xf]
    %v479 = vld [vmem:[%s11] sm:$0x1]
    %v480 = vld [vmem:[%s1] sm:$0xf]
    %v482 = vlaneseq
    %v483 = vshrl.u32 %v482, 7
    %v484 = vsub.s32 0, %v483
    %v485 = vrot.slane %v479, %v484
    %487 = vxpose.xlu0.b32.start [1/16] %v480, 128
    %488 = vxpose.xlu0.b32.cont [2/16] 0.0, 128
    %489 = vxpose.xlu0.b32.cont [3/16] 0.0, 128
    %490 = vxpose.xlu0.b32.cont [4/16] 0.0, 128
    %491 = vxpose.xlu0.b32.cont [5/16] 0.0, 128
    %492 = vxpose.xlu0.b32.cont [6/16] 0.0, 128
    %493 = vxpose.xlu0.b32.cont [7/16] 0.0, 128
    %494 = vxpose.xlu0.b32.cont [8/16] 0.0, 128
    %495 = vxpose.xlu0.b32.cont [9/16] 0.0, 128
    %496 = vxpose.xlu0.b32.cont [10/16] 0.0, 128
    %497 = vxpose.xlu0.b32.cont [11/16] 0.0, 128
    %498 = vxpose.xlu0.b32.cont [12/16] 0.0, 128
    %499 = vxpose.xlu0.b32.cont [13/16] 0.0, 128
    %500 = vxpose.xlu0.b32.cont [14/16] 0.0, 128
    %501 = vxpose.xlu0.b32.cont [15/16] 0.0, 128
    %502 = vxpose.xlu0.b32.end [16/16] 0.0, 128
    %v503 = vpop.trf.xlu0
    %v504 = vpop.trf.xlu0
    %v505 = vpop.trf.xlu0
    %v506 = vpop.trf.xlu0
    %v507 = vpop.trf.xlu0
    %v508 = vpop.trf.xlu0
    %v509 = vpop.trf.xlu0
    %v510 = vpop.trf.xlu0
    %v511 = vpop.trf.xlu0
    %v512 = vpop.trf.xlu0
    %v513 = vpop.trf.xlu0
    %v514 = vpop.trf.xlu0
    %v515 = vpop.trf.xlu0
    %v516 = vpop.trf.xlu0
    %v517 = vpop.trf.xlu0
    %v518 = vpop.trf.xlu0
    %vm519 = vcmask 31744
    %v521 = vsel %vm519, %v503, 0
    %v524 = vsel %vm519, %v504, 0
    %v527 = vsel %vm519, %v505, 0
    %v530 = vsel %vm519, %v506, 0
    %v533 = vsel %vm519, %v507, 0
    %v536 = vsel %vm519, %v508, 0
    %v539 = vsel %vm519, %v509, 0
    %v542 = vsel %vm519, %v510, 0
    %vm544 = vcmask 1043456
    %v546 = vsel %vm544, %v478, 0
    %548 = vmatprep.subr.mxu0 0.0
    %549 = vmatpush1.msra.mxu0 %v546
    %550 = vmatprep.subr.mxu0 0.0
    %551 = vmatpush1.msra.mxu0 0.0
    %552 = vmatprep.subr.mxu0 0.0
    %553 = vmatpush1.msra.mxu0 0.0
    %554 = vmatprep.subr.mxu0 0.0
    %555 = vmatpush1.msra.mxu0 0.0
    %556 = vmatprep.subr.mxu0 0.0
    %557 = vmatpush1.msra.mxu0 0.0
    %558 = vmatprep.subr.mxu0 0.0
    %559 = vmatpush1.msra.mxu0 0.0
    %560 = vmatprep.subr.mxu0 0.0
    %561 = vmatpush1.msra.mxu0 0.0
    %562 = vmatprep.subr.mxu0 0.0
    %563 = vmatpush1.msra.mxu0 0.0
    %564 = vmatprep.subr.mxu0 0.0
    %565 = vmatpush1.msra.mxu0 0.0
    %566 = vmatprep.subr.mxu0 0.0
    %567 = vmatpush1.msra.mxu0 0.0
    %568 = vmatprep.subr.mxu0 0.0
    %569 = vmatpush1.msra.mxu0 0.0
    %570 = vmatprep.subr.mxu0 0.0
    %571 = vmatpush1.msra.mxu0 0.0
    %572 = vmatprep.subr.mxu0 0.0
    %573 = vmatpush1.msra.mxu0 0.0
    %574 = vmatprep.subr.mxu0 0.0
    %575 = vmatpush1.msra.mxu0 0.0
    %576 = vmatprep.subr.mxu0 0.0
    %577 = vmatpush1.msra.mxu0 0.0
    %578 = vmatprep.subr.mxu0 0.0
    %579 = vmatpush1.msra.mxu0 0.0
    %580 = vmatprep.subr.mxu0 0.0
    %581 = vmatpush1.msra.mxu0 0.0
    %582 = vmatprep.subr.mxu0 0.0
    %583 = vmatpush1.msra.mxu0 0.0
    %584 = vmatprep.subr.mxu0 0.0
    %585 = vmatpush1.msra.mxu0 0.0
    %586 = vmatprep.subr.mxu0 0.0
    %587 = vmatpush1.msra.mxu0 0.0
    %588 = vmatprep.subr.mxu0 0.0
    %589 = vmatpush1.msra.mxu0 0.0
    %590 = vmatprep.subr.mxu0 0.0
    %591 = vmatpush1.msra.mxu0 0.0
    %592 = vmatprep.subr.mxu0 0.0
    %593 = vmatpush1.msra.mxu0 0.0
    %594 = vmatprep.subr.mxu0 0.0
    %595 = vmatpush1.msra.mxu0 0.0
    %596 = vmatprep.subr.mxu0 0.0
    %597 = vmatpush1.msra.mxu0 0.0
    %598 = vmatprep.subr.mxu0 0.0
    %599 = vmatpush1.msra.mxu0 0.0
    %600 = vmatprep.subr.mxu0 0.0
    %601 = vmatpush1.msra.mxu0 0.0
    %602 = vmatprep.subr.mxu0 0.0
    %603 = vmatpush1.msra.mxu0 0.0
    %604 = vmatprep.subr.mxu0 0.0
    %605 = vmatpush1.msra.mxu0 0.0
    %606 = vmatprep.subr.mxu0 0.0
    %607 = vmatpush1.msra.mxu0 0.0
    %608 = vmatprep.subr.mxu0 0.0
    %609 = vmatpush1.msra.mxu0 0.0
    %610 = vmatprep.subr.mxu0 0.0
    %611 = vmatpush1.msra.mxu0 0.0
    %612 = vmatprep.mubr.f32.mxu0 0.0
    %613 = vmatmul.mubr.f32.gmra.mrb[0].mxu0 %v521
    %v614 = vpop.f32.mrb[0].mxu0
    %v615 = vadd.f32 %v485, %v614
    %v616 = vpop.f32.mrb[0].mxu0
    %617 = vmatprep.mubr.f32.mxu0 0.0
    %618 = vmatmul.mubr.f32.gmra.mrb[0].mxu0 %v524
    %v619 = vpop.f32.mrb[0].mxu0
    %v620 = vadd.f32 %v485, %v619
    %v621 = vpop.f32.mrb[0].mxu0
    %622 = vmatprep.mubr.f32.mxu0 0.0
    %623 = vmatmul.mubr.f32.gmra.mrb[0].mxu0 %v527
    %v624 = vpop.f32.mrb[0].mxu0
    %v625 = vadd.f32 %v485, %v624
    %v626 = vpop.f32.mrb[0].mxu0
    %627 = vmatprep.mubr.f32.mxu0 0.0
    %628 = vmatmul.mubr.f32.gmra.mrb[0].mxu0 %v530
    %v629 = vpop.f32.mrb[0].mxu0
    %v630 = vadd.f32 %v485, %v629
    %v631 = vpop.f32.mrb[0].mxu0
    %632 = vmatprep.mubr.f32.mxu0 0.0
    %633 = vmatmul.mubr.f32.gmra.mrb[0].mxu0 %v533
    %v634 = vpop.f32.mrb[0].mxu0
    %v635 = vadd.f32 %v485, %v634
    %v636 = vpop.f32.mrb[0].mxu0
    %637 = vmatprep.mubr.f32.mxu0 0.0
    %638 = vmatmul.mubr.f32.gmra.mrb[0].mxu0 %v536
    %v639 = vpop.f32.mrb[0].mxu0
    %v640 = vadd.f32 %v485, %v639
    %v641 = vpop.f32.mrb[0].mxu0
    %642 = vmatprep.mubr.f32.mxu0 0.0
    %643 = vmatmul.mubr.f32.gmra.mrb[0].mxu0 %v539
    %v644 = vpop.f32.mrb[0].mxu0
    %v645 = vadd.f32 %v485, %v644
    %v646 = vpop.f32.mrb[0].mxu0
    %647 = vmatprep.mubr.f32.mxu0 0.0
    %648 = vmatmul.mubr.f32.gmra.mrb[0].mxu0 %v542
    %v649 = vpop.f32.mrb[0].mxu0
    %v650 = vadd.f32 %v485, %v649
    %v651 = vpop.f32.mrb[0].mxu0
    %652 = vdwg.mxu0
    %v653 = vld [vmem:[%s1 + $0x4] sm:$0xf]
    %654 = vxpose.xlu0.b32.start [1/16] %v653, 128
    %655 = vxpose.xlu0.b32.cont [2/16] 0.0, 128
    %656 = vxpose.xlu0.b32.cont [3/16] 0.0, 128
    %657 = vxpose.xlu0.b32.cont [4/16] 0.0, 128
    %658 = vxpose.xlu0.b32.cont [5/16] 0.0, 128
    %659 = vxpose.xlu0.b32.cont [6/16] 0.0, 128
    %660 = vxpose.xlu0.b32.cont [7/16] 0.0, 128
    %661 = vxpose.xlu0.b32.cont [8/16] 0.0, 128
    %662 = vxpose.xlu0.b32.cont [9/16] 0.0, 128
    %663 = vxpose.xlu0.b32.cont [10/16] 0.0, 128
    %664 = vxpose.xlu0.b32.cont [11/16] 0.0, 128
    %665 = vxpose.xlu0.b32.cont [12/16] 0.0, 128
    %666 = vxpose.xlu0.b32.cont [13/16] 0.0, 128
    %667 = vxpose.xlu0.b32.cont [14/16] 0.0, 128
    %668 = vxpose.xlu0.b32.cont [15/16] 0.0, 128
    %669 = vxpose.xlu0.b32.end [16/16] 0.0, 128
    %v670 = vpop.trf.xlu0
    %v671 = vpop.trf.xlu0
    %v672 = vpop.trf.xlu0
    %v673 = vpop.trf.xlu0
    %v674 = vpop.trf.xlu0
    %v675 = vpop.trf.xlu0
    %v676 = vpop.trf.xlu0
    %v677 = vpop.trf.xlu0
    %v678 = vpop.trf.xlu0
    %v679 = vpop.trf.xlu0
    %v680 = vpop.trf.xlu0
    %v681 = vpop.trf.xlu0
    %v682 = vpop.trf.xlu0
    %v683 = vpop.trf.xlu0
    %v684 = vpop.trf.xlu0
    %v685 = vpop.trf.xlu0
    %v687 = vsel %vm519, %v670, 0
    %v690 = vsel %vm519, %v671, 0
    %v693 = vsel %vm519, %v672, 0
    %v696 = vsel %vm519, %v673, 0
    %v699 = vsel %vm519, %v674, 0
    %v702 = vsel %vm519, %v675, 0
    %v705 = vsel %vm519, %v676, 0
    %v708 = vsel %vm519, %v677, 0
    %710 = vmatprep.subr.mxu0 0.0
    %711 = vmatpush1.msra.mxu0 %v546
    %712 = vmatprep.subr.mxu0 0.0
    %713 = vmatpush1.msra.mxu0 0.0
    %714 = vmatprep.subr.mxu0 0.0
    %715 = vmatpush1.msra.mxu0 0.0
    %716 = vmatprep.subr.mxu0 0.0
    %717 = vmatpush1.msra.mxu0 0.0
    %718 = vmatprep.subr.mxu0 0.0
    %719 = vmatpush1.msra.mxu0 0.0
    %720 = vmatprep.subr.mxu0 0.0
    %721 = vmatpush1.msra.mxu0 0.0
    %722 = vmatprep.subr.mxu0 0.0
    %723 = vmatpush1.msra.mxu0 0.0
    %724 = vmatprep.subr.mxu0 0.0
    %725 = vmatpush1.msra.mxu0 0.0
    %726 = vmatprep.subr.mxu0 0.0
    %727 = vmatpush1.msra.mxu0 0.0
    %728 = vmatprep.subr.mxu0 0.0
    %729 = vmatpush1.msra.mxu0 0.0
    %730 = vmatprep.subr.mxu0 0.0
    %731 = vmatpush1.msra.mxu0 0.0
    %732 = vmatprep.subr.mxu0 0.0
    %733 = vmatpush1.msra.mxu0 0.0
    %734 = vmatprep.subr.mxu0 0.0
    %735 = vmatpush1.msra.mxu0 0.0
    %736 = vmatprep.subr.mxu0 0.0
    %737 = vmatpush1.msra.mxu0 0.0
    %738 = vmatprep.subr.mxu0 0.0
    %739 = vmatpush1.msra.mxu0 0.0
    %740 = vmatprep.subr.mxu0 0.0
    %741 = vmatpush1.msra.mxu0 0.0
    %742 = vmatprep.subr.mxu0 0.0
    %743 = vmatpush1.msra.mxu0 0.0
    %744 = vmatprep.subr.mxu0 0.0
    %745 = vmatpush1.msra.mxu0 0.0
    %746 = vmatprep.subr.mxu0 0.0
    %747 = vmatpush1.msra.mxu0 0.0
    %748 = vmatprep.subr.mxu0 0.0
    %749 = vmatpush1.msra.mxu0 0.0
    %750 = vmatprep.subr.mxu0 0.0
    %751 = vmatpush1.msra.mxu0 0.0
    %752 = vmatprep.subr.mxu0 0.0
    %753 = vmatpush1.msra.mxu0 0.0
    %754 = vmatprep.subr.mxu0 0.0
    %755 = vmatpush1.msra.mxu0 0.0
    %756 = vmatprep.subr.mxu0 0.0
    %757 = vmatpush1.msra.mxu0 0.0
    %758 = vmatprep.subr.mxu0 0.0
    %759 = vmatpush1.msra.mxu0 0.0
    %760 = vmatprep.subr.mxu0 0.0
    %761 = vmatpush1.msra.mxu0 0.0
    %762 = vmatprep.subr.mxu0 0.0
    %763 = vmatpush1.msra.mxu0 0.0
    %764 = vmatprep.subr.mxu0 0.0
    %765 = vmatpush1.msra.mxu0 0.0
    %766 = vmatprep.subr.mxu0 0.0
    %767 = vmatpush1.msra.mxu0 0.0
    %768 = vmatprep.subr.mxu0 0.0
    %769 = vmatpush1.msra.mxu0 0.0
    %770 = vmatprep.subr.mxu0 0.0
    %771 = vmatpush1.msra.mxu0 0.0
    %772 = vmatprep.subr.mxu0 0.0
    %773 = vmatpush1.msra.mxu0 0.0
    %774 = vmatprep.mubr.f32.mxu0 0.0
    %775 = vmatmul.mubr.f32.gmra.mrb[0].mxu0 %v687
    %v776 = vpop.f32.mrb[0].mxu0
    %v777 = vadd.f32 %v485, %v776
    %v778 = vpop.f32.mrb[0].mxu0
    %779 = vmatprep.mubr.f32.mxu0 0.0
    %780 = vmatmul.mubr.f32.gmra.mrb[0].mxu0 %v690
    %v781 = vpop.f32.mrb[0].mxu0
    %v782 = vadd.f32 %v485, %v781
    %v783 = vpop.f32.mrb[0].mxu0
    %784 = vmatprep.mubr.f32.mxu0 0.0
    %785 = vmatmul.mubr.f32.gmra.mrb[0].mxu0 %v693
    %v786 = vpop.f32.mrb[0].mxu0
    %v787 = vadd.f32 %v485, %v786
    %v788 = vpop.f32.mrb[0].mxu0
    %789 = vmatprep.mubr.f32.mxu0 0.0
    %790 = vmatmul.mubr.f32.gmra.mrb[0].mxu0 %v696
    %v791 = vpop.f32.mrb[0].mxu0
    %v792 = vadd.f32 %v485, %v791
    %v793 = vpop.f32.mrb[0].mxu0
    %794 = vmatprep.mubr.f32.mxu0 0.0
    %795 = vmatmul.mubr.f32.gmra.mrb[0].mxu0 %v699
    %v796 = vpop.f32.mrb[0].mxu0
    %v797 = vadd.f32 %v485, %v796
    %v798 = vpop.f32.mrb[0].mxu0
    %799 = vmatprep.mubr.f32.mxu0 0.0
    %800 = vmatmul.mubr.f32.gmra.mrb[0].mxu0 %v702
    %v801 = vpop.f32.mrb[0].mxu0
    %v802 = vadd.f32 %v485, %v801
    %v803 = vpop.f32.mrb[0].mxu0
    %804 = vmatprep.mubr.f32.mxu0 0.0
    %805 = vmatmul.mubr.f32.gmra.mrb[0].mxu0 %v705
    %v806 = vpop.f32.mrb[0].mxu0
    %v807 = vadd.f32 %v485, %v806
    %v808 = vpop.f32.mrb[0].mxu0
    %809 = vmatprep.mubr.f32.mxu0 0.0
    %810 = vmatmul.mubr.f32.gmra.mrb[0].mxu0 %v708
    %v811 = vpop.f32.mrb[0].mxu0
    %v812 = vadd.f32 %v485, %v811
    %v813 = vpop.f32.mrb[0].mxu0
    %814 = vdwg.mxu0
    %v815 = vld [vmem:[%s3] sm:$0x1]
    %v817 = vlaneseq
    %v818 = vshrl.u32 %v817, 7
    %v819 = vsub.s32 0, %v818
    %v820 = vrot.slane %v815, %v819
    %v822 = vld [vmem:[#allocation2] sm:$0xff]
    %v823 = vld [vmem:[#allocation2 + $0x8] sm:$0xff]
    %v824 = vld [vmem:[#allocation2 + $0x10] sm:$0xff]
    %v825 = vld [vmem:[#allocation2 + $0x18] sm:$0xff]
    %v826 = vld [vmem:[#allocation2 + $0x20] sm:$0xff]
    %v827 = vld [vmem:[#allocation2 + $0x28] sm:$0xff]
    %v828 = vld [vmem:[#allocation2 + $0x30] sm:$0xff]
    %v829 = vld [vmem:[#allocation2 + $0x38] sm:$0xff]
    %v830 = vld [vmem:[#allocation2 + $0x40] sm:$0xff]
    %v831 = vld [vmem:[#allocation2 + $0x48] sm:$0xff]
    %v832 = vld [vmem:[#allocation2 + $0x50] sm:$0xff]
    %v833 = vld [vmem:[#allocation2 + $0x58] sm:$0xff]
    %v834 = vld [vmem:[#allocation2 + $0x60] sm:$0xff]
    %v835 = vld [vmem:[#allocation2 + $0x68] sm:$0xff]
    %v836 = vld [vmem:[#allocation2 + $0x70] sm:$0xff]
    %v837 = vld [vmem:[#allocation2 + $0x78] sm:$0xff]
    %v838 = vld [vmem:[#allocation2 + $0x80] sm:$0xff]
    %v839 = vld [vmem:[#allocation2 + $0x88] sm:$0xff]
    %v840 = vld [vmem:[%s5] sm:$0xff]
    %v841 = vld [vmem:[%s5 + $0x8] sm:$0x1]
    %vm842 = vcmask 72704
    %v844 = vsel %vm842, %v822, 0
    %v847 = vsel %vm842, %v823, 0
    %v850 = vsel %vm842, %v824, 0
    %v853 = vsel %vm842, %v825, 0
    %v856 = vsel %vm842, %v826, 0
    %v859 = vsel %vm842, %v827, 0
    %v862 = vsel %vm842, %v828, 0
    %v865 = vsel %vm842, %v829, 0
    %v868 = vsel %vm842, %v830, 0
    %v871 = vsel %vm842, %v831, 0
    %v874 = vsel %vm842, %v832, 0
    %v877 = vsel %vm842, %v833, 0
    %v880 = vsel %vm842, %v834, 0
    %v883 = vsel %vm842, %v835, 0
    %v886 = vsel %vm842, %v836, 0
    %v889 = vsel %vm842, %v837, 0
    %v892 = vsel %vm842, %v838, 0
    %v895 = vsel %vm842, %v839, 0
    %vm897 = vcmask 1040384
    %v899 = vsel %vm897, %v841, 0
    %901 = vmatprep.subr.mxu0 0.0
    %902 = vmatpush1.msra.mxu0 %v840
    %903 = vmatprep.subr.mxu0 0.0
    %904 = vmatpush1.msra.mxu0 %v899
    %905 = vmatprep.subr.mxu0 0.0
    %906 = vmatpush1.msra.mxu0 0.0
    %907 = vmatprep.subr.mxu0 0.0
    %908 = vmatpush1.msra.mxu0 0.0
    %909 = vmatprep.subr.mxu0 0.0
    %910 = vmatpush1.msra.mxu0 0.0
    %911 = vmatprep.subr.mxu0 0.0
    %912 = vmatpush1.msra.mxu0 0.0
    %913 = vmatprep.subr.mxu0 0.0
    %914 = vmatpush1.msra.mxu0 0.0
    %915 = vmatprep.subr.mxu0 0.0
    %916 = vmatpush1.msra.mxu0 0.0
    %917 = vmatprep.subr.mxu0 0.0
    %918 = vmatpush1.msra.mxu0 0.0
    %919 = vmatprep.subr.mxu0 0.0
    %920 = vmatpush1.msra.mxu0 0.0
    %921 = vmatprep.subr.mxu0 0.0
    %922 = vmatpush1.msra.mxu0 0.0
    %923 = vmatprep.subr.mxu0 0.0
    %924 = vmatpush1.msra.mxu0 0.0
    %925 = vmatprep.subr.mxu0 0.0
    %926 = vmatpush1.msra.mxu0 0.0
    %927 = vmatprep.subr.mxu0 0.0
    %928 = vmatpush1.msra.mxu0 0.0
    %929 = vmatprep.subr.mxu0 0.0
    %930 = vmatpush1.msra.mxu0 0.0
    %931 = vmatprep.subr.mxu0 0.0
    %932 = vmatpush1.msra.mxu0 0.0
    %933 = vmatprep.subr.mxu0 0.0
    %934 = vmatpush1.msra.mxu0 0.0
    %935 = vmatprep.subr.mxu0 0.0
    %936 = vmatpush1.msra.mxu0 0.0
    %937 = vmatprep.subr.mxu0 0.0
    %938 = vmatpush1.msra.mxu0 0.0
    %939 = vmatprep.subr.mxu0 0.0
    %940 = vmatpush1.msra.mxu0 0.0
    %941 = vmatprep.subr.mxu0 0.0
    %942 = vmatpush1.msra.mxu0 0.0
    %943 = vmatprep.subr.mxu0 0.0
    %944 = vmatpush1.msra.mxu0 0.0
    %945 = vmatprep.subr.mxu0 0.0
    %946 = vmatpush1.msra.mxu0 0.0
    %947 = vmatprep.subr.mxu0 0.0
    %948 = vmatpush1.msra.mxu0 0.0
    %949 = vmatprep.subr.mxu0 0.0
    %950 = vmatpush1.msra.mxu0 0.0
    %951 = vmatprep.subr.mxu0 0.0
    %952 = vmatpush1.msra.mxu0 0.0
    %953 = vmatprep.subr.mxu0 0.0
    %954 = vmatpush1.msra.mxu0 0.0
    %955 = vmatprep.subr.mxu0 0.0
    %956 = vmatpush1.msra.mxu0 0.0
    %957 = vmatprep.subr.mxu0 0.0
    %958 = vmatpush1.msra.mxu0 0.0
    %959 = vmatprep.subr.mxu0 0.0
    %960 = vmatpush1.msra.mxu0 0.0
    %961 = vmatprep.subr.mxu0 0.0
    %962 = vmatpush1.msra.mxu0 0.0
    %963 = vmatprep.subr.mxu0 0.0
    %964 = vmatpush1.msra.mxu0 0.0
    %965 = vmatprep.mubr.f32.mxu0 0.0
    %966 = vmatmul.mubr.f32.gmra.mrb[0].mxu0 %v844
    %v967 = vpop.f32.mrb[0].mxu0
    %v968 = vadd.f32 0.0, %v967
    %v969 = vpop.f32.mrb[0].mxu0
    %970 = vmatprep.mubr.f32.mxu0 0.0
    %971 = vmatmul.mubr.f32.gmra.mrb[0].mxu0 %v847
    %v972 = vpop.f32.mrb[0].mxu0
    %v973 = vadd.f32 0.0, %v972
    %v974 = vpop.f32.mrb[0].mxu0
    %975 = vmatprep.mubr.f32.mxu0 0.0
    %976 = vmatmul.mubr.f32.gmra.mrb[0].mxu0 %v850
    %v977 = vpop.f32.mrb[0].mxu0
    %v978 = vadd.f32 0.0, %v977
    %v979 = vpop.f32.mrb[0].mxu0
    %980 = vmatprep.mubr.f32.mxu0 0.0
    %981 = vmatmul.mubr.f32.gmra.mrb[0].mxu0 %v853
    %v982 = vpop.f32.mrb[0].mxu0
    %v983 = vadd.f32 0.0, %v982
    %v984 = vpop.f32.mrb[0].mxu0
    %985 = vmatprep.mubr.f32.mxu0 0.0
    %986 = vmatmul.mubr.f32.gmra.mrb[0].mxu0 %v856
    %v987 = vpop.f32.mrb[0].mxu0
    %v988 = vadd.f32 0.0, %v987
    %v989 = vpop.f32.mrb[0].mxu0
    %990 = vmatprep.mubr.f32.mxu0 0.0
    %991 = vmatmul.mubr.f32.gmra.mrb[0].mxu0 %v859
    %v992 = vpop.f32.mrb[0].mxu0
    %v993 = vadd.f32 0.0, %v992
    %v994 = vpop.f32.mrb[0].mxu0
    %995 = vmatprep.mubr.f32.mxu0 0.0
    %996 = vmatmul.mubr.f32.gmra.mrb[0].mxu0 %v862
    %v997 = vpop.f32.mrb[0].mxu0
    %v998 = vadd.f32 0.0, %v997
    %v999 = vpop.f32.mrb[0].mxu0
    %1000 = vmatprep.mubr.f32.mxu0 0.0
    %1001 = vmatmul.mubr.f32.gmra.mrb[0].mxu0 %v865
    %v1002 = vpop.f32.mrb[0].mxu0
    %v1003 = vadd.f32 0.0, %v1002
    %v1004 = vpop.f32.mrb[0].mxu0
    %1005 = vmatprep.mubr.f32.mxu0 0.0
    %1006 = vmatmul.mubr.f32.gmra.mrb[0].mxu0 %v868
    %v1007 = vpop.f32.mrb[0].mxu0
    %v1008 = vadd.f32 0.0, %v1007
    %v1009 = vpop.f32.mrb[0].mxu0
    %1010 = vmatprep.mubr.f32.mxu0 0.0
    %1011 = vmatmul.mubr.f32.gmra.mrb[0].mxu0 %v871
    %v1012 = vpop.f32.mrb[0].mxu0
    %v1013 = vadd.f32 0.0, %v1012
    %v1014 = vpop.f32.mrb[0].mxu0
    %1015 = vmatprep.mubr.f32.mxu0 0.0
    %1016 = vmatmul.mubr.f32.gmra.mrb[0].mxu0 %v874
    %v1017 = vpop.f32.mrb[0].mxu0
    %v1018 = vadd.f32 0.0, %v1017
    %v1019 = vpop.f32.mrb[0].mxu0
    %1020 = vmatprep.mubr.f32.mxu0 0.0
    %1021 = vmatmul.mubr.f32.gmra.mrb[0].mxu0 %v877
    %v1022 = vpop.f32.mrb[0].mxu0
    %v1023 = vadd.f32 0.0, %v1022
    %v1024 = vpop.f32.mrb[0].mxu0
    %1025 = vmatprep.mubr.f32.mxu0 0.0
    %1026 = vmatmul.mubr.f32.gmra.mrb[0].mxu0 %v880
    %v1027 = vpop.f32.mrb[0].mxu0
    %v1028 = vadd.f32 0.0, %v1027
    %v1029 = vpop.f32.mrb[0].mxu0
    %1030 = vmatprep.mubr.f32.mxu0 0.0
    %1031 = vmatmul.mubr.f32.gmra.mrb[0].mxu0 %v883
    %v1032 = vpop.f32.mrb[0].mxu0
    %v1033 = vadd.f32 0.0, %v1032
    %v1034 = vpop.f32.mrb[0].mxu0
    %1035 = vmatprep.mubr.f32.mxu0 0.0
    %1036 = vmatmul.mubr.f32.gmra.mrb[0].mxu0 %v886
    %v1037 = vpop.f32.mrb[0].mxu0
    %v1038 = vadd.f32 0.0, %v1037
    %v1039 = vpop.f32.mrb[0].mxu0
    %1040 = vmatprep.mubr.f32.mxu0 0.0
    %1041 = vmatmul.mubr.f32.gmra.mrb[0].mxu0 %v889
    %v1042 = vpop.f32.mrb[0].mxu0
    %v1043 = vadd.f32 0.0, %v1042
    %v1044 = vpop.f32.mrb[0].mxu0
    %1045 = vmatprep.mubr.f32.mxu0 0.0
    %1046 = vmatmul.mubr.f32.gmra.mrb[0].mxu0 %v892
    %v1047 = vpop.f32.mrb[0].mxu0
    %v1048 = vadd.f32 0.0, %v1047
    %v1049 = vpop.f32.mrb[0].mxu0
    %1050 = vmatprep.mubr.f32.mxu0 0.0
    %1051 = vmatmul.mubr.f32.gmra.mrb[0].mxu0 %v895
    %v1052 = vpop.f32.mrb[0].mxu0
    %v1053 = vadd.f32 0.0, %v1052
    %v1054 = vpop.f32.mrb[0].mxu0
    %1055 = vdwg.mxu0
    %v1056 = vadd.f32 %v820, %v968
    %v1057 = vadd.f32 %v820, %v973
    %v1058 = vadd.f32 %v615, %v978
    %v1059 = vadd.f32 %v620, %v983
    %v1060 = vadd.f32 %v625, %v988
    %v1061 = vadd.f32 %v630, %v993
    %v1062 = vadd.f32 %v635, %v998
    %v1063 = vadd.f32 %v640, %v1003
    %v1064 = vadd.f32 %v645, %v1008
    %v1065 = vadd.f32 %v650, %v1013
    %v1066 = vadd.f32 %v777, %v1018
    %v1067 = vadd.f32 %v782, %v1023
    %v1068 = vadd.f32 %v787, %v1028
    %v1069 = vadd.f32 %v792, %v1033
    %v1070 = vadd.f32 %v797, %v1038
    %v1071 = vadd.f32 %v802, %v1043
    %v1072 = vadd.f32 %v807, %v1048
    %v1073 = vadd.f32 %v812, %v1053
    %vm1074 = vcmask 261120
    %v1075 = vsel %vm1074, %v1056, 0.0
    %1076 = vadd.xlane.f32.xlu0 %v1075
    %v1077 = vpop.xlane.xlu0 %1076
    %v1078 = vsel %vm1074, %v1057, 0.0
    %1079 = vadd.xlane.f32.xlu0 %v1078
    %v1080 = vpop.xlane.xlu0 %1079
    %v1081 = vsel %vm1074, %v1058, 0.0
    %1082 = vadd.xlane.f32.xlu0 %v1081
    %v1083 = vpop.xlane.xlu0 %1082
    %v1084 = vsel %vm1074, %v1059, 0.0
    %1085 = vadd.xlane.f32.xlu0 %v1084
    %v1086 = vpop.xlane.xlu0 %1085
    %v1087 = vsel %vm1074, %v1060, 0.0
    %1088 = vadd.xlane.f32.xlu0 %v1087
    %v1089 = vpop.xlane.xlu0 %1088
    %v1090 = vsel %vm1074, %v1061, 0.0
    %1091 = vadd.xlane.f32.xlu0 %v1090
    %v1092 = vpop.xlane.xlu0 %1091
    %v1093 = vsel %vm1074, %v1062, 0.0
    %1094 = vadd.xlane.f32.xlu0 %v1093
    %v1095 = vpop.xlane.xlu0 %1094
    %v1096 = vsel %vm1074, %v1063, 0.0
    %1097 = vadd.xlane.f32.xlu0 %v1096
    %v1098 = vpop.xlane.xlu0 %1097
    %v1099 = vsel %vm1074, %v1064, 0.0
    %1100 = vadd.xlane.f32.xlu0 %v1099
    %v1101 = vpop.xlane.xlu0 %1100
    %v1102 = vsel %vm1074, %v1065, 0.0
    %1103 = vadd.xlane.f32.xlu0 %v1102
    %v1104 = vpop.xlane.xlu0 %1103
    %v1105 = vsel %vm1074, %v1066, 0.0
    %1106 = vadd.xlane.f32.xlu0 %v1105
    %v1107 = vpop.xlane.xlu0 %1106
    %v1108 = vsel %vm1074, %v1067, 0.0
    %1109 = vadd.xlane.f32.xlu0 %v1108
    %v1110 = vpop.xlane.xlu0 %1109
    %v1111 = vsel %vm1074, %v1068, 0.0
    %1112 = vadd.xlane.f32.xlu0 %v1111
    %v1113 = vpop.xlane.xlu0 %1112
    %v1114 = vsel %vm1074, %v1069, 0.0
    %1115 = vadd.xlane.f32.xlu0 %v1114
    %v1116 = vpop.xlane.xlu0 %1115
    %v1117 = vsel %vm1074, %v1070, 0.0
    %1118 = vadd.xlane.f32.xlu0 %v1117
    %v1119 = vpop.xlane.xlu0 %1118
    %v1120 = vsel %vm1074, %v1071, 0.0
    %1121 = vadd.xlane.f32.xlu0 %v1120
    %v1122 = vpop.xlane.xlu0 %1121
    %v1123 = vsel %vm1074, %v1072, 0.0
    %1124 = vadd.xlane.f32.xlu0 %v1123
    %v1125 = vpop.xlane.xlu0 %1124
    %v1126 = vsel %vm1074, %v1073, 0.0
    %1127 = vadd.xlane.f32.xlu0 %v1126
    %v1128 = vpop.xlane.xlu0 %1127
    %v1129 = vrcp.pop 32.0
    %v1130 = vmul.f32 %v1077, %v1129
    %v1131 = vmul.f32 %v1080, %v1129
    %v1132 = vmul.f32 %v1083, %v1129
    %v1133 = vmul.f32 %v1086, %v1129
    %v1134 = vmul.f32 %v1089, %v1129
    %v1135 = vmul.f32 %v1092, %v1129
    %v1136 = vmul.f32 %v1095, %v1129
    %v1137 = vmul.f32 %v1098, %v1129
    %v1138 = vmul.f32 %v1101, %v1129
    %v1139 = vmul.f32 %v1104, %v1129
    %v1140 = vmul.f32 %v1107, %v1129
    %v1141 = vmul.f32 %v1110, %v1129
    %v1142 = vmul.f32 %v1113, %v1129
    %v1143 = vmul.f32 %v1116, %v1129
    %v1144 = vmul.f32 %v1119, %v1129
    %v1145 = vmul.f32 %v1122, %v1129
    %v1146 = vmul.f32 %v1125, %v1129
    %v1147 = vmul.f32 %v1128, %v1129
    %v1148 = vsub.f32 %v1056, %v1130
    %v1149 = vsub.f32 %v1057, %v1131
    %v1150 = vsub.f32 %v1058, %v1132
    %v1151 = vsub.f32 %v1059, %v1133
    %v1152 = vsub.f32 %v1060, %v1134
    %v1153 = vsub.f32 %v1061, %v1135
    %v1154 = vsub.f32 %v1062, %v1136
    %v1155 = vsub.f32 %v1063, %v1137
    %v1156 = vsub.f32 %v1064, %v1138
    %v1157 = vsub.f32 %v1065, %v1139
    %v1158 = vsub.f32 %v1066, %v1140
    %v1159 = vsub.f32 %v1067, %v1141
    %v1160 = vsub.f32 %v1068, %v1142
    %v1161 = vsub.f32 %v1069, %v1143
    %v1162 = vsub.f32 %v1070, %v1144
    %v1163 = vsub.f32 %v1071, %v1145
    %v1164 = vsub.f32 %v1072, %v1146
    %v1165 = vsub.f32 %v1073, %v1147
    %v1166 = vmul.f32 %v1148, %v1148
    %v1167 = vmul.f32 %v1149, %v1149
    %v1168 = vmul.f32 %v1150, %v1150
    %v1169 = vmul.f32 %v1151, %v1151
    %v1170 = vmul.f32 %v1152, %v1152
    %v1171 = vmul.f32 %v1153, %v1153
    %v1172 = vmul.f32 %v1154, %v1154
    %v1173 = vmul.f32 %v1155, %v1155
    %v1174 = vmul.f32 %v1156, %v1156
    %v1175 = vmul.f32 %v1157, %v1157
    %v1176 = vmul.f32 %v1158, %v1158
    %v1177 = vmul.f32 %v1159, %v1159
    %v1178 = vmul.f32 %v1160, %v1160
    %v1179 = vmul.f32 %v1161, %v1161
    %v1180 = vmul.f32 %v1162, %v1162
    %v1181 = vmul.f32 %v1163, %v1163
    %v1182 = vmul.f32 %v1164, %v1164
    %v1183 = vmul.f32 %v1165, %v1165
    %v1184 = vsel %vm1074, %v1166, 0.0
    %1185 = vadd.xlane.f32.xlu0 %v1184
    %v1186 = vpop.xlane.xlu0 %1185
    %v1187 = vsel %vm1074, %v1167, 0.0
    %1188 = vadd.xlane.f32.xlu0 %v1187
    %v1189 = vpop.xlane.xlu0 %1188
    %v1190 = vsel %vm1074, %v1168, 0.0
    %1191 = vadd.xlane.f32.xlu0 %v1190
    %v1192 = vpop.xlane.xlu0 %1191
    %v1193 = vsel %vm1074, %v1169, 0.0
    %1194 = vadd.xlane.f32.xlu0 %v1193
    %v1195 = vpop.xlane.xlu0 %1194
    %v1196 = vsel %vm1074, %v1170, 0.0
    %1197 = vadd.xlane.f32.xlu0 %v1196
    %v1198 = vpop.xlane.xlu0 %1197
    %v1199 = vsel %vm1074, %v1171, 0.0
    %1200 = vadd.xlane.f32.xlu0 %v1199
    %v1201 = vpop.xlane.xlu0 %1200
    %v1202 = vsel %vm1074, %v1172, 0.0
    %1203 = vadd.xlane.f32.xlu0 %v1202
    %v1204 = vpop.xlane.xlu0 %1203
    %v1205 = vsel %vm1074, %v1173, 0.0
    %1206 = vadd.xlane.f32.xlu0 %v1205
    %v1207 = vpop.xlane.xlu0 %1206
    %v1208 = vsel %vm1074, %v1174, 0.0
    %1209 = vadd.xlane.f32.xlu0 %v1208
    %v1210 = vpop.xlane.xlu0 %1209
    %v1211 = vsel %vm1074, %v1175, 0.0
    %1212 = vadd.xlane.f32.xlu0 %v1211
    %v1213 = vpop.xlane.xlu0 %1212
    %v1214 = vsel %vm1074, %v1176, 0.0
    %1215 = vadd.xlane.f32.xlu0 %v1214
    %v1216 = vpop.xlane.xlu0 %1215
    %v1217 = vsel %vm1074, %v1177, 0.0
    %1218 = vadd.xlane.f32.xlu0 %v1217
    %v1219 = vpop.xlane.xlu0 %1218
    %v1220 = vsel %vm1074, %v1178, 0.0
    %1221 = vadd.xlane.f32.xlu0 %v1220
    %v1222 = vpop.xlane.xlu0 %1221
    %v1223 = vsel %vm1074, %v1179, 0.0
    %1224 = vadd.xlane.f32.xlu0 %v1223
    %v1225 = vpop.xlane.xlu0 %1224
    %v1226 = vsel %vm1074, %v1180, 0.0
    %1227 = vadd.xlane.f32.xlu0 %v1226
    %v1228 = vpop.xlane.xlu0 %1227
    %v1229 = vsel %vm1074, %v1181, 0.0
    %1230 = vadd.xlane.f32.xlu0 %v1229
    %v1231 = vpop.xlane.xlu0 %1230
    %v1232 = vsel %vm1074, %v1182, 0.0
    %1233 = vadd.xlane.f32.xlu0 %v1232
    %v1234 = vpop.xlane.xlu0 %1233
    %v1235 = vsel %vm1074, %v1183, 0.0
    %1236 = vadd.xlane.f32.xlu0 %v1235
    %v1237 = vpop.xlane.xlu0 %1236
    %v1238 = vmul.f32 %v1186, %v1129
    %v1239 = vmul.f32 %v1189, %v1129
    %v1240 = vmul.f32 %v1192, %v1129
    %v1241 = vmul.f32 %v1195, %v1129
    %v1242 = vmul.f32 %v1198, %v1129
    %v1243 = vmul.f32 %v1201, %v1129
    %v1244 = vmul.f32 %v1204, %v1129
    %v1245 = vmul.f32 %v1207, %v1129
    %v1246 = vmul.f32 %v1210, %v1129
    %v1247 = vmul.f32 %v1213, %v1129
    %v1248 = vmul.f32 %v1216, %v1129
    %v1249 = vmul.f32 %v1219, %v1129
    %v1250 = vmul.f32 %v1222, %v1129
    %v1251 = vmul.f32 %v1225, %v1129
    %v1252 = vmul.f32 %v1228, %v1129
    %v1253 = vmul.f32 %v1231, %v1129
    %v1254 = vmul.f32 %v1234, %v1129
    %v1255 = vmul.f32 %v1237, %v1129
    %v1256 = vadd.f32 %v1238, 1e-05
    %v1257 = vadd.f32 %v1239, 1e-05
    %v1258 = vadd.f32 %v1240, 1e-05
    %v1259 = vadd.f32 %v1241, 1e-05
    %v1260 = vadd.f32 %v1242, 1e-05
    %v1261 = vadd.f32 %v1243, 1e-05
    %v1262 = vadd.f32 %v1244, 1e-05
    %v1263 = vadd.f32 %v1245, 1e-05
    %v1264 = vadd.f32 %v1246, 1e-05
    %v1265 = vadd.f32 %v1247, 1e-05
    %v1266 = vadd.f32 %v1248, 1e-05
    %v1267 = vadd.f32 %v1249, 1e-05
    %v1268 = vadd.f32 %v1250, 1e-05
    %v1269 = vadd.f32 %v1251, 1e-05
    %v1270 = vadd.f32 %v1252, 1e-05
    %v1271 = vadd.f32 %v1253, 1e-05
    %v1272 = vadd.f32 %v1254, 1e-05
    %v1273 = vadd.f32 %v1255, 1e-05
    %v1274 = vrsqrt.pop %v1256
    %v1275 = vrsqrt.pop %v1257
    %v1276 = vrsqrt.pop %v1258
    %v1277 = vrsqrt.pop %v1259
    %v1278 = vrsqrt.pop %v1260
    %v1279 = vrsqrt.pop %v1261
    %v1280 = vrsqrt.pop %v1262
    %v1281 = vrsqrt.pop %v1263
    %v1282 = vrsqrt.pop %v1264
    %v1283 = vrsqrt.pop %v1265
    %v1284 = vrsqrt.pop %v1266
    %v1285 = vrsqrt.pop %v1267
    %v1286 = vrsqrt.pop %v1268
    %v1287 = vrsqrt.pop %v1269
    %v1288 = vrsqrt.pop %v1270
    %v1289 = vrsqrt.pop %v1271
    %v1290 = vrsqrt.pop %v1272
    %v1291 = vrsqrt.pop %v1273
    %v1292 = vmul.f32 %v1148, %v1274
    %v1293 = vmul.f32 %v1149, %v1275
    %v1294 = vmul.f32 %v1150, %v1276
    %v1295 = vmul.f32 %v1151, %v1277
    %v1296 = vmul.f32 %v1152, %v1278
    %v1297 = vmul.f32 %v1153, %v1279
    %v1298 = vmul.f32 %v1154, %v1280
    %v1299 = vmul.f32 %v1155, %v1281
    %v1300 = vmul.f32 %v1156, %v1282
    %v1301 = vmul.f32 %v1157, %v1283
    %v1302 = vmul.f32 %v1158, %v1284
    %v1303 = vmul.f32 %v1159, %v1285
    %v1304 = vmul.f32 %v1160, %v1286
    %v1305 = vmul.f32 %v1161, %v1287
    %v1306 = vmul.f32 %v1162, %v1288
    %v1307 = vmul.f32 %v1163, %v1289
    %v1308 = vmul.f32 %v1164, %v1290
    %v1309 = vmul.f32 %v1165, %v1291
    %v1311 = vlaneseq
    %v1312 = vshrl.u32 %v1311, 7
    %v1313 = vsub.s32 0, %v1312
    %v1314 = vrot.slane %v424, %v1313
    %v1316 = vmul.f32 %v1292, %v1314
    %v1317 = vmul.f32 %v1293, %v1314
    %v1318 = vmul.f32 %v1294, %v1314
    %v1319 = vmul.f32 %v1295, %v1314
    %v1320 = vmul.f32 %v1296, %v1314
    %v1321 = vmul.f32 %v1297, %v1314
    %v1322 = vmul.f32 %v1298, %v1314
    %v1323 = vmul.f32 %v1299, %v1314
    %v1324 = vmul.f32 %v1300, %v1314
    %v1325 = vmul.f32 %v1301, %v1314
    %v1326 = vmul.f32 %v1302, %v1314
    %v1327 = vmul.f32 %v1303, %v1314
    %v1328 = vmul.f32 %v1304, %v1314
    %v1329 = vmul.f32 %v1305, %v1314
    %v1330 = vmul.f32 %v1306, %v1314
    %v1331 = vmul.f32 %v1307, %v1314
    %v1332 = vmul.f32 %v1308, %v1314
    %v1333 = vmul.f32 %v1309, %v1314
    %v1335 = vlaneseq
    %v1336 = vshrl.u32 %v1335, 7
    %v1337 = vsub.s32 0, %v1336
    %v1338 = vrot.slane %v425, %v1337
    %v1340 = vadd.f32 %v1316, %v1338
    %v1341 = vadd.f32 %v1317, %v1338
    %v1342 = vadd.f32 %v1318, %v1338
    %v1343 = vadd.f32 %v1319, %v1338
    %v1344 = vadd.f32 %v1320, %v1338
    %v1345 = vadd.f32 %v1321, %v1338
    %v1346 = vadd.f32 %v1322, %v1338
    %v1347 = vadd.f32 %v1323, %v1338
    %v1348 = vadd.f32 %v1324, %v1338
    %v1349 = vadd.f32 %v1325, %v1338
    %v1350 = vadd.f32 %v1326, %v1338
    %v1351 = vadd.f32 %v1327, %v1338
    %v1352 = vadd.f32 %v1328, %v1338
    %v1353 = vadd.f32 %v1329, %v1338
    %v1354 = vadd.f32 %v1330, %v1338
    %v1355 = vadd.f32 %v1331, %v1338
    %v1356 = vadd.f32 %v1332, %v1338
    %v1357 = vadd.f32 %v1333, %v1338
    %v1359 = vsel %vm1074, %v1340, 0
    %v1362 = vsel %vm1074, %v1341, 0
    %v1365 = vsel %vm1074, %v1342, 0
    %v1368 = vsel %vm1074, %v1343, 0
    %v1371 = vsel %vm1074, %v1344, 0
    %v1374 = vsel %vm1074, %v1345, 0
    %v1377 = vsel %vm1074, %v1346, 0
    %v1380 = vsel %vm1074, %v1347, 0
    %v1383 = vsel %vm1074, %v1348, 0
    %v1386 = vsel %vm1074, %v1349, 0
    %v1389 = vsel %vm1074, %v1350, 0
    %v1392 = vsel %vm1074, %v1351, 0
    %v1395 = vsel %vm1074, %v1352, 0
    %v1398 = vsel %vm1074, %v1353, 0
    %v1401 = vsel %vm1074, %v1354, 0
    %v1404 = vsel %vm1074, %v1355, 0
    %v1407 = vsel %vm1074, %v1356, 0
    %v1410 = vsel %vm1074, %v1357, 0
    %1412 = vmatprep.subr.mxu0 0.0
    %1413 = vmatpush1.msra.mxu0 %v426
    %1414 = vmatprep.subr.mxu0 0.0
    %1415 = vmatpush1.msra.mxu0 %v427
    %1416 = vmatprep.subr.mxu0 0.0
    %1417 = vmatpush1.msra.mxu0 %v428
    %1418 = vmatprep.subr.mxu0 0.0
    %1419 = vmatpush1.msra.mxu0 %v429
    %1420 = vmatprep.subr.mxu0 0.0
    %1421 = vmatpush1.msra.mxu0 0.0
    %1422 = vmatprep.subr.mxu0 0.0
    %1423 = vmatpush1.msra.mxu0 0.0
    %1424 = vmatprep.subr.mxu0 0.0
    %1425 = vmatpush1.msra.mxu0 0.0
    %1426 = vmatprep.subr.mxu0 0.0
    %1427 = vmatpush1.msra.mxu0 0.0
    %1428 = vmatprep.subr.mxu0 0.0
    %1429 = vmatpush1.msra.mxu0 0.0
    %1430 = vmatprep.subr.mxu0 0.0
    %1431 = vmatpush1.msra.mxu0 0.0
    %1432 = vmatprep.subr.mxu0 0.0
    %1433 = vmatpush1.msra.mxu0 0.0
    %1434 = vmatprep.subr.mxu0 0.0
    %1435 = vmatpush1.msra.mxu0 0.0
    %1436 = vmatprep.subr.mxu0 0.0
    %1437 = vmatpush1.msra.mxu0 0.0
    %1438 = vmatprep.subr.mxu0 0.0
    %1439 = vmatpush1.msra.mxu0 0.0
    %1440 = vmatprep.subr.mxu0 0.0
    %1441 = vmatpush1.msra.mxu0 0.0
    %1442 = vmatprep.subr.mxu0 0.0
    %1443 = vmatpush1.msra.mxu0 0.0
    %1444 = vmatprep.subr.mxu0 0.0
    %1445 = vmatpush1.msra.mxu0 0.0
    %1446 = vmatprep.subr.mxu0 0.0
    %1447 = vmatpush1.msra.mxu0 0.0
    %1448 = vmatprep.subr.mxu0 0.0
    %1449 = vmatpush1.msra.mxu0 0.0
    %1450 = vmatprep.subr.mxu0 0.0
    %1451 = vmatpush1.msra.mxu0 0.0
    %1452 = vmatprep.subr.mxu0 0.0
    %1453 = vmatpush1.msra.mxu0 0.0
    %1454 = vmatprep.subr.mxu0 0.0
    %1455 = vmatpush1.msra.mxu0 0.0
    %1456 = vmatprep.subr.mxu0 0.0
    %1457 = vmatpush1.msra.mxu0 0.0
    %1458 = vmatprep.subr.mxu0 0.0
    %1459 = vmatpush1.msra.mxu0 0.0
    %1460 = vmatprep.subr.mxu0 0.0
    %1461 = vmatpush1.msra.mxu0 0.0
    %1462 = vmatprep.subr.mxu0 0.0
    %1463 = vmatpush1.msra.mxu0 0.0
    %1464 = vmatprep.subr.mxu0 0.0
    %1465 = vmatpush1.msra.mxu0 0.0
    %1466 = vmatprep.subr.mxu0 0.0
    %1467 = vmatpush1.msra.mxu0 0.0
    %1468 = vmatprep.subr.mxu0 0.0
    %1469 = vmatpush1.msra.mxu0 0.0
    %1470 = vmatprep.subr.mxu0 0.0
    %1471 = vmatpush1.msra.mxu0 0.0
    %1472 = vmatprep.subr.mxu0 0.0
    %1473 = vmatpush1.msra.mxu0 0.0
    %1474 = vmatprep.subr.mxu0 0.0
    %1475 = vmatpush1.msra.mxu0 0.0
    %1476 = vmatprep.mubr.f32.mxu0 0.0
    %1477 = vmatmul.mubr.f32.gmra.mrb[0].mxu0 %v1359
    %v1478 = vpop.f32.mrb[0].mxu0
    %v1479 = vadd.f32 0.0, %v1478
    %v1480 = vpop.f32.mrb[0].mxu0
    %1481 = vmatprep.mubr.f32.mxu0 0.0
    %1482 = vmatmul.mubr.f32.gmra.mrb[0].mxu0 %v1362
    %v1483 = vpop.f32.mrb[0].mxu0
    %v1484 = vadd.f32 0.0, %v1483
    %v1485 = vpop.f32.mrb[0].mxu0
    %1486 = vmatprep.mubr.f32.mxu0 0.0
    %1487 = vmatmul.mubr.f32.gmra.mrb[0].mxu0 %v1365
    %v1488 = vpop.f32.mrb[0].mxu0
    %v1489 = vadd.f32 0.0, %v1488
    %v1490 = vpop.f32.mrb[0].mxu0
    %1491 = vmatprep.mubr.f32.mxu0 0.0
    %1492 = vmatmul.mubr.f32.gmra.mrb[0].mxu0 %v1368
    %v1493 = vpop.f32.mrb[0].mxu0
    %v1494 = vadd.f32 0.0, %v1493
    %v1495 = vpop.f32.mrb[0].mxu0
    %1496 = vmatprep.mubr.f32.mxu0 0.0
    %1497 = vmatmul.mubr.f32.gmra.mrb[0].mxu0 %v1371
    %v1498 = vpop.f32.mrb[0].mxu0
    %v1499 = vadd.f32 0.0, %v1498
    %v1500 = vpop.f32.mrb[0].mxu0
    %1501 = vmatprep.mubr.f32.mxu0 0.0
    %1502 = vmatmul.mubr.f32.gmra.mrb[0].mxu0 %v1374
    %v1503 = vpop.f32.mrb[0].mxu0
    %v1504 = vadd.f32 0.0, %v1503
    %v1505 = vpop.f32.mrb[0].mxu0
    %1506 = vmatprep.mubr.f32.mxu0 0.0
    %1507 = vmatmul.mubr.f32.gmra.mrb[0].mxu0 %v1377
    %v1508 = vpop.f32.mrb[0].mxu0
    %v1509 = vadd.f32 0.0, %v1508
    %v1510 = vpop.f32.mrb[0].mxu0
    %1511 = vmatprep.mubr.f32.mxu0 0.0
    %1512 = vmatmul.mubr.f32.gmra.mrb[0].mxu0 %v1380
    %v1513 = vpop.f32.mrb[0].mxu0
    %v1514 = vadd.f32 0.0, %v1513
    %v1515 = vpop.f32.mrb[0].mxu0
    %1516 = vmatprep.mubr.f32.mxu0 0.0
    %1517 = vmatmul.mubr.f32.gmra.mrb[0].mxu0 %v1383
    %v1518 = vpop.f32.mrb[0].mxu0
    %v1519 = vadd.f32 0.0, %v1518
    %v1520 = vpop.f32.mrb[0].mxu0
    %1521 = vmatprep.mubr.f32.mxu0 0.0
    %1522 = vmatmul.mubr.f32.gmra.mrb[0].mxu0 %v1386
    %v1523 = vpop.f32.mrb[0].mxu0
    %v1524 = vadd.f32 0.0, %v1523
    %v1525 = vpop.f32.mrb[0].mxu0
    %1526 = vmatprep.mubr.f32.mxu0 0.0
    %1527 = vmatmul.mubr.f32.gmra.mrb[0].mxu0 %v1389
    %v1528 = vpop.f32.mrb[0].mxu0
    %v1529 = vadd.f32 0.0, %v1528
    %v1530 = vpop.f32.mrb[0].mxu0
    %1531 = vmatprep.mubr.f32.mxu0 0.0
    %1532 = vmatmul.mubr.f32.gmra.mrb[0].mxu0 %v1392
    %v1533 = vpop.f32.mrb[0].mxu0
    %v1534 = vadd.f32 0.0, %v1533
    %v1535 = vpop.f32.mrb[0].mxu0
    %1536 = vmatprep.mubr.f32.mxu0 0.0
    %1537 = vmatmul.mubr.f32.gmra.mrb[0].mxu0 %v1395
    %v1538 = vpop.f32.mrb[0].mxu0
    %v1539 = vadd.f32 0.0, %v1538
    %v1540 = vpop.f32.mrb[0].mxu0
    %1541 = vmatprep.mubr.f32.mxu0 0.0
    %1542 = vmatmul.mubr.f32.gmra.mrb[0].mxu0 %v1398
    %v1543 = vpop.f32.mrb[0].mxu0
    %v1544 = vadd.f32 0.0, %v1543
    %v1545 = vpop.f32.mrb[0].mxu0
    %1546 = vmatprep.mubr.f32.mxu0 0.0
    %1547 = vmatmul.mubr.f32.gmra.mrb[0].mxu0 %v1401
    %v1548 = vpop.f32.mrb[0].mxu0
    %v1549 = vadd.f32 0.0, %v1548
    %v1550 = vpop.f32.mrb[0].mxu0
    %1551 = vmatprep.mubr.f32.mxu0 0.0
    %1552 = vmatmul.mubr.f32.gmra.mrb[0].mxu0 %v1404
    %v1553 = vpop.f32.mrb[0].mxu0
    %v1554 = vadd.f32 0.0, %v1553
    %v1555 = vpop.f32.mrb[0].mxu0
    %1556 = vmatprep.mubr.f32.mxu0 0.0
    %1557 = vmatmul.mubr.f32.gmra.mrb[0].mxu0 %v1407
    %v1558 = vpop.f32.mrb[0].mxu0
    %v1559 = vadd.f32 0.0, %v1558
    %v1560 = vpop.f32.mrb[0].mxu0
    %1561 = vmatprep.mubr.f32.mxu0 0.0
    %1562 = vmatmul.mubr.f32.gmra.mrb[0].mxu0 %v1410
    %v1563 = vpop.f32.mrb[0].mxu0
    %v1564 = vadd.f32 0.0, %v1563
    %v1565 = vpop.f32.mrb[0].mxu0
    %1566 = vdwg.mxu0
    %v1568 = vlaneseq
    %v1569 = vshrl.u32 %v1568, 7
    %v1570 = vsub.s32 0, %v1569
    %v1571 = vrot.slane %v434, %v1570
    %1591 = vrot.lane.b32.xlu0 %v1479, 96
    %v1592 = vpop.permute.xlu0 %1591
    %1593 = vrot.lane.b32.xlu0 %v1484, 96
    %v1594 = vpop.permute.xlu0 %1593
    %1595 = vrot.lane.b32.xlu0 %v1489, 96
    %v1596 = vpop.permute.xlu0 %1595
    %1597 = vrot.lane.b32.xlu0 %v1494, 96
    %v1598 = vpop.permute.xlu0 %1597
    %1599 = vrot.lane.b32.xlu0 %v1499, 96
    %v1600 = vpop.permute.xlu0 %1599
    %1601 = vrot.lane.b32.xlu0 %v1504, 96
    %v1602 = vpop.permute.xlu0 %1601
    %1603 = vrot.lane.b32.xlu0 %v1509, 96
    %v1604 = vpop.permute.xlu0 %1603
    %1605 = vrot.lane.b32.xlu0 %v1514, 96
    %v1606 = vpop.permute.xlu0 %1605
    %1607 = vrot.lane.b32.xlu0 %v1519, 96
    %v1608 = vpop.permute.xlu0 %1607
    %1609 = vrot.lane.b32.xlu0 %v1524, 96
    %v1610 = vpop.permute.xlu0 %1609
    %1611 = vrot.lane.b32.xlu0 %v1529, 96
    %v1612 = vpop.permute.xlu0 %1611
    %1613 = vrot.lane.b32.xlu0 %v1534, 96
    %v1614 = vpop.permute.xlu0 %1613
    %1615 = vrot.lane.b32.xlu0 %v1539, 96
    %v1616 = vpop.permute.xlu0 %1615
    %1617 = vrot.lane.b32.xlu0 %v1544, 96
    %v1618 = vpop.permute.xlu0 %1617
    %1619 = vrot.lane.b32.xlu0 %v1549, 96
    %v1620 = vpop.permute.xlu0 %1619
    %1621 = vrot.lane.b32.xlu0 %v1554, 96
    %v1622 = vpop.permute.xlu0 %1621
    %1623 = vrot.lane.b32.xlu0 %v1559, 96
    %v1624 = vpop.permute.xlu0 %1623
    %1625 = vrot.lane.b32.xlu0 %v1564, 96
    %v1626 = vpop.permute.xlu0 %1625
    %vm1627 = vcmask 130048
    %v1628 = vsel %vm1627, %v1479, 0
    %v1630 = vsel %vm1627, %v1484, 0
    %v1632 = vsel %vm1627, %v1489, 0
    %v1634 = vsel %vm1627, %v1494, 0
    %v1636 = vsel %vm1627, %v1499, 0
    %v1638 = vsel %vm1627, %v1504, 0
    %v1640 = vsel %vm1627, %v1509, 0
    %v1642 = vsel %vm1627, %v1514, 0
    %v1644 = vsel %vm1627, %v1519, 0
    %v1646 = vsel %vm1627, %v1524, 0
    %v1648 = vsel %vm1627, %v1529, 0
    %v1650 = vsel %vm1627, %v1534, 0
    %v1652 = vsel %vm1627, %v1539, 0
    %v1654 = vsel %vm1627, %v1544, 0
    %v1656 = vsel %vm1627, %v1549, 0
    %v1658 = vsel %vm1627, %v1554, 0
    %v1660 = vsel %vm1627, %v1559, 0
    %v1662 = vsel %vm1627, %v1564, 0
    %v1664 = vsel %vm1627, %v1592, 0
    %v1666 = vsel %vm1627, %v1594, 0
    %v1668 = vsel %vm1627, %v1596, 0
    %v1670 = vsel %vm1627, %v1598, 0
    %v1672 = vsel %vm1627, %v1600, 0
    %v1674 = vsel %vm1627, %v1602, 0
    %v1676 = vsel %vm1627, %v1604, 0
    %v1678 = vsel %vm1627, %v1606, 0
    %v1680 = vsel %vm1627, %v1608, 0
    %v1682 = vsel %vm1627, %v1610, 0
    %v1684 = vsel %vm1627, %v1612, 0
    %v1686 = vsel %vm1627, %v1614, 0
    %v1688 = vsel %vm1627, %v1616, 0
    %v1690 = vsel %vm1627, %v1618, 0
    %v1692 = vsel %vm1627, %v1620, 0
    %v1694 = vsel %vm1627, %v1622, 0
    %v1696 = vsel %vm1627, %v1624, 0
    %v1698 = vsel %vm1627, %v1626, 0
    %1700 = vmatprep.subr.mxu0 0.0
    %1701 = vmatpush1.xpose.msra.mxu0 %v1664
    %1702 = vmatprep.subr.mxu0 0.0
    %1703 = vmatpush1.xpose.msra.mxu0 %v1666
    %1704 = vmatprep.subr.mxu0 0.0
    %1705 = vmatpush1.xpose.msra.mxu0 %v1668
    %1706 = vmatprep.subr.mxu0 0.0
    %1707 = vmatpush1.xpose.msra.mxu0 %v1670
    %1708 = vmatprep.subr.mxu0 0.0
    %1709 = vmatpush1.xpose.msra.mxu0 %v1672
    %1710 = vmatprep.subr.mxu0 0.0
    %1711 = vmatpush1.xpose.msra.mxu0 %v1674
    %1712 = vmatprep.subr.mxu0 0.0
    %1713 = vmatpush1.xpose.msra.mxu0 %v1676
    %1714 = vmatprep.subr.mxu0 0.0
    %1715 = vmatpush1.xpose.msra.mxu0 %v1678
    %1716 = vmatprep.subr.mxu0 0.0
    %1717 = vmatpush1.xpose.msra.mxu0 %v1680
    %1718 = vmatprep.subr.mxu0 0.0
    %1719 = vmatpush1.xpose.msra.mxu0 %v1682
    %1720 = vmatprep.subr.mxu0 0.0
    %1721 = vmatpush1.xpose.msra.mxu0 %v1684
    %1722 = vmatprep.subr.mxu0 0.0
    %1723 = vmatpush1.xpose.msra.mxu0 %v1686
    %1724 = vmatprep.subr.mxu0 0.0
    %1725 = vmatpush1.xpose.msra.mxu0 %v1688
    %1726 = vmatprep.subr.mxu0 0.0
    %1727 = vmatpush1.xpose.msra.mxu0 %v1690
    %1728 = vmatprep.subr.mxu0 0.0
    %1729 = vmatpush1.xpose.msra.mxu0 %v1692
    %1730 = vmatprep.subr.mxu0 0.0
    %1731 = vmatpush1.xpose.msra.mxu0 %v1694
    %1732 = vmatprep.subr.mxu0 0.0
    %1733 = vmatpush1.xpose.msra.mxu0 %v1696
    %1734 = vmatprep.subr.mxu0 0.0
    %1735 = vmatpush1.xpose.msra.mxu0 %v1698
    %1736 = vmatprep.subr.mxu0 0.0
    %1737 = vmatpush1.xpose.msra.mxu0 0.0
    %1738 = vmatprep.subr.mxu0 0.0
    %1739 = vmatpush1.xpose.msra.mxu0 0.0
    %1740 = vmatprep.subr.mxu0 0.0
    %1741 = vmatpush1.xpose.msra.mxu0 0.0
    %1742 = vmatprep.subr.mxu0 0.0
    %1743 = vmatpush1.xpose.msra.mxu0 0.0
    %1744 = vmatprep.subr.mxu0 0.0
    %1745 = vmatpush1.xpose.msra.mxu0 0.0
    %1746 = vmatprep.subr.mxu0 0.0
    %1747 = vmatpush1.xpose.msra.mxu0 0.0
    %1748 = vmatprep.subr.mxu0 0.0
    %1749 = vmatpush1.xpose.msra.mxu0 0.0
    %1750 = vmatprep.subr.mxu0 0.0
    %1751 = vmatpush1.xpose.msra.mxu0 0.0
    %1752 = vmatprep.subr.mxu0 0.0
    %1753 = vmatpush1.xpose.msra.mxu0 0.0
    %1754 = vmatprep.subr.mxu0 0.0
    %1755 = vmatpush1.xpose.msra.mxu0 0.0
    %1756 = vmatprep.subr.mxu0 0.0
    %1757 = vmatpush1.xpose.msra.mxu0 0.0
    %1758 = vmatprep.subr.mxu0 0.0
    %1759 = vmatpush1.xpose.msra.mxu0 0.0
    %1760 = vmatprep.subr.mxu0 0.0
    %1761 = vmatpush1.xpose.msra.mxu0 0.0
    %1762 = vmatprep.subr.mxu0 0.0
    %1763 = vmatpush1.xpose.msra.mxu0 0.0
    %1764 = vmatprep.mubr.f32.mxu0 0.0
    %1765 = vmatmul.mubr.f32.gmra.mrb[0].mxu0 %v1628
    %v1766 = vpop.f32.mrb[0].mxu0
    %v1767 = vadd.f32 0.0, %v1766
    %v1768 = vpop.f32.mrb[0].mxu0
    %v1769 = vadd.f32 0.0, %v1768
    %1770 = vmatprep.mubr.f32.mxu0 0.0
    %1771 = vmatmul.mubr.f32.gmra.mrb[0].mxu0 %v1630
    %v1772 = vpop.f32.mrb[0].mxu0
    %v1773 = vadd.f32 0.0, %v1772
    %v1774 = vpop.f32.mrb[0].mxu0
    %v1775 = vadd.f32 0.0, %v1774
    %1776 = vmatprep.mubr.f32.mxu0 0.0
    %1777 = vmatmul.mubr.f32.gmra.mrb[0].mxu0 %v1632
    %v1778 = vpop.f32.mrb[0].mxu0
    %v1779 = vadd.f32 0.0, %v1778
    %v1780 = vpop.f32.mrb[0].mxu0
    %v1781 = vadd.f32 0.0, %v1780
    %1782 = vmatprep.mubr.f32.mxu0 0.0
    %1783 = vmatmul.mubr.f32.gmra.mrb[0].mxu0 %v1634
    %v1784 = vpop.f32.mrb[0].mxu0
    %v1785 = vadd.f32 0.0, %v1784
    %v1786 = vpop.f32.mrb[0].mxu0
    %v1787 = vadd.f32 0.0, %v1786
    %1788 = vmatprep.mubr.f32.mxu0 0.0
    %1789 = vmatmul.mubr.f32.gmra.mrb[0].mxu0 %v1636
    %v1790 = vpop.f32.mrb[0].mxu0
    %v1791 = vadd.f32 0.0, %v1790
    %v1792 = vpop.f32.mrb[0].mxu0
    %v1793 = vadd.f32 0.0, %v1792
    %1794 = vmatprep.mubr.f32.mxu0 0.0
    %1795 = vmatmul.mubr.f32.gmra.mrb[0].mxu0 %v1638
    %v1796 = vpop.f32.mrb[0].mxu0
    %v1797 = vadd.f32 0.0, %v1796
    %v1798 = vpop.f32.mrb[0].mxu0
    %v1799 = vadd.f32 0.0, %v1798
    %1800 = vmatprep.mubr.f32.mxu0 0.0
    %1801 = vmatmul.mubr.f32.gmra.mrb[0].mxu0 %v1640
    %v1802 = vpop.f32.mrb[0].mxu0
    %v1803 = vadd.f32 0.0, %v1802
    %v1804 = vpop.f32.mrb[0].mxu0
    %v1805 = vadd.f32 0.0, %v1804
    %1806 = vmatprep.mubr.f32.mxu0 0.0
    %1807 = vmatmul.mubr.f32.gmra.mrb[0].mxu0 %v1642
    %v1808 = vpop.f32.mrb[0].mxu0
    %v1809 = vadd.f32 0.0, %v1808
    %v1810 = vpop.f32.mrb[0].mxu0
    %v1811 = vadd.f32 0.0, %v1810
    %1812 = vmatprep.mubr.f32.mxu0 0.0
    %1813 = vmatmul.mubr.f32.gmra.mrb[0].mxu0 %v1644
    %v1814 = vpop.f32.mrb[0].mxu0
    %v1815 = vadd.f32 0.0, %v1814
    %v1816 = vpop.f32.mrb[0].mxu0
    %v1817 = vadd.f32 0.0, %v1816
    %1818 = vmatprep.mubr.f32.mxu0 0.0
    %1819 = vmatmul.mubr.f32.gmra.mrb[0].mxu0 %v1646
    %v1820 = vpop.f32.mrb[0].mxu0
    %v1821 = vadd.f32 0.0, %v1820
    %v1822 = vpop.f32.mrb[0].mxu0
    %v1823 = vadd.f32 0.0, %v1822
    %1824 = vmatprep.mubr.f32.mxu0 0.0
    %1825 = vmatmul.mubr.f32.gmra.mrb[0].mxu0 %v1648
    %v1826 = vpop.f32.mrb[0].mxu0
    %v1827 = vadd.f32 0.0, %v1826
    %v1828 = vpop.f32.mrb[0].mxu0
    %v1829 = vadd.f32 0.0, %v1828
    %1830 = vmatprep.mubr.f32.mxu0 0.0
    %1831 = vmatmul.mubr.f32.gmra.mrb[0].mxu0 %v1650
    %v1832 = vpop.f32.mrb[0].mxu0
    %v1833 = vadd.f32 0.0, %v1832
    %v1834 = vpop.f32.mrb[0].mxu0
    %v1835 = vadd.f32 0.0, %v1834
    %1836 = vmatprep.mubr.f32.mxu0 0.0
    %1837 = vmatmul.mubr.f32.gmra.mrb[0].mxu0 %v1652
    %v1838 = vpop.f32.mrb[0].mxu0
    %v1839 = vadd.f32 0.0, %v1838
    %v1840 = vpop.f32.mrb[0].mxu0
    %v1841 = vadd.f32 0.0, %v1840
    %1842 = vmatprep.mubr.f32.mxu0 0.0
    %1843 = vmatmul.mubr.f32.gmra.mrb[0].mxu0 %v1654
    %v1844 = vpop.f32.mrb[0].mxu0
    %v1845 = vadd.f32 0.0, %v1844
    %v1846 = vpop.f32.mrb[0].mxu0
    %v1847 = vadd.f32 0.0, %v1846
    %1848 = vmatprep.mubr.f32.mxu0 0.0
    %1849 = vmatmul.mubr.f32.gmra.mrb[0].mxu0 %v1656
    %v1850 = vpop.f32.mrb[0].mxu0
    %v1851 = vadd.f32 0.0, %v1850
    %v1852 = vpop.f32.mrb[0].mxu0
    %v1853 = vadd.f32 0.0, %v1852
    %1854 = vmatprep.mubr.f32.mxu0 0.0
    %1855 = vmatmul.mubr.f32.gmra.mrb[0].mxu0 %v1658
    %v1856 = vpop.f32.mrb[0].mxu0
    %v1857 = vadd.f32 0.0, %v1856
    %v1858 = vpop.f32.mrb[0].mxu0
    %v1859 = vadd.f32 0.0, %v1858
    %1860 = vmatprep.mubr.f32.mxu0 0.0
    %1861 = vmatmul.mubr.f32.gmra.mrb[0].mxu0 %v1660
    %v1862 = vpop.f32.mrb[0].mxu0
    %v1863 = vadd.f32 0.0, %v1862
    %v1864 = vpop.f32.mrb[0].mxu0
    %v1865 = vadd.f32 0.0, %v1864
    %1866 = vmatprep.mubr.f32.mxu0 0.0
    %1867 = vmatmul.mubr.f32.gmra.mrb[0].mxu0 %v1662
    %v1868 = vpop.f32.mrb[0].mxu0
    %v1869 = vadd.f32 0.0, %v1868
    %v1870 = vpop.f32.mrb[0].mxu0
    %v1871 = vadd.f32 0.0, %v1870
    %1872 = vdwg.mxu0
    %v1873 = vmul.f32 %v1767, 0.25
    %v1874 = vmul.f32 %v1769, 0.25
    %v1875 = vmul.f32 %v1773, 0.25
    %v1876 = vmul.f32 %v1775, 0.25
    %v1877 = vmul.f32 %v1779, 0.25
    %v1878 = vmul.f32 %v1781, 0.25
    %v1879 = vmul.f32 %v1785, 0.25
    %v1880 = vmul.f32 %v1787, 0.25
    %v1881 = vmul.f32 %v1791, 0.25
    %v1882 = vmul.f32 %v1793, 0.25
    %v1883 = vmul.f32 %v1797, 0.25
    %v1884 = vmul.f32 %v1799, 0.25
    %v1885 = vmul.f32 %v1803, 0.25
    %v1886 = vmul.f32 %v1805, 0.25
    %v1887 = vmul.f32 %v1809, 0.25
    %v1888 = vmul.f32 %v1811, 0.25
    %v1889 = vmul.f32 %v1815, 0.25
    %v1890 = vmul.f32 %v1817, 0.25
    %v1891 = vmul.f32 %v1821, 0.25
    %v1892 = vmul.f32 %v1823, 0.25
    %v1893 = vmul.f32 %v1827, 0.25
    %v1894 = vmul.f32 %v1829, 0.25
    %v1895 = vmul.f32 %v1833, 0.25
    %v1896 = vmul.f32 %v1835, 0.25
    %v1897 = vmul.f32 %v1839, 0.25
    %v1898 = vmul.f32 %v1841, 0.25
    %v1899 = vmul.f32 %v1845, 0.25
    %v1900 = vmul.f32 %v1847, 0.25
    %v1901 = vmul.f32 %v1851, 0.25
    %v1902 = vmul.f32 %v1853, 0.25
    %v1903 = vmul.f32 %v1857, 0.25
    %v1904 = vmul.f32 %v1859, 0.25
    %v1905 = vmul.f32 %v1863, 0.25
    %v1906 = vmul.f32 %v1865, 0.25
    %v1907 = vmul.f32 %v1869, 0.25
    %v1908 = vmul.f32 %v1871, 0.25
    %v1909 = vld [vmem:[#allocation5] sm:$0xff]
    %v1910 = vld [vmem:[#allocation5 + $0x8] sm:$0xff]
    %v1911 = vld [vmem:[#allocation5 + $0x10] sm:$0xff]
    %v1912 = vld [vmem:[#allocation5 + $0x18] sm:$0xff]
    %v1913 = vld [vmem:[#allocation5 + $0x20] sm:$0xff]
    %v1914 = vld [vmem:[#allocation5 + $0x28] sm:$0xff]
    %v1915 = vld [vmem:[#allocation5 + $0x30] sm:$0xff]
    %v1916 = vld [vmem:[#allocation5 + $0x38] sm:$0xff]
    %v1917 = vld [vmem:[#allocation5 + $0x40] sm:$0xff]
    %v1918 = vld [vmem:[#allocation5 + $0x48] sm:$0xff]
    %v1919 = vld [vmem:[#allocation5 + $0x50] sm:$0xff]
    %v1920 = vld [vmem:[#allocation5 + $0x58] sm:$0xff]
    %v1921 = vld [vmem:[#allocation5 + $0x60] sm:$0xff]
    %v1922 = vld [vmem:[#allocation5 + $0x68] sm:$0xff]
    %v1923 = vld [vmem:[#allocation5 + $0x70] sm:$0xff]
    %v1924 = vld [vmem:[#allocation5 + $0x78] sm:$0xff]
    %v1925 = vld [vmem:[#allocation5 + $0x80] sm:$0xff]
    %v1926 = vld [vmem:[#allocation5 + $0x88] sm:$0xff]
    %v1927 = vld [vmem:[#allocation5 + $0x90] sm:$0xff]
    %v1928 = vld [vmem:[#allocation5 + $0x98] sm:$0xff]
    %v1929 = vld [vmem:[#allocation5 + $0xa0] sm:$0xff]
    %v1930 = vld [vmem:[#allocation5 + $0xa8] sm:$0xff]
    %v1931 = vld [vmem:[#allocation5 + $0xb0] sm:$0xff]
    %v1932 = vld [vmem:[#allocation5 + $0xb8] sm:$0xff]
    %v1933 = vld [vmem:[#allocation5 + $0xc0] sm:$0xff]
    %v1934 = vld [vmem:[#allocation5 + $0xc8] sm:$0xff]
    %v1935 = vld [vmem:[#allocation5 + $0xd0] sm:$0xff]
    %v1936 = vld [vmem:[#allocation5 + $0xd8] sm:$0xff]
    %v1937 = vld [vmem:[#allocation5 + $0xe0] sm:$0xff]
    %v1938 = vld [vmem:[#allocation5 + $0xe8] sm:$0xff]
    %v1939 = vld [vmem:[#allocation5 + $0xf0] sm:$0xff]
    %v1940 = vld [vmem:[#allocation5 + $0xf8] sm:$0xff]
    %v1941 = vld [vmem:[#allocation5 + $0x100] sm:$0xff]
    %v1942 = vld [vmem:[#allocation5 + $0x108] sm:$0xff]
    %v1943 = vld [vmem:[#allocation5 + $0x110] sm:$0xff]
    %v1944 = vld [vmem:[#allocation5 + $0x118] sm:$0xff]
    %v1945 = vadd.f32 %v1873, %v1909
    %v1946 = vadd.f32 %v1874, %v1910
    %v1947 = vadd.f32 %v1875, %v1911
    %v1948 = vadd.f32 %v1876, %v1912
    %v1949 = vadd.f32 %v1877, %v1913
    %v1950 = vadd.f32 %v1878, %v1914
    %v1951 = vadd.f32 %v1879, %v1915
    %v1952 = vadd.f32 %v1880, %v1916
    %v1953 = vadd.f32 %v1881, %v1917
    %v1954 = vadd.f32 %v1882, %v1918
    %v1955 = vadd.f32 %v1883, %v1919
    %v1956 = vadd.f32 %v1884, %v1920
    %v1957 = vadd.f32 %v1885, %v1921
    %v1958 = vadd.f32 %v1886, %v1922
    %v1959 = vadd.f32 %v1887, %v1923
    %v1960 = vadd.f32 %v1888, %v1924
    %v1961 = vadd.f32 %v1889, %v1925
    %v1962 = vadd.f32 %v1890, %v1926
    %v1963 = vadd.f32 %v1891, %v1927
    %v1964 = vadd.f32 %v1892, %v1928
    %v1965 = vadd.f32 %v1893, %v1929
    %v1966 = vadd.f32 %v1894, %v1930
    %v1967 = vadd.f32 %v1895, %v1931
    %v1968 = vadd.f32 %v1896, %v1932
    %v1969 = vadd.f32 %v1897, %v1933
    %v1970 = vadd.f32 %v1898, %v1934
    %v1971 = vadd.f32 %v1899, %v1935
    %v1972 = vadd.f32 %v1900, %v1936
    %v1973 = vadd.f32 %v1901, %v1937
    %v1974 = vadd.f32 %v1902, %v1938
    %v1975 = vadd.f32 %v1903, %v1939
    %v1976 = vadd.f32 %v1904, %v1940
    %v1977 = vadd.f32 %v1905, %v1941
    %v1978 = vadd.f32 %v1906, %v1942
    %v1979 = vadd.f32 %v1907, %v1943
    %v1980 = vadd.f32 %v1908, %v1944
    %v1981 = vsel %vm1627, %v1946, -inf
    %v1982 = vmax.f32 %v1945, %v1981
    %1983 = vmax.xlane.f32.xlu0 %v1982
    %v1984 = vpop.xlane.xlu0 %1983
    %v1985 = vsel %vm1627, %v1948, -inf
    %v1986 = vmax.f32 %v1947, %v1985
    %1987 = vmax.xlane.f32.xlu0 %v1986
    %v1988 = vpop.xlane.xlu0 %1987
    %v1989 = vsel %vm1627, %v1950, -inf
    %v1990 = vmax.f32 %v1949, %v1989
    %1991 = vmax.xlane.f32.xlu0 %v1990
    %v1992 = vpop.xlane.xlu0 %1991
    %v1993 = vsel %vm1627, %v1952, -inf
    %v1994 = vmax.f32 %v1951, %v1993
    %1995 = vmax.xlane.f32.xlu0 %v1994
    %v1996 = vpop.xlane.xlu0 %1995
    %v1997 = vsel %vm1627, %v1954, -inf
    %v1998 = vmax.f32 %v1953, %v1997
    %1999 = vmax.xlane.f32.xlu0 %v1998
    %v2000 = vpop.xlane.xlu0 %1999
    %v2001 = vsel %vm1627, %v1956, -inf
    %v2002 = vmax.f32 %v1955, %v2001
    %2003 = vmax.xlane.f32.xlu0 %v2002
    %v2004 = vpop.xlane.xlu0 %2003
    %v2005 = vsel %vm1627, %v1958, -inf
    %v2006 = vmax.f32 %v1957, %v2005
    %2007 = vmax.xlane.f32.xlu0 %v2006
    %v2008 = vpop.xlane.xlu0 %2007
    %v2009 = vsel %vm1627, %v1960, -inf
    %v2010 = vmax.f32 %v1959, %v2009
    %2011 = vmax.xlane.f32.xlu0 %v2010
    %v2012 = vpop.xlane.xlu0 %2011
    %v2013 = vsel %vm1627, %v1962, -inf
    %v2014 = vmax.f32 %v1961, %v2013
    %2015 = vmax.xlane.f32.xlu0 %v2014
    %v2016 = vpop.xlane.xlu0 %2015
    %v2017 = vsel %vm1627, %v1964, -inf
    %v2018 = vmax.f32 %v1963, %v2017
    %2019 = vmax.xlane.f32.xlu0 %v2018
    %v2020 = vpop.xlane.xlu0 %2019
    %v2021 = vsel %vm1627, %v1966, -inf
    %v2022 = vmax.f32 %v1965, %v2021
    %2023 = vmax.xlane.f32.xlu0 %v2022
    %v2024 = vpop.xlane.xlu0 %2023
    %v2025 = vsel %vm1627, %v1968, -inf
    %v2026 = vmax.f32 %v1967, %v2025
    %2027 = vmax.xlane.f32.xlu0 %v2026
    %v2028 = vpop.xlane.xlu0 %2027
    %v2029 = vsel %vm1627, %v1970, -inf
    %v2030 = vmax.f32 %v1969, %v2029
    %2031 = vmax.xlane.f32.xlu0 %v2030
    %v2032 = vpop.xlane.xlu0 %2031
    %v2033 = vsel %vm1627, %v1972, -inf
    %v2034 = vmax.f32 %v1971, %v2033
    %2035 = vmax.xlane.f32.xlu0 %v2034
    %v2036 = vpop.xlane.xlu0 %2035
    %v2037 = vsel %vm1627, %v1974, -inf
    %v2038 = vmax.f32 %v1973, %v2037
    %2039 = vmax.xlane.f32.xlu0 %v2038
    %v2040 = vpop.xlane.xlu0 %2039
    %v2041 = vsel %vm1627, %v1976, -inf
    %v2042 = vmax.f32 %v1975, %v2041
    %2043 = vmax.xlane.f32.xlu0 %v2042
    %v2044 = vpop.xlane.xlu0 %2043
    %v2045 = vsel %vm1627, %v1978, -inf
    %v2046 = vmax.f32 %v1977, %v2045
    %2047 = vmax.xlane.f32.xlu0 %v2046
    %v2048 = vpop.xlane.xlu0 %2047
    %v2049 = vsel %vm1627, %v1980, -inf
    %v2050 = vmax.f32 %v1979, %v2049
    %2051 = vmax.xlane.f32.xlu0 %v2050
    %v2052 = vpop.xlane.xlu0 %2051
    %v2053 = vsub.f32 %v1945, %v1984
    %v2054 = vsub.f32 %v1946, %v1984
    %v2055 = vsub.f32 %v1947, %v1988
    %v2056 = vsub.f32 %v1948, %v1988
    %v2057 = vsub.f32 %v1949, %v1992
    %v2058 = vsub.f32 %v1950, %v1992
    %v2059 = vsub.f32 %v1951, %v1996
    %v2060 = vsub.f32 %v1952, %v1996
    %v2061 = vsub.f32 %v1953, %v2000
    %v2062 = vsub.f32 %v1954, %v2000
    %v2063 = vsub.f32 %v1955, %v2004
    %v2064 = vsub.f32 %v1956, %v2004
    %v2065 = vsub.f32 %v1957, %v2008
    %v2066 = vsub.f32 %v1958, %v2008
    %v2067 = vsub.f32 %v1959, %v2012
    %v2068 = vsub.f32 %v1960, %v2012
    %v2069 = vsub.f32 %v1961, %v2016
    %v2070 = vsub.f32 %v1962, %v2016
    %v2071 = vsub.f32 %v1963, %v2020
    %v2072 = vsub.f32 %v1964, %v2020
    %v2073 = vsub.f32 %v1965, %v2024
    %v2074 = vsub.f32 %v1966, %v2024
    %v2075 = vsub.f32 %v1967, %v2028
    %v2076 = vsub.f32 %v1968, %v2028
    %v2077 = vsub.f32 %v1969, %v2032
    %v2078 = vsub.f32 %v1970, %v2032
    %v2079 = vsub.f32 %v1971, %v2036
    %v2080 = vsub.f32 %v1972, %v2036
    %v2081 = vsub.f32 %v1973, %v2040
    %v2082 = vsub.f32 %v1974, %v2040
    %v2083 = vsub.f32 %v1975, %v2044
    %v2084 = vsub.f32 %v1976, %v2044
    %v2085 = vsub.f32 %v1977, %v2048
    %v2086 = vsub.f32 %v1978, %v2048
    %v2087 = vsub.f32 %v1979, %v2052
    %v2088 = vsub.f32 %v1980, %v2052
    %v2089 = vmul.f32 %v2053, 1.442695
    %v2090 = vpow.pop %v2089
    %v2091 = vmul.f32 %v2054, 1.442695
    %v2092 = vpow.pop %v2091
    %v2093 = vmul.f32 %v2055, 1.442695
    %v2094 = vpow.pop %v2093
    %v2095 = vmul.f32 %v2056, 1.442695
    %v2096 = vpow.pop %v2095
    %v2097 = vmul.f32 %v2057, 1.442695
    %v2098 = vpow.pop %v2097
    %v2099 = vmul.f32 %v2058, 1.442695
    %v2100 = vpow.pop %v2099
    %v2101 = vmul.f32 %v2059, 1.442695
    %v2102 = vpow.pop %v2101
    %v2103 = vmul.f32 %v2060, 1.442695
    %v2104 = vpow.pop %v2103
    %v2105 = vmul.f32 %v2061, 1.442695
    %v2106 = vpow.pop %v2105
    %v2107 = vmul.f32 %v2062, 1.442695
    %v2108 = vpow.pop %v2107
    %v2109 = vmul.f32 %v2063, 1.442695
    %v2110 = vpow.pop %v2109
    %v2111 = vmul.f32 %v2064, 1.442695
    %v2112 = vpow.pop %v2111
    %v2113 = vmul.f32 %v2065, 1.442695
    %v2114 = vpow.pop %v2113
    %v2115 = vmul.f32 %v2066, 1.442695
    %v2116 = vpow.pop %v2115
    %v2117 = vmul.f32 %v2067, 1.442695
    %v2118 = vpow.pop %v2117
    %v2119 = vmul.f32 %v2068, 1.442695
    %v2120 = vpow.pop %v2119
    %v2121 = vmul.f32 %v2069, 1.442695
    %v2122 = vpow.pop %v2121
    %v2123 = vmul.f32 %v2070, 1.442695
    %v2124 = vpow.pop %v2123
    %v2125 = vmul.f32 %v2071, 1.442695
    %v2126 = vpow.pop %v2125
    %v2127 = vmul.f32 %v2072, 1.442695
    %v2128 = vpow.pop %v2127
    %v2129 = vmul.f32 %v2073, 1.442695
    %v2130 = vpow.pop %v2129
    %v2131 = vmul.f32 %v2074, 1.442695
    %v2132 = vpow.pop %v2131
    %v2133 = vmul.f32 %v2075, 1.442695
    %v2134 = vpow.pop %v2133
    %v2135 = vmul.f32 %v2076, 1.442695
    %v2136 = vpow.pop %v2135
    %v2137 = vmul.f32 %v2077, 1.442695
    %v2138 = vpow.pop %v2137
    %v2139 = vmul.f32 %v2078, 1.442695
    %v2140 = vpow.pop %v2139
    %v2141 = vmul.f32 %v2079, 1.442695
    %v2142 = vpow.pop %v2141
    %v2143 = vmul.f32 %v2080, 1.442695
    %v2144 = vpow.pop %v2143
    %v2145 = vmul.f32 %v2081, 1.442695
    %v2146 = vpow.pop %v2145
    %v2147 = vmul.f32 %v2082, 1.442695
    %v2148 = vpow.pop %v2147
    %v2149 = vmul.f32 %v2083, 1.442695
    %v2150 = vpow.pop %v2149
    %v2151 = vmul.f32 %v2084, 1.442695
    %v2152 = vpow.pop %v2151
    %v2153 = vmul.f32 %v2085, 1.442695
    %v2154 = vpow.pop %v2153
    %v2155 = vmul.f32 %v2086, 1.442695
    %v2156 = vpow.pop %v2155
    %v2157 = vmul.f32 %v2087, 1.442695
    %v2158 = vpow.pop %v2157
    %v2159 = vmul.f32 %v2088, 1.442695
    %v2160 = vpow.pop %v2159
    %v2161 = vsel %vm1627, %v2092, 0.0
    %v2162 = vadd.f32 %v2090, %v2161
    %2163 = vadd.xlane.f32.xlu0 %v2162
    %v2164 = vpop.xlane.xlu0 %2163
    %v2165 = vsel %vm1627, %v2096, 0.0
    %v2166 = vadd.f32 %v2094, %v2165
    %2167 = vadd.xlane.f32.xlu0 %v2166
    %v2168 = vpop.xlane.xlu0 %2167
    %v2169 = vsel %vm1627, %v2100, 0.0
    %v2170 = vadd.f32 %v2098, %v2169
    %2171 = vadd.xlane.f32.xlu0 %v2170
    %v2172 = vpop.xlane.xlu0 %2171
    %v2173 = vsel %vm1627, %v2104, 0.0
    %v2174 = vadd.f32 %v2102, %v2173
    %2175 = vadd.xlane.f32.xlu0 %v2174
    %v2176 = vpop.xlane.xlu0 %2175
    %v2177 = vsel %vm1627, %v2108, 0.0
    %v2178 = vadd.f32 %v2106, %v2177
    %2179 = vadd.xlane.f32.xlu0 %v2178
    %v2180 = vpop.xlane.xlu0 %2179
    %v2181 = vsel %vm1627, %v2112, 0.0
    %v2182 = vadd.f32 %v2110, %v2181
    %2183 = vadd.xlane.f32.xlu0 %v2182
    %v2184 = vpop.xlane.xlu0 %2183
    %v2185 = vsel %vm1627, %v2116, 0.0
    %v2186 = vadd.f32 %v2114, %v2185
    %2187 = vadd.xlane.f32.xlu0 %v2186
    %v2188 = vpop.xlane.xlu0 %2187
    %v2189 = vsel %vm1627, %v2120, 0.0
    %v2190 = vadd.f32 %v2118, %v2189
    %2191 = vadd.xlane.f32.xlu0 %v2190
    %v2192 = vpop.xlane.xlu0 %2191
    %v2193 = vsel %vm1627, %v2124, 0.0
    %v2194 = vadd.f32 %v2122, %v2193
    %2195 = vadd.xlane.f32.xlu0 %v2194
    %v2196 = vpop.xlane.xlu0 %2195
    %v2197 = vsel %vm1627, %v2128, 0.0
    %v2198 = vadd.f32 %v2126, %v2197
    %2199 = vadd.xlane.f32.xlu0 %v2198
    %v2200 = vpop.xlane.xlu0 %2199
    %v2201 = vsel %vm1627, %v2132, 0.0
    %v2202 = vadd.f32 %v2130, %v2201
    %2203 = vadd.xlane.f32.xlu0 %v2202
    %v2204 = vpop.xlane.xlu0 %2203
    %v2205 = vsel %vm1627, %v2136, 0.0
    %v2206 = vadd.f32 %v2134, %v2205
    %2207 = vadd.xlane.f32.xlu0 %v2206
    %v2208 = vpop.xlane.xlu0 %2207
    %v2209 = vsel %vm1627, %v2140, 0.0
    %v2210 = vadd.f32 %v2138, %v2209
    %2211 = vadd.xlane.f32.xlu0 %v2210
    %v2212 = vpop.xlane.xlu0 %2211
    %v2213 = vsel %vm1627, %v2144, 0.0
    %v2214 = vadd.f32 %v2142, %v2213
    %2215 = vadd.xlane.f32.xlu0 %v2214
    %v2216 = vpop.xlane.xlu0 %2215
    %v2217 = vsel %vm1627, %v2148, 0.0
    %v2218 = vadd.f32 %v2146, %v2217
    %2219 = vadd.xlane.f32.xlu0 %v2218
    %v2220 = vpop.xlane.xlu0 %2219
    %v2221 = vsel %vm1627, %v2152, 0.0
    %v2222 = vadd.f32 %v2150, %v2221
    %2223 = vadd.xlane.f32.xlu0 %v2222
    %v2224 = vpop.xlane.xlu0 %2223
    %v2225 = vsel %vm1627, %v2156, 0.0
    %v2226 = vadd.f32 %v2154, %v2225
    %2227 = vadd.xlane.f32.xlu0 %v2226
    %v2228 = vpop.xlane.xlu0 %2227
    %v2229 = vsel %vm1627, %v2160, 0.0
    %v2230 = vadd.f32 %v2158, %v2229
    %2231 = vadd.xlane.f32.xlu0 %v2230
    %v2232 = vpop.xlane.xlu0 %2231
    %v2233 = vrcp.pop %v2164
    %v2234 = vmul.f32 %v2090, %v2233
    %v2235 = vmul.f32 %v2092, %v2233
    %v2236 = vrcp.pop %v2168
    %v2237 = vmul.f32 %v2094, %v2236
    %v2238 = vmul.f32 %v2096, %v2236
    %v2239 = vrcp.pop %v2172
    %v2240 = vmul.f32 %v2098, %v2239
    %v2241 = vmul.f32 %v2100, %v2239
    %v2242 = vrcp.pop %v2176
    %v2243 = vmul.f32 %v2102, %v2242
    %v2244 = vmul.f32 %v2104, %v2242
    %v2245 = vrcp.pop %v2180
    %v2246 = vmul.f32 %v2106, %v2245
    %v2247 = vmul.f32 %v2108, %v2245
    %v2248 = vrcp.pop %v2184
    %v2249 = vmul.f32 %v2110, %v2248
    %v2250 = vmul.f32 %v2112, %v2248
    %v2251 = vrcp.pop %v2188
    %v2252 = vmul.f32 %v2114, %v2251
    %v2253 = vmul.f32 %v2116, %v2251
    %v2254 = vrcp.pop %v2192
    %v2255 = vmul.f32 %v2118, %v2254
    %v2256 = vmul.f32 %v2120, %v2254
    %v2257 = vrcp.pop %v2196
    %v2258 = vmul.f32 %v2122, %v2257
    %v2259 = vmul.f32 %v2124, %v2257
    %v2260 = vrcp.pop %v2200
    %v2261 = vmul.f32 %v2126, %v2260
    %v2262 = vmul.f32 %v2128, %v2260
    %v2263 = vrcp.pop %v2204
    %v2264 = vmul.f32 %v2130, %v2263
    %v2265 = vmul.f32 %v2132, %v2263
    %v2266 = vrcp.pop %v2208
    %v2267 = vmul.f32 %v2134, %v2266
    %v2268 = vmul.f32 %v2136, %v2266
    %v2269 = vrcp.pop %v2212
    %v2270 = vmul.f32 %v2138, %v2269
    %v2271 = vmul.f32 %v2140, %v2269
    %v2272 = vrcp.pop %v2216
    %v2273 = vmul.f32 %v2142, %v2272
    %v2274 = vmul.f32 %v2144, %v2272
    %v2275 = vrcp.pop %v2220
    %v2276 = vmul.f32 %v2146, %v2275
    %v2277 = vmul.f32 %v2148, %v2275
    %v2278 = vrcp.pop %v2224
    %v2279 = vmul.f32 %v2150, %v2278
    %v2280 = vmul.f32 %v2152, %v2278
    %v2281 = vrcp.pop %v2228
    %v2282 = vmul.f32 %v2154, %v2281
    %v2283 = vmul.f32 %v2156, %v2281
    %v2284 = vrcp.pop %v2232
    %v2285 = vmul.f32 %v2158, %v2284
    %v2286 = vmul.f32 %v2160, %v2284
    %2287 = vrot.lane.b32.xlu0 %v1479, 64
    %v2288 = vpop.permute.xlu0 %2287
    %2289 = vrot.lane.b32.xlu0 %v1484, 64
    %v2290 = vpop.permute.xlu0 %2289
    %2291 = vrot.lane.b32.xlu0 %v1489, 64
    %v2292 = vpop.permute.xlu0 %2291
    %2293 = vrot.lane.b32.xlu0 %v1494, 64
    %v2294 = vpop.permute.xlu0 %2293
    %2295 = vrot.lane.b32.xlu0 %v1499, 64
    %v2296 = vpop.permute.xlu0 %2295
    %2297 = vrot.lane.b32.xlu0 %v1504, 64
    %v2298 = vpop.permute.xlu0 %2297
    %2299 = vrot.lane.b32.xlu0 %v1509, 64
    %v2300 = vpop.permute.xlu0 %2299
    %2301 = vrot.lane.b32.xlu0 %v1514, 64
    %v2302 = vpop.permute.xlu0 %2301
    %2303 = vrot.lane.b32.xlu0 %v1519, 64
    %v2304 = vpop.permute.xlu0 %2303
    %2305 = vrot.lane.b32.xlu0 %v1524, 64
    %v2306 = vpop.permute.xlu0 %2305
    %2307 = vrot.lane.b32.xlu0 %v1529, 64
    %v2308 = vpop.permute.xlu0 %2307
    %2309 = vrot.lane.b32.xlu0 %v1534, 64
    %v2310 = vpop.permute.xlu0 %2309
    %2311 = vrot.lane.b32.xlu0 %v1539, 64
    %v2312 = vpop.permute.xlu0 %2311
    %2313 = vrot.lane.b32.xlu0 %v1544, 64
    %v2314 = vpop.permute.xlu0 %2313
    %2315 = vrot.lane.b32.xlu0 %v1549, 64
    %v2316 = vpop.permute.xlu0 %2315
    %2317 = vrot.lane.b32.xlu0 %v1554, 64
    %v2318 = vpop.permute.xlu0 %2317
    %2319 = vrot.lane.b32.xlu0 %v1559, 64
    %v2320 = vpop.permute.xlu0 %2319
    %2321 = vrot.lane.b32.xlu0 %v1564, 64
    %v2322 = vpop.permute.xlu0 %2321
    %v2342 = vsel %vm1627, %v2235, 0
    %v2345 = vsel %vm1627, %v2238, 0
    %v2348 = vsel %vm1627, %v2241, 0
    %v2351 = vsel %vm1627, %v2244, 0
    %v2354 = vsel %vm1627, %v2247, 0
    %v2357 = vsel %vm1627, %v2250, 0
    %v2360 = vsel %vm1627, %v2253, 0
    %v2363 = vsel %vm1627, %v2256, 0
    %v2366 = vsel %vm1627, %v2259, 0
    %v2369 = vsel %vm1627, %v2262, 0
    %v2372 = vsel %vm1627, %v2265, 0
    %v2375 = vsel %vm1627, %v2268, 0
    %v2378 = vsel %vm1627, %v2271, 0
    %v2381 = vsel %vm1627, %v2274, 0
    %v2384 = vsel %vm1627, %v2277, 0
    %v2387 = vsel %vm1627, %v2280, 0
    %v2390 = vsel %vm1627, %v2283, 0
    %v2393 = vsel %vm1627, %v2286, 0
    %2395 = vmatprep.subr.mxu0 0.0
    %2396 = vmatpush1.msra.mxu0 %v2288
    %2397 = vmatprep.subr.mxu0 0.0
    %2398 = vmatpush1.msra.mxu0 %v2290
    %2399 = vmatprep.subr.mxu0 0.0
    %2400 = vmatpush1.msra.mxu0 %v2292
    %2401 = vmatprep.subr.mxu0 0.0
    %2402 = vmatpush1.msra.mxu0 %v2294
    %2403 = vmatprep.subr.mxu0 0.0
    %2404 = vmatpush1.msra.mxu0 %v2296
    %2405 = vmatprep.subr.mxu0 0.0
    %2406 = vmatpush1.msra.mxu0 %v2298
    %2407 = vmatprep.subr.mxu0 0.0
    %2408 = vmatpush1.msra.mxu0 %v2300
    %2409 = vmatprep.subr.mxu0 0.0
    %2410 = vmatpush1.msra.mxu0 %v2302
    %2411 = vmatprep.subr.mxu0 0.0
    %2412 = vmatpush1.msra.mxu0 %v2304
    %2413 = vmatprep.subr.mxu0 0.0
    %2414 = vmatpush1.msra.mxu0 %v2306
    %2415 = vmatprep.subr.mxu0 0.0
    %2416 = vmatpush1.msra.mxu0 %v2308
    %2417 = vmatprep.subr.mxu0 0.0
    %2418 = vmatpush1.msra.mxu0 %v2310
    %2419 = vmatprep.subr.mxu0 0.0
    %2420 = vmatpush1.msra.mxu0 %v2312
    %2421 = vmatprep.subr.mxu0 0.0
    %2422 = vmatpush1.msra.mxu0 %v2314
    %2423 = vmatprep.subr.mxu0 0.0
    %2424 = vmatpush1.msra.mxu0 %v2316
    %2425 = vmatprep.subr.mxu0 0.0
    %2426 = vmatpush1.msra.mxu0 %v2318
    %2427 = vmatprep.subr.mxu0 0.0
    %2428 = vmatpush1.msra.mxu0 %v2320
    %2429 = vmatprep.subr.mxu0 0.0
    %2430 = vmatpush1.msra.mxu0 %v2322
    %2431 = vmatprep.subr.mxu0 0.0
    %2432 = vmatpush1.msra.mxu0 0.0
    %2433 = vmatprep.subr.mxu0 0.0
    %2434 = vmatpush1.msra.mxu0 0.0
    %2435 = vmatprep.subr.mxu0 0.0
    %2436 = vmatpush1.msra.mxu0 0.0
    %2437 = vmatprep.subr.mxu0 0.0
    %2438 = vmatpush1.msra.mxu0 0.0
    %2439 = vmatprep.subr.mxu0 0.0
    %2440 = vmatpush1.msra.mxu0 0.0
    %2441 = vmatprep.subr.mxu0 0.0
    %2442 = vmatpush1.msra.mxu0 0.0
    %2443 = vmatprep.subr.mxu0 0.0
    %2444 = vmatpush1.msra.mxu0 0.0
    %2445 = vmatprep.subr.mxu0 0.0
    %2446 = vmatpush1.msra.mxu0 0.0
    %2447 = vmatprep.subr.mxu0 0.0
    %2448 = vmatpush1.msra.mxu0 0.0
    %2449 = vmatprep.subr.mxu0 0.0
    %2450 = vmatpush1.msra.mxu0 0.0
    %2451 = vmatprep.subr.mxu0 0.0
    %2452 = vmatpush1.msra.mxu0 0.0
    %2453 = vmatprep.subr.mxu0 0.0
    %2454 = vmatpush1.msra.mxu0 0.0
    %2455 = vmatprep.subr.mxu0 0.0
    %2456 = vmatpush1.msra.mxu0 0.0
    %2457 = vmatprep.subr.mxu0 0.0
    %2458 = vmatpush1.msra.mxu0 0.0
    %2459 = vmatprep.mubr.f32.mxu0 %v2342
    %2460 = vmatmul.mubr.f32.gmra.mrb[0].mxu0 %v2234
    %v2461 = vpop.f32.mrb[0].mxu0
    %v2462 = vadd.f32 0.0, %v2461
    %v2463 = vpop.f32.mrb[0].mxu0
    %2464 = vmatprep.mubr.f32.mxu0 %v2345
    %2465 = vmatmul.mubr.f32.gmra.mrb[0].mxu0 %v2237
    %v2466 = vpop.f32.mrb[0].mxu0
    %v2467 = vadd.f32 0.0, %v2466
    %v2468 = vpop.f32.mrb[0].mxu0
    %2469 = vmatprep.mubr.f32.mxu0 %v2348
    %2470 = vmatmul.mubr.f32.gmra.mrb[0].mxu0 %v2240
    %v2471 = vpop.f32.mrb[0].mxu0
    %v2472 = vadd.f32 0.0, %v2471
    %v2473 = vpop.f32.mrb[0].mxu0
    %2474 = vmatprep.mubr.f32.mxu0 %v2351
    %2475 = vmatmul.mubr.f32.gmra.mrb[0].mxu0 %v2243
    %v2476 = vpop.f32.mrb[0].mxu0
    %v2477 = vadd.f32 0.0, %v2476
    %v2478 = vpop.f32.mrb[0].mxu0
    %2479 = vmatprep.mubr.f32.mxu0 %v2354
    %2480 = vmatmul.mubr.f32.gmra.mrb[0].mxu0 %v2246
    %v2481 = vpop.f32.mrb[0].mxu0
    %v2482 = vadd.f32 0.0, %v2481
    %v2483 = vpop.f32.mrb[0].mxu0
    %2484 = vmatprep.mubr.f32.mxu0 %v2357
    %2485 = vmatmul.mubr.f32.gmra.mrb[0].mxu0 %v2249
    %v2486 = vpop.f32.mrb[0].mxu0
    %v2487 = vadd.f32 0.0, %v2486
    %v2488 = vpop.f32.mrb[0].mxu0
    %2489 = vmatprep.mubr.f32.mxu0 %v2360
    %2490 = vmatmul.mubr.f32.gmra.mrb[0].mxu0 %v2252
    %v2491 = vpop.f32.mrb[0].mxu0
    %v2492 = vadd.f32 0.0, %v2491
    %v2493 = vpop.f32.mrb[0].mxu0
    %2494 = vmatprep.mubr.f32.mxu0 %v2363
    %2495 = vmatmul.mubr.f32.gmra.mrb[0].mxu0 %v2255
    %v2496 = vpop.f32.mrb[0].mxu0
    %v2497 = vadd.f32 0.0, %v2496
    %v2498 = vpop.f32.mrb[0].mxu0
    %2499 = vmatprep.mubr.f32.mxu0 %v2366
    %2500 = vmatmul.mubr.f32.gmra.mrb[0].mxu0 %v2258
    %v2501 = vpop.f32.mrb[0].mxu0
    %v2502 = vadd.f32 0.0, %v2501
    %v2503 = vpop.f32.mrb[0].mxu0
    %2504 = vmatprep.mubr.f32.mxu0 %v2369
    %2505 = vmatmul.mubr.f32.gmra.mrb[0].mxu0 %v2261
    %v2506 = vpop.f32.mrb[0].mxu0
    %v2507 = vadd.f32 0.0, %v2506
    %v2508 = vpop.f32.mrb[0].mxu0
    %2509 = vmatprep.mubr.f32.mxu0 %v2372
    %2510 = vmatmul.mubr.f32.gmra.mrb[0].mxu0 %v2264
    %v2511 = vpop.f32.mrb[0].mxu0
    %v2512 = vadd.f32 0.0, %v2511
    %v2513 = vpop.f32.mrb[0].mxu0
    %2514 = vmatprep.mubr.f32.mxu0 %v2375
    %2515 = vmatmul.mubr.f32.gmra.mrb[0].mxu0 %v2267
    %v2516 = vpop.f32.mrb[0].mxu0
    %v2517 = vadd.f32 0.0, %v2516
    %v2518 = vpop.f32.mrb[0].mxu0
    %2519 = vmatprep.mubr.f32.mxu0 %v2378
    %2520 = vmatmul.mubr.f32.gmra.mrb[0].mxu0 %v2270
    %v2521 = vpop.f32.mrb[0].mxu0
    %v2522 = vadd.f32 0.0, %v2521
    %v2523 = vpop.f32.mrb[0].mxu0
    %2524 = vmatprep.mubr.f32.mxu0 %v2381
    %2525 = vmatmul.mubr.f32.gmra.mrb[0].mxu0 %v2273
    %v2526 = vpop.f32.mrb[0].mxu0
    %v2527 = vadd.f32 0.0, %v2526
    %v2528 = vpop.f32.mrb[0].mxu0
    %2529 = vmatprep.mubr.f32.mxu0 %v2384
    %2530 = vmatmul.mubr.f32.gmra.mrb[0].mxu0 %v2276
    %v2531 = vpop.f32.mrb[0].mxu0
    %v2532 = vadd.f32 0.0, %v2531
    %v2533 = vpop.f32.mrb[0].mxu0
    %2534 = vmatprep.mubr.f32.mxu0 %v2387
    %2535 = vmatmul.mubr.f32.gmra.mrb[0].mxu0 %v2279
    %v2536 = vpop.f32.mrb[0].mxu0
    %v2537 = vadd.f32 0.0, %v2536
    %v2538 = vpop.f32.mrb[0].mxu0
    %2539 = vmatprep.mubr.f32.mxu0 %v2390
    %2540 = vmatmul.mubr.f32.gmra.mrb[0].mxu0 %v2282
    %v2541 = vpop.f32.mrb[0].mxu0
    %v2542 = vadd.f32 0.0, %v2541
    %v2543 = vpop.f32.mrb[0].mxu0
    %2544 = vmatprep.mubr.f32.mxu0 %v2393
    %2545 = vmatmul.mubr.f32.gmra.mrb[0].mxu0 %v2285
    %v2546 = vpop.f32.mrb[0].mxu0
    %v2547 = vadd.f32 0.0, %v2546
    %v2548 = vpop.f32.mrb[0].mxu0
    %2549 = vdwg.mxu0
    %v2551 = vsel %vm1627, %v2462, 0
    %v2554 = vsel %vm1627, %v2467, 0
    %v2557 = vsel %vm1627, %v2472, 0
    %v2560 = vsel %vm1627, %v2477, 0
    %v2563 = vsel %vm1627, %v2482, 0
    %v2566 = vsel %vm1627, %v2487, 0
    %v2569 = vsel %vm1627, %v2492, 0
    %v2572 = vsel %vm1627, %v2497, 0
    %v2575 = vsel %vm1627, %v2502, 0
    %v2578 = vsel %vm1627, %v2507, 0
    %v2581 = vsel %vm1627, %v2512, 0
    %v2584 = vsel %vm1627, %v2517, 0
    %v2587 = vsel %vm1627, %v2522, 0
    %v2590 = vsel %vm1627, %v2527, 0
    %v2593 = vsel %vm1627, %v2532, 0
    %v2596 = vsel %vm1627, %v2537, 0
    %v2599 = vsel %vm1627, %v2542, 0
    %v2602 = vsel %vm1627, %v2547, 0
    %2604 = vmatprep.subr.mxu0 0.0
    %2605 = vmatpush1.msra.mxu0 %v430
    %2606 = vmatprep.subr.mxu0 0.0
    %2607 = vmatpush1.msra.mxu0 %v431
    %2608 = vmatprep.subr.mxu0 0.0
    %2609 = vmatpush1.msra.mxu0 0.0
    %2610 = vmatprep.subr.mxu0 0.0
    %2611 = vmatpush1.msra.mxu0 0.0
    %2612 = vmatprep.subr.mxu0 0.0
    %2613 = vmatpush1.msra.mxu0 0.0
    %2614 = vmatprep.subr.mxu0 0.0
    %2615 = vmatpush1.msra.mxu0 0.0
    %2616 = vmatprep.subr.mxu0 0.0
    %2617 = vmatpush1.msra.mxu0 0.0
    %2618 = vmatprep.subr.mxu0 0.0
    %2619 = vmatpush1.msra.mxu0 0.0
    %2620 = vmatprep.subr.mxu0 0.0
    %2621 = vmatpush1.msra.mxu0 0.0
    %2622 = vmatprep.subr.mxu0 0.0
    %2623 = vmatpush1.msra.mxu0 0.0
    %2624 = vmatprep.subr.mxu0 0.0
    %2625 = vmatpush1.msra.mxu0 0.0
    %2626 = vmatprep.subr.mxu0 0.0
    %2627 = vmatpush1.msra.mxu0 0.0
    %2628 = vmatprep.subr.mxu0 0.0
    %2629 = vmatpush1.msra.mxu0 0.0
    %2630 = vmatprep.subr.mxu0 0.0
    %2631 = vmatpush1.msra.mxu0 0.0
    %2632 = vmatprep.subr.mxu0 0.0
    %2633 = vmatpush1.msra.mxu0 0.0
    %2634 = vmatprep.subr.mxu0 0.0
    %2635 = vmatpush1.msra.mxu0 0.0
    %2636 = vmatprep.subr.mxu0 0.0
    %2637 = vmatpush1.msra.mxu0 0.0
    %2638 = vmatprep.subr.mxu0 0.0
    %2639 = vmatpush1.msra.mxu0 0.0
    %2640 = vmatprep.subr.mxu0 0.0
    %2641 = vmatpush1.msra.mxu0 0.0
    %2642 = vmatprep.subr.mxu0 0.0
    %2643 = vmatpush1.msra.mxu0 0.0
    %2644 = vmatprep.subr.mxu0 0.0
    %2645 = vmatpush1.msra.mxu0 0.0
    %2646 = vmatprep.subr.mxu0 0.0
    %2647 = vmatpush1.msra.mxu0 0.0
    %2648 = vmatprep.subr.mxu0 0.0
    %2649 = vmatpush1.msra.mxu0 0.0
    %2650 = vmatprep.subr.mxu0 0.0
    %2651 = vmatpush1.msra.mxu0 0.0
    %2652 = vmatprep.subr.mxu0 0.0
    %2653 = vmatpush1.msra.mxu0 0.0
    %2654 = vmatprep.subr.mxu0 0.0
    %2655 = vmatpush1.msra.mxu0 0.0
    %2656 = vmatprep.subr.mxu0 0.0
    %2657 = vmatpush1.msra.mxu0 0.0
    %2658 = vmatprep.subr.mxu0 0.0
    %2659 = vmatpush1.msra.mxu0 0.0
    %2660 = vmatprep.subr.mxu0 0.0
    %2661 = vmatpush1.msra.mxu0 0.0
    %2662 = vmatprep.subr.mxu0 0.0
    %2663 = vmatpush1.msra.mxu0 0.0
    %2664 = vmatprep.subr.mxu0 0.0
    %2665 = vmatpush1.msra.mxu0 0.0
    %2666 = vmatprep.subr.mxu0 0.0
    %2667 = vmatpush1.msra.mxu0 0.0
    %2668 = vmatprep.mubr.f32.mxu0 0.0
    %2669 = vmatmul.mubr.f32.gmra.mrb[0].mxu0 %v2551
    %v2670 = vpop.f32.mrb[0].mxu0
    %v2671 = vadd.f32 0.0, %v2670
    %v2672 = vpop.f32.mrb[0].mxu0
    %2673 = vmatprep.mubr.f32.mxu0 0.0
    %2674 = vmatmul.mubr.f32.gmra.mrb[0].mxu0 %v2554
    %v2675 = vpop.f32.mrb[0].mxu0
    %v2676 = vadd.f32 0.0, %v2675
    %v2677 = vpop.f32.mrb[0].mxu0
    %2678 = vmatprep.mubr.f32.mxu0 0.0
    %2679 = vmatmul.mubr.f32.gmra.mrb[0].mxu0 %v2557
    %v2680 = vpop.f32.mrb[0].mxu0
    %v2681 = vadd.f32 0.0, %v2680
    %v2682 = vpop.f32.mrb[0].mxu0
    %2683 = vmatprep.mubr.f32.mxu0 0.0
    %2684 = vmatmul.mubr.f32.gmra.mrb[0].mxu0 %v2560
    %v2685 = vpop.f32.mrb[0].mxu0
    %v2686 = vadd.f32 0.0, %v2685
    %v2687 = vpop.f32.mrb[0].mxu0
    %2688 = vmatprep.mubr.f32.mxu0 0.0
    %2689 = vmatmul.mubr.f32.gmra.mrb[0].mxu0 %v2563
    %v2690 = vpop.f32.mrb[0].mxu0
    %v2691 = vadd.f32 0.0, %v2690
    %v2692 = vpop.f32.mrb[0].mxu0
    %2693 = vmatprep.mubr.f32.mxu0 0.0
    %2694 = vmatmul.mubr.f32.gmra.mrb[0].mxu0 %v2566
    %v2695 = vpop.f32.mrb[0].mxu0
    %v2696 = vadd.f32 0.0, %v2695
    %v2697 = vpop.f32.mrb[0].mxu0
    %2698 = vmatprep.mubr.f32.mxu0 0.0
    %2699 = vmatmul.mubr.f32.gmra.mrb[0].mxu0 %v2569
    %v2700 = vpop.f32.mrb[0].mxu0
    %v2701 = vadd.f32 0.0, %v2700
    %v2702 = vpop.f32.mrb[0].mxu0
    %2703 = vmatprep.mubr.f32.mxu0 0.0
    %2704 = vmatmul.mubr.f32.gmra.mrb[0].mxu0 %v2572
    %v2705 = vpop.f32.mrb[0].mxu0
    %v2706 = vadd.f32 0.0, %v2705
    %v2707 = vpop.f32.mrb[0].mxu0
    %2708 = vmatprep.mubr.f32.mxu0 0.0
    %2709 = vmatmul.mubr.f32.gmra.mrb[0].mxu0 %v2575
    %v2710 = vpop.f32.mrb[0].mxu0
    %v2711 = vadd.f32 0.0, %v2710
    %v2712 = vpop.f32.mrb[0].mxu0
    %2713 = vmatprep.mubr.f32.mxu0 0.0
    %2714 = vmatmul.mubr.f32.gmra.mrb[0].mxu0 %v2578
    %v2715 = vpop.f32.mrb[0].mxu0
    %v2716 = vadd.f32 0.0, %v2715
    %v2717 = vpop.f32.mrb[0].mxu0
    %2718 = vmatprep.mubr.f32.mxu0 0.0
    %2719 = vmatmul.mubr.f32.gmra.mrb[0].mxu0 %v2581
    %v2720 = vpop.f32.mrb[0].mxu0
    %v2721 = vadd.f32 0.0, %v2720
    %v2722 = vpop.f32.mrb[0].mxu0
    %2723 = vmatprep.mubr.f32.mxu0 0.0
    %2724 = vmatmul.mubr.f32.gmra.mrb[0].mxu0 %v2584
    %v2725 = vpop.f32.mrb[0].mxu0
    %v2726 = vadd.f32 0.0, %v2725
    %v2727 = vpop.f32.mrb[0].mxu0
    %2728 = vmatprep.mubr.f32.mxu0 0.0
    %2729 = vmatmul.mubr.f32.gmra.mrb[0].mxu0 %v2587
    %v2730 = vpop.f32.mrb[0].mxu0
    %v2731 = vadd.f32 0.0, %v2730
    %v2732 = vpop.f32.mrb[0].mxu0
    %2733 = vmatprep.mubr.f32.mxu0 0.0
    %2734 = vmatmul.mubr.f32.gmra.mrb[0].mxu0 %v2590
    %v2735 = vpop.f32.mrb[0].mxu0
    %v2736 = vadd.f32 0.0, %v2735
    %v2737 = vpop.f32.mrb[0].mxu0
    %2738 = vmatprep.mubr.f32.mxu0 0.0
    %2739 = vmatmul.mubr.f32.gmra.mrb[0].mxu0 %v2593
    %v2740 = vpop.f32.mrb[0].mxu0
    %v2741 = vadd.f32 0.0, %v2740
    %v2742 = vpop.f32.mrb[0].mxu0
    %2743 = vmatprep.mubr.f32.mxu0 0.0
    %2744 = vmatmul.mubr.f32.gmra.mrb[0].mxu0 %v2596
    %v2745 = vpop.f32.mrb[0].mxu0
    %v2746 = vadd.f32 0.0, %v2745
    %v2747 = vpop.f32.mrb[0].mxu0
    %2748 = vmatprep.mubr.f32.mxu0 0.0
    %2749 = vmatmul.mubr.f32.gmra.mrb[0].mxu0 %v2599
    %v2750 = vpop.f32.mrb[0].mxu0
    %v2751 = vadd.f32 0.0, %v2750
    %v2752 = vpop.f32.mrb[0].mxu0
    %2753 = vmatprep.mubr.f32.mxu0 0.0
    %2754 = vmatmul.mubr.f32.gmra.mrb[0].mxu0 %v2602
    %v2755 = vpop.f32.mrb[0].mxu0
    %v2756 = vadd.f32 0.0, %v2755
    %v2757 = vpop.f32.mrb[0].mxu0
    %2758 = vdwg.mxu0
    %v2759 = vadd.f32 %v1571, %v2671
    %v2760 = vadd.f32 %v1571, %v2676
    %v2761 = vadd.f32 %v1571, %v2681
    %v2762 = vadd.f32 %v1571, %v2686
    %v2763 = vadd.f32 %v1571, %v2691
    %v2764 = vadd.f32 %v1571, %v2696
    %v2765 = vadd.f32 %v1571, %v2701
    %v2766 = vadd.f32 %v1571, %v2706
    %v2767 = vadd.f32 %v1571, %v2711
    %v2768 = vadd.f32 %v1571, %v2716
    %v2769 = vadd.f32 %v1571, %v2721
    %v2770 = vadd.f32 %v1571, %v2726
    %v2771 = vadd.f32 %v1571, %v2731
    %v2772 = vadd.f32 %v1571, %v2736
    %v2773 = vadd.f32 %v1571, %v2741
    %v2774 = vadd.f32 %v1571, %v2746
    %v2775 = vadd.f32 %v1571, %v2751
    %v2776 = vadd.f32 %v1571, %v2756
    %2777 = vrot.lane.b32.xlu0 %v1479, 112
    %v2778 = vpop.permute.xlu0 %2777
    %2779 = vrot.lane.b32.xlu0 %v1484, 112
    %v2780 = vpop.permute.xlu0 %2779
    %2781 = vrot.lane.b32.xlu0 %v1489, 112
    %v2782 = vpop.permute.xlu0 %2781
    %2783 = vrot.lane.b32.xlu0 %v1494, 112
    %v2784 = vpop.permute.xlu0 %2783
    %2785 = vrot.lane.b32.xlu0 %v1499, 112
    %v2786 = vpop.permute.xlu0 %2785
    %2787 = vrot.lane.b32.xlu0 %v1504, 112
    %v2788 = vpop.permute.xlu0 %2787
    %2789 = vrot.lane.b32.xlu0 %v1509, 112
    %v2790 = vpop.permute.xlu0 %2789
    %2791 = vrot.lane.b32.xlu0 %v1514, 112
    %v2792 = vpop.permute.xlu0 %2791
    %2793 = vrot.lane.b32.xlu0 %v1519, 112
    %v2794 = vpop.permute.xlu0 %2793
    %2795 = vrot.lane.b32.xlu0 %v1524, 112
    %v2796 = vpop.permute.xlu0 %2795
    %2797 = vrot.lane.b32.xlu0 %v1529, 112
    %v2798 = vpop.permute.xlu0 %2797
    %2799 = vrot.lane.b32.xlu0 %v1534, 112
    %v2800 = vpop.permute.xlu0 %2799
    %2801 = vrot.lane.b32.xlu0 %v1539, 112
    %v2802 = vpop.permute.xlu0 %2801
    %2803 = vrot.lane.b32.xlu0 %v1544, 112
    %v2804 = vpop.permute.xlu0 %2803
    %2805 = vrot.lane.b32.xlu0 %v1549, 112
    %v2806 = vpop.permute.xlu0 %2805
    %2807 = vrot.lane.b32.xlu0 %v1554, 112
    %v2808 = vpop.permute.xlu0 %2807
    %2809 = vrot.lane.b32.xlu0 %v1559, 112
    %v2810 = vpop.permute.xlu0 %2809
    %2811 = vrot.lane.b32.xlu0 %v1564, 112
    %v2812 = vpop.permute.xlu0 %2811
    %2813 = vrot.lane.b32.xlu0 %v1479, 80
    %v2814 = vpop.permute.xlu0 %2813
    %2815 = vrot.lane.b32.xlu0 %v1484, 80
    %v2816 = vpop.permute.xlu0 %2815
    %2817 = vrot.lane.b32.xlu0 %v1489, 80
    %v2818 = vpop.permute.xlu0 %2817
    %2819 = vrot.lane.b32.xlu0 %v1494, 80
    %v2820 = vpop.permute.xlu0 %2819
    %2821 = vrot.lane.b32.xlu0 %v1499, 80
    %v2822 = vpop.permute.xlu0 %2821
    %2823 = vrot.lane.b32.xlu0 %v1504, 80
    %v2824 = vpop.permute.xlu0 %2823
    %2825 = vrot.lane.b32.xlu0 %v1509, 80
    %v2826 = vpop.permute.xlu0 %2825
    %2827 = vrot.lane.b32.xlu0 %v1514, 80
    %v2828 = vpop.permute.xlu0 %2827
    %2829 = vrot.lane.b32.xlu0 %v1519, 80
    %v2830 = vpop.permute.xlu0 %2829
    %2831 = vrot.lane.b32.xlu0 %v1524, 80
    %v2832 = vpop.permute.xlu0 %2831
    %2833 = vrot.lane.b32.xlu0 %v1529, 80
    %v2834 = vpop.permute.xlu0 %2833
    %2835 = vrot.lane.b32.xlu0 %v1534, 80
    %v2836 = vpop.permute.xlu0 %2835
    %2837 = vrot.lane.b32.xlu0 %v1539, 80
    %v2838 = vpop.permute.xlu0 %2837
    %2839 = vrot.lane.b32.xlu0 %v1544, 80
    %v2840 = vpop.permute.xlu0 %2839
    %2841 = vrot.lane.b32.xlu0 %v1549, 80
    %v2842 = vpop.permute.xlu0 %2841
    %2843 = vrot.lane.b32.xlu0 %v1554, 80
    %v2844 = vpop.permute.xlu0 %2843
    %2845 = vrot.lane.b32.xlu0 %v1559, 80
    %v2846 = vpop.permute.xlu0 %2845
    %2847 = vrot.lane.b32.xlu0 %v1564, 80
    %v2848 = vpop.permute.xlu0 %2847
    %v2849 = vsel %vm1627, %v2778, 0
    %v2851 = vsel %vm1627, %v2780, 0
    %v2853 = vsel %vm1627, %v2782, 0
    %v2855 = vsel %vm1627, %v2784, 0
    %v2857 = vsel %vm1627, %v2786, 0
    %v2859 = vsel %vm1627, %v2788, 0
    %v2861 = vsel %vm1627, %v2790, 0
    %v2863 = vsel %vm1627, %v2792, 0
    %v2865 = vsel %vm1627, %v2794, 0
    %v2867 = vsel %vm1627, %v2796, 0
    %v2869 = vsel %vm1627, %v2798, 0
    %v2871 = vsel %vm1627, %v2800, 0
    %v2873 = vsel %vm1627, %v2802, 0
    %v2875 = vsel %vm1627, %v2804, 0
    %v2877 = vsel %vm1627, %v2806, 0
    %v2879 = vsel %vm1627, %v2808, 0
    %v2881 = vsel %vm1627, %v2810, 0
    %v2883 = vsel %vm1627, %v2812, 0
    %v2885 = vsel %vm1627, %v2814, 0
    %v2887 = vsel %vm1627, %v2816, 0
    %v2889 = vsel %vm1627, %v2818, 0
    %v2891 = vsel %vm1627, %v2820, 0
    %v2893 = vsel %vm1627, %v2822, 0
    %v2895 = vsel %vm1627, %v2824, 0
    %v2897 = vsel %vm1627, %v2826, 0
    %v2899 = vsel %vm1627, %v2828, 0
    %v2901 = vsel %vm1627, %v2830, 0
    %v2903 = vsel %vm1627, %v2832, 0
    %v2905 = vsel %vm1627, %v2834, 0
    %v2907 = vsel %vm1627, %v2836, 0
    %v2909 = vsel %vm1627, %v2838, 0
    %v2911 = vsel %vm1627, %v2840, 0
    %v2913 = vsel %vm1627, %v2842, 0
    %v2915 = vsel %vm1627, %v2844, 0
    %v2917 = vsel %vm1627, %v2846, 0
    %v2919 = vsel %vm1627, %v2848, 0
    %2921 = vmatprep.subr.mxu0 0.0
    %2922 = vmatpush1.xpose.msra.mxu0 %v2885
    %2923 = vmatprep.subr.mxu0 0.0
    %2924 = vmatpush1.xpose.msra.mxu0 %v2887
    %2925 = vmatprep.subr.mxu0 0.0
    %2926 = vmatpush1.xpose.msra.mxu0 %v2889
    %2927 = vmatprep.subr.mxu0 0.0
    %2928 = vmatpush1.xpose.msra.mxu0 %v2891
    %2929 = vmatprep.subr.mxu0 0.0
    %2930 = vmatpush1.xpose.msra.mxu0 %v2893
    %2931 = vmatprep.subr.mxu0 0.0
    %2932 = vmatpush1.xpose.msra.mxu0 %v2895
    %2933 = vmatprep.subr.mxu0 0.0
    %2934 = vmatpush1.xpose.msra.mxu0 %v2897
    %2935 = vmatprep.subr.mxu0 0.0
    %2936 = vmatpush1.xpose.msra.mxu0 %v2899
    %2937 = vmatprep.subr.mxu0 0.0
    %2938 = vmatpush1.xpose.msra.mxu0 %v2901
    %2939 = vmatprep.subr.mxu0 0.0
    %2940 = vmatpush1.xpose.msra.mxu0 %v2903
    %2941 = vmatprep.subr.mxu0 0.0
    %2942 = vmatpush1.xpose.msra.mxu0 %v2905
    %2943 = vmatprep.subr.mxu0 0.0
    %2944 = vmatpush1.xpose.msra.mxu0 %v2907
    %2945 = vmatprep.subr.mxu0 0.0
    %2946 = vmatpush1.xpose.msra.mxu0 %v2909
    %2947 = vmatprep.subr.mxu0 0.0
    %2948 = vmatpush1.xpose.msra.mxu0 %v2911
    %2949 = vmatprep.subr.mxu0 0.0
    %2950 = vmatpush1.xpose.msra.mxu0 %v2913
    %2951 = vmatprep.subr.mxu0 0.0
    %2952 = vmatpush1.xpose.msra.mxu0 %v2915
    %2953 = vmatprep.subr.mxu0 0.0
    %2954 = vmatpush1.xpose.msra.mxu0 %v2917
    %2955 = vmatprep.subr.mxu0 0.0
    %2956 = vmatpush1.xpose.msra.mxu0 %v2919
    %2957 = vmatprep.subr.mxu0 0.0
    %2958 = vmatpush1.xpose.msra.mxu0 0.0
    %2959 = vmatprep.subr.mxu0 0.0
    %2960 = vmatpush1.xpose.msra.mxu0 0.0
    %2961 = vmatprep.subr.mxu0 0.0
    %2962 = vmatpush1.xpose.msra.mxu0 0.0
    %2963 = vmatprep.subr.mxu0 0.0
    %2964 = vmatpush1.xpose.msra.mxu0 0.0
    %2965 = vmatprep.subr.mxu0 0.0
    %2966 = vmatpush1.xpose.msra.mxu0 0.0
    %2967 = vmatprep.subr.mxu0 0.0
    %2968 = vmatpush1.xpose.msra.mxu0 0.0
    %2969 = vmatprep.subr.mxu0 0.0
    %2970 = vmatpush1.xpose.msra.mxu0 0.0
    %2971 = vmatprep.subr.mxu0 0.0
    %2972 = vmatpush1.xpose.msra.mxu0 0.0
    %2973 = vmatprep.subr.mxu0 0.0
    %2974 = vmatpush1.xpose.msra.mxu0 0.0
    %2975 = vmatprep.subr.mxu0 0.0
    %2976 = vmatpush1.xpose.msra.mxu0 0.0
    %2977 = vmatprep.subr.mxu0 0.0
    %2978 = vmatpush1.xpose.msra.mxu0 0.0
    %2979 = vmatprep.subr.mxu0 0.0
    %2980 = vmatpush1.xpose.msra.mxu0 0.0
    %2981 = vmatprep.subr.mxu0 0.0
    %2982 = vmatpush1.xpose.msra.mxu0 0.0
    %2983 = vmatprep.subr.mxu0 0.0
    %2984 = vmatpush1.xpose.msra.mxu0 0.0
    %2985 = vmatprep.mubr.f32.mxu0 0.0
    %2986 = vmatmul.mubr.f32.gmra.mrb[0].mxu0 %v2849
    %v2987 = vpop.f32.mrb[0].mxu0
    %v2988 = vadd.f32 0.0, %v2987
    %v2989 = vpop.f32.mrb[0].mxu0
    %v2990 = vadd.f32 0.0, %v2989
    %2991 = vmatprep.mubr.f32.mxu0 0.0
    %2992 = vmatmul.mubr.f32.gmra.mrb[0].mxu0 %v2851
    %v2993 = vpop.f32.mrb[0].mxu0
    %v2994 = vadd.f32 0.0, %v2993
    %v2995 = vpop.f32.mrb[0].mxu0
    %v2996 = vadd.f32 0.0, %v2995
    %2997 = vmatprep.mubr.f32.mxu0 0.0
    %2998 = vmatmul.mubr.f32.gmra.mrb[0].mxu0 %v2853
    %v2999 = vpop.f32.mrb[0].mxu0
    %v3000 = vadd.f32 0.0, %v2999
    %v3001 = vpop.f32.mrb[0].mxu0
    %v3002 = vadd.f32 0.0, %v3001
    %3003 = vmatprep.mubr.f32.mxu0 0.0
    %3004 = vmatmul.mubr.f32.gmra.mrb[0].mxu0 %v2855
    %v3005 = vpop.f32.mrb[0].mxu0
    %v3006 = vadd.f32 0.0, %v3005
    %v3007 = vpop.f32.mrb[0].mxu0
    %v3008 = vadd.f32 0.0, %v3007
    %3009 = vmatprep.mubr.f32.mxu0 0.0
    %3010 = vmatmul.mubr.f32.gmra.mrb[0].mxu0 %v2857
    %v3011 = vpop.f32.mrb[0].mxu0
    %v3012 = vadd.f32 0.0, %v3011
    %v3013 = vpop.f32.mrb[0].mxu0
    %v3014 = vadd.f32 0.0, %v3013
    %3015 = vmatprep.mubr.f32.mxu0 0.0
    %3016 = vmatmul.mubr.f32.gmra.mrb[0].mxu0 %v2859
    %v3017 = vpop.f32.mrb[0].mxu0
    %v3018 = vadd.f32 0.0, %v3017
    %v3019 = vpop.f32.mrb[0].mxu0
    %v3020 = vadd.f32 0.0, %v3019
    %3021 = vmatprep.mubr.f32.mxu0 0.0
    %3022 = vmatmul.mubr.f32.gmra.mrb[0].mxu0 %v2861
    %v3023 = vpop.f32.mrb[0].mxu0
    %v3024 = vadd.f32 0.0, %v3023
    %v3025 = vpop.f32.mrb[0].mxu0
    %v3026 = vadd.f32 0.0, %v3025
    %3027 = vmatprep.mubr.f32.mxu0 0.0
    %3028 = vmatmul.mubr.f32.gmra.mrb[0].mxu0 %v2863
    %v3029 = vpop.f32.mrb[0].mxu0
    %v3030 = vadd.f32 0.0, %v3029
    %v3031 = vpop.f32.mrb[0].mxu0
    %v3032 = vadd.f32 0.0, %v3031
    %3033 = vmatprep.mubr.f32.mxu0 0.0
    %3034 = vmatmul.mubr.f32.gmra.mrb[0].mxu0 %v2865
    %v3035 = vpop.f32.mrb[0].mxu0
    %v3036 = vadd.f32 0.0, %v3035
    %v3037 = vpop.f32.mrb[0].mxu0
    %v3038 = vadd.f32 0.0, %v3037
    %3039 = vmatprep.mubr.f32.mxu0 0.0
    %3040 = vmatmul.mubr.f32.gmra.mrb[0].mxu0 %v2867
    %v3041 = vpop.f32.mrb[0].mxu0
    %v3042 = vadd.f32 0.0, %v3041
    %v3043 = vpop.f32.mrb[0].mxu0
    %v3044 = vadd.f32 0.0, %v3043
    %3045 = vmatprep.mubr.f32.mxu0 0.0
    %3046 = vmatmul.mubr.f32.gmra.mrb[0].mxu0 %v2869
    %v3047 = vpop.f32.mrb[0].mxu0
    %v3048 = vadd.f32 0.0, %v3047
    %v3049 = vpop.f32.mrb[0].mxu0
    %v3050 = vadd.f32 0.0, %v3049
    %3051 = vmatprep.mubr.f32.mxu0 0.0
    %3052 = vmatmul.mubr.f32.gmra.mrb[0].mxu0 %v2871
    %v3053 = vpop.f32.mrb[0].mxu0
    %v3054 = vadd.f32 0.0, %v3053
    %v3055 = vpop.f32.mrb[0].mxu0
    %v3056 = vadd.f32 0.0, %v3055
    %3057 = vmatprep.mubr.f32.mxu0 0.0
    %3058 = vmatmul.mubr.f32.gmra.mrb[0].mxu0 %v2873
    %v3059 = vpop.f32.mrb[0].mxu0
    %v3060 = vadd.f32 0.0, %v3059
    %v3061 = vpop.f32.mrb[0].mxu0
    %v3062 = vadd.f32 0.0, %v3061
    %3063 = vmatprep.mubr.f32.mxu0 0.0
    %3064 = vmatmul.mubr.f32.gmra.mrb[0].mxu0 %v2875
    %v3065 = vpop.f32.mrb[0].mxu0
    %v3066 = vadd.f32 0.0, %v3065
    %v3067 = vpop.f32.mrb[0].mxu0
    %v3068 = vadd.f32 0.0, %v3067
    %3069 = vmatprep.mubr.f32.mxu0 0.0
    %3070 = vmatmul.mubr.f32.gmra.mrb[0].mxu0 %v2877
    %v3071 = vpop.f32.mrb[0].mxu0
    %v3072 = vadd.f32 0.0, %v3071
    %v3073 = vpop.f32.mrb[0].mxu0
    %v3074 = vadd.f32 0.0, %v3073
    %3075 = vmatprep.mubr.f32.mxu0 0.0
    %3076 = vmatmul.mubr.f32.gmra.mrb[0].mxu0 %v2879
    %v3077 = vpop.f32.mrb[0].mxu0
    %v3078 = vadd.f32 0.0, %v3077
    %v3079 = vpop.f32.mrb[0].mxu0
    %v3080 = vadd.f32 0.0, %v3079
    %3081 = vmatprep.mubr.f32.mxu0 0.0
    %3082 = vmatmul.mubr.f32.gmra.mrb[0].mxu0 %v2881
    %v3083 = vpop.f32.mrb[0].mxu0
    %v3084 = vadd.f32 0.0, %v3083
    %v3085 = vpop.f32.mrb[0].mxu0
    %v3086 = vadd.f32 0.0, %v3085
    %3087 = vmatprep.mubr.f32.mxu0 0.0
    %3088 = vmatmul.mubr.f32.gmra.mrb[0].mxu0 %v2883
    %v3089 = vpop.f32.mrb[0].mxu0
    %v3090 = vadd.f32 0.0, %v3089
    %v3091 = vpop.f32.mrb[0].mxu0
    %v3092 = vadd.f32 0.0, %v3091
    %3093 = vdwg.mxu0
    %v3094 = vmul.f32 %v2988, 0.25
    %v3095 = vmul.f32 %v2990, 0.25
    %v3096 = vmul.f32 %v2994, 0.25
    %v3097 = vmul.f32 %v2996, 0.25
    %v3098 = vmul.f32 %v3000, 0.25
    %v3099 = vmul.f32 %v3002, 0.25
    %v3100 = vmul.f32 %v3006, 0.25
    %v3101 = vmul.f32 %v3008, 0.25
    %v3102 = vmul.f32 %v3012, 0.25
    %v3103 = vmul.f32 %v3014, 0.25
    %v3104 = vmul.f32 %v3018, 0.25
    %v3105 = vmul.f32 %v3020, 0.25
    %v3106 = vmul.f32 %v3024, 0.25
    %v3107 = vmul.f32 %v3026, 0.25
    %v3108 = vmul.f32 %v3030, 0.25
    %v3109 = vmul.f32 %v3032, 0.25
    %v3110 = vmul.f32 %v3036, 0.25
    %v3111 = vmul.f32 %v3038, 0.25
    %v3112 = vmul.f32 %v3042, 0.25
    %v3113 = vmul.f32 %v3044, 0.25
    %v3114 = vmul.f32 %v3048, 0.25
    %v3115 = vmul.f32 %v3050, 0.25
    %v3116 = vmul.f32 %v3054, 0.25
    %v3117 = vmul.f32 %v3056, 0.25
    %v3118 = vmul.f32 %v3060, 0.25
    %v3119 = vmul.f32 %v3062, 0.25
    %v3120 = vmul.f32 %v3066, 0.25
    %v3121 = vmul.f32 %v3068, 0.25
    %v3122 = vmul.f32 %v3072, 0.25
    %v3123 = vmul.f32 %v3074, 0.25
    %v3124 = vmul.f32 %v3078, 0.25
    %v3125 = vmul.f32 %v3080, 0.25
    %v3126 = vmul.f32 %v3084, 0.25
    %v3127 = vmul.f32 %v3086, 0.25
    %v3128 = vmul.f32 %v3090, 0.25
    %v3129 = vmul.f32 %v3092, 0.25
    %v3130 = vadd.f32 %v3094, %v1909
    %v3131 = vadd.f32 %v3095, %v1910
    %v3132 = vadd.f32 %v3096, %v1911
    %v3133 = vadd.f32 %v3097, %v1912
    %v3134 = vadd.f32 %v3098, %v1913
    %v3135 = vadd.f32 %v3099, %v1914
    %v3136 = vadd.f32 %v3100, %v1915
    %v3137 = vadd.f32 %v3101, %v1916
    %v3138 = vadd.f32 %v3102, %v1917
    %v3139 = vadd.f32 %v3103, %v1918
    %v3140 = vadd.f32 %v3104, %v1919
    %v3141 = vadd.f32 %v3105, %v1920
    %v3142 = vadd.f32 %v3106, %v1921
    %v3143 = vadd.f32 %v3107, %v1922
    %v3144 = vadd.f32 %v3108, %v1923
    %v3145 = vadd.f32 %v3109, %v1924
    %v3146 = vadd.f32 %v3110, %v1925
    %v3147 = vadd.f32 %v3111, %v1926
    %v3148 = vadd.f32 %v3112, %v1927
    %v3149 = vadd.f32 %v3113, %v1928
    %v3150 = vadd.f32 %v3114, %v1929
    %v3151 = vadd.f32 %v3115, %v1930
    %v3152 = vadd.f32 %v3116, %v1931
    %v3153 = vadd.f32 %v3117, %v1932
    %v3154 = vadd.f32 %v3118, %v1933
    %v3155 = vadd.f32 %v3119, %v1934
    %v3156 = vadd.f32 %v3120, %v1935
    %v3157 = vadd.f32 %v3121, %v1936
    %v3158 = vadd.f32 %v3122, %v1937
    %v3159 = vadd.f32 %v3123, %v1938
    %v3160 = vadd.f32 %v3124, %v1939
    %v3161 = vadd.f32 %v3125, %v1940
    %v3162 = vadd.f32 %v3126, %v1941
    %v3163 = vadd.f32 %v3127, %v1942
    %v3164 = vadd.f32 %v3128, %v1943
    %v3165 = vadd.f32 %v3129, %v1944
    %v3166 = vsel %vm1627, %v3131, -inf
    %v3167 = vmax.f32 %v3130, %v3166
    %3168 = vmax.xlane.f32.xlu0 %v3167
    %v3169 = vpop.xlane.xlu0 %3168
    %v3170 = vsel %vm1627, %v3133, -inf
    %v3171 = vmax.f32 %v3132, %v3170
    %3172 = vmax.xlane.f32.xlu0 %v3171
    %v3173 = vpop.xlane.xlu0 %3172
    %v3174 = vsel %vm1627, %v3135, -inf
    %v3175 = vmax.f32 %v3134, %v3174
    %3176 = vmax.xlane.f32.xlu0 %v3175
    %v3177 = vpop.xlane.xlu0 %3176
    %v3178 = vsel %vm1627, %v3137, -inf
    %v3179 = vmax.f32 %v3136, %v3178
    %3180 = vmax.xlane.f32.xlu0 %v3179
    %v3181 = vpop.xlane.xlu0 %3180
    %v3182 = vsel %vm1627, %v3139, -inf
    %v3183 = vmax.f32 %v3138, %v3182
    %3184 = vmax.xlane.f32.xlu0 %v3183
    %v3185 = vpop.xlane.xlu0 %3184
    %v3186 = vsel %vm1627, %v3141, -inf
    %v3187 = vmax.f32 %v3140, %v3186
    %3188 = vmax.xlane.f32.xlu0 %v3187
    %v3189 = vpop.xlane.xlu0 %3188
    %v3190 = vsel %vm1627, %v3143, -inf
    %v3191 = vmax.f32 %v3142, %v3190
    %3192 = vmax.xlane.f32.xlu0 %v3191
    %v3193 = vpop.xlane.xlu0 %3192
    %v3194 = vsel %vm1627, %v3145, -inf
    %v3195 = vmax.f32 %v3144, %v3194
    %3196 = vmax.xlane.f32.xlu0 %v3195
    %v3197 = vpop.xlane.xlu0 %3196
    %v3198 = vsel %vm1627, %v3147, -inf
    %v3199 = vmax.f32 %v3146, %v3198
    %3200 = vmax.xlane.f32.xlu0 %v3199
    %v3201 = vpop.xlane.xlu0 %3200
    %v3202 = vsel %vm1627, %v3149, -inf
    %v3203 = vmax.f32 %v3148, %v3202
    %3204 = vmax.xlane.f32.xlu0 %v3203
    %v3205 = vpop.xlane.xlu0 %3204
    %v3206 = vsel %vm1627, %v3151, -inf
    %v3207 = vmax.f32 %v3150, %v3206
    %3208 = vmax.xlane.f32.xlu0 %v3207
    %v3209 = vpop.xlane.xlu0 %3208
    %v3210 = vsel %vm1627, %v3153, -inf
    %v3211 = vmax.f32 %v3152, %v3210
    %3212 = vmax.xlane.f32.xlu0 %v3211
    %v3213 = vpop.xlane.xlu0 %3212
    %v3214 = vsel %vm1627, %v3155, -inf
    %v3215 = vmax.f32 %v3154, %v3214
    %3216 = vmax.xlane.f32.xlu0 %v3215
    %v3217 = vpop.xlane.xlu0 %3216
    %v3218 = vsel %vm1627, %v3157, -inf
    %v3219 = vmax.f32 %v3156, %v3218
    %3220 = vmax.xlane.f32.xlu0 %v3219
    %v3221 = vpop.xlane.xlu0 %3220
    %v3222 = vsel %vm1627, %v3159, -inf
    %v3223 = vmax.f32 %v3158, %v3222
    %3224 = vmax.xlane.f32.xlu0 %v3223
    %v3225 = vpop.xlane.xlu0 %3224
    %v3226 = vsel %vm1627, %v3161, -inf
    %v3227 = vmax.f32 %v3160, %v3226
    %3228 = vmax.xlane.f32.xlu0 %v3227
    %v3229 = vpop.xlane.xlu0 %3228
    %v3230 = vsel %vm1627, %v3163, -inf
    %v3231 = vmax.f32 %v3162, %v3230
    %3232 = vmax.xlane.f32.xlu0 %v3231
    %v3233 = vpop.xlane.xlu0 %3232
    %v3234 = vsel %vm1627, %v3165, -inf
    %v3235 = vmax.f32 %v3164, %v3234
    %3236 = vmax.xlane.f32.xlu0 %v3235
    %v3237 = vpop.xlane.xlu0 %3236
    %v3238 = vsub.f32 %v3130, %v3169
    %v3239 = vsub.f32 %v3131, %v3169
    %v3240 = vsub.f32 %v3132, %v3173
    %v3241 = vsub.f32 %v3133, %v3173
    %v3242 = vsub.f32 %v3134, %v3177
    %v3243 = vsub.f32 %v3135, %v3177
    %v3244 = vsub.f32 %v3136, %v3181
    %v3245 = vsub.f32 %v3137, %v3181
    %v3246 = vsub.f32 %v3138, %v3185
    %v3247 = vsub.f32 %v3139, %v3185
    %v3248 = vsub.f32 %v3140, %v3189
    %v3249 = vsub.f32 %v3141, %v3189
    %v3250 = vsub.f32 %v3142, %v3193
    %v3251 = vsub.f32 %v3143, %v3193
    %v3252 = vsub.f32 %v3144, %v3197
    %v3253 = vsub.f32 %v3145, %v3197
    %v3254 = vsub.f32 %v3146, %v3201
    %v3255 = vsub.f32 %v3147, %v3201
    %v3256 = vsub.f32 %v3148, %v3205
    %v3257 = vsub.f32 %v3149, %v3205
    %v3258 = vsub.f32 %v3150, %v3209
    %v3259 = vsub.f32 %v3151, %v3209
    %v3260 = vsub.f32 %v3152, %v3213
    %v3261 = vsub.f32 %v3153, %v3213
    %v3262 = vsub.f32 %v3154, %v3217
    %v3263 = vsub.f32 %v3155, %v3217
    %v3264 = vsub.f32 %v3156, %v3221
    %v3265 = vsub.f32 %v3157, %v3221
    %v3266 = vsub.f32 %v3158, %v3225
    %v3267 = vsub.f32 %v3159, %v3225
    %v3268 = vsub.f32 %v3160, %v3229
    %v3269 = vsub.f32 %v3161, %v3229
    %v3270 = vsub.f32 %v3162, %v3233
    %v3271 = vsub.f32 %v3163, %v3233
    %v3272 = vsub.f32 %v3164, %v3237
    %v3273 = vsub.f32 %v3165, %v3237
    %v3274 = vmul.f32 %v3238, 1.442695
    %v3275 = vpow.pop %v3274
    %v3276 = vmul.f32 %v3239, 1.442695
    %v3277 = vpow.pop %v3276
    %v3278 = vmul.f32 %v3240, 1.442695
    %v3279 = vpow.pop %v3278
    %v3280 = vmul.f32 %v3241, 1.442695
    %v3281 = vpow.pop %v3280
    %v3282 = vmul.f32 %v3242, 1.442695
    %v3283 = vpow.pop %v3282
    %v3284 = vmul.f32 %v3243, 1.442695
    %v3285 = vpow.pop %v3284
    %v3286 = vmul.f32 %v3244, 1.442695
    %v3287 = vpow.pop %v3286
    %v3288 = vmul.f32 %v3245, 1.442695
    %v3289 = vpow.pop %v3288
    %v3290 = vmul.f32 %v3246, 1.442695
    %v3291 = vpow.pop %v3290
    %v3292 = vmul.f32 %v3247, 1.442695
    %v3293 = vpow.pop %v3292
    %v3294 = vmul.f32 %v3248, 1.442695
    %v3295 = vpow.pop %v3294
    %v3296 = vmul.f32 %v3249, 1.442695
    %v3297 = vpow.pop %v3296
    %v3298 = vmul.f32 %v3250, 1.442695
    %v3299 = vpow.pop %v3298
    %v3300 = vmul.f32 %v3251, 1.442695
    %v3301 = vpow.pop %v3300
    %v3302 = vmul.f32 %v3252, 1.442695
    %v3303 = vpow.pop %v3302
    %v3304 = vmul.f32 %v3253, 1.442695
    %v3305 = vpow.pop %v3304
    %v3306 = vmul.f32 %v3254, 1.442695
    %v3307 = vpow.pop %v3306
    %v3308 = vmul.f32 %v3255, 1.442695
    %v3309 = vpow.pop %v3308
    %v3310 = vmul.f32 %v3256, 1.442695
    %v3311 = vpow.pop %v3310
    %v3312 = vmul.f32 %v3257, 1.442695
    %v3313 = vpow.pop %v3312
    %v3314 = vmul.f32 %v3258, 1.442695
    %v3315 = vpow.pop %v3314
    %v3316 = vmul.f32 %v3259, 1.442695
    %v3317 = vpow.pop %v3316
    %v3318 = vmul.f32 %v3260, 1.442695
    %v3319 = vpow.pop %v3318
    %v3320 = vmul.f32 %v3261, 1.442695
    %v3321 = vpow.pop %v3320
    %v3322 = vmul.f32 %v3262, 1.442695
    %v3323 = vpow.pop %v3322
    %v3324 = vmul.f32 %v3263, 1.442695
    %v3325 = vpow.pop %v3324
    %v3326 = vmul.f32 %v3264, 1.442695
    %v3327 = vpow.pop %v3326
    %v3328 = vmul.f32 %v3265, 1.442695
    %v3329 = vpow.pop %v3328
    %v3330 = vmul.f32 %v3266, 1.442695
    %v3331 = vpow.pop %v3330
    %v3332 = vmul.f32 %v3267, 1.442695
    %v3333 = vpow.pop %v3332
    %v3334 = vmul.f32 %v3268, 1.442695
    %v3335 = vpow.pop %v3334
    %v3336 = vmul.f32 %v3269, 1.442695
    %v3337 = vpow.pop %v3336
    %v3338 = vmul.f32 %v3270, 1.442695
    %v3339 = vpow.pop %v3338
    %v3340 = vmul.f32 %v3271, 1.442695
    %v3341 = vpow.pop %v3340
    %v3342 = vmul.f32 %v3272, 1.442695
    %v3343 = vpow.pop %v3342
    %v3344 = vmul.f32 %v3273, 1.442695
    %v3345 = vpow.pop %v3344
    %v3346 = vsel %vm1627, %v3277, 0.0
    %v3347 = vadd.f32 %v3275, %v3346
    %3348 = vadd.xlane.f32.xlu0 %v3347
    %v3349 = vpop.xlane.xlu0 %3348
    %v3350 = vsel %vm1627, %v3281, 0.0
    %v3351 = vadd.f32 %v3279, %v3350
    %3352 = vadd.xlane.f32.xlu0 %v3351
    %v3353 = vpop.xlane.xlu0 %3352
    %v3354 = vsel %vm1627, %v3285, 0.0
    %v3355 = vadd.f32 %v3283, %v3354
    %3356 = vadd.xlane.f32.xlu0 %v3355
    %v3357 = vpop.xlane.xlu0 %3356
    %v3358 = vsel %vm1627, %v3289, 0.0
    %v3359 = vadd.f32 %v3287, %v3358
    %3360 = vadd.xlane.f32.xlu0 %v3359
    %v3361 = vpop.xlane.xlu0 %3360
    %v3362 = vsel %vm1627, %v3293, 0.0
    %v3363 = vadd.f32 %v3291, %v3362
    %3364 = vadd.xlane.f32.xlu0 %v3363
    %v3365 = vpop.xlane.xlu0 %3364
    %v3366 = vsel %vm1627, %v3297, 0.0
    %v3367 = vadd.f32 %v3295, %v3366
    %3368 = vadd.xlane.f32.xlu0 %v3367
    %v3369 = vpop.xlane.xlu0 %3368
    %v3370 = vsel %vm1627, %v3301, 0.0
    %v3371 = vadd.f32 %v3299, %v3370
    %3372 = vadd.xlane.f32.xlu0 %v3371
    %v3373 = vpop.xlane.xlu0 %3372
    %v3374 = vsel %vm1627, %v3305, 0.0
    %v3375 = vadd.f32 %v3303, %v3374
    %3376 = vadd.xlane.f32.xlu0 %v3375
    %v3377 = vpop.xlane.xlu0 %3376
    %v3378 = vsel %vm1627, %v3309, 0.0
    %v3379 = vadd.f32 %v3307, %v3378
    %3380 = vadd.xlane.f32.xlu0 %v3379
    %v3381 = vpop.xlane.xlu0 %3380
    %v3382 = vsel %vm1627, %v3313, 0.0
    %v3383 = vadd.f32 %v3311, %v3382
    %3384 = vadd.xlane.f32.xlu0 %v3383
    %v3385 = vpop.xlane.xlu0 %3384
    %v3386 = vsel %vm1627, %v3317, 0.0
    %v3387 = vadd.f32 %v3315, %v3386
    %3388 = vadd.xlane.f32.xlu0 %v3387
    %v3389 = vpop.xlane.xlu0 %3388
    %v3390 = vsel %vm1627, %v3321, 0.0
    %v3391 = vadd.f32 %v3319, %v3390
    %3392 = vadd.xlane.f32.xlu0 %v3391
    %v3393 = vpop.xlane.xlu0 %3392
    %v3394 = vsel %vm1627, %v3325, 0.0
    %v3395 = vadd.f32 %v3323, %v3394
    %3396 = vadd.xlane.f32.xlu0 %v3395
    %v3397 = vpop.xlane.xlu0 %3396
    %v3398 = vsel %vm1627, %v3329, 0.0
    %v3399 = vadd.f32 %v3327, %v3398
    %3400 = vadd.xlane.f32.xlu0 %v3399
    %v3401 = vpop.xlane.xlu0 %3400
    %v3402 = vsel %vm1627, %v3333, 0.0
    %v3403 = vadd.f32 %v3331, %v3402
    %3404 = vadd.xlane.f32.xlu0 %v3403
    %v3405 = vpop.xlane.xlu0 %3404
    %v3406 = vsel %vm1627, %v3337, 0.0
    %v3407 = vadd.f32 %v3335, %v3406
    %3408 = vadd.xlane.f32.xlu0 %v3407
    %v3409 = vpop.xlane.xlu0 %3408
    %v3410 = vsel %vm1627, %v3341, 0.0
    %v3411 = vadd.f32 %v3339, %v3410
    %3412 = vadd.xlane.f32.xlu0 %v3411
    %v3413 = vpop.xlane.xlu0 %3412
    %v3414 = vsel %vm1627, %v3345, 0.0
    %v3415 = vadd.f32 %v3343, %v3414
    %3416 = vadd.xlane.f32.xlu0 %v3415
    %v3417 = vpop.xlane.xlu0 %3416
    %v3418 = vrcp.pop %v3349
    %v3419 = vmul.f32 %v3275, %v3418
    %v3420 = vmul.f32 %v3277, %v3418
    %v3421 = vrcp.pop %v3353
    %v3422 = vmul.f32 %v3279, %v3421
    %v3423 = vmul.f32 %v3281, %v3421
    %v3424 = vrcp.pop %v3357
    %v3425 = vmul.f32 %v3283, %v3424
    %v3426 = vmul.f32 %v3285, %v3424
    %v3427 = vrcp.pop %v3361
    %v3428 = vmul.f32 %v3287, %v3427
    %v3429 = vmul.f32 %v3289, %v3427
    %v3430 = vrcp.pop %v3365
    %v3431 = vmul.f32 %v3291, %v3430
    %v3432 = vmul.f32 %v3293, %v3430
    %v3433 = vrcp.pop %v3369
    %v3434 = vmul.f32 %v3295, %v3433
    %v3435 = vmul.f32 %v3297, %v3433
    %v3436 = vrcp.pop %v3373
    %v3437 = vmul.f32 %v3299, %v3436
    %v3438 = vmul.f32 %v3301, %v3436
    %v3439 = vrcp.pop %v3377
    %v3440 = vmul.f32 %v3303, %v3439
    %v3441 = vmul.f32 %v3305, %v3439
    %v3442 = vrcp.pop %v3381
    %v3443 = vmul.f32 %v3307, %v3442
    %v3444 = vmul.f32 %v3309, %v3442
    %v3445 = vrcp.pop %v3385
    %v3446 = vmul.f32 %v3311, %v3445
    %v3447 = vmul.f32 %v3313, %v3445
    %v3448 = vrcp.pop %v3389
    %v3449 = vmul.f32 %v3315, %v3448
    %v3450 = vmul.f32 %v3317, %v3448
    %v3451 = vrcp.pop %v3393
    %v3452 = vmul.f32 %v3319, %v3451
    %v3453 = vmul.f32 %v3321, %v3451
    %v3454 = vrcp.pop %v3397
    %v3455 = vmul.f32 %v3323, %v3454
    %v3456 = vmul.f32 %v3325, %v3454
    %v3457 = vrcp.pop %v3401
    %v3458 = vmul.f32 %v3327, %v3457
    %v3459 = vmul.f32 %v3329, %v3457
    %v3460 = vrcp.pop %v3405
    %v3461 = vmul.f32 %v3331, %v3460
    %v3462 = vmul.f32 %v3333, %v3460
    %v3463 = vrcp.pop %v3409
    %v3464 = vmul.f32 %v3335, %v3463
    %v3465 = vmul.f32 %v3337, %v3463
    %v3466 = vrcp.pop %v3413
    %v3467 = vmul.f32 %v3339, %v3466
    %v3468 = vmul.f32 %v3341, %v3466
    %v3469 = vrcp.pop %v3417
    %v3470 = vmul.f32 %v3343, %v3469
    %v3471 = vmul.f32 %v3345, %v3469
    %3472 = vrot.lane.b32.xlu0 %v1479, 48
    %v3473 = vpop.permute.xlu0 %3472
    %3474 = vrot.lane.b32.xlu0 %v1484, 48
    %v3475 = vpop.permute.xlu0 %3474
    %3476 = vrot.lane.b32.xlu0 %v1489, 48
    %v3477 = vpop.permute.xlu0 %3476
    %3478 = vrot.lane.b32.xlu0 %v1494, 48
    %v3479 = vpop.permute.xlu0 %3478
    %3480 = vrot.lane.b32.xlu0 %v1499, 48
    %v3481 = vpop.permute.xlu0 %3480
    %3482 = vrot.lane.b32.xlu0 %v1504, 48
    %v3483 = vpop.permute.xlu0 %3482
    %3484 = vrot.lane.b32.xlu0 %v1509, 48
    %v3485 = vpop.permute.xlu0 %3484
    %3486 = vrot.lane.b32.xlu0 %v1514, 48
    %v3487 = vpop.permute.xlu0 %3486
    %3488 = vrot.lane.b32.xlu0 %v1519, 48
    %v3489 = vpop.permute.xlu0 %3488
    %3490 = vrot.lane.b32.xlu0 %v1524, 48
    %v3491 = vpop.permute.xlu0 %3490
    %3492 = vrot.lane.b32.xlu0 %v1529, 48
    %v3493 = vpop.permute.xlu0 %3492
    %3494 = vrot.lane.b32.xlu0 %v1534, 48
    %v3495 = vpop.permute.xlu0 %3494
    %3496 = vrot.lane.b32.xlu0 %v1539, 48
    %v3497 = vpop.permute.xlu0 %3496
    %3498 = vrot.lane.b32.xlu0 %v1544, 48
    %v3499 = vpop.permute.xlu0 %3498
    %3500 = vrot.lane.b32.xlu0 %v1549, 48
    %v3501 = vpop.permute.xlu0 %3500
    %3502 = vrot.lane.b32.xlu0 %v1554, 48
    %v3503 = vpop.permute.xlu0 %3502
    %3504 = vrot.lane.b32.xlu0 %v1559, 48
    %v3505 = vpop.permute.xlu0 %3504
    %3506 = vrot.lane.b32.xlu0 %v1564, 48
    %v3507 = vpop.permute.xlu0 %3506
    %v3527 = vsel %vm1627, %v3420, 0
    %v3530 = vsel %vm1627, %v3423, 0
    %v3533 = vsel %vm1627, %v3426, 0
    %v3536 = vsel %vm1627, %v3429, 0
    %v3539 = vsel %vm1627, %v3432, 0
    %v3542 = vsel %vm1627, %v3435, 0
    %v3545 = vsel %vm1627, %v3438, 0
    %v3548 = vsel %vm1627, %v3441, 0
    %v3551 = vsel %vm1627, %v3444, 0
    %v3554 = vsel %vm1627, %v3447, 0
    %v3557 = vsel %vm1627, %v3450, 0
    %v3560 = vsel %vm1627, %v3453, 0
    %v3563 = vsel %vm1627, %v3456, 0
    %v3566 = vsel %vm1627, %v3459, 0
    %v3569 = vsel %vm1627, %v3462, 0
    %v3572 = vsel %vm1627, %v3465, 0
    %v3575 = vsel %vm1627, %v3468, 0
    %v3578 = vsel %vm1627, %v3471, 0
    %3580 = vmatprep.subr.mxu0 0.0
    %3581 = vmatpush1.msra.mxu0 %v3473
    %3582 = vmatprep.subr.mxu0 0.0
    %3583 = vmatpush1.msra.mxu0 %v3475
    %3584 = vmatprep.subr.mxu0 0.0
    %3585 = vmatpush1.msra.mxu0 %v3477
    %3586 = vmatprep.subr.mxu0 0.0
    %3587 = vmatpush1.msra.mxu0 %v3479
    %3588 = vmatprep.subr.mxu0 0.0
    %3589 = vmatpush1.msra.mxu0 %v3481
    %3590 = vmatprep.subr.mxu0 0.0
    %3591 = vmatpush1.msra.mxu0 %v3483
    %3592 = vmatprep.subr.mxu0 0.0
    %3593 = vmatpush1.msra.mxu0 %v3485
    %3594 = vmatprep.subr.mxu0 0.0
    %3595 = vmatpush1.msra.mxu0 %v3487
    %3596 = vmatprep.subr.mxu0 0.0
    %3597 = vmatpush1.msra.mxu0 %v3489
    %3598 = vmatprep.subr.mxu0 0.0
    %3599 = vmatpush1.msra.mxu0 %v3491
    %3600 = vmatprep.subr.mxu0 0.0
    %3601 = vmatpush1.msra.mxu0 %v3493
    %3602 = vmatprep.subr.mxu0 0.0
    %3603 = vmatpush1.msra.mxu0 %v3495
    %3604 = vmatprep.subr.mxu0 0.0
    %3605 = vmatpush1.msra.mxu0 %v3497
    %3606 = vmatprep.subr.mxu0 0.0
    %3607 = vmatpush1.msra.mxu0 %v3499
    %3608 = vmatprep.subr.mxu0 0.0
    %3609 = vmatpush1.msra.mxu0 %v3501
    %3610 = vmatprep.subr.mxu0 0.0
    %3611 = vmatpush1.msra.mxu0 %v3503
    %3612 = vmatprep.subr.mxu0 0.0
    %3613 = vmatpush1.msra.mxu0 %v3505
    %3614 = vmatprep.subr.mxu0 0.0
    %3615 = vmatpush1.msra.mxu0 %v3507
    %3616 = vmatprep.subr.mxu0 0.0
    %3617 = vmatpush1.msra.mxu0 0.0
    %3618 = vmatprep.subr.mxu0 0.0
    %3619 = vmatpush1.msra.mxu0 0.0
    %3620 = vmatprep.subr.mxu0 0.0
    %3621 = vmatpush1.msra.mxu0 0.0
    %3622 = vmatprep.subr.mxu0 0.0
    %3623 = vmatpush1.msra.mxu0 0.0
    %3624 = vmatprep.subr.mxu0 0.0
    %3625 = vmatpush1.msra.mxu0 0.0
    %3626 = vmatprep.subr.mxu0 0.0
    %3627 = vmatpush1.msra.mxu0 0.0
    %3628 = vmatprep.subr.mxu0 0.0
    %3629 = vmatpush1.msra.mxu0 0.0
    %3630 = vmatprep.subr.mxu0 0.0
    %3631 = vmatpush1.msra.mxu0 0.0
    %3632 = vmatprep.subr.mxu0 0.0
    %3633 = vmatpush1.msra.mxu0 0.0
    %3634 = vmatprep.subr.mxu0 0.0
    %3635 = vmatpush1.msra.mxu0 0.0
    %3636 = vmatprep.subr.mxu0 0.0
    %3637 = vmatpush1.msra.mxu0 0.0
    %3638 = vmatprep.subr.mxu0 0.0
    %3639 = vmatpush1.msra.mxu0 0.0
    %3640 = vmatprep.subr.mxu0 0.0
    %3641 = vmatpush1.msra.mxu0 0.0
    %3642 = vmatprep.subr.mxu0 0.0
    %3643 = vmatpush1.msra.mxu0 0.0
    %3644 = vmatprep.mubr.f32.mxu0 %v3527
    %3645 = vmatmul.mubr.f32.gmra.mrb[0].mxu0 %v3419
    %v3646 = vpop.f32.mrb[0].mxu0
    %v3647 = vadd.f32 0.0, %v3646
    %v3648 = vpop.f32.mrb[0].mxu0
    %3649 = vmatprep.mubr.f32.mxu0 %v3530
    %3650 = vmatmul.mubr.f32.gmra.mrb[0].mxu0 %v3422
    %v3651 = vpop.f32.mrb[0].mxu0
    %v3652 = vadd.f32 0.0, %v3651
    %v3653 = vpop.f32.mrb[0].mxu0
    %3654 = vmatprep.mubr.f32.mxu0 %v3533
    %3655 = vmatmul.mubr.f32.gmra.mrb[0].mxu0 %v3425
    %v3656 = vpop.f32.mrb[0].mxu0
    %v3657 = vadd.f32 0.0, %v3656
    %v3658 = vpop.f32.mrb[0].mxu0
    %3659 = vmatprep.mubr.f32.mxu0 %v3536
    %3660 = vmatmul.mubr.f32.gmra.mrb[0].mxu0 %v3428
    %v3661 = vpop.f32.mrb[0].mxu0
    %v3662 = vadd.f32 0.0, %v3661
    %v3663 = vpop.f32.mrb[0].mxu0
    %3664 = vmatprep.mubr.f32.mxu0 %v3539
    %3665 = vmatmul.mubr.f32.gmra.mrb[0].mxu0 %v3431
    %v3666 = vpop.f32.mrb[0].mxu0
    %v3667 = vadd.f32 0.0, %v3666
    %v3668 = vpop.f32.mrb[0].mxu0
    %3669 = vmatprep.mubr.f32.mxu0 %v3542
    %3670 = vmatmul.mubr.f32.gmra.mrb[0].mxu0 %v3434
    %v3671 = vpop.f32.mrb[0].mxu0
    %v3672 = vadd.f32 0.0, %v3671
    %v3673 = vpop.f32.mrb[0].mxu0
    %3674 = vmatprep.mubr.f32.mxu0 %v3545
    %3675 = vmatmul.mubr.f32.gmra.mrb[0].mxu0 %v3437
    %v3676 = vpop.f32.mrb[0].mxu0
    %v3677 = vadd.f32 0.0, %v3676
    %v3678 = vpop.f32.mrb[0].mxu0
    %3679 = vmatprep.mubr.f32.mxu0 %v3548
    %3680 = vmatmul.mubr.f32.gmra.mrb[0].mxu0 %v3440
    %v3681 = vpop.f32.mrb[0].mxu0
    %v3682 = vadd.f32 0.0, %v3681
    %v3683 = vpop.f32.mrb[0].mxu0
    %3684 = vmatprep.mubr.f32.mxu0 %v3551
    %3685 = vmatmul.mubr.f32.gmra.mrb[0].mxu0 %v3443
    %v3686 = vpop.f32.mrb[0].mxu0
    %v3687 = vadd.f32 0.0, %v3686
    %v3688 = vpop.f32.mrb[0].mxu0
    %3689 = vmatprep.mubr.f32.mxu0 %v3554
    %3690 = vmatmul.mubr.f32.gmra.mrb[0].mxu0 %v3446
    %v3691 = vpop.f32.mrb[0].mxu0
    %v3692 = vadd.f32 0.0, %v3691
    %v3693 = vpop.f32.mrb[0].mxu0
    %3694 = vmatprep.mubr.f32.mxu0 %v3557
    %3695 = vmatmul.mubr.f32.gmra.mrb[0].mxu0 %v3449
    %v3696 = vpop.f32.mrb[0].mxu0
    %v3697 = vadd.f32 0.0, %v3696
    %v3698 = vpop.f32.mrb[0].mxu0
    %3699 = vmatprep.mubr.f32.mxu0 %v3560
    %3700 = vmatmul.mubr.f32.gmra.mrb[0].mxu0 %v3452
    %v3701 = vpop.f32.mrb[0].mxu0
    %v3702 = vadd.f32 0.0, %v3701
    %v3703 = vpop.f32.mrb[0].mxu0
    %3704 = vmatprep.mubr.f32.mxu0 %v3563
    %3705 = vmatmul.mubr.f32.gmra.mrb[0].mxu0 %v3455
    %v3706 = vpop.f32.mrb[0].mxu0
    %v3707 = vadd.f32 0.0, %v3706
    %v3708 = vpop.f32.mrb[0].mxu0
    %3709 = vmatprep.mubr.f32.mxu0 %v3566
    %3710 = vmatmul.mubr.f32.gmra.mrb[0].mxu0 %v3458
    %v3711 = vpop.f32.mrb[0].mxu0
    %v3712 = vadd.f32 0.0, %v3711
    %v3713 = vpop.f32.mrb[0].mxu0
    %3714 = vmatprep.mubr.f32.mxu0 %v3569
    %3715 = vmatmul.mubr.f32.gmra.mrb[0].mxu0 %v3461
    %v3716 = vpop.f32.mrb[0].mxu0
    %v3717 = vadd.f32 0.0, %v3716
    %v3718 = vpop.f32.mrb[0].mxu0
    %3719 = vmatprep.mubr.f32.mxu0 %v3572
    %3720 = vmatmul.mubr.f32.gmra.mrb[0].mxu0 %v3464
    %v3721 = vpop.f32.mrb[0].mxu0
    %v3722 = vadd.f32 0.0, %v3721
    %v3723 = vpop.f32.mrb[0].mxu0
    %3724 = vmatprep.mubr.f32.mxu0 %v3575
    %3725 = vmatmul.mubr.f32.gmra.mrb[0].mxu0 %v3467
    %v3726 = vpop.f32.mrb[0].mxu0
    %v3727 = vadd.f32 0.0, %v3726
    %v3728 = vpop.f32.mrb[0].mxu0
    %3729 = vmatprep.mubr.f32.mxu0 %v3578
    %3730 = vmatmul.mubr.f32.gmra.mrb[0].mxu0 %v3470
    %v3731 = vpop.f32.mrb[0].mxu0
    %v3732 = vadd.f32 0.0, %v3731
    %v3733 = vpop.f32.mrb[0].mxu0
    %3734 = vdwg.mxu0
    %v3736 = vsel %vm1627, %v3647, 0
    %v3739 = vsel %vm1627, %v3652, 0
    %v3742 = vsel %vm1627, %v3657, 0
    %v3745 = vsel %vm1627, %v3662, 0
    %v3748 = vsel %vm1627, %v3667, 0
    %v3751 = vsel %vm1627, %v3672, 0
    %v3754 = vsel %vm1627, %v3677, 0
    %v3757 = vsel %vm1627, %v3682, 0
    %v3760 = vsel %vm1627, %v3687, 0
    %v3763 = vsel %vm1627, %v3692, 0
    %v3766 = vsel %vm1627, %v3697, 0
    %v3769 = vsel %vm1627, %v3702, 0
    %v3772 = vsel %vm1627, %v3707, 0
    %v3775 = vsel %vm1627, %v3712, 0
    %v3778 = vsel %vm1627, %v3717, 0
    %v3781 = vsel %vm1627, %v3722, 0
    %v3784 = vsel %vm1627, %v3727, 0
    %v3787 = vsel %vm1627, %v3732, 0
    %3789 = vmatprep.subr.mxu0 0.0
    %3790 = vmatpush1.msra.mxu0 %v432
    %3791 = vmatprep.subr.mxu0 0.0
    %3792 = vmatpush1.msra.mxu0 %v433
    %3793 = vmatprep.subr.mxu0 0.0
    %3794 = vmatpush1.msra.mxu0 0.0
    %3795 = vmatprep.subr.mxu0 0.0
    %3796 = vmatpush1.msra.mxu0 0.0
    %3797 = vmatprep.subr.mxu0 0.0
    %3798 = vmatpush1.msra.mxu0 0.0
    %3799 = vmatprep.subr.mxu0 0.0
    %3800 = vmatpush1.msra.mxu0 0.0
    %3801 = vmatprep.subr.mxu0 0.0
    %3802 = vmatpush1.msra.mxu0 0.0
    %3803 = vmatprep.subr.mxu0 0.0
    %3804 = vmatpush1.msra.mxu0 0.0
    %3805 = vmatprep.subr.mxu0 0.0
    %3806 = vmatpush1.msra.mxu0 0.0
    %3807 = vmatprep.subr.mxu0 0.0
    %3808 = vmatpush1.msra.mxu0 0.0
    %3809 = vmatprep.subr.mxu0 0.0
    %3810 = vmatpush1.msra.mxu0 0.0
    %3811 = vmatprep.subr.mxu0 0.0
    %3812 = vmatpush1.msra.mxu0 0.0
    %3813 = vmatprep.subr.mxu0 0.0
    %3814 = vmatpush1.msra.mxu0 0.0
    %3815 = vmatprep.subr.mxu0 0.0
    %3816 = vmatpush1.msra.mxu0 0.0
    %3817 = vmatprep.subr.mxu0 0.0
    %3818 = vmatpush1.msra.mxu0 0.0
    %3819 = vmatprep.subr.mxu0 0.0
    %3820 = vmatpush1.msra.mxu0 0.0
    %3821 = vmatprep.subr.mxu0 0.0
    %3822 = vmatpush1.msra.mxu0 0.0
    %3823 = vmatprep.subr.mxu0 0.0
    %3824 = vmatpush1.msra.mxu0 0.0
    %3825 = vmatprep.subr.mxu0 0.0
    %3826 = vmatpush1.msra.mxu0 0.0
    %3827 = vmatprep.subr.mxu0 0.0
    %3828 = vmatpush1.msra.mxu0 0.0
    %3829 = vmatprep.subr.mxu0 0.0
    %3830 = vmatpush1.msra.mxu0 0.0
    %3831 = vmatprep.subr.mxu0 0.0
    %3832 = vmatpush1.msra.mxu0 0.0
    %3833 = vmatprep.subr.mxu0 0.0
    %3834 = vmatpush1.msra.mxu0 0.0
    %3835 = vmatprep.subr.mxu0 0.0
    %3836 = vmatpush1.msra.mxu0 0.0
    %3837 = vmatprep.subr.mxu0 0.0
    %3838 = vmatpush1.msra.mxu0 0.0
    %3839 = vmatprep.subr.mxu0 0.0
    %3840 = vmatpush1.msra.mxu0 0.0
    %3841 = vmatprep.subr.mxu0 0.0
    %3842 = vmatpush1.msra.mxu0 0.0
    %3843 = vmatprep.subr.mxu0 0.0
    %3844 = vmatpush1.msra.mxu0 0.0
    %3845 = vmatprep.subr.mxu0 0.0
    %3846 = vmatpush1.msra.mxu0 0.0
    %3847 = vmatprep.subr.mxu0 0.0
    %3848 = vmatpush1.msra.mxu0 0.0
    %3849 = vmatprep.subr.mxu0 0.0
    %3850 = vmatpush1.msra.mxu0 0.0
    %3851 = vmatprep.subr.mxu0 0.0
    %3852 = vmatpush1.msra.mxu0 0.0
    %3853 = vmatprep.mubr.f32.mxu0 0.0
    %3854 = vmatmul.mubr.f32.gmra.mrb[0].mxu0 %v3736
    %v3855 = vpop.f32.mrb[0].mxu0
    %v3856 = vadd.f32 0.0, %v3855
    %v3857 = vpop.f32.mrb[0].mxu0
    %3858 = vmatprep.mubr.f32.mxu0 0.0
    %3859 = vmatmul.mubr.f32.gmra.mrb[0].mxu0 %v3739
    %v3860 = vpop.f32.mrb[0].mxu0
    %v3861 = vadd.f32 0.0, %v3860
    %v3862 = vpop.f32.mrb[0].mxu0
    %3863 = vmatprep.mubr.f32.mxu0 0.0
    %3864 = vmatmul.mubr.f32.gmra.mrb[0].mxu0 %v3742
    %v3865 = vpop.f32.mrb[0].mxu0
    %v3866 = vadd.f32 0.0, %v3865
    %v3867 = vpop.f32.mrb[0].mxu0
    %3868 = vmatprep.mubr.f32.mxu0 0.0
    %3869 = vmatmul.mubr.f32.gmra.mrb[0].mxu0 %v3745
    %v3870 = vpop.f32.mrb[0].mxu0
    %v3871 = vadd.f32 0.0, %v3870
    %v3872 = vpop.f32.mrb[0].mxu0
    %3873 = vmatprep.mubr.f32.mxu0 0.0
    %3874 = vmatmul.mubr.f32.gmra.mrb[0].mxu0 %v3748
    %v3875 = vpop.f32.mrb[0].mxu0
    %v3876 = vadd.f32 0.0, %v3875
    %v3877 = vpop.f32.mrb[0].mxu0
    %3878 = vmatprep.mubr.f32.mxu0 0.0
    %3879 = vmatmul.mubr.f32.gmra.mrb[0].mxu0 %v3751
    %v3880 = vpop.f32.mrb[0].mxu0
    %v3881 = vadd.f32 0.0, %v3880
    %v3882 = vpop.f32.mrb[0].mxu0
    %3883 = vmatprep.mubr.f32.mxu0 0.0
    %3884 = vmatmul.mubr.f32.gmra.mrb[0].mxu0 %v3754
    %v3885 = vpop.f32.mrb[0].mxu0
    %v3886 = vadd.f32 0.0, %v3885
    %v3887 = vpop.f32.mrb[0].mxu0
    %3888 = vmatprep.mubr.f32.mxu0 0.0
    %3889 = vmatmul.mubr.f32.gmra.mrb[0].mxu0 %v3757
    %v3890 = vpop.f32.mrb[0].mxu0
    %v3891 = vadd.f32 0.0, %v3890
    %v3892 = vpop.f32.mrb[0].mxu0
    %3893 = vmatprep.mubr.f32.mxu0 0.0
    %3894 = vmatmul.mubr.f32.gmra.mrb[0].mxu0 %v3760
    %v3895 = vpop.f32.mrb[0].mxu0
    %v3896 = vadd.f32 0.0, %v3895
    %v3897 = vpop.f32.mrb[0].mxu0
    %3898 = vmatprep.mubr.f32.mxu0 0.0
    %3899 = vmatmul.mubr.f32.gmra.mrb[0].mxu0 %v3763
    %v3900 = vpop.f32.mrb[0].mxu0
    %v3901 = vadd.f32 0.0, %v3900
    %v3902 = vpop.f32.mrb[0].mxu0
    %3903 = vmatprep.mubr.f32.mxu0 0.0
    %3904 = vmatmul.mubr.f32.gmra.mrb[0].mxu0 %v3766
    %v3905 = vpop.f32.mrb[0].mxu0
    %v3906 = vadd.f32 0.0, %v3905
    %v3907 = vpop.f32.mrb[0].mxu0
    %3908 = vmatprep.mubr.f32.mxu0 0.0
    %3909 = vmatmul.mubr.f32.gmra.mrb[0].mxu0 %v3769
    %v3910 = vpop.f32.mrb[0].mxu0
    %v3911 = vadd.f32 0.0, %v3910
    %v3912 = vpop.f32.mrb[0].mxu0
    %3913 = vmatprep.mubr.f32.mxu0 0.0
    %3914 = vmatmul.mubr.f32.gmra.mrb[0].mxu0 %v3772
    %v3915 = vpop.f32.mrb[0].mxu0
    %v3916 = vadd.f32 0.0, %v3915
    %v3917 = vpop.f32.mrb[0].mxu0
    %3918 = vmatprep.mubr.f32.mxu0 0.0
    %3919 = vmatmul.mubr.f32.gmra.mrb[0].mxu0 %v3775
    %v3920 = vpop.f32.mrb[0].mxu0
    %v3921 = vadd.f32 0.0, %v3920
    %v3922 = vpop.f32.mrb[0].mxu0
    %3923 = vmatprep.mubr.f32.mxu0 0.0
    %3924 = vmatmul.mubr.f32.gmra.mrb[0].mxu0 %v3778
    %v3925 = vpop.f32.mrb[0].mxu0
    %v3926 = vadd.f32 0.0, %v3925
    %v3927 = vpop.f32.mrb[0].mxu0
    %3928 = vmatprep.mubr.f32.mxu0 0.0
    %3929 = vmatmul.mubr.f32.gmra.mrb[0].mxu0 %v3781
    %v3930 = vpop.f32.mrb[0].mxu0
    %v3931 = vadd.f32 0.0, %v3930
    %v3932 = vpop.f32.mrb[0].mxu0
    %3933 = vmatprep.mubr.f32.mxu0 0.0
    %3934 = vmatmul.mubr.f32.gmra.mrb[0].mxu0 %v3784
    %v3935 = vpop.f32.mrb[0].mxu0
    %v3936 = vadd.f32 0.0, %v3935
    %v3937 = vpop.f32.mrb[0].mxu0
    %3938 = vmatprep.mubr.f32.mxu0 0.0
    %3939 = vmatmul.mubr.f32.gmra.mrb[0].mxu0 %v3787
    %v3940 = vpop.f32.mrb[0].mxu0
    %v3941 = vadd.f32 0.0, %v3940
    %v3942 = vpop.f32.mrb[0].mxu0
    %3943 = vdwg.mxu0
    %v3944 = vadd.f32 %v2759, %v3856
    %v3945 = vadd.f32 %v2760, %v3861
    %v3946 = vadd.f32 %v2761, %v3866
    %v3947 = vadd.f32 %v2762, %v3871
    %v3948 = vadd.f32 %v2763, %v3876
    %v3949 = vadd.f32 %v2764, %v3881
    %v3950 = vadd.f32 %v2765, %v3886
    %v3951 = vadd.f32 %v2766, %v3891
    %v3952 = vadd.f32 %v2767, %v3896
    %v3953 = vadd.f32 %v2768, %v3901
    %v3954 = vadd.f32 %v2769, %v3906
    %v3955 = vadd.f32 %v2770, %v3911
    %v3956 = vadd.f32 %v2771, %v3916
    %v3957 = vadd.f32 %v2772, %v3921
    %v3958 = vadd.f32 %v2773, %v3926
    %v3959 = vadd.f32 %v2774, %v3931
    %v3960 = vadd.f32 %v2775, %v3936
    %v3961 = vadd.f32 %v2776, %v3941
    %v3962 = vadd.f32 %v1056, %v3944
    %v3963 = vadd.f32 %v1057, %v3945
    %v3964 = vadd.f32 %v1058, %v3946
    %v3965 = vadd.f32 %v1059, %v3947
    %v3966 = vadd.f32 %v1060, %v3948
    %v3967 = vadd.f32 %v1061, %v3949
    %v3968 = vadd.f32 %v1062, %v3950
    %v3969 = vadd.f32 %v1063, %v3951
    %v3970 = vadd.f32 %v1064, %v3952
    %v3971 = vadd.f32 %v1065, %v3953
    %v3972 = vadd.f32 %v1066, %v3954
    %v3973 = vadd.f32 %v1067, %v3955
    %v3974 = vadd.f32 %v1068, %v3956
    %v3975 = vadd.f32 %v1069, %v3957
    %v3976 = vadd.f32 %v1070, %v3958
    %v3977 = vadd.f32 %v1071, %v3959
    %v3978 = vadd.f32 %v1072, %v3960
    %v3979 = vadd.f32 %v1073, %v3961
    %v3980 = vsel %vm1074, %v3962, 0.0
    %3981 = vadd.xlane.f32.xlu0 %v3980
    %v3982 = vpop.xlane.xlu0 %3981
    %v3983 = vsel %vm1074, %v3963, 0.0
    %3984 = vadd.xlane.f32.xlu0 %v3983
    %v3985 = vpop.xlane.xlu0 %3984
    %v3986 = vsel %vm1074, %v3964, 0.0
    %3987 = vadd.xlane.f32.xlu0 %v3986
    %v3988 = vpop.xlane.xlu0 %3987
    %v3989 = vsel %vm1074, %v3965, 0.0
    %3990 = vadd.xlane.f32.xlu0 %v3989
    %v3991 = vpop.xlane.xlu0 %3990
    %v3992 = vsel %vm1074, %v3966, 0.0
    %3993 = vadd.xlane.f32.xlu0 %v3992
    %v3994 = vpop.xlane.xlu0 %3993
    %v3995 = vsel %vm1074, %v3967, 0.0
    %3996 = vadd.xlane.f32.xlu0 %v3995
    %v3997 = vpop.xlane.xlu0 %3996
    %v3998 = vsel %vm1074, %v3968, 0.0
    %3999 = vadd.xlane.f32.xlu0 %v3998
    %v4000 = vpop.xlane.xlu0 %3999
    %v4001 = vsel %vm1074, %v3969, 0.0
    %4002 = vadd.xlane.f32.xlu0 %v4001
    %v4003 = vpop.xlane.xlu0 %4002
    %v4004 = vsel %vm1074, %v3970, 0.0
    %4005 = vadd.xlane.f32.xlu0 %v4004
    %v4006 = vpop.xlane.xlu0 %4005
    %v4007 = vsel %vm1074, %v3971, 0.0
    %4008 = vadd.xlane.f32.xlu0 %v4007
    %v4009 = vpop.xlane.xlu0 %4008
    %v4010 = vsel %vm1074, %v3972, 0.0
    %4011 = vadd.xlane.f32.xlu0 %v4010
    %v4012 = vpop.xlane.xlu0 %4011
    %v4013 = vsel %vm1074, %v3973, 0.0
    %4014 = vadd.xlane.f32.xlu0 %v4013
    %v4015 = vpop.xlane.xlu0 %4014
    %v4016 = vsel %vm1074, %v3974, 0.0
    %4017 = vadd.xlane.f32.xlu0 %v4016
    %v4018 = vpop.xlane.xlu0 %4017
    %v4019 = vsel %vm1074, %v3975, 0.0
    %4020 = vadd.xlane.f32.xlu0 %v4019
    %v4021 = vpop.xlane.xlu0 %4020
    %v4022 = vsel %vm1074, %v3976, 0.0
    %4023 = vadd.xlane.f32.xlu0 %v4022
    %v4024 = vpop.xlane.xlu0 %4023
    %v4025 = vsel %vm1074, %v3977, 0.0
    %4026 = vadd.xlane.f32.xlu0 %v4025
    %v4027 = vpop.xlane.xlu0 %4026
    %v4028 = vsel %vm1074, %v3978, 0.0
    %4029 = vadd.xlane.f32.xlu0 %v4028
    %v4030 = vpop.xlane.xlu0 %4029
    %v4031 = vsel %vm1074, %v3979, 0.0
    %4032 = vadd.xlane.f32.xlu0 %v4031
    %v4033 = vpop.xlane.xlu0 %4032
    %v4034 = vmul.f32 %v3982, %v1129
    %v4035 = vmul.f32 %v3985, %v1129
    %v4036 = vmul.f32 %v3988, %v1129
    %v4037 = vmul.f32 %v3991, %v1129
    %v4038 = vmul.f32 %v3994, %v1129
    %v4039 = vmul.f32 %v3997, %v1129
    %v4040 = vmul.f32 %v4000, %v1129
    %v4041 = vmul.f32 %v4003, %v1129
    %v4042 = vmul.f32 %v4006, %v1129
    %v4043 = vmul.f32 %v4009, %v1129
    %v4044 = vmul.f32 %v4012, %v1129
    %v4045 = vmul.f32 %v4015, %v1129
    %v4046 = vmul.f32 %v4018, %v1129
    %v4047 = vmul.f32 %v4021, %v1129
    %v4048 = vmul.f32 %v4024, %v1129
    %v4049 = vmul.f32 %v4027, %v1129
    %v4050 = vmul.f32 %v4030, %v1129
    %v4051 = vmul.f32 %v4033, %v1129
    %v4052 = vsub.f32 %v3962, %v4034
    %v4053 = vsub.f32 %v3963, %v4035
    %v4054 = vsub.f32 %v3964, %v4036
    %v4055 = vsub.f32 %v3965, %v4037
    %v4056 = vsub.f32 %v3966, %v4038
    %v4057 = vsub.f32 %v3967, %v4039
    %v4058 = vsub.f32 %v3968, %v4040
    %v4059 = vsub.f32 %v3969, %v4041
    %v4060 = vsub.f32 %v3970, %v4042
    %v4061 = vsub.f32 %v3971, %v4043
    %v4062 = vsub.f32 %v3972, %v4044
    %v4063 = vsub.f32 %v3973, %v4045
    %v4064 = vsub.f32 %v3974, %v4046
    %v4065 = vsub.f32 %v3975, %v4047
    %v4066 = vsub.f32 %v3976, %v4048
    %v4067 = vsub.f32 %v3977, %v4049
    %v4068 = vsub.f32 %v3978, %v4050
    %v4069 = vsub.f32 %v3979, %v4051
    %v4070 = vmul.f32 %v4052, %v4052
    %v4071 = vmul.f32 %v4053, %v4053
    %v4072 = vmul.f32 %v4054, %v4054
    %v4073 = vmul.f32 %v4055, %v4055
    %v4074 = vmul.f32 %v4056, %v4056
    %v4075 = vmul.f32 %v4057, %v4057
    %v4076 = vmul.f32 %v4058, %v4058
    %v4077 = vmul.f32 %v4059, %v4059
    %v4078 = vmul.f32 %v4060, %v4060
    %v4079 = vmul.f32 %v4061, %v4061
    %v4080 = vmul.f32 %v4062, %v4062
    %v4081 = vmul.f32 %v4063, %v4063
    %v4082 = vmul.f32 %v4064, %v4064
    %v4083 = vmul.f32 %v4065, %v4065
    %v4084 = vmul.f32 %v4066, %v4066
    %v4085 = vmul.f32 %v4067, %v4067
    %v4086 = vmul.f32 %v4068, %v4068
    %v4087 = vmul.f32 %v4069, %v4069
    %v4088 = vsel %vm1074, %v4070, 0.0
    %4089 = vadd.xlane.f32.xlu0 %v4088
    %v4090 = vpop.xlane.xlu0 %4089
    %v4091 = vsel %vm1074, %v4071, 0.0
    %4092 = vadd.xlane.f32.xlu0 %v4091
    %v4093 = vpop.xlane.xlu0 %4092
    %v4094 = vsel %vm1074, %v4072, 0.0
    %4095 = vadd.xlane.f32.xlu0 %v4094
    %v4096 = vpop.xlane.xlu0 %4095
    %v4097 = vsel %vm1074, %v4073, 0.0
    %4098 = vadd.xlane.f32.xlu0 %v4097
    %v4099 = vpop.xlane.xlu0 %4098
    %v4100 = vsel %vm1074, %v4074, 0.0
    %4101 = vadd.xlane.f32.xlu0 %v4100
    %v4102 = vpop.xlane.xlu0 %4101
    %v4103 = vsel %vm1074, %v4075, 0.0
    %4104 = vadd.xlane.f32.xlu0 %v4103
    %v4105 = vpop.xlane.xlu0 %4104
    %v4106 = vsel %vm1074, %v4076, 0.0
    %4107 = vadd.xlane.f32.xlu0 %v4106
    %v4108 = vpop.xlane.xlu0 %4107
    %v4109 = vsel %vm1074, %v4077, 0.0
    %4110 = vadd.xlane.f32.xlu0 %v4109
    %v4111 = vpop.xlane.xlu0 %4110
    %v4112 = vsel %vm1074, %v4078, 0.0
    %4113 = vadd.xlane.f32.xlu0 %v4112
    %v4114 = vpop.xlane.xlu0 %4113
    %v4115 = vsel %vm1074, %v4079, 0.0
    %4116 = vadd.xlane.f32.xlu0 %v4115
    %v4117 = vpop.xlane.xlu0 %4116
    %v4118 = vsel %vm1074, %v4080, 0.0
    %4119 = vadd.xlane.f32.xlu0 %v4118
    %v4120 = vpop.xlane.xlu0 %4119
    %v4121 = vsel %vm1074, %v4081, 0.0
    %4122 = vadd.xlane.f32.xlu0 %v4121
    %v4123 = vpop.xlane.xlu0 %4122
    %v4124 = vsel %vm1074, %v4082, 0.0
    %4125 = vadd.xlane.f32.xlu0 %v4124
    %v4126 = vpop.xlane.xlu0 %4125
    %v4127 = vsel %vm1074, %v4083, 0.0
    %4128 = vadd.xlane.f32.xlu0 %v4127
    %v4129 = vpop.xlane.xlu0 %4128
    %v4130 = vsel %vm1074, %v4084, 0.0
    %4131 = vadd.xlane.f32.xlu0 %v4130
    %v4132 = vpop.xlane.xlu0 %4131
    %v4133 = vsel %vm1074, %v4085, 0.0
    %4134 = vadd.xlane.f32.xlu0 %v4133
    %v4135 = vpop.xlane.xlu0 %4134
    %v4136 = vsel %vm1074, %v4086, 0.0
    %4137 = vadd.xlane.f32.xlu0 %v4136
    %v4138 = vpop.xlane.xlu0 %4137
    %v4139 = vsel %vm1074, %v4087, 0.0
    %4140 = vadd.xlane.f32.xlu0 %v4139
    %v4141 = vpop.xlane.xlu0 %4140
    %v4142 = vmul.f32 %v4090, %v1129
    %v4143 = vmul.f32 %v4093, %v1129
    %v4144 = vmul.f32 %v4096, %v1129
    %v4145 = vmul.f32 %v4099, %v1129
    %v4146 = vmul.f32 %v4102, %v1129
    %v4147 = vmul.f32 %v4105, %v1129
    %v4148 = vmul.f32 %v4108, %v1129
    %v4149 = vmul.f32 %v4111, %v1129
    %v4150 = vmul.f32 %v4114, %v1129
    %v4151 = vmul.f32 %v4117, %v1129
    %v4152 = vmul.f32 %v4120, %v1129
    %v4153 = vmul.f32 %v4123, %v1129
    %v4154 = vmul.f32 %v4126, %v1129
    %v4155 = vmul.f32 %v4129, %v1129
    %v4156 = vmul.f32 %v4132, %v1129
    %v4157 = vmul.f32 %v4135, %v1129
    %v4158 = vmul.f32 %v4138, %v1129
    %v4159 = vmul.f32 %v4141, %v1129
    %v4160 = vadd.f32 %v4142, 1e-05
    %v4161 = vadd.f32 %v4143, 1e-05
    %v4162 = vadd.f32 %v4144, 1e-05
    %v4163 = vadd.f32 %v4145, 1e-05
    %v4164 = vadd.f32 %v4146, 1e-05
    %v4165 = vadd.f32 %v4147, 1e-05
    %v4166 = vadd.f32 %v4148, 1e-05
    %v4167 = vadd.f32 %v4149, 1e-05
    %v4168 = vadd.f32 %v4150, 1e-05
    %v4169 = vadd.f32 %v4151, 1e-05
    %v4170 = vadd.f32 %v4152, 1e-05
    %v4171 = vadd.f32 %v4153, 1e-05
    %v4172 = vadd.f32 %v4154, 1e-05
    %v4173 = vadd.f32 %v4155, 1e-05
    %v4174 = vadd.f32 %v4156, 1e-05
    %v4175 = vadd.f32 %v4157, 1e-05
    %v4176 = vadd.f32 %v4158, 1e-05
    %v4177 = vadd.f32 %v4159, 1e-05
    %v4178 = vrsqrt.pop %v4160
    %v4179 = vrsqrt.pop %v4161
    %v4180 = vrsqrt.pop %v4162
    %v4181 = vrsqrt.pop %v4163
    %v4182 = vrsqrt.pop %v4164
    %v4183 = vrsqrt.pop %v4165
    %v4184 = vrsqrt.pop %v4166
    %v4185 = vrsqrt.pop %v4167
    %v4186 = vrsqrt.pop %v4168
    %v4187 = vrsqrt.pop %v4169
    %v4188 = vrsqrt.pop %v4170
    %v4189 = vrsqrt.pop %v4171
    %v4190 = vrsqrt.pop %v4172
    %v4191 = vrsqrt.pop %v4173
    %v4192 = vrsqrt.pop %v4174
    %v4193 = vrsqrt.pop %v4175
    %v4194 = vrsqrt.pop %v4176
    %v4195 = vrsqrt.pop %v4177
    %v4196 = vmul.f32 %v4052, %v4178
    %v4197 = vmul.f32 %v4053, %v4179
    %v4198 = vmul.f32 %v4054, %v4180
    %v4199 = vmul.f32 %v4055, %v4181
    %v4200 = vmul.f32 %v4056, %v4182
    %v4201 = vmul.f32 %v4057, %v4183
    %v4202 = vmul.f32 %v4058, %v4184
    %v4203 = vmul.f32 %v4059, %v4185
    %v4204 = vmul.f32 %v4060, %v4186
    %v4205 = vmul.f32 %v4061, %v4187
    %v4206 = vmul.f32 %v4062, %v4188
    %v4207 = vmul.f32 %v4063, %v4189
    %v4208 = vmul.f32 %v4064, %v4190
    %v4209 = vmul.f32 %v4065, %v4191
    %v4210 = vmul.f32 %v4066, %v4192
    %v4211 = vmul.f32 %v4067, %v4193
    %v4212 = vmul.f32 %v4068, %v4194
    %v4213 = vmul.f32 %v4069, %v4195
    %v4215 = vlaneseq
    %v4216 = vshrl.u32 %v4215, 7
    %v4217 = vsub.s32 0, %v4216
    %v4218 = vrot.slane %v435, %v4217
    %v4220 = vmul.f32 %v4196, %v4218
    %v4221 = vmul.f32 %v4197, %v4218
    %v4222 = vmul.f32 %v4198, %v4218
    %v4223 = vmul.f32 %v4199, %v4218
    %v4224 = vmul.f32 %v4200, %v4218
    %v4225 = vmul.f32 %v4201, %v4218
    %v4226 = vmul.f32 %v4202, %v4218
    %v4227 = vmul.f32 %v4203, %v4218
    %v4228 = vmul.f32 %v4204, %v4218
    %v4229 = vmul.f32 %v4205, %v4218
    %v4230 = vmul.f32 %v4206, %v4218
    %v4231 = vmul.f32 %v4207, %v4218
    %v4232 = vmul.f32 %v4208, %v4218
    %v4233 = vmul.f32 %v4209, %v4218
    %v4234 = vmul.f32 %v4210, %v4218
    %v4235 = vmul.f32 %v4211, %v4218
    %v4236 = vmul.f32 %v4212, %v4218
    %v4237 = vmul.f32 %v4213, %v4218
    %v4239 = vlaneseq
    %v4240 = vshrl.u32 %v4239, 7
    %v4241 = vsub.s32 0, %v4240
    %v4242 = vrot.slane %v436, %v4241
    %v4244 = vadd.f32 %v4220, %v4242
    %v4245 = vadd.f32 %v4221, %v4242
    %v4246 = vadd.f32 %v4222, %v4242
    %v4247 = vadd.f32 %v4223, %v4242
    %v4248 = vadd.f32 %v4224, %v4242
    %v4249 = vadd.f32 %v4225, %v4242
    %v4250 = vadd.f32 %v4226, %v4242
    %v4251 = vadd.f32 %v4227, %v4242
    %v4252 = vadd.f32 %v4228, %v4242
    %v4253 = vadd.f32 %v4229, %v4242
    %v4254 = vadd.f32 %v4230, %v4242
    %v4255 = vadd.f32 %v4231, %v4242
    %v4256 = vadd.f32 %v4232, %v4242
    %v4257 = vadd.f32 %v4233, %v4242
    %v4258 = vadd.f32 %v4234, %v4242
    %v4259 = vadd.f32 %v4235, %v4242
    %v4260 = vadd.f32 %v4236, %v4242
    %v4261 = vadd.f32 %v4237, %v4242
    %v4263 = vlaneseq
    %v4264 = vshrl.u32 %v4263, 7
    %v4265 = vsub.s32 0, %v4264
    %v4266 = vrot.slane %v441, %v4265
    %v4269 = vsel %vm1074, %v4244, 0
    %v4272 = vsel %vm1074, %v4245, 0
    %v4275 = vsel %vm1074, %v4246, 0
    %v4278 = vsel %vm1074, %v4247, 0
    %v4281 = vsel %vm1074, %v4248, 0
    %v4284 = vsel %vm1074, %v4249, 0
    %v4287 = vsel %vm1074, %v4250, 0
    %v4290 = vsel %vm1074, %v4251, 0
    %v4293 = vsel %vm1074, %v4252, 0
    %v4296 = vsel %vm1074, %v4253, 0
    %v4299 = vsel %vm1074, %v4254, 0
    %v4302 = vsel %vm1074, %v4255, 0
    %v4305 = vsel %vm1074, %v4256, 0
    %v4308 = vsel %vm1074, %v4257, 0
    %v4311 = vsel %vm1074, %v4258, 0
    %v4314 = vsel %vm1074, %v4259, 0
    %v4317 = vsel %vm1074, %v4260, 0
    %v4320 = vsel %vm1074, %v4261, 0
    %4322 = vmatprep.subr.mxu0 0.0
    %4323 = vmatpush1.msra.mxu0 %v437
    %4324 = vmatprep.subr.mxu0 0.0
    %4325 = vmatpush1.msra.mxu0 %v438
    %4326 = vmatprep.subr.mxu0 0.0
    %4327 = vmatpush1.msra.mxu0 %v439
    %4328 = vmatprep.subr.mxu0 0.0
    %4329 = vmatpush1.msra.mxu0 %v440
    %4330 = vmatprep.subr.mxu0 0.0
    %4331 = vmatpush1.msra.mxu0 0.0
    %4332 = vmatprep.subr.mxu0 0.0
    %4333 = vmatpush1.msra.mxu0 0.0
    %4334 = vmatprep.subr.mxu0 0.0
    %4335 = vmatpush1.msra.mxu0 0.0
    %4336 = vmatprep.subr.mxu0 0.0
    %4337 = vmatpush1.msra.mxu0 0.0
    %4338 = vmatprep.subr.mxu0 0.0
    %4339 = vmatpush1.msra.mxu0 0.0
    %4340 = vmatprep.subr.mxu0 0.0
    %4341 = vmatpush1.msra.mxu0 0.0
    %4342 = vmatprep.subr.mxu0 0.0
    %4343 = vmatpush1.msra.mxu0 0.0
    %4344 = vmatprep.subr.mxu0 0.0
    %4345 = vmatpush1.msra.mxu0 0.0
    %4346 = vmatprep.subr.mxu0 0.0
    %4347 = vmatpush1.msra.mxu0 0.0
    %4348 = vmatprep.subr.mxu0 0.0
    %4349 = vmatpush1.msra.mxu0 0.0
    %4350 = vmatprep.subr.mxu0 0.0
    %4351 = vmatpush1.msra.mxu0 0.0
    %4352 = vmatprep.subr.mxu0 0.0
    %4353 = vmatpush1.msra.mxu0 0.0
    %4354 = vmatprep.subr.mxu0 0.0
    %4355 = vmatpush1.msra.mxu0 0.0
    %4356 = vmatprep.subr.mxu0 0.0
    %4357 = vmatpush1.msra.mxu0 0.0
    %4358 = vmatprep.subr.mxu0 0.0
    %4359 = vmatpush1.msra.mxu0 0.0
    %4360 = vmatprep.subr.mxu0 0.0
    %4361 = vmatpush1.msra.mxu0 0.0
    %4362 = vmatprep.subr.mxu0 0.0
    %4363 = vmatpush1.msra.mxu0 0.0
    %4364 = vmatprep.subr.mxu0 0.0
    %4365 = vmatpush1.msra.mxu0 0.0
    %4366 = vmatprep.subr.mxu0 0.0
    %4367 = vmatpush1.msra.mxu0 0.0
    %4368 = vmatprep.subr.mxu0 0.0
    %4369 = vmatpush1.msra.mxu0 0.0
    %4370 = vmatprep.subr.mxu0 0.0
    %4371 = vmatpush1.msra.mxu0 0.0
    %4372 = vmatprep.subr.mxu0 0.0
    %4373 = vmatpush1.msra.mxu0 0.0
    %4374 = vmatprep.subr.mxu0 0.0
    %4375 = vmatpush1.msra.mxu0 0.0
    %4376 = vmatprep.subr.mxu0 0.0
    %4377 = vmatpush1.msra.mxu0 0.0
    %4378 = vmatprep.subr.mxu0 0.0
    %4379 = vmatpush1.msra.mxu0 0.0
    %4380 = vmatprep.subr.mxu0 0.0
    %4381 = vmatpush1.msra.mxu0 0.0
    %4382 = vmatprep.subr.mxu0 0.0
    %4383 = vmatpush1.msra.mxu0 0.0
    %4384 = vmatprep.subr.mxu0 0.0
    %4385 = vmatpush1.msra.mxu0 0.0
    %4386 = vmatprep.mubr.f32.mxu0 0.0
    %4387 = vmatmul.mubr.f32.gmra.mrb[0].mxu0 %v4269
    %v4388 = vpop.f32.mrb[0].mxu0
    %v4389 = vadd.f32 %v4266, %v4388
    %v4390 = vpop.f32.mrb[0].mxu0
    %4391 = vmatprep.mubr.f32.mxu0 0.0
    %4392 = vmatmul.mubr.f32.gmra.mrb[0].mxu0 %v4272
    %v4393 = vpop.f32.mrb[0].mxu0
    %v4394 = vadd.f32 %v4266, %v4393
    %v4395 = vpop.f32.mrb[0].mxu0
    %4396 = vmatprep.mubr.f32.mxu0 0.0
    %4397 = vmatmul.mubr.f32.gmra.mrb[0].mxu0 %v4275
    %v4398 = vpop.f32.mrb[0].mxu0
    %v4399 = vadd.f32 %v4266, %v4398
    %v4400 = vpop.f32.mrb[0].mxu0
    %4401 = vmatprep.mubr.f32.mxu0 0.0
    %4402 = vmatmul.mubr.f32.gmra.mrb[0].mxu0 %v4278
    %v4403 = vpop.f32.mrb[0].mxu0
    %v4404 = vadd.f32 %v4266, %v4403
    %v4405 = vpop.f32.mrb[0].mxu0
    %4406 = vmatprep.mubr.f32.mxu0 0.0
    %4407 = vmatmul.mubr.f32.gmra.mrb[0].mxu0 %v4281
    %v4408 = vpop.f32.mrb[0].mxu0
    %v4409 = vadd.f32 %v4266, %v4408
    %v4410 = vpop.f32.mrb[0].mxu0
    %4411 = vmatprep.mubr.f32.mxu0 0.0
    %4412 = vmatmul.mubr.f32.gmra.mrb[0].mxu0 %v4284
    %v4413 = vpop.f32.mrb[0].mxu0
    %v4414 = vadd.f32 %v4266, %v4413
    %v4415 = vpop.f32.mrb[0].mxu0
    %4416 = vmatprep.mubr.f32.mxu0 0.0
    %4417 = vmatmul.mubr.f32.gmra.mrb[0].mxu0 %v4287
    %v4418 = vpop.f32.mrb[0].mxu0
    %v4419 = vadd.f32 %v4266, %v4418
    %v4420 = vpop.f32.mrb[0].mxu0
    %4421 = vmatprep.mubr.f32.mxu0 0.0
    %4422 = vmatmul.mubr.f32.gmra.mrb[0].mxu0 %v4290
    %v4423 = vpop.f32.mrb[0].mxu0
    %v4424 = vadd.f32 %v4266, %v4423
    %v4425 = vpop.f32.mrb[0].mxu0
    %4426 = vmatprep.mubr.f32.mxu0 0.0
    %4427 = vmatmul.mubr.f32.gmra.mrb[0].mxu0 %v4293
    %v4428 = vpop.f32.mrb[0].mxu0
    %v4429 = vadd.f32 %v4266, %v4428
    %v4430 = vpop.f32.mrb[0].mxu0
    %4431 = vmatprep.mubr.f32.mxu0 0.0
    %4432 = vmatmul.mubr.f32.gmra.mrb[0].mxu0 %v4296
    %v4433 = vpop.f32.mrb[0].mxu0
    %v4434 = vadd.f32 %v4266, %v4433
    %v4435 = vpop.f32.mrb[0].mxu0
    %4436 = vmatprep.mubr.f32.mxu0 0.0
    %4437 = vmatmul.mubr.f32.gmra.mrb[0].mxu0 %v4299
    %v4438 = vpop.f32.mrb[0].mxu0
    %v4439 = vadd.f32 %v4266, %v4438
    %v4440 = vpop.f32.mrb[0].mxu0
    %4441 = vmatprep.mubr.f32.mxu0 0.0
    %4442 = vmatmul.mubr.f32.gmra.mrb[0].mxu0 %v4302
    %v4443 = vpop.f32.mrb[0].mxu0
    %v4444 = vadd.f32 %v4266, %v4443
    %v4445 = vpop.f32.mrb[0].mxu0
    %4446 = vmatprep.mubr.f32.mxu0 0.0
    %4447 = vmatmul.mubr.f32.gmra.mrb[0].mxu0 %v4305
    %v4448 = vpop.f32.mrb[0].mxu0
    %v4449 = vadd.f32 %v4266, %v4448
    %v4450 = vpop.f32.mrb[0].mxu0
    %4451 = vmatprep.mubr.f32.mxu0 0.0
    %4452 = vmatmul.mubr.f32.gmra.mrb[0].mxu0 %v4308
    %v4453 = vpop.f32.mrb[0].mxu0
    %v4454 = vadd.f32 %v4266, %v4453
    %v4455 = vpop.f32.mrb[0].mxu0
    %4456 = vmatprep.mubr.f32.mxu0 0.0
    %4457 = vmatmul.mubr.f32.gmra.mrb[0].mxu0 %v4311
    %v4458 = vpop.f32.mrb[0].mxu0
    %v4459 = vadd.f32 %v4266, %v4458
    %v4460 = vpop.f32.mrb[0].mxu0
    %4461 = vmatprep.mubr.f32.mxu0 0.0
    %4462 = vmatmul.mubr.f32.gmra.mrb[0].mxu0 %v4314
    %v4463 = vpop.f32.mrb[0].mxu0
    %v4464 = vadd.f32 %v4266, %v4463
    %v4465 = vpop.f32.mrb[0].mxu0
    %4466 = vmatprep.mubr.f32.mxu0 0.0
    %4467 = vmatmul.mubr.f32.gmra.mrb[0].mxu0 %v4317
    %v4468 = vpop.f32.mrb[0].mxu0
    %v4469 = vadd.f32 %v4266, %v4468
    %v4470 = vpop.f32.mrb[0].mxu0
    %4471 = vmatprep.mubr.f32.mxu0 0.0
    %4472 = vmatmul.mubr.f32.gmra.mrb[0].mxu0 %v4320
    %v4473 = vpop.f32.mrb[0].mxu0
    %v4474 = vadd.f32 %v4266, %v4473
    %v4475 = vpop.f32.mrb[0].mxu0
    %4476 = vdwg.mxu0
    %v4477 = vmul.f32 %v4389, 0.5
    %v4478 = vmul.f32 %v4394, 0.5
    %v4479 = vmul.f32 %v4399, 0.5
    %v4480 = vmul.f32 %v4404, 0.5
    %v4481 = vmul.f32 %v4409, 0.5
    %v4482 = vmul.f32 %v4414, 0.5
    %v4483 = vmul.f32 %v4419, 0.5
    %v4484 = vmul.f32 %v4424, 0.5
    %v4485 = vmul.f32 %v4429, 0.5
    %v4486 = vmul.f32 %v4434, 0.5
    %v4487 = vmul.f32 %v4439, 0.5
    %v4488 = vmul.f32 %v4444, 0.5
    %v4489 = vmul.f32 %v4449, 0.5
    %v4490 = vmul.f32 %v4454, 0.5
    %v4491 = vmul.f32 %v4459, 0.5
    %v4492 = vmul.f32 %v4464, 0.5
    %v4493 = vmul.f32 %v4469, 0.5
    %v4494 = vmul.f32 %v4474, 0.5
    %v4495 = vmul.f32 %v4389, 0.70710677
    %v4496 = vmul.f32 %v4394, 0.70710677
    %v4497 = vmul.f32 %v4399, 0.70710677
    %v4498 = vmul.f32 %v4404, 0.70710677
    %v4499 = vmul.f32 %v4409, 0.70710677
    %v4500 = vmul.f32 %v4414, 0.70710677
    %v4501 = vmul.f32 %v4419, 0.70710677
    %v4502 = vmul.f32 %v4424, 0.70710677
    %v4503 = vmul.f32 %v4429, 0.70710677
    %v4504 = vmul.f32 %v4434, 0.70710677
    %v4505 = vmul.f32 %v4439, 0.70710677
    %v4506 = vmul.f32 %v4444, 0.70710677
    %v4507 = vmul.f32 %v4449, 0.70710677
    %v4508 = vmul.f32 %v4454, 0.70710677
    %v4509 = vmul.f32 %v4459, 0.70710677
    %v4510 = vmul.f32 %v4464, 0.70710677
    %v4511 = vmul.f32 %v4469, 0.70710677
    %v4512 = vmul.f32 %v4474, 0.70710677
    %v4513 = verf.f32.pop %v4495
    %v4514 = verf.f32.pop %v4496
    %v4515 = verf.f32.pop %v4497
    %v4516 = verf.f32.pop %v4498
    %v4517 = verf.f32.pop %v4499
    %v4518 = verf.f32.pop %v4500
    %v4519 = verf.f32.pop %v4501
    %v4520 = verf.f32.pop %v4502
    %v4521 = verf.f32.pop %v4503
    %v4522 = verf.f32.pop %v4504
    %v4523 = verf.f32.pop %v4505
    %v4524 = verf.f32.pop %v4506
    %v4525 = verf.f32.pop %v4507
    %v4526 = verf.f32.pop %v4508
    %v4527 = verf.f32.pop %v4509
    %v4528 = verf.f32.pop %v4510
    %v4529 = verf.f32.pop %v4511
    %v4530 = verf.f32.pop %v4512
    %v4531 = vadd.f32 %v4513, 1.0
    %v4532 = vadd.f32 %v4514, 1.0
    %v4533 = vadd.f32 %v4515, 1.0
    %v4534 = vadd.f32 %v4516, 1.0
    %v4535 = vadd.f32 %v4517, 1.0
    %v4536 = vadd.f32 %v4518, 1.0
    %v4537 = vadd.f32 %v4519, 1.0
    %v4538 = vadd.f32 %v4520, 1.0
    %v4539 = vadd.f32 %v4521, 1.0
    %v4540 = vadd.f32 %v4522, 1.0
    %v4541 = vadd.f32 %v4523, 1.0
    %v4542 = vadd.f32 %v4524, 1.0
    %v4543 = vadd.f32 %v4525, 1.0
    %v4544 = vadd.f32 %v4526, 1.0
    %v4545 = vadd.f32 %v4527, 1.0
    %v4546 = vadd.f32 %v4528, 1.0
    %v4547 = vadd.f32 %v4529, 1.0
    %v4548 = vadd.f32 %v4530, 1.0
    %v4549 = vmul.f32 %v4477, %v4531
    %v4550 = vmul.f32 %v4478, %v4532
    %v4551 = vmul.f32 %v4479, %v4533
    %v4552 = vmul.f32 %v4480, %v4534
    %v4553 = vmul.f32 %v4481, %v4535
    %v4554 = vmul.f32 %v4482, %v4536
    %v4555 = vmul.f32 %v4483, %v4537
    %v4556 = vmul.f32 %v4484, %v4538
    %v4557 = vmul.f32 %v4485, %v4539
    %v4558 = vmul.f32 %v4486, %v4540
    %v4559 = vmul.f32 %v4487, %v4541
    %v4560 = vmul.f32 %v4488, %v4542
    %v4561 = vmul.f32 %v4489, %v4543
    %v4562 = vmul.f32 %v4490, %v4544
    %v4563 = vmul.f32 %v4491, %v4545
    %v4564 = vmul.f32 %v4492, %v4546
    %v4565 = vmul.f32 %v4493, %v4547
    %v4566 = vmul.f32 %v4494, %v4548
    %vm4567 = vcmask 523264
    %v4569 = vsel %vm4567, %v4549, 0
    %v4572 = vsel %vm4567, %v4550, 0
    %v4575 = vsel %vm4567, %v4551, 0
    %v4578 = vsel %vm4567, %v4552, 0
    %v4581 = vsel %vm4567, %v4553, 0
    %v4584 = vsel %vm4567, %v4554, 0
    %v4587 = vsel %vm4567, %v4555, 0
    %v4590 = vsel %vm4567, %v4556, 0
    %v4593 = vsel %vm4567, %v4557, 0
    %v4596 = vsel %vm4567, %v4558, 0
    %v4599 = vsel %vm4567, %v4559, 0
    %v4602 = vsel %vm4567, %v4560, 0
    %v4605 = vsel %vm4567, %v4561, 0
    %v4608 = vsel %vm4567, %v4562, 0
    %v4611 = vsel %vm4567, %v4563, 0
    %v4614 = vsel %vm4567, %v4564, 0
    %v4617 = vsel %vm4567, %v4565, 0
    %v4620 = vsel %vm4567, %v4566, 0
    %4622 = vmatprep.subr.mxu0 0.0
    %4623 = vmatpush1.msra.mxu0 %v442
    %4624 = vmatprep.subr.mxu0 0.0
    %4625 = vmatpush1.msra.mxu0 %v443
    %4626 = vmatprep.subr.mxu0 0.0
    %4627 = vmatpush1.msra.mxu0 %v444
    %4628 = vmatprep.subr.mxu0 0.0
    %4629 = vmatpush1.msra.mxu0 %v445
    %4630 = vmatprep.subr.mxu0 0.0
    %4631 = vmatpush1.msra.mxu0 %v446
    %4632 = vmatprep.subr.mxu0 0.0
    %4633 = vmatpush1.msra.mxu0 %v447
    %4634 = vmatprep.subr.mxu0 0.0
    %4635 = vmatpush1.msra.mxu0 %v448
    %4636 = vmatprep.subr.mxu0 0.0
    %4637 = vmatpush1.msra.mxu0 %v449
    %4638 = vmatprep.subr.mxu0 0.0
    %4639 = vmatpush1.msra.mxu0 0.0
    %4640 = vmatprep.subr.mxu0 0.0
    %4641 = vmatpush1.msra.mxu0 0.0
    %4642 = vmatprep.subr.mxu0 0.0
    %4643 = vmatpush1.msra.mxu0 0.0
    %4644 = vmatprep.subr.mxu0 0.0
    %4645 = vmatpush1.msra.mxu0 0.0
    %4646 = vmatprep.subr.mxu0 0.0
    %4647 = vmatpush1.msra.mxu0 0.0
    %4648 = vmatprep.subr.mxu0 0.0
    %4649 = vmatpush1.msra.mxu0 0.0
    %4650 = vmatprep.subr.mxu0 0.0
    %4651 = vmatpush1.msra.mxu0 0.0
    %4652 = vmatprep.subr.mxu0 0.0
    %4653 = vmatpush1.msra.mxu0 0.0
    %4654 = vmatprep.subr.mxu0 0.0
    %4655 = vmatpush1.msra.mxu0 0.0
    %4656 = vmatprep.subr.mxu0 0.0
    %4657 = vmatpush1.msra.mxu0 0.0
    %4658 = vmatprep.subr.mxu0 0.0
    %4659 = vmatpush1.msra.mxu0 0.0
    %4660 = vmatprep.subr.mxu0 0.0
    %4661 = vmatpush1.msra.mxu0 0.0
    %4662 = vmatprep.subr.mxu0 0.0
    %4663 = vmatpush1.msra.mxu0 0.0
    %4664 = vmatprep.subr.mxu0 0.0
    %4665 = vmatpush1.msra.mxu0 0.0
    %4666 = vmatprep.subr.mxu0 0.0
    %4667 = vmatpush1.msra.mxu0 0.0
    %4668 = vmatprep.subr.mxu0 0.0
    %4669 = vmatpush1.msra.mxu0 0.0
    %4670 = vmatprep.subr.mxu0 0.0
    %4671 = vmatpush1.msra.mxu0 0.0
    %4672 = vmatprep.subr.mxu0 0.0
    %4673 = vmatpush1.msra.mxu0 0.0
    %4674 = vmatprep.subr.mxu0 0.0
    %4675 = vmatpush1.msra.mxu0 0.0
    %4676 = vmatprep.subr.mxu0 0.0
    %4677 = vmatpush1.msra.mxu0 0.0
    %4678 = vmatprep.subr.mxu0 0.0
    %4679 = vmatpush1.msra.mxu0 0.0
    %4680 = vmatprep.subr.mxu0 0.0
    %4681 = vmatpush1.msra.mxu0 0.0
    %4682 = vmatprep.subr.mxu0 0.0
    %4683 = vmatpush1.msra.mxu0 0.0
    %4684 = vmatprep.subr.mxu0 0.0
    %4685 = vmatpush1.msra.mxu0 0.0
    %4686 = vmatprep.mubr.f32.mxu0 0.0
    %4687 = vmatmul.mubr.f32.gmra.mrb[0].mxu0 %v4569
    %v4688 = vpop.f32.mrb[0].mxu0
    %v4689 = vadd.f32 0.0, %v4688
    %v4690 = vpop.f32.mrb[0].mxu0
    %4691 = vmatprep.mubr.f32.mxu0 0.0
    %4692 = vmatmul.mubr.f32.gmra.mrb[0].mxu0 %v4572
    %v4693 = vpop.f32.mrb[0].mxu0
    %v4694 = vadd.f32 0.0, %v4693
    %v4695 = vpop.f32.mrb[0].mxu0
    %4696 = vmatprep.mubr.f32.mxu0 0.0
    %4697 = vmatmul.mubr.f32.gmra.mrb[0].mxu0 %v4575
    %v4698 = vpop.f32.mrb[0].mxu0
    %v4699 = vadd.f32 0.0, %v4698
    %v4700 = vpop.f32.mrb[0].mxu0
    %4701 = vmatprep.mubr.f32.mxu0 0.0
    %4702 = vmatmul.mubr.f32.gmra.mrb[0].mxu0 %v4578
    %v4703 = vpop.f32.mrb[0].mxu0
    %v4704 = vadd.f32 0.0, %v4703
    %v4705 = vpop.f32.mrb[0].mxu0
    %4706 = vmatprep.mubr.f32.mxu0 0.0
    %4707 = vmatmul.mubr.f32.gmra.mrb[0].mxu0 %v4581
    %v4708 = vpop.f32.mrb[0].mxu0
    %v4709 = vadd.f32 0.0, %v4708
    %v4710 = vpop.f32.mrb[0].mxu0
    %4711 = vmatprep.mubr.f32.mxu0 0.0
    %4712 = vmatmul.mubr.f32.gmra.mrb[0].mxu0 %v4584
    %v4713 = vpop.f32.mrb[0].mxu0
    %v4714 = vadd.f32 0.0, %v4713
    %v4715 = vpop.f32.mrb[0].mxu0
    %4716 = vmatprep.mubr.f32.mxu0 0.0
    %4717 = vmatmul.mubr.f32.gmra.mrb[0].mxu0 %v4587
    %v4718 = vpop.f32.mrb[0].mxu0
    %v4719 = vadd.f32 0.0, %v4718
    %v4720 = vpop.f32.mrb[0].mxu0
    %4721 = vmatprep.mubr.f32.mxu0 0.0
    %4722 = vmatmul.mubr.f32.gmra.mrb[0].mxu0 %v4590
    %v4723 = vpop.f32.mrb[0].mxu0
    %v4724 = vadd.f32 0.0, %v4723
    %v4725 = vpop.f32.mrb[0].mxu0
    %4726 = vmatprep.mubr.f32.mxu0 0.0
    %4727 = vmatmul.mubr.f32.gmra.mrb[0].mxu0 %v4593
    %v4728 = vpop.f32.mrb[0].mxu0
    %v4729 = vadd.f32 0.0, %v4728
    %v4730 = vpop.f32.mrb[0].mxu0
    %4731 = vmatprep.mubr.f32.mxu0 0.0
    %4732 = vmatmul.mubr.f32.gmra.mrb[0].mxu0 %v4596
    %v4733 = vpop.f32.mrb[0].mxu0
    %v4734 = vadd.f32 0.0, %v4733
    %v4735 = vpop.f32.mrb[0].mxu0
    %4736 = vmatprep.mubr.f32.mxu0 0.0
    %4737 = vmatmul.mubr.f32.gmra.mrb[0].mxu0 %v4599
    %v4738 = vpop.f32.mrb[0].mxu0
    %v4739 = vadd.f32 0.0, %v4738
    %v4740 = vpop.f32.mrb[0].mxu0
    %4741 = vmatprep.mubr.f32.mxu0 0.0
    %4742 = vmatmul.mubr.f32.gmra.mrb[0].mxu0 %v4602
    %v4743 = vpop.f32.mrb[0].mxu0
    %v4744 = vadd.f32 0.0, %v4743
    %v4745 = vpop.f32.mrb[0].mxu0
    %4746 = vmatprep.mubr.f32.mxu0 0.0
    %4747 = vmatmul.mubr.f32.gmra.mrb[0].mxu0 %v4605
    %v4748 = vpop.f32.mrb[0].mxu0
    %v4749 = vadd.f32 0.0, %v4748
    %v4750 = vpop.f32.mrb[0].mxu0
    %4751 = vmatprep.mubr.f32.mxu0 0.0
    %4752 = vmatmul.mubr.f32.gmra.mrb[0].mxu0 %v4608
    %v4753 = vpop.f32.mrb[0].mxu0
    %v4754 = vadd.f32 0.0, %v4753
    %v4755 = vpop.f32.mrb[0].mxu0
    %4756 = vmatprep.mubr.f32.mxu0 0.0
    %4757 = vmatmul.mubr.f32.gmra.mrb[0].mxu0 %v4611
    %v4758 = vpop.f32.mrb[0].mxu0
    %v4759 = vadd.f32 0.0, %v4758
    %v4760 = vpop.f32.mrb[0].mxu0
    %4761 = vmatprep.mubr.f32.mxu0 0.0
    %4762 = vmatmul.mubr.f32.gmra.mrb[0].mxu0 %v4614
    %v4763 = vpop.f32.mrb[0].mxu0
    %v4764 = vadd.f32 0.0, %v4763
    %v4765 = vpop.f32.mrb[0].mxu0
    %4766 = vmatprep.mubr.f32.mxu0 0.0
    %4767 = vmatmul.mubr.f32.gmra.mrb[0].mxu0 %v4617
    %v4768 = vpop.f32.mrb[0].mxu0
    %v4769 = vadd.f32 0.0, %v4768
    %v4770 = vpop.f32.mrb[0].mxu0
    %4771 = vmatprep.mubr.f32.mxu0 0.0
    %4772 = vmatmul.mubr.f32.gmra.mrb[0].mxu0 %v4620
    %v4773 = vpop.f32.mrb[0].mxu0
    %v4774 = vadd.f32 0.0, %v4773
    %v4775 = vpop.f32.mrb[0].mxu0
    %4776 = vdwg.mxu0
    %v4777 = vadd.f32 %v3962, %v4689
    %v4778 = vadd.f32 %v3963, %v4694
    %v4779 = vadd.f32 %v3964, %v4699
    %v4780 = vadd.f32 %v3965, %v4704
    %v4781 = vadd.f32 %v3966, %v4709
    %v4782 = vadd.f32 %v3967, %v4714
    %v4783 = vadd.f32 %v3968, %v4719
    %v4784 = vadd.f32 %v3969, %v4724
    %v4785 = vadd.f32 %v3970, %v4729
    %v4786 = vadd.f32 %v3971, %v4734
    %v4787 = vadd.f32 %v3972, %v4739
    %v4788 = vadd.f32 %v3973, %v4744
    %v4789 = vadd.f32 %v3974, %v4749
    %v4790 = vadd.f32 %v3975, %v4754
    %v4791 = vadd.f32 %v3976, %v4759
    %v4792 = vadd.f32 %v3977, %v4764
    %v4793 = vadd.f32 %v3978, %v4769
    %v4794 = vadd.f32 %v3979, %v4774
    %v4796 = vlaneseq
    %v4797 = vshrl.u32 %v4796, 7
    %v4798 = vsub.s32 0, %v4797
    %v4799 = vrot.slane %v450, %v4798
    %v4801 = vadd.f32 %v4777, %v4799
    %v4802 = vadd.f32 %v4778, %v4799
    %v4803 = vadd.f32 %v4779, %v4799
    %v4804 = vadd.f32 %v4780, %v4799
    %v4805 = vadd.f32 %v4781, %v4799
    %v4806 = vadd.f32 %v4782, %v4799
    %v4807 = vadd.f32 %v4783, %v4799
    %v4808 = vadd.f32 %v4784, %v4799
    %v4809 = vadd.f32 %v4785, %v4799
    %v4810 = vadd.f32 %v4786, %v4799
    %v4811 = vadd.f32 %v4787, %v4799
    %v4812 = vadd.f32 %v4788, %v4799
    %v4813 = vadd.f32 %v4789, %v4799
    %v4814 = vadd.f32 %v4790, %v4799
    %v4815 = vadd.f32 %v4791, %v4799
    %v4816 = vadd.f32 %v4792, %v4799
    %v4817 = vadd.f32 %v4793, %v4799
    %v4818 = vadd.f32 %v4794, %v4799
    %v4819 = vld [vmem:[#allocation7] sm:$0xff]
    %v4820 = vld [vmem:[#allocation7 + $0x8] sm:$0xff]
    %v4822 = vsel %vm1627, %v4819, 0
    %v4825 = vsel %vm1627, %v4820, 0
    %4827 = vmatprep.subr.mxu0 0.0
    %4828 = vmatpush1.msra.mxu0 %v4801
    %4829 = vmatprep.subr.mxu0 0.0
    %4830 = vmatpush1.msra.mxu0 %v4802
    %4831 = vmatprep.subr.mxu0 0.0
    %4832 = vmatpush1.msra.mxu0 0.0
    %4833 = vmatprep.subr.mxu0 0.0
    %4834 = vmatpush1.msra.mxu0 0.0
    %4835 = vmatprep.subr.mxu0 0.0
    %4836 = vmatpush1.msra.mxu0 0.0
    %4837 = vmatprep.subr.mxu0 0.0
    %4838 = vmatpush1.msra.mxu0 0.0
    %4839 = vmatprep.subr.mxu0 0.0
    %4840 = vmatpush1.msra.mxu0 0.0
    %4841 = vmatprep.subr.mxu0 0.0
    %4842 = vmatpush1.msra.mxu0 0.0
    %4843 = vmatprep.subr.mxu0 0.0
    %4844 = vmatpush1.msra.mxu0 0.0
    %4845 = vmatprep.subr.mxu0 0.0
    %4846 = vmatpush1.msra.mxu0 0.0
    %4847 = vmatprep.subr.mxu0 0.0
    %4848 = vmatpush1.msra.mxu0 0.0
    %4849 = vmatprep.subr.mxu0 0.0
    %4850 = vmatpush1.msra.mxu0 0.0
    %4851 = vmatprep.subr.mxu0 0.0
    %4852 = vmatpush1.msra.mxu0 0.0
    %4853 = vmatprep.subr.mxu0 0.0
    %4854 = vmatpush1.msra.mxu0 0.0
    %4855 = vmatprep.subr.mxu0 0.0
    %4856 = vmatpush1.msra.mxu0 0.0
    %4857 = vmatprep.subr.mxu0 0.0
    %4858 = vmatpush1.msra.mxu0 0.0
    %4859 = vmatprep.subr.mxu0 0.0
    %4860 = vmatpush1.msra.mxu0 0.0
    %4861 = vmatprep.subr.mxu0 0.0
    %4862 = vmatpush1.msra.mxu0 0.0
    %4863 = vmatprep.subr.mxu0 0.0
    %4864 = vmatpush1.msra.mxu0 0.0
    %4865 = vmatprep.subr.mxu0 0.0
    %4866 = vmatpush1.msra.mxu0 0.0
    %4867 = vmatprep.subr.mxu0 0.0
    %4868 = vmatpush1.msra.mxu0 0.0
    %4869 = vmatprep.subr.mxu0 0.0
    %4870 = vmatpush1.msra.mxu0 0.0
    %4871 = vmatprep.subr.mxu0 0.0
    %4872 = vmatpush1.msra.mxu0 0.0
    %4873 = vmatprep.subr.mxu0 0.0
    %4874 = vmatpush1.msra.mxu0 0.0
    %4875 = vmatprep.subr.mxu0 0.0
    %4876 = vmatpush1.msra.mxu0 0.0
    %4877 = vmatprep.subr.mxu0 0.0
    %4878 = vmatpush1.msra.mxu0 0.0
    %4879 = vmatprep.subr.mxu0 0.0
    %4880 = vmatpush1.msra.mxu0 0.0
    %4881 = vmatprep.subr.mxu0 0.0
    %4882 = vmatpush1.msra.mxu0 0.0
    %4883 = vmatprep.subr.mxu0 0.0
    %4884 = vmatpush1.msra.mxu0 0.0
    %4885 = vmatprep.subr.mxu0 0.0
    %4886 = vmatpush1.msra.mxu0 0.0
    %4887 = vmatprep.subr.mxu0 0.0
    %4888 = vmatpush1.msra.mxu0 0.0
    %4889 = vmatprep.subr.mxu0 0.0
    %4890 = vmatpush1.msra.mxu0 0.0
    %4891 = vmatprep.mubr.f32.mxu0 0.0
    %4892 = vmatmul.mubr.f32.gmra.mrb[0].mxu0 %v4822
    %v4893 = vpop.f32.mrb[0].mxu0
    %v4894 = vadd.f32 0.0, %v4893
    %v4895 = vpop.f32.mrb[0].mxu0
    %4896 = vmatprep.mubr.f32.mxu0 0.0
    %4897 = vmatmul.mubr.f32.gmra.mrb[0].mxu0 %v4825
    %v4898 = vpop.f32.mrb[0].mxu0
    %v4899 = vadd.f32 0.0, %v4898
    %v4900 = vpop.f32.mrb[0].mxu0
    %4901 = vdwg.mxu0
    %v4902 = vld [vmem:[%s15] sm:$0xff]
    %v4903 = vld [vmem:[%s15 + $0x8] sm:$0xff]
    %v4904 = vld [vmem:[%s15 + $0x10] sm:$0xff]
    %v4905 = vld [vmem:[%s15 + $0x18] sm:$0xff]
    %v4906 = vld [vmem:[%s15 + $0x20] sm:$0xff]
    %v4907 = vld [vmem:[%s15 + $0x28] sm:$0xff]
    %v4908 = vld [vmem:[%s15 + $0x30] sm:$0xff]
    %v4909 = vld [vmem:[%s15 + $0x38] sm:$0xff]
    %v4910 = vld [vmem:[%s15 + $0x40] sm:$0xff]
    %v4911 = vld [vmem:[%s15 + $0x48] sm:$0xff]
    %v4912 = vld [vmem:[%s15 + $0x50] sm:$0xff]
    %v4913 = vld [vmem:[%s15 + $0x58] sm:$0xff]
    %v4914 = vld [vmem:[%s15 + $0x60] sm:$0xff]
    %v4915 = vld [vmem:[%s15 + $0x68] sm:$0xff]
    %v4916 = vld [vmem:[%s15 + $0x70] sm:$0xff]
    %v4917 = vld [vmem:[%s15 + $0x78] sm:$0xff]
    %v4918 = vld [vmem:[%s15 + $0x80] sm:$0xff]
    %v4919 = vld [vmem:[%s15 + $0x88] sm:$0xff]
    %v4920 = vld [vmem:[%s7] sm:$0xff]
    %v4921 = vld [vmem:[%s7 + $0x8] sm:$0x1]
    %v4923 = vsel %vm842, %v4902, 0
    %v4926 = vsel %vm842, %v4903, 0
    %v4929 = vsel %vm842, %v4904, 0
    %v4932 = vsel %vm842, %v4905, 0
    %v4935 = vsel %vm842, %v4906, 0
    %v4938 = vsel %vm842, %v4907, 0
    %v4941 = vsel %vm842, %v4908, 0
    %v4944 = vsel %vm842, %v4909, 0
    %v4947 = vsel %vm842, %v4910, 0
    %v4950 = vsel %vm842, %v4911, 0
    %v4953 = vsel %vm842, %v4912, 0
    %v4956 = vsel %vm842, %v4913, 0
    %v4959 = vsel %vm842, %v4914, 0
    %v4962 = vsel %vm842, %v4915, 0
    %v4965 = vsel %vm842, %v4916, 0
    %v4968 = vsel %vm842, %v4917, 0
    %v4971 = vsel %vm842, %v4918, 0
    %v4974 = vsel %vm842, %v4919, 0
    %v4977 = vsel %vm897, %v4921, 0
    %4979 = vmatprep.subr.mxu0 0.0
    %4980 = vmatpush1.msra.mxu0 %v4920
    %4981 = vmatprep.subr.mxu0 0.0
    %4982 = vmatpush1.msra.mxu0 %v4977
    %4983 = vmatprep.subr.mxu0 0.0
    %4984 = vmatpush1.msra.mxu0 0.0
    %4985 = vmatprep.subr.mxu0 0.0
    %4986 = vmatpush1.msra.mxu0 0.0
    %4987 = vmatprep.subr.mxu0 0.0
    %4988 = vmatpush1.msra.mxu0 0.0
    %4989 = vmatprep.subr.mxu0 0.0
    %4990 = vmatpush1.msra.mxu0 0.0
    %4991 = vmatprep.subr.mxu0 0.0
    %4992 = vmatpush1.msra.mxu0 0.0
    %4993 = vmatprep.subr.mxu0 0.0
    %4994 = vmatpush1.msra.mxu0 0.0
    %4995 = vmatprep.subr.mxu0 0.0
    %4996 = vmatpush1.msra.mxu0 0.0
    %4997 = vmatprep.subr.mxu0 0.0
    %4998 = vmatpush1.msra.mxu0 0.0
    %4999 = vmatprep.subr.mxu0 0.0
    %5000 = vmatpush1.msra.mxu0 0.0
    %5001 = vmatprep.subr.mxu0 0.0
    %5002 = vmatpush1.msra.mxu0 0.0
    %5003 = vmatprep.subr.mxu0 0.0
    %5004 = vmatpush1.msra.mxu0 0.0
    %5005 = vmatprep.subr.mxu0 0.0
    %5006 = vmatpush1.msra.mxu0 0.0
    %5007 = vmatprep.subr.mxu0 0.0
    %5008 = vmatpush1.msra.mxu0 0.0
    %5009 = vmatprep.subr.mxu0 0.0
    %5010 = vmatpush1.msra.mxu0 0.0
    %5011 = vmatprep.subr.mxu0 0.0
    %5012 = vmatpush1.msra.mxu0 0.0
    %5013 = vmatprep.subr.mxu0 0.0
    %5014 = vmatpush1.msra.mxu0 0.0
    %5015 = vmatprep.subr.mxu0 0.0
    %5016 = vmatpush1.msra.mxu0 0.0
    %5017 = vmatprep.subr.mxu0 0.0
    %5018 = vmatpush1.msra.mxu0 0.0
    %5019 = vmatprep.subr.mxu0 0.0
    %5020 = vmatpush1.msra.mxu0 0.0
    %5021 = vmatprep.subr.mxu0 0.0
    %5022 = vmatpush1.msra.mxu0 0.0
    %5023 = vmatprep.subr.mxu0 0.0
    %5024 = vmatpush1.msra.mxu0 0.0
    %5025 = vmatprep.subr.mxu0 0.0
    %5026 = vmatpush1.msra.mxu0 0.0
    %5027 = vmatprep.subr.mxu0 0.0
    %5028 = vmatpush1.msra.mxu0 0.0
    %5029 = vmatprep.subr.mxu0 0.0
    %5030 = vmatpush1.msra.mxu0 0.0
    %5031 = vmatprep.subr.mxu0 0.0
    %5032 = vmatpush1.msra.mxu0 0.0
    %5033 = vmatprep.subr.mxu0 0.0
    %5034 = vmatpush1.msra.mxu0 0.0
    %5035 = vmatprep.subr.mxu0 0.0
    %5036 = vmatpush1.msra.mxu0 0.0
    %5037 = vmatprep.subr.mxu0 0.0
    %5038 = vmatpush1.msra.mxu0 0.0
    %5039 = vmatprep.subr.mxu0 0.0
    %5040 = vmatpush1.msra.mxu0 0.0
    %5041 = vmatprep.subr.mxu0 0.0
    %5042 = vmatpush1.msra.mxu0 0.0
    %5043 = vmatprep.mubr.f32.mxu0 0.0
    %5044 = vmatmul.mubr.f32.gmra.mrb[0].mxu0 %v4923
    %v5045 = vpop.f32.mrb[0].mxu0
    %v5046 = vadd.f32 0.0, %v5045
    %v5047 = vpop.f32.mrb[0].mxu0
    %5048 = vmatprep.mubr.f32.mxu0 0.0
    %5049 = vmatmul.mubr.f32.gmra.mrb[0].mxu0 %v4926
    %v5050 = vpop.f32.mrb[0].mxu0
    %v5051 = vadd.f32 0.0, %v5050
    %v5052 = vpop.f32.mrb[0].mxu0
    %5053 = vmatprep.mubr.f32.mxu0 0.0
    %5054 = vmatmul.mubr.f32.gmra.mrb[0].mxu0 %v4929
    %v5055 = vpop.f32.mrb[0].mxu0
    %v5056 = vadd.f32 0.0, %v5055
    %v5057 = vpop.f32.mrb[0].mxu0
    %5058 = vmatprep.mubr.f32.mxu0 0.0
    %5059 = vmatmul.mubr.f32.gmra.mrb[0].mxu0 %v4932
    %v5060 = vpop.f32.mrb[0].mxu0
    %v5061 = vadd.f32 0.0, %v5060
    %v5062 = vpop.f32.mrb[0].mxu0
    %5063 = vmatprep.mubr.f32.mxu0 0.0
    %5064 = vmatmul.mubr.f32.gmra.mrb[0].mxu0 %v4935
    %v5065 = vpop.f32.mrb[0].mxu0
    %v5066 = vadd.f32 0.0, %v5065
    %v5067 = vpop.f32.mrb[0].mxu0
    %5068 = vmatprep.mubr.f32.mxu0 0.0
    %5069 = vmatmul.mubr.f32.gmra.mrb[0].mxu0 %v4938
    %v5070 = vpop.f32.mrb[0].mxu0
    %v5071 = vadd.f32 0.0, %v5070
    %v5072 = vpop.f32.mrb[0].mxu0
    %5073 = vmatprep.mubr.f32.mxu0 0.0
    %5074 = vmatmul.mubr.f32.gmra.mrb[0].mxu0 %v4941
    %v5075 = vpop.f32.mrb[0].mxu0
    %v5076 = vadd.f32 0.0, %v5075
    %v5077 = vpop.f32.mrb[0].mxu0
    %5078 = vmatprep.mubr.f32.mxu0 0.0
    %5079 = vmatmul.mubr.f32.gmra.mrb[0].mxu0 %v4944
    %v5080 = vpop.f32.mrb[0].mxu0
    %v5081 = vadd.f32 0.0, %v5080
    %v5082 = vpop.f32.mrb[0].mxu0
    %5083 = vmatprep.mubr.f32.mxu0 0.0
    %5084 = vmatmul.mubr.f32.gmra.mrb[0].mxu0 %v4947
    %v5085 = vpop.f32.mrb[0].mxu0
    %v5086 = vadd.f32 0.0, %v5085
    %v5087 = vpop.f32.mrb[0].mxu0
    %5088 = vmatprep.mubr.f32.mxu0 0.0
    %5089 = vmatmul.mubr.f32.gmra.mrb[0].mxu0 %v4950
    %v5090 = vpop.f32.mrb[0].mxu0
    %v5091 = vadd.f32 0.0, %v5090
    %v5092 = vpop.f32.mrb[0].mxu0
    %5093 = vmatprep.mubr.f32.mxu0 0.0
    %5094 = vmatmul.mubr.f32.gmra.mrb[0].mxu0 %v4953
    %v5095 = vpop.f32.mrb[0].mxu0
    %v5096 = vadd.f32 0.0, %v5095
    %v5097 = vpop.f32.mrb[0].mxu0
    %5098 = vmatprep.mubr.f32.mxu0 0.0
    %5099 = vmatmul.mubr.f32.gmra.mrb[0].mxu0 %v4956
    %v5100 = vpop.f32.mrb[0].mxu0
    %v5101 = vadd.f32 0.0, %v5100
    %v5102 = vpop.f32.mrb[0].mxu0
    %5103 = vmatprep.mubr.f32.mxu0 0.0
    %5104 = vmatmul.mubr.f32.gmra.mrb[0].mxu0 %v4959
    %v5105 = vpop.f32.mrb[0].mxu0
    %v5106 = vadd.f32 0.0, %v5105
    %v5107 = vpop.f32.mrb[0].mxu0
    %5108 = vmatprep.mubr.f32.mxu0 0.0
    %5109 = vmatmul.mubr.f32.gmra.mrb[0].mxu0 %v4962
    %v5110 = vpop.f32.mrb[0].mxu0
    %v5111 = vadd.f32 0.0, %v5110
    %v5112 = vpop.f32.mrb[0].mxu0
    %5113 = vmatprep.mubr.f32.mxu0 0.0
    %5114 = vmatmul.mubr.f32.gmra.mrb[0].mxu0 %v4965
    %v5115 = vpop.f32.mrb[0].mxu0
    %v5116 = vadd.f32 0.0, %v5115
    %v5117 = vpop.f32.mrb[0].mxu0
    %5118 = vmatprep.mubr.f32.mxu0 0.0
    %5119 = vmatmul.mubr.f32.gmra.mrb[0].mxu0 %v4968
    %v5120 = vpop.f32.mrb[0].mxu0
    %v5121 = vadd.f32 0.0, %v5120
    %v5122 = vpop.f32.mrb[0].mxu0
    %5123 = vmatprep.mubr.f32.mxu0 0.0
    %5124 = vmatmul.mubr.f32.gmra.mrb[0].mxu0 %v4971
    %v5125 = vpop.f32.mrb[0].mxu0
    %v5126 = vadd.f32 0.0, %v5125
    %v5127 = vpop.f32.mrb[0].mxu0
    %5128 = vmatprep.mubr.f32.mxu0 0.0
    %5129 = vmatmul.mubr.f32.gmra.mrb[0].mxu0 %v4974
    %v5130 = vpop.f32.mrb[0].mxu0
    %v5131 = vadd.f32 0.0, %v5130
    %v5132 = vpop.f32.mrb[0].mxu0
    %5133 = vdwg.mxu0
    %v5134 = vadd.f32 %v4894, %v5046
    %v5135 = vadd.f32 %v4899, %v5051
    %v5136 = vadd.f32 %v4803, %v5056
    %v5137 = vadd.f32 %v4804, %v5061
    %v5138 = vadd.f32 %v4805, %v5066
    %v5139 = vadd.f32 %v4806, %v5071
    %v5140 = vadd.f32 %v4807, %v5076
    %v5141 = vadd.f32 %v4808, %v5081
    %v5142 = vadd.f32 %v4809, %v5086
    %v5143 = vadd.f32 %v4810, %v5091
    %v5144 = vadd.f32 %v4811, %v5096
    %v5145 = vadd.f32 %v4812, %v5101
    %v5146 = vadd.f32 %v4813, %v5106
    %v5147 = vadd.f32 %v4814, %v5111
    %v5148 = vadd.f32 %v4815, %v5116
    %v5149 = vadd.f32 %v4816, %v5121
    %v5150 = vadd.f32 %v4817, %v5126
    %v5151 = vadd.f32 %v4818, %v5131
    %v5152 = vsel %vm1074, %v5134, 0.0
    %5153 = vadd.xlane.f32.xlu0 %v5152
    %v5154 = vpop.xlane.xlu0 %5153
    %v5155 = vsel %vm1074, %v5135, 0.0
    %5156 = vadd.xlane.f32.xlu0 %v5155
    %v5157 = vpop.xlane.xlu0 %5156
    %v5158 = vsel %vm1074, %v5136, 0.0
    %5159 = vadd.xlane.f32.xlu0 %v5158
    %v5160 = vpop.xlane.xlu0 %5159
    %v5161 = vsel %vm1074, %v5137, 0.0
    %5162 = vadd.xlane.f32.xlu0 %v5161
    %v5163 = vpop.xlane.xlu0 %5162
    %v5164 = vsel %vm1074, %v5138, 0.0
    %5165 = vadd.xlane.f32.xlu0 %v5164
    %v5166 = vpop.xlane.xlu0 %5165
    %v5167 = vsel %vm1074, %v5139, 0.0
    %5168 = vadd.xlane.f32.xlu0 %v5167
    %v5169 = vpop.xlane.xlu0 %5168
    %v5170 = vsel %vm1074, %v5140, 0.0
    %5171 = vadd.xlane.f32.xlu0 %v5170
    %v5172 = vpop.xlane.xlu0 %5171
    %v5173 = vsel %vm1074, %v5141, 0.0
    %5174 = vadd.xlane.f32.xlu0 %v5173
    %v5175 = vpop.xlane.xlu0 %5174
    %v5176 = vsel %vm1074, %v5142, 0.0
    %5177 = vadd.xlane.f32.xlu0 %v5176
    %v5178 = vpop.xlane.xlu0 %5177
    %v5179 = vsel %vm1074, %v5143, 0.0
    %5180 = vadd.xlane.f32.xlu0 %v5179
    %v5181 = vpop.xlane.xlu0 %5180
    %v5182 = vsel %vm1074, %v5144, 0.0
    %5183 = vadd.xlane.f32.xlu0 %v5182
    %v5184 = vpop.xlane.xlu0 %5183
    %v5185 = vsel %vm1074, %v5145, 0.0
    %5186 = vadd.xlane.f32.xlu0 %v5185
    %v5187 = vpop.xlane.xlu0 %5186
    %v5188 = vsel %vm1074, %v5146, 0.0
    %5189 = vadd.xlane.f32.xlu0 %v5188
    %v5190 = vpop.xlane.xlu0 %5189
    %v5191 = vsel %vm1074, %v5147, 0.0
    %5192 = vadd.xlane.f32.xlu0 %v5191
    %v5193 = vpop.xlane.xlu0 %5192
    %v5194 = vsel %vm1074, %v5148, 0.0
    %5195 = vadd.xlane.f32.xlu0 %v5194
    %v5196 = vpop.xlane.xlu0 %5195
    %v5197 = vsel %vm1074, %v5149, 0.0
    %5198 = vadd.xlane.f32.xlu0 %v5197
    %v5199 = vpop.xlane.xlu0 %5198
    %v5200 = vsel %vm1074, %v5150, 0.0
    %5201 = vadd.xlane.f32.xlu0 %v5200
    %v5202 = vpop.xlane.xlu0 %5201
    %v5203 = vsel %vm1074, %v5151, 0.0
    %5204 = vadd.xlane.f32.xlu0 %v5203
    %v5205 = vpop.xlane.xlu0 %5204
    %v5206 = vmul.f32 %v5154, %v1129
    %v5207 = vmul.f32 %v5157, %v1129
    %v5208 = vmul.f32 %v5160, %v1129
    %v5209 = vmul.f32 %v5163, %v1129
    %v5210 = vmul.f32 %v5166, %v1129
    %v5211 = vmul.f32 %v5169, %v1129
    %v5212 = vmul.f32 %v5172, %v1129
    %v5213 = vmul.f32 %v5175, %v1129
    %v5214 = vmul.f32 %v5178, %v1129
    %v5215 = vmul.f32 %v5181, %v1129
    %v5216 = vmul.f32 %v5184, %v1129
    %v5217 = vmul.f32 %v5187, %v1129
    %v5218 = vmul.f32 %v5190, %v1129
    %v5219 = vmul.f32 %v5193, %v1129
    %v5220 = vmul.f32 %v5196, %v1129
    %v5221 = vmul.f32 %v5199, %v1129
    %v5222 = vmul.f32 %v5202, %v1129
    %v5223 = vmul.f32 %v5205, %v1129
    %v5224 = vsub.f32 %v5134, %v5206
    %v5225 = vsub.f32 %v5135, %v5207
    %v5226 = vsub.f32 %v5136, %v5208
    %v5227 = vsub.f32 %v5137, %v5209
    %v5228 = vsub.f32 %v5138, %v5210
    %v5229 = vsub.f32 %v5139, %v5211
    %v5230 = vsub.f32 %v5140, %v5212
    %v5231 = vsub.f32 %v5141, %v5213
    %v5232 = vsub.f32 %v5142, %v5214
    %v5233 = vsub.f32 %v5143, %v5215
    %v5234 = vsub.f32 %v5144, %v5216
    %v5235 = vsub.f32 %v5145, %v5217
    %v5236 = vsub.f32 %v5146, %v5218
    %v5237 = vsub.f32 %v5147, %v5219
    %v5238 = vsub.f32 %v5148, %v5220
    %v5239 = vsub.f32 %v5149, %v5221
    %v5240 = vsub.f32 %v5150, %v5222
    %v5241 = vsub.f32 %v5151, %v5223
    %v5242 = vmul.f32 %v5224, %v5224
    %v5243 = vmul.f32 %v5225, %v5225
    %v5244 = vmul.f32 %v5226, %v5226
    %v5245 = vmul.f32 %v5227, %v5227
    %v5246 = vmul.f32 %v5228, %v5228
    %v5247 = vmul.f32 %v5229, %v5229
    %v5248 = vmul.f32 %v5230, %v5230
    %v5249 = vmul.f32 %v5231, %v5231
    %v5250 = vmul.f32 %v5232, %v5232
    %v5251 = vmul.f32 %v5233, %v5233
    %v5252 = vmul.f32 %v5234, %v5234
    %v5253 = vmul.f32 %v5235, %v5235
    %v5254 = vmul.f32 %v5236, %v5236
    %v5255 = vmul.f32 %v5237, %v5237
    %v5256 = vmul.f32 %v5238, %v5238
    %v5257 = vmul.f32 %v5239, %v5239
    %v5258 = vmul.f32 %v5240, %v5240
    %v5259 = vmul.f32 %v5241, %v5241
    %v5260 = vsel %vm1074, %v5242, 0.0
    %5261 = vadd.xlane.f32.xlu0 %v5260
    %v5262 = vpop.xlane.xlu0 %5261
    %v5263 = vsel %vm1074, %v5243, 0.0
    %5264 = vadd.xlane.f32.xlu0 %v5263
    %v5265 = vpop.xlane.xlu0 %5264
    %v5266 = vsel %vm1074, %v5244, 0.0
    %5267 = vadd.xlane.f32.xlu0 %v5266
    %v5268 = vpop.xlane.xlu0 %5267
    %v5269 = vsel %vm1074, %v5245, 0.0
    %5270 = vadd.xlane.f32.xlu0 %v5269
    %v5271 = vpop.xlane.xlu0 %5270
    %v5272 = vsel %vm1074, %v5246, 0.0
    %5273 = vadd.xlane.f32.xlu0 %v5272
    %v5274 = vpop.xlane.xlu0 %5273
    %v5275 = vsel %vm1074, %v5247, 0.0
    %5276 = vadd.xlane.f32.xlu0 %v5275
    %v5277 = vpop.xlane.xlu0 %5276
    %v5278 = vsel %vm1074, %v5248, 0.0
    %5279 = vadd.xlane.f32.xlu0 %v5278
    %v5280 = vpop.xlane.xlu0 %5279
    %v5281 = vsel %vm1074, %v5249, 0.0
    %5282 = vadd.xlane.f32.xlu0 %v5281
    %v5283 = vpop.xlane.xlu0 %5282
    %v5284 = vsel %vm1074, %v5250, 0.0
    %5285 = vadd.xlane.f32.xlu0 %v5284
    %v5286 = vpop.xlane.xlu0 %5285
    %v5287 = vsel %vm1074, %v5251, 0.0
    %5288 = vadd.xlane.f32.xlu0 %v5287
    %v5289 = vpop.xlane.xlu0 %5288
    %v5290 = vsel %vm1074, %v5252, 0.0
    %5291 = vadd.xlane.f32.xlu0 %v5290
    %v5292 = vpop.xlane.xlu0 %5291
    %v5293 = vsel %vm1074, %v5253, 0.0
    %5294 = vadd.xlane.f32.xlu0 %v5293
    %v5295 = vpop.xlane.xlu0 %5294
    %v5296 = vsel %vm1074, %v5254, 0.0
    %5297 = vadd.xlane.f32.xlu0 %v5296
    %v5298 = vpop.xlane.xlu0 %5297
    %v5299 = vsel %vm1074, %v5255, 0.0
    %5300 = vadd.xlane.f32.xlu0 %v5299
    %v5301 = vpop.xlane.xlu0 %5300
    %v5302 = vsel %vm1074, %v5256, 0.0
    %5303 = vadd.xlane.f32.xlu0 %v5302
    %v5304 = vpop.xlane.xlu0 %5303
    %v5305 = vsel %vm1074, %v5257, 0.0
    %5306 = vadd.xlane.f32.xlu0 %v5305
    %v5307 = vpop.xlane.xlu0 %5306
    %v5308 = vsel %vm1074, %v5258, 0.0
    %5309 = vadd.xlane.f32.xlu0 %v5308
    %v5310 = vpop.xlane.xlu0 %5309
    %v5311 = vsel %vm1074, %v5259, 0.0
    %5312 = vadd.xlane.f32.xlu0 %v5311
    %v5313 = vpop.xlane.xlu0 %5312
    %v5314 = vmul.f32 %v5262, %v1129
    %v5315 = vmul.f32 %v5265, %v1129
    %v5316 = vmul.f32 %v5268, %v1129
    %v5317 = vmul.f32 %v5271, %v1129
    %v5318 = vmul.f32 %v5274, %v1129
    %v5319 = vmul.f32 %v5277, %v1129
    %v5320 = vmul.f32 %v5280, %v1129
    %v5321 = vmul.f32 %v5283, %v1129
    %v5322 = vmul.f32 %v5286, %v1129
    %v5323 = vmul.f32 %v5289, %v1129
    %v5324 = vmul.f32 %v5292, %v1129
    %v5325 = vmul.f32 %v5295, %v1129
    %v5326 = vmul.f32 %v5298, %v1129
    %v5327 = vmul.f32 %v5301, %v1129
    %v5328 = vmul.f32 %v5304, %v1129
    %v5329 = vmul.f32 %v5307, %v1129
    %v5330 = vmul.f32 %v5310, %v1129
    %v5331 = vmul.f32 %v5313, %v1129
    %v5332 = vadd.f32 %v5314, 1e-05
    %v5333 = vadd.f32 %v5315, 1e-05
    %v5334 = vadd.f32 %v5316, 1e-05
    %v5335 = vadd.f32 %v5317, 1e-05
    %v5336 = vadd.f32 %v5318, 1e-05
    %v5337 = vadd.f32 %v5319, 1e-05
    %v5338 = vadd.f32 %v5320, 1e-05
    %v5339 = vadd.f32 %v5321, 1e-05
    %v5340 = vadd.f32 %v5322, 1e-05
    %v5341 = vadd.f32 %v5323, 1e-05
    %v5342 = vadd.f32 %v5324, 1e-05
    %v5343 = vadd.f32 %v5325, 1e-05
    %v5344 = vadd.f32 %v5326, 1e-05
    %v5345 = vadd.f32 %v5327, 1e-05
    %v5346 = vadd.f32 %v5328, 1e-05
    %v5347 = vadd.f32 %v5329, 1e-05
    %v5348 = vadd.f32 %v5330, 1e-05
    %v5349 = vadd.f32 %v5331, 1e-05
    %v5350 = vrsqrt.pop %v5332
    %v5351 = vrsqrt.pop %v5333
    %v5352 = vrsqrt.pop %v5334
    %v5353 = vrsqrt.pop %v5335
    %v5354 = vrsqrt.pop %v5336
    %v5355 = vrsqrt.pop %v5337
    %v5356 = vrsqrt.pop %v5338
    %v5357 = vrsqrt.pop %v5339
    %v5358 = vrsqrt.pop %v5340
    %v5359 = vrsqrt.pop %v5341
    %v5360 = vrsqrt.pop %v5342
    %v5361 = vrsqrt.pop %v5343
    %v5362 = vrsqrt.pop %v5344
    %v5363 = vrsqrt.pop %v5345
    %v5364 = vrsqrt.pop %v5346
    %v5365 = vrsqrt.pop %v5347
    %v5366 = vrsqrt.pop %v5348
    %v5367 = vrsqrt.pop %v5349
    %v5368 = vmul.f32 %v5224, %v5350
    %v5369 = vmul.f32 %v5225, %v5351
    %v5370 = vmul.f32 %v5226, %v5352
    %v5371 = vmul.f32 %v5227, %v5353
    %v5372 = vmul.f32 %v5228, %v5354
    %v5373 = vmul.f32 %v5229, %v5355
    %v5374 = vmul.f32 %v5230, %v5356
    %v5375 = vmul.f32 %v5231, %v5357
    %v5376 = vmul.f32 %v5232, %v5358
    %v5377 = vmul.f32 %v5233, %v5359
    %v5378 = vmul.f32 %v5234, %v5360
    %v5379 = vmul.f32 %v5235, %v5361
    %v5380 = vmul.f32 %v5236, %v5362
    %v5381 = vmul.f32 %v5237, %v5363
    %v5382 = vmul.f32 %v5238, %v5364
    %v5383 = vmul.f32 %v5239, %v5365
    %v5384 = vmul.f32 %v5240, %v5366
    %v5385 = vmul.f32 %v5241, %v5367
    %v5387 = vlaneseq
    %v5388 = vshrl.u32 %v5387, 7
    %v5389 = vsub.s32 0, %v5388
    %v5390 = vrot.slane %v451, %v5389
    %v5392 = vmul.f32 %v5368, %v5390
    %v5393 = vmul.f32 %v5369, %v5390
    %v5394 = vmul.f32 %v5370, %v5390
    %v5395 = vmul.f32 %v5371, %v5390
    %v5396 = vmul.f32 %v5372, %v5390
    %v5397 = vmul.f32 %v5373, %v5390
    %v5398 = vmul.f32 %v5374, %v5390
    %v5399 = vmul.f32 %v5375, %v5390
    %v5400 = vmul.f32 %v5376, %v5390
    %v5401 = vmul.f32 %v5377, %v5390
    %v5402 = vmul.f32 %v5378, %v5390
    %v5403 = vmul.f32 %v5379, %v5390
    %v5404 = vmul.f32 %v5380, %v5390
    %v5405 = vmul.f32 %v5381, %v5390
    %v5406 = vmul.f32 %v5382, %v5390
    %v5407 = vmul.f32 %v5383, %v5390
    %v5408 = vmul.f32 %v5384, %v5390
    %v5409 = vmul.f32 %v5385, %v5390
    %v5411 = vlaneseq
    %v5412 = vshrl.u32 %v5411, 7
    %v5413 = vsub.s32 0, %v5412
    %v5414 = vrot.slane %v452, %v5413
    %v5416 = vadd.f32 %v5392, %v5414
    %v5417 = vadd.f32 %v5393, %v5414
    %v5418 = vadd.f32 %v5394, %v5414
    %v5419 = vadd.f32 %v5395, %v5414
    %v5420 = vadd.f32 %v5396, %v5414
    %v5421 = vadd.f32 %v5397, %v5414
    %v5422 = vadd.f32 %v5398, %v5414
    %v5423 = vadd.f32 %v5399, %v5414
    %v5424 = vadd.f32 %v5400, %v5414
    %v5425 = vadd.f32 %v5401, %v5414
    %v5426 = vadd.f32 %v5402, %v5414
    %v5427 = vadd.f32 %v5403, %v5414
    %v5428 = vadd.f32 %v5404, %v5414
    %v5429 = vadd.f32 %v5405, %v5414
    %v5430 = vadd.f32 %v5406, %v5414
    %v5431 = vadd.f32 %v5407, %v5414
    %v5432 = vadd.f32 %v5408, %v5414
    %v5433 = vadd.f32 %v5409, %v5414
    %v5435 = vsel %vm1074, %v5416, 0
    %v5438 = vsel %vm1074, %v5417, 0
    %v5441 = vsel %vm1074, %v5418, 0
    %v5444 = vsel %vm1074, %v5419, 0
    %v5447 = vsel %vm1074, %v5420, 0
    %v5450 = vsel %vm1074, %v5421, 0
    %v5453 = vsel %vm1074, %v5422, 0
    %v5456 = vsel %vm1074, %v5423, 0
    %v5459 = vsel %vm1074, %v5424, 0
    %v5462 = vsel %vm1074, %v5425, 0
    %v5465 = vsel %vm1074, %v5426, 0
    %v5468 = vsel %vm1074, %v5427, 0
    %v5471 = vsel %vm1074, %v5428, 0
    %v5474 = vsel %vm1074, %v5429, 0
    %v5477 = vsel %vm1074, %v5430, 0
    %v5480 = vsel %vm1074, %v5431, 0
    %v5483 = vsel %vm1074, %v5432, 0
    %v5486 = vsel %vm1074, %v5433, 0
    %5488 = vmatprep.subr.mxu0 0.0
    %5489 = vmatpush1.msra.mxu0 %v453
    %5490 = vmatprep.subr.mxu0 0.0
    %5491 = vmatpush1.msra.mxu0 %v454
    %5492 = vmatprep.subr.mxu0 0.0
    %5493 = vmatpush1.msra.mxu0 %v455
    %5494 = vmatprep.subr.mxu0 0.0
    %5495 = vmatpush1.msra.mxu0 %v456
    %5496 = vmatprep.subr.mxu0 0.0
    %5497 = vmatpush1.msra.mxu0 0.0
    %5498 = vmatprep.subr.mxu0 0.0
    %5499 = vmatpush1.msra.mxu0 0.0
    %5500 = vmatprep.subr.mxu0 0.0
    %5501 = vmatpush1.msra.mxu0 0.0
    %5502 = vmatprep.subr.mxu0 0.0
    %5503 = vmatpush1.msra.mxu0 0.0
    %5504 = vmatprep.subr.mxu0 0.0
    %5505 = vmatpush1.msra.mxu0 0.0
    %5506 = vmatprep.subr.mxu0 0.0
    %5507 = vmatpush1.msra.mxu0 0.0
    %5508 = vmatprep.subr.mxu0 0.0
    %5509 = vmatpush1.msra.mxu0 0.0
    %5510 = vmatprep.subr.mxu0 0.0
    %5511 = vmatpush1.msra.mxu0 0.0
    %5512 = vmatprep.subr.mxu0 0.0
    %5513 = vmatpush1.msra.mxu0 0.0
    %5514 = vmatprep.subr.mxu0 0.0
    %5515 = vmatpush1.msra.mxu0 0.0
    %5516 = vmatprep.subr.mxu0 0.0
    %5517 = vmatpush1.msra.mxu0 0.0
    %5518 = vmatprep.subr.mxu0 0.0
    %5519 = vmatpush1.msra.mxu0 0.0
    %5520 = vmatprep.subr.mxu0 0.0
    %5521 = vmatpush1.msra.mxu0 0.0
    %5522 = vmatprep.subr.mxu0 0.0
    %5523 = vmatpush1.msra.mxu0 0.0
    %5524 = vmatprep.subr.mxu0 0.0
    %5525 = vmatpush1.msra.mxu0 0.0
    %5526 = vmatprep.subr.mxu0 0.0
    %5527 = vmatpush1.msra.mxu0 0.0
    %5528 = vmatprep.subr.mxu0 0.0
    %5529 = vmatpush1.msra.mxu0 0.0
    %5530 = vmatprep.subr.mxu0 0.0
    %5531 = vmatpush1.msra.mxu0 0.0
    %5532 = vmatprep.subr.mxu0 0.0
    %5533 = vmatpush1.msra.mxu0 0.0
    %5534 = vmatprep.subr.mxu0 0.0
    %5535 = vmatpush1.msra.mxu0 0.0
    %5536 = vmatprep.subr.mxu0 0.0
    %5537 = vmatpush1.msra.mxu0 0.0
    %5538 = vmatprep.subr.mxu0 0.0
    %5539 = vmatpush1.msra.mxu0 0.0
    %5540 = vmatprep.subr.mxu0 0.0
    %5541 = vmatpush1.msra.mxu0 0.0
    %5542 = vmatprep.subr.mxu0 0.0
    %5543 = vmatpush1.msra.mxu0 0.0
    %5544 = vmatprep.subr.mxu0 0.0
    %5545 = vmatpush1.msra.mxu0 0.0
    %5546 = vmatprep.subr.mxu0 0.0
    %5547 = vmatpush1.msra.mxu0 0.0
    %5548 = vmatprep.subr.mxu0 0.0
    %5549 = vmatpush1.msra.mxu0 0.0
    %5550 = vmatprep.subr.mxu0 0.0
    %5551 = vmatpush1.msra.mxu0 0.0
    %5552 = vmatprep.mubr.f32.mxu0 0.0
    %5553 = vmatmul.mubr.f32.gmra.mrb[0].mxu0 %v5435
    %v5554 = vpop.f32.mrb[0].mxu0
    %v5555 = vadd.f32 0.0, %v5554
    %v5556 = vpop.f32.mrb[0].mxu0
    %5557 = vmatprep.mubr.f32.mxu0 0.0
    %5558 = vmatmul.mubr.f32.gmra.mrb[0].mxu0 %v5438
    %v5559 = vpop.f32.mrb[0].mxu0
    %v5560 = vadd.f32 0.0, %v5559
    %v5561 = vpop.f32.mrb[0].mxu0
    %5562 = vmatprep.mubr.f32.mxu0 0.0
    %5563 = vmatmul.mubr.f32.gmra.mrb[0].mxu0 %v5441
    %v5564 = vpop.f32.mrb[0].mxu0
    %v5565 = vadd.f32 0.0, %v5564
    %v5566 = vpop.f32.mrb[0].mxu0
    %5567 = vmatprep.mubr.f32.mxu0 0.0
    %5568 = vmatmul.mubr.f32.gmra.mrb[0].mxu0 %v5444
    %v5569 = vpop.f32.mrb[0].mxu0
    %v5570 = vadd.f32 0.0, %v5569
    %v5571 = vpop.f32.mrb[0].mxu0
    %5572 = vmatprep.mubr.f32.mxu0 0.0
    %5573 = vmatmul.mubr.f32.gmra.mrb[0].mxu0 %v5447
    %v5574 = vpop.f32.mrb[0].mxu0
    %v5575 = vadd.f32 0.0, %v5574
    %v5576 = vpop.f32.mrb[0].mxu0
    %5577 = vmatprep.mubr.f32.mxu0 0.0
    %5578 = vmatmul.mubr.f32.gmra.mrb[0].mxu0 %v5450
    %v5579 = vpop.f32.mrb[0].mxu0
    %v5580 = vadd.f32 0.0, %v5579
    %v5581 = vpop.f32.mrb[0].mxu0
    %5582 = vmatprep.mubr.f32.mxu0 0.0
    %5583 = vmatmul.mubr.f32.gmra.mrb[0].mxu0 %v5453
    %v5584 = vpop.f32.mrb[0].mxu0
    %v5585 = vadd.f32 0.0, %v5584
    %v5586 = vpop.f32.mrb[0].mxu0
    %5587 = vmatprep.mubr.f32.mxu0 0.0
    %5588 = vmatmul.mubr.f32.gmra.mrb[0].mxu0 %v5456
    %v5589 = vpop.f32.mrb[0].mxu0
    %v5590 = vadd.f32 0.0, %v5589
    %v5591 = vpop.f32.mrb[0].mxu0
    %5592 = vmatprep.mubr.f32.mxu0 0.0
    %5593 = vmatmul.mubr.f32.gmra.mrb[0].mxu0 %v5459
    %v5594 = vpop.f32.mrb[0].mxu0
    %v5595 = vadd.f32 0.0, %v5594
    %v5596 = vpop.f32.mrb[0].mxu0
    %5597 = vmatprep.mubr.f32.mxu0 0.0
    %5598 = vmatmul.mubr.f32.gmra.mrb[0].mxu0 %v5462
    %v5599 = vpop.f32.mrb[0].mxu0
    %v5600 = vadd.f32 0.0, %v5599
    %v5601 = vpop.f32.mrb[0].mxu0
    %5602 = vmatprep.mubr.f32.mxu0 0.0
    %5603 = vmatmul.mubr.f32.gmra.mrb[0].mxu0 %v5465
    %v5604 = vpop.f32.mrb[0].mxu0
    %v5605 = vadd.f32 0.0, %v5604
    %v5606 = vpop.f32.mrb[0].mxu0
    %5607 = vmatprep.mubr.f32.mxu0 0.0
    %5608 = vmatmul.mubr.f32.gmra.mrb[0].mxu0 %v5468
    %v5609 = vpop.f32.mrb[0].mxu0
    %v5610 = vadd.f32 0.0, %v5609
    %v5611 = vpop.f32.mrb[0].mxu0
    %5612 = vmatprep.mubr.f32.mxu0 0.0
    %5613 = vmatmul.mubr.f32.gmra.mrb[0].mxu0 %v5471
    %v5614 = vpop.f32.mrb[0].mxu0
    %v5615 = vadd.f32 0.0, %v5614
    %v5616 = vpop.f32.mrb[0].mxu0
    %5617 = vmatprep.mubr.f32.mxu0 0.0
    %5618 = vmatmul.mubr.f32.gmra.mrb[0].mxu0 %v5474
    %v5619 = vpop.f32.mrb[0].mxu0
    %v5620 = vadd.f32 0.0, %v5619
    %v5621 = vpop.f32.mrb[0].mxu0
    %5622 = vmatprep.mubr.f32.mxu0 0.0
    %5623 = vmatmul.mubr.f32.gmra.mrb[0].mxu0 %v5477
    %v5624 = vpop.f32.mrb[0].mxu0
    %v5625 = vadd.f32 0.0, %v5624
    %v5626 = vpop.f32.mrb[0].mxu0
    %5627 = vmatprep.mubr.f32.mxu0 0.0
    %5628 = vmatmul.mubr.f32.gmra.mrb[0].mxu0 %v5480
    %v5629 = vpop.f32.mrb[0].mxu0
    %v5630 = vadd.f32 0.0, %v5629
    %v5631 = vpop.f32.mrb[0].mxu0
    %5632 = vmatprep.mubr.f32.mxu0 0.0
    %5633 = vmatmul.mubr.f32.gmra.mrb[0].mxu0 %v5483
    %v5634 = vpop.f32.mrb[0].mxu0
    %v5635 = vadd.f32 0.0, %v5634
    %v5636 = vpop.f32.mrb[0].mxu0
    %5637 = vmatprep.mubr.f32.mxu0 0.0
    %5638 = vmatmul.mubr.f32.gmra.mrb[0].mxu0 %v5486
    %v5639 = vpop.f32.mrb[0].mxu0
    %v5640 = vadd.f32 0.0, %v5639
    %v5641 = vpop.f32.mrb[0].mxu0
    %5642 = vdwg.mxu0
    %v5644 = vlaneseq
    %v5645 = vshrl.u32 %v5644, 7
    %v5646 = vsub.s32 0, %v5645
    %v5647 = vrot.slane %v461, %v5646
    %5667 = vrot.lane.b32.xlu0 %v5555, 96
    %v5668 = vpop.permute.xlu0 %5667
    %5669 = vrot.lane.b32.xlu0 %v5560, 96
    %v5670 = vpop.permute.xlu0 %5669
    %5671 = vrot.lane.b32.xlu0 %v5565, 96
    %v5672 = vpop.permute.xlu0 %5671
    %5673 = vrot.lane.b32.xlu0 %v5570, 96
    %v5674 = vpop.permute.xlu0 %5673
    %5675 = vrot.lane.b32.xlu0 %v5575, 96
    %v5676 = vpop.permute.xlu0 %5675
    %5677 = vrot.lane.b32.xlu0 %v5580, 96
    %v5678 = vpop.permute.xlu0 %5677
    %5679 = vrot.lane.b32.xlu0 %v5585, 96
    %v5680 = vpop.permute.xlu0 %5679
    %5681 = vrot.lane.b32.xlu0 %v5590, 96
    %v5682 = vpop.permute.xlu0 %5681
    %5683 = vrot.lane.b32.xlu0 %v5595, 96
    %v5684 = vpop.permute.xlu0 %5683
    %5685 = vrot.lane.b32.xlu0 %v5600, 96
    %v5686 = vpop.permute.xlu0 %5685
    %5687 = vrot.lane.b32.xlu0 %v5605, 96
    %v5688 = vpop.permute.xlu0 %5687
    %5689 = vrot.lane.b32.xlu0 %v5610, 96
    %v5690 = vpop.permute.xlu0 %5689
    %5691 = vrot.lane.b32.xlu0 %v5615, 96
    %v5692 = vpop.permute.xlu0 %5691
    %5693 = vrot.lane.b32.xlu0 %v5620, 96
    %v5694 = vpop.permute.xlu0 %5693
    %5695 = vrot.lane.b32.xlu0 %v5625, 96
    %v5696 = vpop.permute.xlu0 %5695
    %5697 = vrot.lane.b32.xlu0 %v5630, 96
    %v5698 = vpop.permute.xlu0 %5697
    %5699 = vrot.lane.b32.xlu0 %v5635, 96
    %v5700 = vpop.permute.xlu0 %5699
    %5701 = vrot.lane.b32.xlu0 %v5640, 96
    %v5702 = vpop.permute.xlu0 %5701
    %v5703 = vsel %vm1627, %v5555, 0
    %v5705 = vsel %vm1627, %v5560, 0
    %v5707 = vsel %vm1627, %v5565, 0
    %v5709 = vsel %vm1627, %v5570, 0
    %v5711 = vsel %vm1627, %v5575, 0
    %v5713 = vsel %vm1627, %v5580, 0
    %v5715 = vsel %vm1627, %v5585, 0
    %v5717 = vsel %vm1627, %v5590, 0
    %v5719 = vsel %vm1627, %v5595, 0
    %v5721 = vsel %vm1627, %v5600, 0
    %v5723 = vsel %vm1627, %v5605, 0
    %v5725 = vsel %vm1627, %v5610, 0
    %v5727 = vsel %vm1627, %v5615, 0
    %v5729 = vsel %vm1627, %v5620, 0
    %v5731 = vsel %vm1627, %v5625, 0
    %v5733 = vsel %vm1627, %v5630, 0
    %v5735 = vsel %vm1627, %v5635, 0
    %v5737 = vsel %vm1627, %v5640, 0
    %v5739 = vsel %vm1627, %v5668, 0
    %v5741 = vsel %vm1627, %v5670, 0
    %v5743 = vsel %vm1627, %v5672, 0
    %v5745 = vsel %vm1627, %v5674, 0
    %v5747 = vsel %vm1627, %v5676, 0
    %v5749 = vsel %vm1627, %v5678, 0
    %v5751 = vsel %vm1627, %v5680, 0
    %v5753 = vsel %vm1627, %v5682, 0
    %v5755 = vsel %vm1627, %v5684, 0
    %v5757 = vsel %vm1627, %v5686, 0
    %v5759 = vsel %vm1627, %v5688, 0
    %v5761 = vsel %vm1627, %v5690, 0
    %v5763 = vsel %vm1627, %v5692, 0
    %v5765 = vsel %vm1627, %v5694, 0
    %v5767 = vsel %vm1627, %v5696, 0
    %v5769 = vsel %vm1627, %v5698, 0
    %v5771 = vsel %vm1627, %v5700, 0
    %v5773 = vsel %vm1627, %v5702, 0
    %5775 = vmatprep.subr.mxu0 0.0
    %5776 = vmatpush1.xpose.msra.mxu0 %v5739
    %5777 = vmatprep.subr.mxu0 0.0
    %5778 = vmatpush1.xpose.msra.mxu0 %v5741
    %5779 = vmatprep.subr.mxu0 0.0
    %5780 = vmatpush1.xpose.msra.mxu0 %v5743
    %5781 = vmatprep.subr.mxu0 0.0
    %5782 = vmatpush1.xpose.msra.mxu0 %v5745
    %5783 = vmatprep.subr.mxu0 0.0
    %5784 = vmatpush1.xpose.msra.mxu0 %v5747
    %5785 = vmatprep.subr.mxu0 0.0
    %5786 = vmatpush1.xpose.msra.mxu0 %v5749
    %5787 = vmatprep.subr.mxu0 0.0
    %5788 = vmatpush1.xpose.msra.mxu0 %v5751
    %5789 = vmatprep.subr.mxu0 0.0
    %5790 = vmatpush1.xpose.msra.mxu0 %v5753
    %5791 = vmatprep.subr.mxu0 0.0
    %5792 = vmatpush1.xpose.msra.mxu0 %v5755
    %5793 = vmatprep.subr.mxu0 0.0
    %5794 = vmatpush1.xpose.msra.mxu0 %v5757
    %5795 = vmatprep.subr.mxu0 0.0
    %5796 = vmatpush1.xpose.msra.mxu0 %v5759
    %5797 = vmatprep.subr.mxu0 0.0
    %5798 = vmatpush1.xpose.msra.mxu0 %v5761
    %5799 = vmatprep.subr.mxu0 0.0
    %5800 = vmatpush1.xpose.msra.mxu0 %v5763
    %5801 = vmatprep.subr.mxu0 0.0
    %5802 = vmatpush1.xpose.msra.mxu0 %v5765
    %5803 = vmatprep.subr.mxu0 0.0
    %5804 = vmatpush1.xpose.msra.mxu0 %v5767
    %5805 = vmatprep.subr.mxu0 0.0
    %5806 = vmatpush1.xpose.msra.mxu0 %v5769
    %5807 = vmatprep.subr.mxu0 0.0
    %5808 = vmatpush1.xpose.msra.mxu0 %v5771
    %5809 = vmatprep.subr.mxu0 0.0
    %5810 = vmatpush1.xpose.msra.mxu0 %v5773
    %5811 = vmatprep.subr.mxu0 0.0
    %5812 = vmatpush1.xpose.msra.mxu0 0.0
    %5813 = vmatprep.subr.mxu0 0.0
    %5814 = vmatpush1.xpose.msra.mxu0 0.0
    %5815 = vmatprep.subr.mxu0 0.0
    %5816 = vmatpush1.xpose.msra.mxu0 0.0
    %5817 = vmatprep.subr.mxu0 0.0
    %5818 = vmatpush1.xpose.msra.mxu0 0.0
    %5819 = vmatprep.subr.mxu0 0.0
    %5820 = vmatpush1.xpose.msra.mxu0 0.0
    %5821 = vmatprep.subr.mxu0 0.0
    %5822 = vmatpush1.xpose.msra.mxu0 0.0
    %5823 = vmatprep.subr.mxu0 0.0
    %5824 = vmatpush1.xpose.msra.mxu0 0.0
    %5825 = vmatprep.subr.mxu0 0.0
    %5826 = vmatpush1.xpose.msra.mxu0 0.0
    %5827 = vmatprep.subr.mxu0 0.0
    %5828 = vmatpush1.xpose.msra.mxu0 0.0
    %5829 = vmatprep.subr.mxu0 0.0
    %5830 = vmatpush1.xpose.msra.mxu0 0.0
    %5831 = vmatprep.subr.mxu0 0.0
    %5832 = vmatpush1.xpose.msra.mxu0 0.0
    %5833 = vmatprep.subr.mxu0 0.0
    %5834 = vmatpush1.xpose.msra.mxu0 0.0
    %5835 = vmatprep.subr.mxu0 0.0
    %5836 = vmatpush1.xpose.msra.mxu0 0.0
    %5837 = vmatprep.subr.mxu0 0.0
    %5838 = vmatpush1.xpose.msra.mxu0 0.0
    %5839 = vmatprep.mubr.f32.mxu0 0.0
    %5840 = vmatmul.mubr.f32.gmra.mrb[0].mxu0 %v5703
    %v5841 = vpop.f32.mrb[0].mxu0
    %v5842 = vadd.f32 0.0, %v5841
    %v5843 = vpop.f32.mrb[0].mxu0
    %v5844 = vadd.f32 0.0, %v5843
    %5845 = vmatprep.mubr.f32.mxu0 0.0
    %5846 = vmatmul.mubr.f32.gmra.mrb[0].mxu0 %v5705
    %v5847 = vpop.f32.mrb[0].mxu0
    %v5848 = vadd.f32 0.0, %v5847
    %v5849 = vpop.f32.mrb[0].mxu0
    %v5850 = vadd.f32 0.0, %v5849
    %5851 = vmatprep.mubr.f32.mxu0 0.0
    %5852 = vmatmul.mubr.f32.gmra.mrb[0].mxu0 %v5707
    %v5853 = vpop.f32.mrb[0].mxu0
    %v5854 = vadd.f32 0.0, %v5853
    %v5855 = vpop.f32.mrb[0].mxu0
    %v5856 = vadd.f32 0.0, %v5855
    %5857 = vmatprep.mubr.f32.mxu0 0.0
    %5858 = vmatmul.mubr.f32.gmra.mrb[0].mxu0 %v5709
    %v5859 = vpop.f32.mrb[0].mxu0
    %v5860 = vadd.f32 0.0, %v5859
    %v5861 = vpop.f32.mrb[0].mxu0
    %v5862 = vadd.f32 0.0, %v5861
    %5863 = vmatprep.mubr.f32.mxu0 0.0
    %5864 = vmatmul.mubr.f32.gmra.mrb[0].mxu0 %v5711
    %v5865 = vpop.f32.mrb[0].mxu0
    %v5866 = vadd.f32 0.0, %v5865
    %v5867 = vpop.f32.mrb[0].mxu0
    %v5868 = vadd.f32 0.0, %v5867
    %5869 = vmatprep.mubr.f32.mxu0 0.0
    %5870 = vmatmul.mubr.f32.gmra.mrb[0].mxu0 %v5713
    %v5871 = vpop.f32.mrb[0].mxu0
    %v5872 = vadd.f32 0.0, %v5871
    %v5873 = vpop.f32.mrb[0].mxu0
    %v5874 = vadd.f32 0.0, %v5873
    %5875 = vmatprep.mubr.f32.mxu0 0.0
    %5876 = vmatmul.mubr.f32.gmra.mrb[0].mxu0 %v5715
    %v5877 = vpop.f32.mrb[0].mxu0
    %v5878 = vadd.f32 0.0, %v5877
    %v5879 = vpop.f32.mrb[0].mxu0
    %v5880 = vadd.f32 0.0, %v5879
    %5881 = vmatprep.mubr.f32.mxu0 0.0
    %5882 = vmatmul.mubr.f32.gmra.mrb[0].mxu0 %v5717
    %v5883 = vpop.f32.mrb[0].mxu0
    %v5884 = vadd.f32 0.0, %v5883
    %v5885 = vpop.f32.mrb[0].mxu0
    %v5886 = vadd.f32 0.0, %v5885
    %5887 = vmatprep.mubr.f32.mxu0 0.0
    %5888 = vmatmul.mubr.f32.gmra.mrb[0].mxu0 %v5719
    %v5889 = vpop.f32.mrb[0].mxu0
    %v5890 = vadd.f32 0.0, %v5889
    %v5891 = vpop.f32.mrb[0].mxu0
    %v5892 = vadd.f32 0.0, %v5891
    %5893 = vmatprep.mubr.f32.mxu0 0.0
    %5894 = vmatmul.mubr.f32.gmra.mrb[0].mxu0 %v5721
    %v5895 = vpop.f32.mrb[0].mxu0
    %v5896 = vadd.f32 0.0, %v5895
    %v5897 = vpop.f32.mrb[0].mxu0
    %v5898 = vadd.f32 0.0, %v5897
    %5899 = vmatprep.mubr.f32.mxu0 0.0
    %5900 = vmatmul.mubr.f32.gmra.mrb[0].mxu0 %v5723
    %v5901 = vpop.f32.mrb[0].mxu0
    %v5902 = vadd.f32 0.0, %v5901
    %v5903 = vpop.f32.mrb[0].mxu0
    %v5904 = vadd.f32 0.0, %v5903
    %5905 = vmatprep.mubr.f32.mxu0 0.0
    %5906 = vmatmul.mubr.f32.gmra.mrb[0].mxu0 %v5725
    %v5907 = vpop.f32.mrb[0].mxu0
    %v5908 = vadd.f32 0.0, %v5907
    %v5909 = vpop.f32.mrb[0].mxu0
    %v5910 = vadd.f32 0.0, %v5909
    %5911 = vmatprep.mubr.f32.mxu0 0.0
    %5912 = vmatmul.mubr.f32.gmra.mrb[0].mxu0 %v5727
    %v5913 = vpop.f32.mrb[0].mxu0
    %v5914 = vadd.f32 0.0, %v5913
    %v5915 = vpop.f32.mrb[0].mxu0
    %v5916 = vadd.f32 0.0, %v5915
    %5917 = vmatprep.mubr.f32.mxu0 0.0
    %5918 = vmatmul.mubr.f32.gmra.mrb[0].mxu0 %v5729
    %v5919 = vpop.f32.mrb[0].mxu0
    %v5920 = vadd.f32 0.0, %v5919
    %v5921 = vpop.f32.mrb[0].mxu0
    %v5922 = vadd.f32 0.0, %v5921
    %5923 = vmatprep.mubr.f32.mxu0 0.0
    %5924 = vmatmul.mubr.f32.gmra.mrb[0].mxu0 %v5731
    %v5925 = vpop.f32.mrb[0].mxu0
    %v5926 = vadd.f32 0.0, %v5925
    %v5927 = vpop.f32.mrb[0].mxu0
    %v5928 = vadd.f32 0.0, %v5927
    %5929 = vmatprep.mubr.f32.mxu0 0.0
    %5930 = vmatmul.mubr.f32.gmra.mrb[0].mxu0 %v5733
    %v5931 = vpop.f32.mrb[0].mxu0
    %v5932 = vadd.f32 0.0, %v5931
    %v5933 = vpop.f32.mrb[0].mxu0
    %v5934 = vadd.f32 0.0, %v5933
    %5935 = vmatprep.mubr.f32.mxu0 0.0
    %5936 = vmatmul.mubr.f32.gmra.mrb[0].mxu0 %v5735
    %v5937 = vpop.f32.mrb[0].mxu0
    %v5938 = vadd.f32 0.0, %v5937
    %v5939 = vpop.f32.mrb[0].mxu0
    %v5940 = vadd.f32 0.0, %v5939
    %5941 = vmatprep.mubr.f32.mxu0 0.0
    %5942 = vmatmul.mubr.f32.gmra.mrb[0].mxu0 %v5737
    %v5943 = vpop.f32.mrb[0].mxu0
    %v5944 = vadd.f32 0.0, %v5943
    %v5945 = vpop.f32.mrb[0].mxu0
    %v5946 = vadd.f32 0.0, %v5945
    %5947 = vdwg.mxu0
    %v5948 = vmul.f32 %v5842, 0.25
    %v5949 = vmul.f32 %v5844, 0.25
    %v5950 = vmul.f32 %v5848, 0.25
    %v5951 = vmul.f32 %v5850, 0.25
    %v5952 = vmul.f32 %v5854, 0.25
    %v5953 = vmul.f32 %v5856, 0.25
    %v5954 = vmul.f32 %v5860, 0.25
    %v5955 = vmul.f32 %v5862, 0.25
    %v5956 = vmul.f32 %v5866, 0.25
    %v5957 = vmul.f32 %v5868, 0.25
    %v5958 = vmul.f32 %v5872, 0.25
    %v5959 = vmul.f32 %v5874, 0.25
    %v5960 = vmul.f32 %v5878, 0.25
    %v5961 = vmul.f32 %v5880, 0.25
    %v5962 = vmul.f32 %v5884, 0.25
    %v5963 = vmul.f32 %v5886, 0.25
    %v5964 = vmul.f32 %v5890, 0.25
    %v5965 = vmul.f32 %v5892, 0.25
    %v5966 = vmul.f32 %v5896, 0.25
    %v5967 = vmul.f32 %v5898, 0.25
    %v5968 = vmul.f32 %v5902, 0.25
    %v5969 = vmul.f32 %v5904, 0.25
    %v5970 = vmul.f32 %v5908, 0.25
    %v5971 = vmul.f32 %v5910, 0.25
    %v5972 = vmul.f32 %v5914, 0.25
    %v5973 = vmul.f32 %v5916, 0.25
    %v5974 = vmul.f32 %v5920, 0.25
    %v5975 = vmul.f32 %v5922, 0.25
    %v5976 = vmul.f32 %v5926, 0.25
    %v5977 = vmul.f32 %v5928, 0.25
    %v5978 = vmul.f32 %v5932, 0.25
    %v5979 = vmul.f32 %v5934, 0.25
    %v5980 = vmul.f32 %v5938, 0.25
    %v5981 = vmul.f32 %v5940, 0.25
    %v5982 = vmul.f32 %v5944, 0.25
    %v5983 = vmul.f32 %v5946, 0.25
    %v5984 = vld [vmem:[%s19] sm:$0xff]
    %v5985 = vld [vmem:[%s19 + $0x8] sm:$0xff]
    %v5986 = vld [vmem:[%s19 + $0x10] sm:$0xff]
    %v5987 = vld [vmem:[%s19 + $0x18] sm:$0xff]
    %v5988 = vld [vmem:[%s19 + $0x20] sm:$0xff]
    %v5989 = vld [vmem:[%s19 + $0x28] sm:$0xff]
    %v5990 = vld [vmem:[%s19 + $0x30] sm:$0xff]
    %v5991 = vld [vmem:[%s19 + $0x38] sm:$0xff]
    %v5992 = vld [vmem:[%s19 + $0x40] sm:$0xff]
    %v5993 = vld [vmem:[%s19 + $0x48] sm:$0xff]
    %v5994 = vld [vmem:[%s19 + $0x50] sm:$0xff]
    %v5995 = vld [vmem:[%s19 + $0x58] sm:$0xff]
    %v5996 = vld [vmem:[%s19 + $0x60] sm:$0xff]
    %v5997 = vld [vmem:[%s19 + $0x68] sm:$0xff]
    %v5998 = vld [vmem:[%s19 + $0x70] sm:$0xff]
    %v5999 = vld [vmem:[%s19 + $0x78] sm:$0xff]
    %v6000 = vld [vmem:[%s19 + $0x80] sm:$0xff]
    %v6001 = vld [vmem:[%s19 + $0x88] sm:$0xff]
    %v6002 = vld [vmem:[%s19 + $0x90] sm:$0xff]
    %v6003 = vld [vmem:[%s19 + $0x98] sm:$0xff]
    %v6004 = vld [vmem:[%s19 + $0xa0] sm:$0xff]
    %v6005 = vld [vmem:[%s19 + $0xa8] sm:$0xff]
    %v6006 = vld [vmem:[%s19 + $0xb0] sm:$0xff]
    %v6007 = vld [vmem:[%s19 + $0xb8] sm:$0xff]
    %v6008 = vld [vmem:[%s19 + $0xc0] sm:$0xff]
    %v6009 = vld [vmem:[%s19 + $0xc8] sm:$0xff]
    %v6010 = vld [vmem:[%s19 + $0xd0] sm:$0xff]
    %v6011 = vld [vmem:[%s19 + $0xd8] sm:$0xff]
    %v6012 = vld [vmem:[%s19 + $0xe0] sm:$0xff]
    %v6013 = vld [vmem:[%s19 + $0xe8] sm:$0xff]
    %v6014 = vld [vmem:[%s19 + $0xf0] sm:$0xff]
    %v6015 = vld [vmem:[%s19 + $0xf8] sm:$0xff]
    %v6016 = vld [vmem:[%s19 + $0x100] sm:$0xff]
    %v6017 = vld [vmem:[%s19 + $0x108] sm:$0xff]
    %v6018 = vld [vmem:[%s19 + $0x110] sm:$0xff]
    %v6019 = vld [vmem:[%s19 + $0x118] sm:$0xff]
    %v6020 = vadd.f32 %v5948, %v5984
    %v6021 = vadd.f32 %v5949, %v5985
    %v6022 = vadd.f32 %v5950, %v5986
    %v6023 = vadd.f32 %v5951, %v5987
    %v6024 = vadd.f32 %v5952, %v5988
    %v6025 = vadd.f32 %v5953, %v5989
    %v6026 = vadd.f32 %v5954, %v5990
    %v6027 = vadd.f32 %v5955, %v5991
    %v6028 = vadd.f32 %v5956, %v5992
    %v6029 = vadd.f32 %v5957, %v5993
    %v6030 = vadd.f32 %v5958, %v5994
    %v6031 = vadd.f32 %v5959, %v5995
    %v6032 = vadd.f32 %v5960, %v5996
    %v6033 = vadd.f32 %v5961, %v5997
    %v6034 = vadd.f32 %v5962, %v5998
    %v6035 = vadd.f32 %v5963, %v5999
    %v6036 = vadd.f32 %v5964, %v6000
    %v6037 = vadd.f32 %v5965, %v6001
    %v6038 = vadd.f32 %v5966, %v6002
    %v6039 = vadd.f32 %v5967, %v6003
    %v6040 = vadd.f32 %v5968, %v6004
    %v6041 = vadd.f32 %v5969, %v6005
    %v6042 = vadd.f32 %v5970, %v6006
    %v6043 = vadd.f32 %v5971, %v6007
    %v6044 = vadd.f32 %v5972, %v6008
    %v6045 = vadd.f32 %v5973, %v6009
    %v6046 = vadd.f32 %v5974, %v6010
    %v6047 = vadd.f32 %v5975, %v6011
    %v6048 = vadd.f32 %v5976, %v6012
    %v6049 = vadd.f32 %v5977, %v6013
    %v6050 = vadd.f32 %v5978, %v6014
    %v6051 = vadd.f32 %v5979, %v6015
    %v6052 = vadd.f32 %v5980, %v6016
    %v6053 = vadd.f32 %v5981, %v6017
    %v6054 = vadd.f32 %v5982, %v6018
    %v6055 = vadd.f32 %v5983, %v6019
    %v6056 = vsel %vm1627, %v6021, -inf
    %v6057 = vmax.f32 %v6020, %v6056
    %6058 = vmax.xlane.f32.xlu0 %v6057
    %v6059 = vpop.xlane.xlu0 %6058
    %v6060 = vsel %vm1627, %v6023, -inf
    %v6061 = vmax.f32 %v6022, %v6060
    %6062 = vmax.xlane.f32.xlu0 %v6061
    %v6063 = vpop.xlane.xlu0 %6062
    %v6064 = vsel %vm1627, %v6025, -inf
    %v6065 = vmax.f32 %v6024, %v6064
    %6066 = vmax.xlane.f32.xlu0 %v6065
    %v6067 = vpop.xlane.xlu0 %6066
    %v6068 = vsel %vm1627, %v6027, -inf
    %v6069 = vmax.f32 %v6026, %v6068
    %6070 = vmax.xlane.f32.xlu0 %v6069
    %v6071 = vpop.xlane.xlu0 %6070
    %v6072 = vsel %vm1627, %v6029, -inf
    %v6073 = vmax.f32 %v6028, %v6072
    %6074 = vmax.xlane.f32.xlu0 %v6073
    %v6075 = vpop.xlane.xlu0 %6074
    %v6076 = vsel %vm1627, %v6031, -inf
    %v6077 = vmax.f32 %v6030, %v6076
    %6078 = vmax.xlane.f32.xlu0 %v6077
    %v6079 = vpop.xlane.xlu0 %6078
    %v6080 = vsel %vm1627, %v6033, -inf
    %v6081 = vmax.f32 %v6032, %v6080
    %6082 = vmax.xlane.f32.xlu0 %v6081
    %v6083 = vpop.xlane.xlu0 %6082
    %v6084 = vsel %vm1627, %v6035, -inf
    %v6085 = vmax.f32 %v6034, %v6084
    %6086 = vmax.xlane.f32.xlu0 %v6085
    %v6087 = vpop.xlane.xlu0 %6086
    %v6088 = vsel %vm1627, %v6037, -inf
    %v6089 = vmax.f32 %v6036, %v6088
    %6090 = vmax.xlane.f32.xlu0 %v6089
    %v6091 = vpop.xlane.xlu0 %6090
    %v6092 = vsel %vm1627, %v6039, -inf
    %v6093 = vmax.f32 %v6038, %v6092
    %6094 = vmax.xlane.f32.xlu0 %v6093
    %v6095 = vpop.xlane.xlu0 %6094
    %v6096 = vsel %vm1627, %v6041, -inf
    %v6097 = vmax.f32 %v6040, %v6096
    %6098 = vmax.xlane.f32.xlu0 %v6097
    %v6099 = vpop.xlane.xlu0 %6098
    %v6100 = vsel %vm1627, %v6043, -inf
    %v6101 = vmax.f32 %v6042, %v6100
    %6102 = vmax.xlane.f32.xlu0 %v6101
    %v6103 = vpop.xlane.xlu0 %6102
    %v6104 = vsel %vm1627, %v6045, -inf
    %v6105 = vmax.f32 %v6044, %v6104
    %6106 = vmax.xlane.f32.xlu0 %v6105
    %v6107 = vpop.xlane.xlu0 %6106
    %v6108 = vsel %vm1627, %v6047, -inf
    %v6109 = vmax.f32 %v6046, %v6108
    %6110 = vmax.xlane.f32.xlu0 %v6109
    %v6111 = vpop.xlane.xlu0 %6110
    %v6112 = vsel %vm1627, %v6049, -inf
    %v6113 = vmax.f32 %v6048, %v6112
    %6114 = vmax.xlane.f32.xlu0 %v6113
    %v6115 = vpop.xlane.xlu0 %6114
    %v6116 = vsel %vm1627, %v6051, -inf
    %v6117 = vmax.f32 %v6050, %v6116
    %6118 = vmax.xlane.f32.xlu0 %v6117
    %v6119 = vpop.xlane.xlu0 %6118
    %v6120 = vsel %vm1627, %v6053, -inf
    %v6121 = vmax.f32 %v6052, %v6120
    %6122 = vmax.xlane.f32.xlu0 %v6121
    %v6123 = vpop.xlane.xlu0 %6122
    %v6124 = vsel %vm1627, %v6055, -inf
    %v6125 = vmax.f32 %v6054, %v6124
    %6126 = vmax.xlane.f32.xlu0 %v6125
    %v6127 = vpop.xlane.xlu0 %6126
    %v6128 = vsub.f32 %v6020, %v6059
    %v6129 = vsub.f32 %v6021, %v6059
    %v6130 = vsub.f32 %v6022, %v6063
    %v6131 = vsub.f32 %v6023, %v6063
    %v6132 = vsub.f32 %v6024, %v6067
    %v6133 = vsub.f32 %v6025, %v6067
    %v6134 = vsub.f32 %v6026, %v6071
    %v6135 = vsub.f32 %v6027, %v6071
    %v6136 = vsub.f32 %v6028, %v6075
    %v6137 = vsub.f32 %v6029, %v6075
    %v6138 = vsub.f32 %v6030, %v6079
    %v6139 = vsub.f32 %v6031, %v6079
    %v6140 = vsub.f32 %v6032, %v6083
    %v6141 = vsub.f32 %v6033, %v6083
    %v6142 = vsub.f32 %v6034, %v6087
    %v6143 = vsub.f32 %v6035, %v6087
    %v6144 = vsub.f32 %v6036, %v6091
    %v6145 = vsub.f32 %v6037, %v6091
    %v6146 = vsub.f32 %v6038, %v6095
    %v6147 = vsub.f32 %v6039, %v6095
    %v6148 = vsub.f32 %v6040, %v6099
    %v6149 = vsub.f32 %v6041, %v6099
    %v6150 = vsub.f32 %v6042, %v6103
    %v6151 = vsub.f32 %v6043, %v6103
    %v6152 = vsub.f32 %v6044, %v6107
    %v6153 = vsub.f32 %v6045, %v6107
    %v6154 = vsub.f32 %v6046, %v6111
    %v6155 = vsub.f32 %v6047, %v6111
    %v6156 = vsub.f32 %v6048, %v6115
    %v6157 = vsub.f32 %v6049, %v6115
    %v6158 = vsub.f32 %v6050, %v6119
    %v6159 = vsub.f32 %v6051, %v6119
    %v6160 = vsub.f32 %v6052, %v6123
    %v6161 = vsub.f32 %v6053, %v6123
    %v6162 = vsub.f32 %v6054, %v6127
    %v6163 = vsub.f32 %v6055, %v6127
    %v6164 = vmul.f32 %v6128, 1.442695
    %v6165 = vpow.pop %v6164
    %v6166 = vmul.f32 %v6129, 1.442695
    %v6167 = vpow.pop %v6166
    %v6168 = vmul.f32 %v6130, 1.442695
    %v6169 = vpow.pop %v6168
    %v6170 = vmul.f32 %v6131, 1.442695
    %v6171 = vpow.pop %v6170
    %v6172 = vmul.f32 %v6132, 1.442695
    %v6173 = vpow.pop %v6172
    %v6174 = vmul.f32 %v6133, 1.442695
    %v6175 = vpow.pop %v6174
    %v6176 = vmul.f32 %v6134, 1.442695
    %v6177 = vpow.pop %v6176
    %v6178 = vmul.f32 %v6135, 1.442695
    %v6179 = vpow.pop %v6178
    %v6180 = vmul.f32 %v6136, 1.442695
    %v6181 = vpow.pop %v6180
    %v6182 = vmul.f32 %v6137, 1.442695
    %v6183 = vpow.pop %v6182
    %v6184 = vmul.f32 %v6138, 1.442695
    %v6185 = vpow.pop %v6184
    %v6186 = vmul.f32 %v6139, 1.442695
    %v6187 = vpow.pop %v6186
    %v6188 = vmul.f32 %v6140, 1.442695
    %v6189 = vpow.pop %v6188
    %v6190 = vmul.f32 %v6141, 1.442695
    %v6191 = vpow.pop %v6190
    %v6192 = vmul.f32 %v6142, 1.442695
    %v6193 = vpow.pop %v6192
    %v6194 = vmul.f32 %v6143, 1.442695
    %v6195 = vpow.pop %v6194
    %v6196 = vmul.f32 %v6144, 1.442695
    %v6197 = vpow.pop %v6196
    %v6198 = vmul.f32 %v6145, 1.442695
    %v6199 = vpow.pop %v6198
    %v6200 = vmul.f32 %v6146, 1.442695
    %v6201 = vpow.pop %v6200
    %v6202 = vmul.f32 %v6147, 1.442695
    %v6203 = vpow.pop %v6202
    %v6204 = vmul.f32 %v6148, 1.442695
    %v6205 = vpow.pop %v6204
    %v6206 = vmul.f32 %v6149, 1.442695
    %v6207 = vpow.pop %v6206
    %v6208 = vmul.f32 %v6150, 1.442695
    %v6209 = vpow.pop %v6208
    %v6210 = vmul.f32 %v6151, 1.442695
    %v6211 = vpow.pop %v6210
    %v6212 = vmul.f32 %v6152, 1.442695
    %v6213 = vpow.pop %v6212
    %v6214 = vmul.f32 %v6153, 1.442695
    %v6215 = vpow.pop %v6214
    %v6216 = vmul.f32 %v6154, 1.442695
    %v6217 = vpow.pop %v6216
    %v6218 = vmul.f32 %v6155, 1.442695
    %v6219 = vpow.pop %v6218
    %v6220 = vmul.f32 %v6156, 1.442695
    %v6221 = vpow.pop %v6220
    %v6222 = vmul.f32 %v6157, 1.442695
    %v6223 = vpow.pop %v6222
    %v6224 = vmul.f32 %v6158, 1.442695
    %v6225 = vpow.pop %v6224
    %v6226 = vmul.f32 %v6159, 1.442695
    %v6227 = vpow.pop %v6226
    %v6228 = vmul.f32 %v6160, 1.442695
    %v6229 = vpow.pop %v6228
    %v6230 = vmul.f32 %v6161, 1.442695
    %v6231 = vpow.pop %v6230
    %v6232 = vmul.f32 %v6162, 1.442695
    %v6233 = vpow.pop %v6232
    %v6234 = vmul.f32 %v6163, 1.442695
    %v6235 = vpow.pop %v6234
    %v6236 = vsel %vm1627, %v6167, 0.0
    %v6237 = vadd.f32 %v6165, %v6236
    %6238 = vadd.xlane.f32.xlu0 %v6237
    %v6239 = vpop.xlane.xlu0 %6238
    %v6240 = vsel %vm1627, %v6171, 0.0
    %v6241 = vadd.f32 %v6169, %v6240
    %6242 = vadd.xlane.f32.xlu0 %v6241
    %v6243 = vpop.xlane.xlu0 %6242
    %v6244 = vsel %vm1627, %v6175, 0.0
    %v6245 = vadd.f32 %v6173, %v6244
    %6246 = vadd.xlane.f32.xlu0 %v6245
    %v6247 = vpop.xlane.xlu0 %6246
    %v6248 = vsel %vm1627, %v6179, 0.0
    %v6249 = vadd.f32 %v6177, %v6248
    %6250 = vadd.xlane.f32.xlu0 %v6249
    %v6251 = vpop.xlane.xlu0 %6250
    %v6252 = vsel %vm1627, %v6183, 0.0
    %v6253 = vadd.f32 %v6181, %v6252
    %6254 = vadd.xlane.f32.xlu0 %v6253
    %v6255 = vpop.xlane.xlu0 %6254
    %v6256 = vsel %vm1627, %v6187, 0.0
    %v6257 = vadd.f32 %v6185, %v6256
    %6258 = vadd.xlane.f32.xlu0 %v6257
    %v6259 = vpop.xlane.xlu0 %6258
    %v6260 = vsel %vm1627, %v6191, 0.0
    %v6261 = vadd.f32 %v6189, %v6260
    %6262 = vadd.xlane.f32.xlu0 %v6261
    %v6263 = vpop.xlane.xlu0 %6262
    %v6264 = vsel %vm1627, %v6195, 0.0
    %v6265 = vadd.f32 %v6193, %v6264
    %6266 = vadd.xlane.f32.xlu0 %v6265
    %v6267 = vpop.xlane.xlu0 %6266
    %v6268 = vsel %vm1627, %v6199, 0.0
    %v6269 = vadd.f32 %v6197, %v6268
    %6270 = vadd.xlane.f32.xlu0 %v6269
    %v6271 = vpop.xlane.xlu0 %6270
    %v6272 = vsel %vm1627, %v6203, 0.0
    %v6273 = vadd.f32 %v6201, %v6272
    %6274 = vadd.xlane.f32.xlu0 %v6273
    %v6275 = vpop.xlane.xlu0 %6274
    %v6276 = vsel %vm1627, %v6207, 0.0
    %v6277 = vadd.f32 %v6205, %v6276
    %6278 = vadd.xlane.f32.xlu0 %v6277
    %v6279 = vpop.xlane.xlu0 %6278
    %v6280 = vsel %vm1627, %v6211, 0.0
    %v6281 = vadd.f32 %v6209, %v6280
    %6282 = vadd.xlane.f32.xlu0 %v6281
    %v6283 = vpop.xlane.xlu0 %6282
    %v6284 = vsel %vm1627, %v6215, 0.0
    %v6285 = vadd.f32 %v6213, %v6284
    %6286 = vadd.xlane.f32.xlu0 %v6285
    %v6287 = vpop.xlane.xlu0 %6286
    %v6288 = vsel %vm1627, %v6219, 0.0
    %v6289 = vadd.f32 %v6217, %v6288
    %6290 = vadd.xlane.f32.xlu0 %v6289
    %v6291 = vpop.xlane.xlu0 %6290
    %v6292 = vsel %vm1627, %v6223, 0.0
    %v6293 = vadd.f32 %v6221, %v6292
    %6294 = vadd.xlane.f32.xlu0 %v6293
    %v6295 = vpop.xlane.xlu0 %6294
    %v6296 = vsel %vm1627, %v6227, 0.0
    %v6297 = vadd.f32 %v6225, %v6296
    %6298 = vadd.xlane.f32.xlu0 %v6297
    %v6299 = vpop.xlane.xlu0 %6298
    %v6300 = vsel %vm1627, %v6231, 0.0
    %v6301 = vadd.f32 %v6229, %v6300
    %6302 = vadd.xlane.f32.xlu0 %v6301
    %v6303 = vpop.xlane.xlu0 %6302
    %v6304 = vsel %vm1627, %v6235, 0.0
    %v6305 = vadd.f32 %v6233, %v6304
    %6306 = vadd.xlane.f32.xlu0 %v6305
    %v6307 = vpop.xlane.xlu0 %6306
    %v6308 = vrcp.pop %v6239
    %v6309 = vmul.f32 %v6165, %v6308
    %v6310 = vmul.f32 %v6167, %v6308
    %v6311 = vrcp.pop %v6243
    %v6312 = vmul.f32 %v6169, %v6311
    %v6313 = vmul.f32 %v6171, %v6311
    %v6314 = vrcp.pop %v6247
    %v6315 = vmul.f32 %v6173, %v6314
    %v6316 = vmul.f32 %v6175, %v6314
    %v6317 = vrcp.pop %v6251
    %v6318 = vmul.f32 %v6177, %v6317
    %v6319 = vmul.f32 %v6179, %v6317
    %v6320 = vrcp.pop %v6255
    %v6321 = vmul.f32 %v6181, %v6320
    %v6322 = vmul.f32 %v6183, %v6320
    %v6323 = vrcp.pop %v6259
    %v6324 = vmul.f32 %v6185, %v6323
    %v6325 = vmul.f32 %v6187, %v6323
    %v6326 = vrcp.pop %v6263
    %v6327 = vmul.f32 %v6189, %v6326
    %v6328 = vmul.f32 %v6191, %v6326
    %v6329 = vrcp.pop %v6267
    %v6330 = vmul.f32 %v6193, %v6329
    %v6331 = vmul.f32 %v6195, %v6329
    %v6332 = vrcp.pop %v6271
    %v6333 = vmul.f32 %v6197, %v6332
    %v6334 = vmul.f32 %v6199, %v6332
    %v6335 = vrcp.pop %v6275
    %v6336 = vmul.f32 %v6201, %v6335
    %v6337 = vmul.f32 %v6203, %v6335
    %v6338 = vrcp.pop %v6279
    %v6339 = vmul.f32 %v6205, %v6338
    %v6340 = vmul.f32 %v6207, %v6338
    %v6341 = vrcp.pop %v6283
    %v6342 = vmul.f32 %v6209, %v6341
    %v6343 = vmul.f32 %v6211, %v6341
    %v6344 = vrcp.pop %v6287
    %v6345 = vmul.f32 %v6213, %v6344
    %v6346 = vmul.f32 %v6215, %v6344
    %v6347 = vrcp.pop %v6291
    %v6348 = vmul.f32 %v6217, %v6347
    %v6349 = vmul.f32 %v6219, %v6347
    %v6350 = vrcp.pop %v6295
    %v6351 = vmul.f32 %v6221, %v6350
    %v6352 = vmul.f32 %v6223, %v6350
    %v6353 = vrcp.pop %v6299
    %v6354 = vmul.f32 %v6225, %v6353
    %v6355 = vmul.f32 %v6227, %v6353
    %v6356 = vrcp.pop %v6303
    %v6357 = vmul.f32 %v6229, %v6356
    %v6358 = vmul.f32 %v6231, %v6356
    %v6359 = vrcp.pop %v6307
    %v6360 = vmul.f32 %v6233, %v6359
    %v6361 = vmul.f32 %v6235, %v6359
    %6362 = vrot.lane.b32.xlu0 %v5555, 64
    %v6363 = vpop.permute.xlu0 %6362
    %6364 = vrot.lane.b32.xlu0 %v5560, 64
    %v6365 = vpop.permute.xlu0 %6364
    %6366 = vrot.lane.b32.xlu0 %v5565, 64
    %v6367 = vpop.permute.xlu0 %6366
    %6368 = vrot.lane.b32.xlu0 %v5570, 64
    %v6369 = vpop.permute.xlu0 %6368
    %6370 = vrot.lane.b32.xlu0 %v5575, 64
    %v6371 = vpop.permute.xlu0 %6370
    %6372 = vrot.lane.b32.xlu0 %v5580, 64
    %v6373 = vpop.permute.xlu0 %6372
    %6374 = vrot.lane.b32.xlu0 %v5585, 64
    %v6375 = vpop.permute.xlu0 %6374
    %6376 = vrot.lane.b32.xlu0 %v5590, 64
    %v6377 = vpop.permute.xlu0 %6376
    %6378 = vrot.lane.b32.xlu0 %v5595, 64
    %v6379 = vpop.permute.xlu0 %6378
    %6380 = vrot.lane.b32.xlu0 %v5600, 64
    %v6381 = vpop.permute.xlu0 %6380
    %6382 = vrot.lane.b32.xlu0 %v5605, 64
    %v6383 = vpop.permute.xlu0 %6382
    %6384 = vrot.lane.b32.xlu0 %v5610, 64
    %v6385 = vpop.permute.xlu0 %6384
    %6386 = vrot.lane.b32.xlu0 %v5615, 64
    %v6387 = vpop.permute.xlu0 %6386
    %6388 = vrot.lane.b32.xlu0 %v5620, 64
    %v6389 = vpop.permute.xlu0 %6388
    %6390 = vrot.lane.b32.xlu0 %v5625, 64
    %v6391 = vpop.permute.xlu0 %6390
    %6392 = vrot.lane.b32.xlu0 %v5630, 64
    %v6393 = vpop.permute.xlu0 %6392
    %6394 = vrot.lane.b32.xlu0 %v5635, 64
    %v6395 = vpop.permute.xlu0 %6394
    %6396 = vrot.lane.b32.xlu0 %v5640, 64
    %v6397 = vpop.permute.xlu0 %6396
    %v6417 = vsel %vm1627, %v6310, 0
    %v6420 = vsel %vm1627, %v6313, 0
    %v6423 = vsel %vm1627, %v6316, 0
    %v6426 = vsel %vm1627, %v6319, 0
    %v6429 = vsel %vm1627, %v6322, 0
    %v6432 = vsel %vm1627, %v6325, 0
    %v6435 = vsel %vm1627, %v6328, 0
    %v6438 = vsel %vm1627, %v6331, 0
    %v6441 = vsel %vm1627, %v6334, 0
    %v6444 = vsel %vm1627, %v6337, 0
    %v6447 = vsel %vm1627, %v6340, 0
    %v6450 = vsel %vm1627, %v6343, 0
    %v6453 = vsel %vm1627, %v6346, 0
    %v6456 = vsel %vm1627, %v6349, 0
    %v6459 = vsel %vm1627, %v6352, 0
    %v6462 = vsel %vm1627, %v6355, 0
    %v6465 = vsel %vm1627, %v6358, 0
    %v6468 = vsel %vm1627, %v6361, 0
    %6470 = vmatprep.subr.mxu0 0.0
    %6471 = vmatpush1.msra.mxu0 %v6363
    %6472 = vmatprep.subr.mxu0 0.0
    %6473 = vmatpush1.msra.mxu0 %v6365
    %6474 = vmatprep.subr.mxu0 0.0
    %6475 = vmatpush1.msra.mxu0 %v6367
    %6476 = vmatprep.subr.mxu0 0.0
    %6477 = vmatpush1.msra.mxu0 %v6369
    %6478 = vmatprep.subr.mxu0 0.0
    %6479 = vmatpush1.msra.mxu0 %v6371
    %6480 = vmatprep.subr.mxu0 0.0
    %6481 = vmatpush1.msra.mxu0 %v6373
    %6482 = vmatprep.subr.mxu0 0.0
    %6483 = vmatpush1.msra.mxu0 %v6375
    %6484 = vmatprep.subr.mxu0 0.0
    %6485 = vmatpush1.msra.mxu0 %v6377
    %6486 = vmatprep.subr.mxu0 0.0
    %6487 = vmatpush1.msra.mxu0 %v6379
    %6488 = vmatprep.subr.mxu0 0.0
    %6489 = vmatpush1.msra.mxu0 %v6381
    %6490 = vmatprep.subr.mxu0 0.0
    %6491 = vmatpush1.msra.mxu0 %v6383
    %6492 = vmatprep.subr.mxu0 0.0
    %6493 = vmatpush1.msra.mxu0 %v6385
    %6494 = vmatprep.subr.mxu0 0.0
    %6495 = vmatpush1.msra.mxu0 %v6387
    %6496 = vmatprep.subr.mxu0 0.0
    %6497 = vmatpush1.msra.mxu0 %v6389
    %6498 = vmatprep.subr.mxu0 0.0
    %6499 = vmatpush1.msra.mxu0 %v6391
    %6500 = vmatprep.subr.mxu0 0.0
    %6501 = vmatpush1.msra.mxu0 %v6393
    %6502 = vmatprep.subr.mxu0 0.0
    %6503 = vmatpush1.msra.mxu0 %v6395
    %6504 = vmatprep.subr.mxu0 0.0
    %6505 = vmatpush1.msra.mxu0 %v6397
    %6506 = vmatprep.subr.mxu0 0.0
    %6507 = vmatpush1.msra.mxu0 0.0
    %6508 = vmatprep.subr.mxu0 0.0
    %6509 = vmatpush1.msra.mxu0 0.0
    %6510 = vmatprep.subr.mxu0 0.0
    %6511 = vmatpush1.msra.mxu0 0.0
    %6512 = vmatprep.subr.mxu0 0.0
    %6513 = vmatpush1.msra.mxu0 0.0
    %6514 = vmatprep.subr.mxu0 0.0
    %6515 = vmatpush1.msra.mxu0 0.0
    %6516 = vmatprep.subr.mxu0 0.0
    %6517 = vmatpush1.msra.mxu0 0.0
    %6518 = vmatprep.subr.mxu0 0.0
    %6519 = vmatpush1.msra.mxu0 0.0
    %6520 = vmatprep.subr.mxu0 0.0
    %6521 = vmatpush1.msra.mxu0 0.0
    %6522 = vmatprep.subr.mxu0 0.0
    %6523 = vmatpush1.msra.mxu0 0.0
    %6524 = vmatprep.subr.mxu0 0.0
    %6525 = vmatpush1.msra.mxu0 0.0
    %6526 = vmatprep.subr.mxu0 0.0
    %6527 = vmatpush1.msra.mxu0 0.0
    %6528 = vmatprep.subr.mxu0 0.0
    %6529 = vmatpush1.msra.mxu0 0.0
    %6530 = vmatprep.subr.mxu0 0.0
    %6531 = vmatpush1.msra.mxu0 0.0
    %6532 = vmatprep.subr.mxu0 0.0
    %6533 = vmatpush1.msra.mxu0 0.0
    %6534 = vmatprep.mubr.f32.mxu0 %v6417
    %6535 = vmatmul.mubr.f32.gmra.mrb[0].mxu0 %v6309
    %v6536 = vpop.f32.mrb[0].mxu0
    %v6537 = vadd.f32 0.0, %v6536
    %v6538 = vpop.f32.mrb[0].mxu0
    %6539 = vmatprep.mubr.f32.mxu0 %v6420
    %6540 = vmatmul.mubr.f32.gmra.mrb[0].mxu0 %v6312
    %v6541 = vpop.f32.mrb[0].mxu0
    %v6542 = vadd.f32 0.0, %v6541
    %v6543 = vpop.f32.mrb[0].mxu0
    %6544 = vmatprep.mubr.f32.mxu0 %v6423
    %6545 = vmatmul.mubr.f32.gmra.mrb[0].mxu0 %v6315
    %v6546 = vpop.f32.mrb[0].mxu0
    %v6547 = vadd.f32 0.0, %v6546
    %v6548 = vpop.f32.mrb[0].mxu0
    %6549 = vmatprep.mubr.f32.mxu0 %v6426
    %6550 = vmatmul.mubr.f32.gmra.mrb[0].mxu0 %v6318
    %v6551 = vpop.f32.mrb[0].mxu0
    %v6552 = vadd.f32 0.0, %v6551
    %v6553 = vpop.f32.mrb[0].mxu0
    %6554 = vmatprep.mubr.f32.mxu0 %v6429
    %6555 = vmatmul.mubr.f32.gmra.mrb[0].mxu0 %v6321
    %v6556 = vpop.f32.mrb[0].mxu0
    %v6557 = vadd.f32 0.0, %v6556
    %v6558 = vpop.f32.mrb[0].mxu0
    %6559 = vmatprep.mubr.f32.mxu0 %v6432
    %6560 = vmatmul.mubr.f32.gmra.mrb[0].mxu0 %v6324
    %v6561 = vpop.f32.mrb[0].mxu0
    %v6562 = vadd.f32 0.0, %v6561
    %v6563 = vpop.f32.mrb[0].mxu0
    %6564 = vmatprep.mubr.f32.mxu0 %v6435
    %6565 = vmatmul.mubr.f32.gmra.mrb[0].mxu0 %v6327
    %v6566 = vpop.f32.mrb[0].mxu0
    %v6567 = vadd.f32 0.0, %v6566
    %v6568 = vpop.f32.mrb[0].mxu0
    %6569 = vmatprep.mubr.f32.mxu0 %v6438
    %6570 = vmatmul.mubr.f32.gmra.mrb[0].mxu0 %v6330
    %v6571 = vpop.f32.mrb[0].mxu0
    %v6572 = vadd.f32 0.0, %v6571
    %v6573 = vpop.f32.mrb[0].mxu0
    %6574 = vmatprep.mubr.f32.mxu0 %v6441
    %6575 = vmatmul.mubr.f32.gmra.mrb[0].mxu0 %v6333
    %v6576 = vpop.f32.mrb[0].mxu0
    %v6577 = vadd.f32 0.0, %v6576
    %v6578 = vpop.f32.mrb[0].mxu0
    %6579 = vmatprep.mubr.f32.mxu0 %v6444
    %6580 = vmatmul.mubr.f32.gmra.mrb[0].mxu0 %v6336
    %v6581 = vpop.f32.mrb[0].mxu0
    %v6582 = vadd.f32 0.0, %v6581
    %v6583 = vpop.f32.mrb[0].mxu0
    %6584 = vmatprep.mubr.f32.mxu0 %v6447
    %6585 = vmatmul.mubr.f32.gmra.mrb[0].mxu0 %v6339
    %v6586 = vpop.f32.mrb[0].mxu0
    %v6587 = vadd.f32 0.0, %v6586
    %v6588 = vpop.f32.mrb[0].mxu0
    %6589 = vmatprep.mubr.f32.mxu0 %v6450
    %6590 = vmatmul.mubr.f32.gmra.mrb[0].mxu0 %v6342
    %v6591 = vpop.f32.mrb[0].mxu0
    %v6592 = vadd.f32 0.0, %v6591
    %v6593 = vpop.f32.mrb[0].mxu0
    %6594 = vmatprep.mubr.f32.mxu0 %v6453
    %6595 = vmatmul.mubr.f32.gmra.mrb[0].mxu0 %v6345
    %v6596 = vpop.f32.mrb[0].mxu0
    %v6597 = vadd.f32 0.0, %v6596
    %v6598 = vpop.f32.mrb[0].mxu0
    %6599 = vmatprep.mubr.f32.mxu0 %v6456
    %6600 = vmatmul.mubr.f32.gmra.mrb[0].mxu0 %v6348
    %v6601 = vpop.f32.mrb[0].mxu0
    %v6602 = vadd.f32 0.0, %v6601
    %v6603 = vpop.f32.mrb[0].mxu0
    %6604 = vmatprep.mubr.f32.mxu0 %v6459
    %6605 = vmatmul.mubr.f32.gmra.mrb[0].mxu0 %v6351
    %v6606 = vpop.f32.mrb[0].mxu0
    %v6607 = vadd.f32 0.0, %v6606
    %v6608 = vpop.f32.mrb[0].mxu0
    %6609 = vmatprep.mubr.f32.mxu0 %v6462
    %6610 = vmatmul.mubr.f32.gmra.mrb[0].mxu0 %v6354
    %v6611 = vpop.f32.mrb[0].mxu0
    %v6612 = vadd.f32 0.0, %v6611
    %v6613 = vpop.f32.mrb[0].mxu0
    %6614 = vmatprep.mubr.f32.mxu0 %v6465
    %6615 = vmatmul.mubr.f32.gmra.mrb[0].mxu0 %v6357
    %v6616 = vpop.f32.mrb[0].mxu0
    %v6617 = vadd.f32 0.0, %v6616
    %v6618 = vpop.f32.mrb[0].mxu0
    %6619 = vmatprep.mubr.f32.mxu0 %v6468
    %6620 = vmatmul.mubr.f32.gmra.mrb[0].mxu0 %v6360
    %v6621 = vpop.f32.mrb[0].mxu0
    %v6622 = vadd.f32 0.0, %v6621
    %v6623 = vpop.f32.mrb[0].mxu0
    %6624 = vdwg.mxu0
    %v6626 = vsel %vm1627, %v6537, 0
    %v6629 = vsel %vm1627, %v6542, 0
    %v6632 = vsel %vm1627, %v6547, 0
    %v6635 = vsel %vm1627, %v6552, 0
    %v6638 = vsel %vm1627, %v6557, 0
    %v6641 = vsel %vm1627, %v6562, 0
    %v6644 = vsel %vm1627, %v6567, 0
    %v6647 = vsel %vm1627, %v6572, 0
    %v6650 = vsel %vm1627, %v6577, 0
    %v6653 = vsel %vm1627, %v6582, 0
    %v6656 = vsel %vm1627, %v6587, 0
    %v6659 = vsel %vm1627, %v6592, 0
    %v6662 = vsel %vm1627, %v6597, 0
    %v6665 = vsel %vm1627, %v6602, 0
    %v6668 = vsel %vm1627, %v6607, 0
    %v6671 = vsel %vm1627, %v6612, 0
    %v6674 = vsel %vm1627, %v6617, 0
    %v6677 = vsel %vm1627, %v6622, 0
    %6679 = vmatprep.subr.mxu0 0.0
    %6680 = vmatpush1.msra.mxu0 %v457
    %6681 = vmatprep.subr.mxu0 0.0
    %6682 = vmatpush1.msra.mxu0 %v458
    %6683 = vmatprep.subr.mxu0 0.0
    %6684 = vmatpush1.msra.mxu0 0.0
    %6685 = vmatprep.subr.mxu0 0.0
    %6686 = vmatpush1.msra.mxu0 0.0
    %6687 = vmatprep.subr.mxu0 0.0
    %6688 = vmatpush1.msra.mxu0 0.0
    %6689 = vmatprep.subr.mxu0 0.0
    %6690 = vmatpush1.msra.mxu0 0.0
    %6691 = vmatprep.subr.mxu0 0.0
    %6692 = vmatpush1.msra.mxu0 0.0
    %6693 = vmatprep.subr.mxu0 0.0
    %6694 = vmatpush1.msra.mxu0 0.0
    %6695 = vmatprep.subr.mxu0 0.0
    %6696 = vmatpush1.msra.mxu0 0.0
    %6697 = vmatprep.subr.mxu0 0.0
    %6698 = vmatpush1.msra.mxu0 0.0
    %6699 = vmatprep.subr.mxu0 0.0
    %6700 = vmatpush1.msra.mxu0 0.0
    %6701 = vmatprep.subr.mxu0 0.0
    %6702 = vmatpush1.msra.mxu0 0.0
    %6703 = vmatprep.subr.mxu0 0.0
    %6704 = vmatpush1.msra.mxu0 0.0
    %6705 = vmatprep.subr.mxu0 0.0
    %6706 = vmatpush1.msra.mxu0 0.0
    %6707 = vmatprep.subr.mxu0 0.0
    %6708 = vmatpush1.msra.mxu0 0.0
    %6709 = vmatprep.subr.mxu0 0.0
    %6710 = vmatpush1.msra.mxu0 0.0
    %6711 = vmatprep.subr.mxu0 0.0
    %6712 = vmatpush1.msra.mxu0 0.0
    %6713 = vmatprep.subr.mxu0 0.0
    %6714 = vmatpush1.msra.mxu0 0.0
    %6715 = vmatprep.subr.mxu0 0.0
    %6716 = vmatpush1.msra.mxu0 0.0
    %6717 = vmatprep.subr.mxu0 0.0
    %6718 = vmatpush1.msra.mxu0 0.0
    %6719 = vmatprep.subr.mxu0 0.0
    %6720 = vmatpush1.msra.mxu0 0.0
    %6721 = vmatprep.subr.mxu0 0.0
    %6722 = vmatpush1.msra.mxu0 0.0
    %6723 = vmatprep.subr.mxu0 0.0
    %6724 = vmatpush1.msra.mxu0 0.0
    %6725 = vmatprep.subr.mxu0 0.0
    %6726 = vmatpush1.msra.mxu0 0.0
    %6727 = vmatprep.subr.mxu0 0.0
    %6728 = vmatpush1.msra.mxu0 0.0
    %6729 = vmatprep.subr.mxu0 0.0
    %6730 = vmatpush1.msra.mxu0 0.0
    %6731 = vmatprep.subr.mxu0 0.0
    %6732 = vmatpush1.msra.mxu0 0.0
    %6733 = vmatprep.subr.mxu0 0.0
    %6734 = vmatpush1.msra.mxu0 0.0
    %6735 = vmatprep.subr.mxu0 0.0
    %6736 = vmatpush1.msra.mxu0 0.0
    %6737 = vmatprep.subr.mxu0 0.0
    %6738 = vmatpush1.msra.mxu0 0.0
    %6739 = vmatprep.subr.mxu0 0.0
    %6740 = vmatpush1.msra.mxu0 0.0
    %6741 = vmatprep.subr.mxu0 0.0
    %6742 = vmatpush1.msra.mxu0 0.0
    %6743 = vmatprep.mubr.f32.mxu0 0.0
    %6744 = vmatmul.mubr.f32.gmra.mrb[0].mxu0 %v6626
    %v6745 = vpop.f32.mrb[0].mxu0
    %v6746 = vadd.f32 0.0, %v6745
    %v6747 = vpop.f32.mrb[0].mxu0
    %6748 = vmatprep.mubr.f32.mxu0 0.0
    %6749 = vmatmul.mubr.f32.gmra.mrb[0].mxu0 %v6629
    %v6750 = vpop.f32.mrb[0].mxu0
    %v6751 = vadd.f32 0.0, %v6750
    %v6752 = vpop.f32.mrb[0].mxu0
    %6753 = vmatprep.mubr.f32.mxu0 0.0
    %6754 = vmatmul.mubr.f32.gmra.mrb[0].mxu0 %v6632
    %v6755 = vpop.f32.mrb[0].mxu0
    %v6756 = vadd.f32 0.0, %v6755
    %v6757 = vpop.f32.mrb[0].mxu0
    %6758 = vmatprep.mubr.f32.mxu0 0.0
    %6759 = vmatmul.mubr.f32.gmra.mrb[0].mxu0 %v6635
    %v6760 = vpop.f32.mrb[0].mxu0
    %v6761 = vadd.f32 0.0, %v6760
    %v6762 = vpop.f32.mrb[0].mxu0
    %6763 = vmatprep.mubr.f32.mxu0 0.0
    %6764 = vmatmul.mubr.f32.gmra.mrb[0].mxu0 %v6638
    %v6765 = vpop.f32.mrb[0].mxu0
    %v6766 = vadd.f32 0.0, %v6765
    %v6767 = vpop.f32.mrb[0].mxu0
    %6768 = vmatprep.mubr.f32.mxu0 0.0
    %6769 = vmatmul.mubr.f32.gmra.mrb[0].mxu0 %v6641
    %v6770 = vpop.f32.mrb[0].mxu0
    %v6771 = vadd.f32 0.0, %v6770
    %v6772 = vpop.f32.mrb[0].mxu0
    %6773 = vmatprep.mubr.f32.mxu0 0.0
    %6774 = vmatmul.mubr.f32.gmra.mrb[0].mxu0 %v6644
    %v6775 = vpop.f32.mrb[0].mxu0
    %v6776 = vadd.f32 0.0, %v6775
    %v6777 = vpop.f32.mrb[0].mxu0
    %6778 = vmatprep.mubr.f32.mxu0 0.0
    %6779 = vmatmul.mubr.f32.gmra.mrb[0].mxu0 %v6647
    %v6780 = vpop.f32.mrb[0].mxu0
    %v6781 = vadd.f32 0.0, %v6780
    %v6782 = vpop.f32.mrb[0].mxu0
    %6783 = vmatprep.mubr.f32.mxu0 0.0
    %6784 = vmatmul.mubr.f32.gmra.mrb[0].mxu0 %v6650
    %v6785 = vpop.f32.mrb[0].mxu0
    %v6786 = vadd.f32 0.0, %v6785
    %v6787 = vpop.f32.mrb[0].mxu0
    %6788 = vmatprep.mubr.f32.mxu0 0.0
    %6789 = vmatmul.mubr.f32.gmra.mrb[0].mxu0 %v6653
    %v6790 = vpop.f32.mrb[0].mxu0
    %v6791 = vadd.f32 0.0, %v6790
    %v6792 = vpop.f32.mrb[0].mxu0
    %6793 = vmatprep.mubr.f32.mxu0 0.0
    %6794 = vmatmul.mubr.f32.gmra.mrb[0].mxu0 %v6656
    %v6795 = vpop.f32.mrb[0].mxu0
    %v6796 = vadd.f32 0.0, %v6795
    %v6797 = vpop.f32.mrb[0].mxu0
    %6798 = vmatprep.mubr.f32.mxu0 0.0
    %6799 = vmatmul.mubr.f32.gmra.mrb[0].mxu0 %v6659
    %v6800 = vpop.f32.mrb[0].mxu0
    %v6801 = vadd.f32 0.0, %v6800
    %v6802 = vpop.f32.mrb[0].mxu0
    %6803 = vmatprep.mubr.f32.mxu0 0.0
    %6804 = vmatmul.mubr.f32.gmra.mrb[0].mxu0 %v6662
    %v6805 = vpop.f32.mrb[0].mxu0
    %v6806 = vadd.f32 0.0, %v6805
    %v6807 = vpop.f32.mrb[0].mxu0
    %6808 = vmatprep.mubr.f32.mxu0 0.0
    %6809 = vmatmul.mubr.f32.gmra.mrb[0].mxu0 %v6665
    %v6810 = vpop.f32.mrb[0].mxu0
    %v6811 = vadd.f32 0.0, %v6810
    %v6812 = vpop.f32.mrb[0].mxu0
    %6813 = vmatprep.mubr.f32.mxu0 0.0
    %6814 = vmatmul.mubr.f32.gmra.mrb[0].mxu0 %v6668
    %v6815 = vpop.f32.mrb[0].mxu0
    %v6816 = vadd.f32 0.0, %v6815
    %v6817 = vpop.f32.mrb[0].mxu0
    %6818 = vmatprep.mubr.f32.mxu0 0.0
    %6819 = vmatmul.mubr.f32.gmra.mrb[0].mxu0 %v6671
    %v6820 = vpop.f32.mrb[0].mxu0
    %v6821 = vadd.f32 0.0, %v6820
    %v6822 = vpop.f32.mrb[0].mxu0
    %6823 = vmatprep.mubr.f32.mxu0 0.0
    %6824 = vmatmul.mubr.f32.gmra.mrb[0].mxu0 %v6674
    %v6825 = vpop.f32.mrb[0].mxu0
    %v6826 = vadd.f32 0.0, %v6825
    %v6827 = vpop.f32.mrb[0].mxu0
    %6828 = vmatprep.mubr.f32.mxu0 0.0
    %6829 = vmatmul.mubr.f32.gmra.mrb[0].mxu0 %v6677
    %v6830 = vpop.f32.mrb[0].mxu0
    %v6831 = vadd.f32 0.0, %v6830
    %v6832 = vpop.f32.mrb[0].mxu0
    %6833 = vdwg.mxu0
    %v6834 = vadd.f32 %v5647, %v6746
    %v6835 = vadd.f32 %v5647, %v6751
    %v6836 = vadd.f32 %v5647, %v6756
    %v6837 = vadd.f32 %v5647, %v6761
    %v6838 = vadd.f32 %v5647, %v6766
    %v6839 = vadd.f32 %v5647, %v6771
    %v6840 = vadd.f32 %v5647, %v6776
    %v6841 = vadd.f32 %v5647, %v6781
    %v6842 = vadd.f32 %v5647, %v6786
    %v6843 = vadd.f32 %v5647, %v6791
    %v6844 = vadd.f32 %v5647, %v6796
    %v6845 = vadd.f32 %v5647, %v6801
    %v6846 = vadd.f32 %v5647, %v6806
    %v6847 = vadd.f32 %v5647, %v6811
    %v6848 = vadd.f32 %v5647, %v6816
    %v6849 = vadd.f32 %v5647, %v6821
    %v6850 = vadd.f32 %v5647, %v6826
    %v6851 = vadd.f32 %v5647, %v6831
    %6852 = vrot.lane.b32.xlu0 %v5555, 112
    %v6853 = vpop.permute.xlu0 %6852
    %6854 = vrot.lane.b32.xlu0 %v5560, 112
    %v6855 = vpop.permute.xlu0 %6854
    %6856 = vrot.lane.b32.xlu0 %v5565, 112
    %v6857 = vpop.permute.xlu0 %6856
    %6858 = vrot.lane.b32.xlu0 %v5570, 112
    %v6859 = vpop.permute.xlu0 %6858
    %6860 = vrot.lane.b32.xlu0 %v5575, 112
    %v6861 = vpop.permute.xlu0 %6860
    %6862 = vrot.lane.b32.xlu0 %v5580, 112
    %v6863 = vpop.permute.xlu0 %6862
    %6864 = vrot.lane.b32.xlu0 %v5585, 112
    %v6865 = vpop.permute.xlu0 %6864
    %6866 = vrot.lane.b32.xlu0 %v5590, 112
    %v6867 = vpop.permute.xlu0 %6866
    %6868 = vrot.lane.b32.xlu0 %v5595, 112
    %v6869 = vpop.permute.xlu0 %6868
    %6870 = vrot.lane.b32.xlu0 %v5600, 112
    %v6871 = vpop.permute.xlu0 %6870
    %6872 = vrot.lane.b32.xlu0 %v5605, 112
    %v6873 = vpop.permute.xlu0 %6872
    %6874 = vrot.lane.b32.xlu0 %v5610, 112
    %v6875 = vpop.permute.xlu0 %6874
    %6876 = vrot.lane.b32.xlu0 %v5615, 112
    %v6877 = vpop.permute.xlu0 %6876
    %6878 = vrot.lane.b32.xlu0 %v5620, 112
    %v6879 = vpop.permute.xlu0 %6878
    %6880 = vrot.lane.b32.xlu0 %v5625, 112
    %v6881 = vpop.permute.xlu0 %6880
    %6882 = vrot.lane.b32.xlu0 %v5630, 112
    %v6883 = vpop.permute.xlu0 %6882
    %6884 = vrot.lane.b32.xlu0 %v5635, 112
    %v6885 = vpop.permute.xlu0 %6884
    %6886 = vrot.lane.b32.xlu0 %v5640, 112
    %v6887 = vpop.permute.xlu0 %6886
    %6888 = vrot.lane.b32.xlu0 %v5555, 80
    %v6889 = vpop.permute.xlu0 %6888
    %6890 = vrot.lane.b32.xlu0 %v5560, 80
    %v6891 = vpop.permute.xlu0 %6890
    %6892 = vrot.lane.b32.xlu0 %v5565, 80
    %v6893 = vpop.permute.xlu0 %6892
    %6894 = vrot.lane.b32.xlu0 %v5570, 80
    %v6895 = vpop.permute.xlu0 %6894
    %6896 = vrot.lane.b32.xlu0 %v5575, 80
    %v6897 = vpop.permute.xlu0 %6896
    %6898 = vrot.lane.b32.xlu0 %v5580, 80
    %v6899 = vpop.permute.xlu0 %6898
    %6900 = vrot.lane.b32.xlu0 %v5585, 80
    %v6901 = vpop.permute.xlu0 %6900
    %6902 = vrot.lane.b32.xlu0 %v5590, 80
    %v6903 = vpop.permute.xlu0 %6902
    %6904 = vrot.lane.b32.xlu0 %v5595, 80
    %v6905 = vpop.permute.xlu0 %6904
    %6906 = vrot.lane.b32.xlu0 %v5600, 80
    %v6907 = vpop.permute.xlu0 %6906
    %6908 = vrot.lane.b32.xlu0 %v5605, 80
    %v6909 = vpop.permute.xlu0 %6908
    %6910 = vrot.lane.b32.xlu0 %v5610, 80
    %v6911 = vpop.permute.xlu0 %6910
    %6912 = vrot.lane.b32.xlu0 %v5615, 80
    %v6913 = vpop.permute.xlu0 %6912
    %6914 = vrot.lane.b32.xlu0 %v5620, 80
    %v6915 = vpop.permute.xlu0 %6914
    %6916 = vrot.lane.b32.xlu0 %v5625, 80
    %v6917 = vpop.permute.xlu0 %6916
    %6918 = vrot.lane.b32.xlu0 %v5630, 80
    %v6919 = vpop.permute.xlu0 %6918
    %6920 = vrot.lane.b32.xlu0 %v5635, 80
    %v6921 = vpop.permute.xlu0 %6920
    %6922 = vrot.lane.b32.xlu0 %v5640, 80
    %v6923 = vpop.permute.xlu0 %6922
    %v6924 = vsel %vm1627, %v6853, 0
    %v6926 = vsel %vm1627, %v6855, 0
    %v6928 = vsel %vm1627, %v6857, 0
    %v6930 = vsel %vm1627, %v6859, 0
    %v6932 = vsel %vm1627, %v6861, 0
    %v6934 = vsel %vm1627, %v6863, 0
    %v6936 = vsel %vm1627, %v6865, 0
    %v6938 = vsel %vm1627, %v6867, 0
    %v6940 = vsel %vm1627, %v6869, 0
    %v6942 = vsel %vm1627, %v6871, 0
    %v6944 = vsel %vm1627, %v6873, 0
    %v6946 = vsel %vm1627, %v6875, 0
    %v6948 = vsel %vm1627, %v6877, 0
    %v6950 = vsel %vm1627, %v6879, 0
    %v6952 = vsel %vm1627, %v6881, 0
    %v6954 = vsel %vm1627, %v6883, 0
    %v6956 = vsel %vm1627, %v6885, 0
    %v6958 = vsel %vm1627, %v6887, 0
    %v6960 = vsel %vm1627, %v6889, 0
    %v6962 = vsel %vm1627, %v6891, 0
    %v6964 = vsel %vm1627, %v6893, 0
    %v6966 = vsel %vm1627, %v6895, 0
    %v6968 = vsel %vm1627, %v6897, 0
    %v6970 = vsel %vm1627, %v6899, 0
    %v6972 = vsel %vm1627, %v6901, 0
    %v6974 = vsel %vm1627, %v6903, 0
    %v6976 = vsel %vm1627, %v6905, 0
    %v6978 = vsel %vm1627, %v6907, 0
    %v6980 = vsel %vm1627, %v6909, 0
    %v6982 = vsel %vm1627, %v6911, 0
    %v6984 = vsel %vm1627, %v6913, 0
    %v6986 = vsel %vm1627, %v6915, 0
    %v6988 = vsel %vm1627, %v6917, 0
    %v6990 = vsel %vm1627, %v6919, 0
    %v6992 = vsel %vm1627, %v6921, 0
    %v6994 = vsel %vm1627, %v6923, 0
    %6996 = vmatprep.subr.mxu0 0.0
    %6997 = vmatpush1.xpose.msra.mxu0 %v6960
    %6998 = vmatprep.subr.mxu0 0.0
    %6999 = vmatpush1.xpose.msra.mxu0 %v6962
    %7000 = vmatprep.subr.mxu0 0.0
    %7001 = vmatpush1.xpose.msra.mxu0 %v6964
    %7002 = vmatprep.subr.mxu0 0.0
    %7003 = vmatpush1.xpose.msra.mxu0 %v6966
    %7004 = vmatprep.subr.mxu0 0.0
    %7005 = vmatpush1.xpose.msra.mxu0 %v6968
    %7006 = vmatprep.subr.mxu0 0.0
    %7007 = vmatpush1.xpose.msra.mxu0 %v6970
    %7008 = vmatprep.subr.mxu0 0.0
    %7009 = vmatpush1.xpose.msra.mxu0 %v6972
    %7010 = vmatprep.subr.mxu0 0.0
    %7011 = vmatpush1.xpose.msra.mxu0 %v6974
    %7012 = vmatprep.subr.mxu0 0.0
    %7013 = vmatpush1.xpose.msra.mxu0 %v6976
    %7014 = vmatprep.subr.mxu0 0.0
    %7015 = vmatpush1.xpose.msra.mxu0 %v6978
    %7016 = vmatprep.subr.mxu0 0.0
    %7017 = vmatpush1.xpose.msra.mxu0 %v6980
    %7018 = vmatprep.subr.mxu0 0.0
    %7019 = vmatpush1.xpose.msra.mxu0 %v6982
    %7020 = vmatprep.subr.mxu0 0.0
    %7021 = vmatpush1.xpose.msra.mxu0 %v6984
    %7022 = vmatprep.subr.mxu0 0.0
    %7023 = vmatpush1.xpose.msra.mxu0 %v6986
    %7024 = vmatprep.subr.mxu0 0.0
    %7025 = vmatpush1.xpose.msra.mxu0 %v6988
    %7026 = vmatprep.subr.mxu0 0.0
    %7027 = vmatpush1.xpose.msra.mxu0 %v6990
    %7028 = vmatprep.subr.mxu0 0.0
    %7029 = vmatpush1.xpose.msra.mxu0 %v6992
    %7030 = vmatprep.subr.mxu0 0.0
    %7031 = vmatpush1.xpose.msra.mxu0 %v6994
    %7032 = vmatprep.subr.mxu0 0.0
    %7033 = vmatpush1.xpose.msra.mxu0 0.0
    %7034 = vmatprep.subr.mxu0 0.0
    %7035 = vmatpush1.xpose.msra.mxu0 0.0
    %7036 = vmatprep.subr.mxu0 0.0
    %7037 = vmatpush1.xpose.msra.mxu0 0.0
    %7038 = vmatprep.subr.mxu0 0.0
    %7039 = vmatpush1.xpose.msra.mxu0 0.0
    %7040 = vmatprep.subr.mxu0 0.0
    %7041 = vmatpush1.xpose.msra.mxu0 0.0
    %7042 = vmatprep.subr.mxu0 0.0
    %7043 = vmatpush1.xpose.msra.mxu0 0.0
    %7044 = vmatprep.subr.mxu0 0.0
    %7045 = vmatpush1.xpose.msra.mxu0 0.0
    %7046 = vmatprep.subr.mxu0 0.0
    %7047 = vmatpush1.xpose.msra.mxu0 0.0
    %7048 = vmatprep.subr.mxu0 0.0
    %7049 = vmatpush1.xpose.msra.mxu0 0.0
    %7050 = vmatprep.subr.mxu0 0.0
    %7051 = vmatpush1.xpose.msra.mxu0 0.0
    %7052 = vmatprep.subr.mxu0 0.0
    %7053 = vmatpush1.xpose.msra.mxu0 0.0
    %7054 = vmatprep.subr.mxu0 0.0
    %7055 = vmatpush1.xpose.msra.mxu0 0.0
    %7056 = vmatprep.subr.mxu0 0.0
    %7057 = vmatpush1.xpose.msra.mxu0 0.0
    %7058 = vmatprep.subr.mxu0 0.0
    %7059 = vmatpush1.xpose.msra.mxu0 0.0
    %7060 = vmatprep.mubr.f32.mxu0 0.0
    %7061 = vmatmul.mubr.f32.gmra.mrb[0].mxu0 %v6924
    %v7062 = vpop.f32.mrb[0].mxu0
    %v7063 = vadd.f32 0.0, %v7062
    %v7064 = vpop.f32.mrb[0].mxu0
    %v7065 = vadd.f32 0.0, %v7064
    %7066 = vmatprep.mubr.f32.mxu0 0.0
    %7067 = vmatmul.mubr.f32.gmra.mrb[0].mxu0 %v6926
    %v7068 = vpop.f32.mrb[0].mxu0
    %v7069 = vadd.f32 0.0, %v7068
    %v7070 = vpop.f32.mrb[0].mxu0
    %v7071 = vadd.f32 0.0, %v7070
    %7072 = vmatprep.mubr.f32.mxu0 0.0
    %7073 = vmatmul.mubr.f32.gmra.mrb[0].mxu0 %v6928
    %v7074 = vpop.f32.mrb[0].mxu0
    %v7075 = vadd.f32 0.0, %v7074
    %v7076 = vpop.f32.mrb[0].mxu0
    %v7077 = vadd.f32 0.0, %v7076
    %7078 = vmatprep.mubr.f32.mxu0 0.0
    %7079 = vmatmul.mubr.f32.gmra.mrb[0].mxu0 %v6930
    %v7080 = vpop.f32.mrb[0].mxu0
    %v7081 = vadd.f32 0.0, %v7080
    %v7082 = vpop.f32.mrb[0].mxu0
    %v7083 = vadd.f32 0.0, %v7082
    %7084 = vmatprep.mubr.f32.mxu0 0.0
    %7085 = vmatmul.mubr.f32.gmra.mrb[0].mxu0 %v6932
    %v7086 = vpop.f32.mrb[0].mxu0
    %v7087 = vadd.f32 0.0, %v7086
    %v7088 = vpop.f32.mrb[0].mxu0
    %v7089 = vadd.f32 0.0, %v7088
    %7090 = vmatprep.mubr.f32.mxu0 0.0
    %7091 = vmatmul.mubr.f32.gmra.mrb[0].mxu0 %v6934
    %v7092 = vpop.f32.mrb[0].mxu0
    %v7093 = vadd.f32 0.0, %v7092
    %v7094 = vpop.f32.mrb[0].mxu0
    %v7095 = vadd.f32 0.0, %v7094
    %7096 = vmatprep.mubr.f32.mxu0 0.0
    %7097 = vmatmul.mubr.f32.gmra.mrb[0].mxu0 %v6936
    %v7098 = vpop.f32.mrb[0].mxu0
    %v7099 = vadd.f32 0.0, %v7098
    %v7100 = vpop.f32.mrb[0].mxu0
    %v7101 = vadd.f32 0.0, %v7100
    %7102 = vmatprep.mubr.f32.mxu0 0.0
    %7103 = vmatmul.mubr.f32.gmra.mrb[0].mxu0 %v6938
    %v7104 = vpop.f32.mrb[0].mxu0
    %v7105 = vadd.f32 0.0, %v7104
    %v7106 = vpop.f32.mrb[0].mxu0
    %v7107 = vadd.f32 0.0, %v7106
    %7108 = vmatprep.mubr.f32.mxu0 0.0
    %7109 = vmatmul.mubr.f32.gmra.mrb[0].mxu0 %v6940
    %v7110 = vpop.f32.mrb[0].mxu0
    %v7111 = vadd.f32 0.0, %v7110
    %v7112 = vpop.f32.mrb[0].mxu0
    %v7113 = vadd.f32 0.0, %v7112
    %7114 = vmatprep.mubr.f32.mxu0 0.0
    %7115 = vmatmul.mubr.f32.gmra.mrb[0].mxu0 %v6942
    %v7116 = vpop.f32.mrb[0].mxu0
    %v7117 = vadd.f32 0.0, %v7116
    %v7118 = vpop.f32.mrb[0].mxu0
    %v7119 = vadd.f32 0.0, %v7118
    %7120 = vmatprep.mubr.f32.mxu0 0.0
    %7121 = vmatmul.mubr.f32.gmra.mrb[0].mxu0 %v6944
    %v7122 = vpop.f32.mrb[0].mxu0
    %v7123 = vadd.f32 0.0, %v7122
    %v7124 = vpop.f32.mrb[0].mxu0
    %v7125 = vadd.f32 0.0, %v7124
    %7126 = vmatprep.mubr.f32.mxu0 0.0
    %7127 = vmatmul.mubr.f32.gmra.mrb[0].mxu0 %v6946
    %v7128 = vpop.f32.mrb[0].mxu0
    %v7129 = vadd.f32 0.0, %v7128
    %v7130 = vpop.f32.mrb[0].mxu0
    %v7131 = vadd.f32 0.0, %v7130
    %7132 = vmatprep.mubr.f32.mxu0 0.0
    %7133 = vmatmul.mubr.f32.gmra.mrb[0].mxu0 %v6948
    %v7134 = vpop.f32.mrb[0].mxu0
    %v7135 = vadd.f32 0.0, %v7134
    %v7136 = vpop.f32.mrb[0].mxu0
    %v7137 = vadd.f32 0.0, %v7136
    %7138 = vmatprep.mubr.f32.mxu0 0.0
    %7139 = vmatmul.mubr.f32.gmra.mrb[0].mxu0 %v6950
    %v7140 = vpop.f32.mrb[0].mxu0
    %v7141 = vadd.f32 0.0, %v7140
    %v7142 = vpop.f32.mrb[0].mxu0
    %v7143 = vadd.f32 0.0, %v7142
    %7144 = vmatprep.mubr.f32.mxu0 0.0
    %7145 = vmatmul.mubr.f32.gmra.mrb[0].mxu0 %v6952
    %v7146 = vpop.f32.mrb[0].mxu0
    %v7147 = vadd.f32 0.0, %v7146
    %v7148 = vpop.f32.mrb[0].mxu0
    %v7149 = vadd.f32 0.0, %v7148
    %7150 = vmatprep.mubr.f32.mxu0 0.0
    %7151 = vmatmul.mubr.f32.gmra.mrb[0].mxu0 %v6954
    %v7152 = vpop.f32.mrb[0].mxu0
    %v7153 = vadd.f32 0.0, %v7152
    %v7154 = vpop.f32.mrb[0].mxu0
    %v7155 = vadd.f32 0.0, %v7154
    %7156 = vmatprep.mubr.f32.mxu0 0.0
    %7157 = vmatmul.mubr.f32.gmra.mrb[0].mxu0 %v6956
    %v7158 = vpop.f32.mrb[0].mxu0
    %v7159 = vadd.f32 0.0, %v7158
    %v7160 = vpop.f32.mrb[0].mxu0
    %v7161 = vadd.f32 0.0, %v7160
    %7162 = vmatprep.mubr.f32.mxu0 0.0
    %7163 = vmatmul.mubr.f32.gmra.mrb[0].mxu0 %v6958
    %v7164 = vpop.f32.mrb[0].mxu0
    %v7165 = vadd.f32 0.0, %v7164
    %v7166 = vpop.f32.mrb[0].mxu0
    %v7167 = vadd.f32 0.0, %v7166
    %7168 = vdwg.mxu0
    %v7169 = vmul.f32 %v7063, 0.25
    %v7170 = vmul.f32 %v7065, 0.25
    %v7171 = vmul.f32 %v7069, 0.25
    %v7172 = vmul.f32 %v7071, 0.25
    %v7173 = vmul.f32 %v7075, 0.25
    %v7174 = vmul.f32 %v7077, 0.25
    %v7175 = vmul.f32 %v7081, 0.25
    %v7176 = vmul.f32 %v7083, 0.25
    %v7177 = vmul.f32 %v7087, 0.25
    %v7178 = vmul.f32 %v7089, 0.25
    %v7179 = vmul.f32 %v7093, 0.25
    %v7180 = vmul.f32 %v7095, 0.25
    %v7181 = vmul.f32 %v7099, 0.25
    %v7182 = vmul.f32 %v7101, 0.25
    %v7183 = vmul.f32 %v7105, 0.25
    %v7184 = vmul.f32 %v7107, 0.25
    %v7185 = vmul.f32 %v7111, 0.25
    %v7186 = vmul.f32 %v7113, 0.25
    %v7187 = vmul.f32 %v7117, 0.25
    %v7188 = vmul.f32 %v7119, 0.25
    %v7189 = vmul.f32 %v7123, 0.25
    %v7190 = vmul.f32 %v7125, 0.25
    %v7191 = vmul.f32 %v7129, 0.25
    %v7192 = vmul.f32 %v7131, 0.25
    %v7193 = vmul.f32 %v7135, 0.25
    %v7194 = vmul.f32 %v7137, 0.25
    %v7195 = vmul.f32 %v7141, 0.25
    %v7196 = vmul.f32 %v7143, 0.25
    %v7197 = vmul.f32 %v7147, 0.25
    %v7198 = vmul.f32 %v7149, 0.25
    %v7199 = vmul.f32 %v7153, 0.25
    %v7200 = vmul.f32 %v7155, 0.25
    %v7201 = vmul.f32 %v7159, 0.25
    %v7202 = vmul.f32 %v7161, 0.25
    %v7203 = vmul.f32 %v7165, 0.25
    %v7204 = vmul.f32 %v7167, 0.25
    %v7205 = vadd.f32 %v7169, %v5984
    %v7206 = vadd.f32 %v7170, %v5985
    %v7207 = vadd.f32 %v7171, %v5986
    %v7208 = vadd.f32 %v7172, %v5987
    %v7209 = vadd.f32 %v7173, %v5988
    %v7210 = vadd.f32 %v7174, %v5989
    %v7211 = vadd.f32 %v7175, %v5990
    %v7212 = vadd.f32 %v7176, %v5991
    %v7213 = vadd.f32 %v7177, %v5992
    %v7214 = vadd.f32 %v7178, %v5993
    %v7215 = vadd.f32 %v7179, %v5994
    %v7216 = vadd.f32 %v7180, %v5995
    %v7217 = vadd.f32 %v7181, %v5996
    %v7218 = vadd.f32 %v7182, %v5997
    %v7219 = vadd.f32 %v7183, %v5998
    %v7220 = vadd.f32 %v7184, %v5999
    %v7221 = vadd.f32 %v7185, %v6000
    %v7222 = vadd.f32 %v7186, %v6001
    %v7223 = vadd.f32 %v7187, %v6002
    %v7224 = vadd.f32 %v7188, %v6003
    %v7225 = vadd.f32 %v7189, %v6004
    %v7226 = vadd.f32 %v7190, %v6005
    %v7227 = vadd.f32 %v7191, %v6006
    %v7228 = vadd.f32 %v7192, %v6007
    %v7229 = vadd.f32 %v7193, %v6008
    %v7230 = vadd.f32 %v7194, %v6009
    %v7231 = vadd.f32 %v7195, %v6010
    %v7232 = vadd.f32 %v7196, %v6011
    %v7233 = vadd.f32 %v7197, %v6012
    %v7234 = vadd.f32 %v7198, %v6013
    %v7235 = vadd.f32 %v7199, %v6014
    %v7236 = vadd.f32 %v7200, %v6015
    %v7237 = vadd.f32 %v7201, %v6016
    %v7238 = vadd.f32 %v7202, %v6017
    %v7239 = vadd.f32 %v7203, %v6018
    %v7240 = vadd.f32 %v7204, %v6019
    %v7241 = vsel %vm1627, %v7206, -inf
    %v7242 = vmax.f32 %v7205, %v7241
    %7243 = vmax.xlane.f32.xlu0 %v7242
    %v7244 = vpop.xlane.xlu0 %7243
    %v7245 = vsel %vm1627, %v7208, -inf
    %v7246 = vmax.f32 %v7207, %v7245
    %7247 = vmax.xlane.f32.xlu0 %v7246
    %v7248 = vpop.xlane.xlu0 %7247
    %v7249 = vsel %vm1627, %v7210, -inf
    %v7250 = vmax.f32 %v7209, %v7249
    %7251 = vmax.xlane.f32.xlu0 %v7250
    %v7252 = vpop.xlane.xlu0 %7251
    %v7253 = vsel %vm1627, %v7212, -inf
    %v7254 = vmax.f32 %v7211, %v7253
    %7255 = vmax.xlane.f32.xlu0 %v7254
    %v7256 = vpop.xlane.xlu0 %7255
    %v7257 = vsel %vm1627, %v7214, -inf
    %v7258 = vmax.f32 %v7213, %v7257
    %7259 = vmax.xlane.f32.xlu0 %v7258
    %v7260 = vpop.xlane.xlu0 %7259
    %v7261 = vsel %vm1627, %v7216, -inf
    %v7262 = vmax.f32 %v7215, %v7261
    %7263 = vmax.xlane.f32.xlu0 %v7262
    %v7264 = vpop.xlane.xlu0 %7263
    %v7265 = vsel %vm1627, %v7218, -inf
    %v7266 = vmax.f32 %v7217, %v7265
    %7267 = vmax.xlane.f32.xlu0 %v7266
    %v7268 = vpop.xlane.xlu0 %7267
    %v7269 = vsel %vm1627, %v7220, -inf
    %v7270 = vmax.f32 %v7219, %v7269
    %7271 = vmax.xlane.f32.xlu0 %v7270
    %v7272 = vpop.xlane.xlu0 %7271
    %v7273 = vsel %vm1627, %v7222, -inf
    %v7274 = vmax.f32 %v7221, %v7273
    %7275 = vmax.xlane.f32.xlu0 %v7274
    %v7276 = vpop.xlane.xlu0 %7275
    %v7277 = vsel %vm1627, %v7224, -inf
    %v7278 = vmax.f32 %v7223, %v7277
    %7279 = vmax.xlane.f32.xlu0 %v7278
    %v7280 = vpop.xlane.xlu0 %7279
    %v7281 = vsel %vm1627, %v7226, -inf
    %v7282 = vmax.f32 %v7225, %v7281
    %7283 = vmax.xlane.f32.xlu0 %v7282
    %v7284 = vpop.xlane.xlu0 %7283
    %v7285 = vsel %vm1627, %v7228, -inf
    %v7286 = vmax.f32 %v7227, %v7285
    %7287 = vmax.xlane.f32.xlu0 %v7286
    %v7288 = vpop.xlane.xlu0 %7287
    %v7289 = vsel %vm1627, %v7230, -inf
    %v7290 = vmax.f32 %v7229, %v7289
    %7291 = vmax.xlane.f32.xlu0 %v7290
    %v7292 = vpop.xlane.xlu0 %7291
    %v7293 = vsel %vm1627, %v7232, -inf
    %v7294 = vmax.f32 %v7231, %v7293
    %7295 = vmax.xlane.f32.xlu0 %v7294
    %v7296 = vpop.xlane.xlu0 %7295
    %v7297 = vsel %vm1627, %v7234, -inf
    %v7298 = vmax.f32 %v7233, %v7297
    %7299 = vmax.xlane.f32.xlu0 %v7298
    %v7300 = vpop.xlane.xlu0 %7299
    %v7301 = vsel %vm1627, %v7236, -inf
    %v7302 = vmax.f32 %v7235, %v7301
    %7303 = vmax.xlane.f32.xlu0 %v7302
    %v7304 = vpop.xlane.xlu0 %7303
    %v7305 = vsel %vm1627, %v7238, -inf
    %v7306 = vmax.f32 %v7237, %v7305
    %7307 = vmax.xlane.f32.xlu0 %v7306
    %v7308 = vpop.xlane.xlu0 %7307
    %v7309 = vsel %vm1627, %v7240, -inf
    %v7310 = vmax.f32 %v7239, %v7309
    %7311 = vmax.xlane.f32.xlu0 %v7310
    %v7312 = vpop.xlane.xlu0 %7311
    %v7313 = vsub.f32 %v7205, %v7244
    %v7314 = vsub.f32 %v7206, %v7244
    %v7315 = vsub.f32 %v7207, %v7248
    %v7316 = vsub.f32 %v7208, %v7248
    %v7317 = vsub.f32 %v7209, %v7252
    %v7318 = vsub.f32 %v7210, %v7252
    %v7319 = vsub.f32 %v7211, %v7256
    %v7320 = vsub.f32 %v7212, %v7256
    %v7321 = vsub.f32 %v7213, %v7260
    %v7322 = vsub.f32 %v7214, %v7260
    %v7323 = vsub.f32 %v7215, %v7264
    %v7324 = vsub.f32 %v7216, %v7264
    %v7325 = vsub.f32 %v7217, %v7268
    %v7326 = vsub.f32 %v7218, %v7268
    %v7327 = vsub.f32 %v7219, %v7272
    %v7328 = vsub.f32 %v7220, %v7272
    %v7329 = vsub.f32 %v7221, %v7276
    %v7330 = vsub.f32 %v7222, %v7276
    %v7331 = vsub.f32 %v7223, %v7280
    %v7332 = vsub.f32 %v7224, %v7280
    %v7333 = vsub.f32 %v7225, %v7284
    %v7334 = vsub.f32 %v7226, %v7284
    %v7335 = vsub.f32 %v7227, %v7288
    %v7336 = vsub.f32 %v7228, %v7288
    %v7337 = vsub.f32 %v7229, %v7292
    %v7338 = vsub.f32 %v7230, %v7292
    %v7339 = vsub.f32 %v7231, %v7296
    %v7340 = vsub.f32 %v7232, %v7296
    %v7341 = vsub.f32 %v7233, %v7300
    %v7342 = vsub.f32 %v7234, %v7300
    %v7343 = vsub.f32 %v7235, %v7304
    %v7344 = vsub.f32 %v7236, %v7304
    %v7345 = vsub.f32 %v7237, %v7308
    %v7346 = vsub.f32 %v7238, %v7308
    %v7347 = vsub.f32 %v7239, %v7312
    %v7348 = vsub.f32 %v7240, %v7312
    %v7349 = vmul.f32 %v7313, 1.442695
    %v7350 = vpow.pop %v7349
    %v7351 = vmul.f32 %v7314, 1.442695
    %v7352 = vpow.pop %v7351
    %v7353 = vmul.f32 %v7315, 1.442695
    %v7354 = vpow.pop %v7353
    %v7355 = vmul.f32 %v7316, 1.442695
    %v7356 = vpow.pop %v7355
    %v7357 = vmul.f32 %v7317, 1.442695
    %v7358 = vpow.pop %v7357
    %v7359 = vmul.f32 %v7318, 1.442695
    %v7360 = vpow.pop %v7359
    %v7361 = vmul.f32 %v7319, 1.442695
    %v7362 = vpow.pop %v7361
    %v7363 = vmul.f32 %v7320, 1.442695
    %v7364 = vpow.pop %v7363
    %v7365 = vmul.f32 %v7321, 1.442695
    %v7366 = vpow.pop %v7365
    %v7367 = vmul.f32 %v7322, 1.442695
    %v7368 = vpow.pop %v7367
    %v7369 = vmul.f32 %v7323, 1.442695
    %v7370 = vpow.pop %v7369
    %v7371 = vmul.f32 %v7324, 1.442695
    %v7372 = vpow.pop %v7371
    %v7373 = vmul.f32 %v7325, 1.442695
    %v7374 = vpow.pop %v7373
    %v7375 = vmul.f32 %v7326, 1.442695
    %v7376 = vpow.pop %v7375
    %v7377 = vmul.f32 %v7327, 1.442695
    %v7378 = vpow.pop %v7377
    %v7379 = vmul.f32 %v7328, 1.442695
    %v7380 = vpow.pop %v7379
    %v7381 = vmul.f32 %v7329, 1.442695
    %v7382 = vpow.pop %v7381
    %v7383 = vmul.f32 %v7330, 1.442695
    %v7384 = vpow.pop %v7383
    %v7385 = vmul.f32 %v7331, 1.442695
    %v7386 = vpow.pop %v7385
    %v7387 = vmul.f32 %v7332, 1.442695
    %v7388 = vpow.pop %v7387
    %v7389 = vmul.f32 %v7333, 1.442695
    %v7390 = vpow.pop %v7389
    %v7391 = vmul.f32 %v7334, 1.442695
    %v7392 = vpow.pop %v7391
    %v7393 = vmul.f32 %v7335, 1.442695
    %v7394 = vpow.pop %v7393
    %v7395 = vmul.f32 %v7336, 1.442695
    %v7396 = vpow.pop %v7395
    %v7397 = vmul.f32 %v7337, 1.442695
    %v7398 = vpow.pop %v7397
    %v7399 = vmul.f32 %v7338, 1.442695
    %v7400 = vpow.pop %v7399
    %v7401 = vmul.f32 %v7339, 1.442695
    %v7402 = vpow.pop %v7401
    %v7403 = vmul.f32 %v7340, 1.442695
    %v7404 = vpow.pop %v7403
    %v7405 = vmul.f32 %v7341, 1.442695
    %v7406 = vpow.pop %v7405
    %v7407 = vmul.f32 %v7342, 1.442695
    %v7408 = vpow.pop %v7407
    %v7409 = vmul.f32 %v7343, 1.442695
    %v7410 = vpow.pop %v7409
    %v7411 = vmul.f32 %v7344, 1.442695
    %v7412 = vpow.pop %v7411
    %v7413 = vmul.f32 %v7345, 1.442695
    %v7414 = vpow.pop %v7413
    %v7415 = vmul.f32 %v7346, 1.442695
    %v7416 = vpow.pop %v7415
    %v7417 = vmul.f32 %v7347, 1.442695
    %v7418 = vpow.pop %v7417
    %v7419 = vmul.f32 %v7348, 1.442695
    %v7420 = vpow.pop %v7419
    %v7421 = vsel %vm1627, %v7352, 0.0
    %v7422 = vadd.f32 %v7350, %v7421
    %7423 = vadd.xlane.f32.xlu0 %v7422
    %v7424 = vpop.xlane.xlu0 %7423
    %v7425 = vsel %vm1627, %v7356, 0.0
    %v7426 = vadd.f32 %v7354, %v7425
    %7427 = vadd.xlane.f32.xlu0 %v7426
    %v7428 = vpop.xlane.xlu0 %7427
    %v7429 = vsel %vm1627, %v7360, 0.0
    %v7430 = vadd.f32 %v7358, %v7429
    %7431 = vadd.xlane.f32.xlu0 %v7430
    %v7432 = vpop.xlane.xlu0 %7431
    %v7433 = vsel %vm1627, %v7364, 0.0
    %v7434 = vadd.f32 %v7362, %v7433
    %7435 = vadd.xlane.f32.xlu0 %v7434
    %v7436 = vpop.xlane.xlu0 %7435
    %v7437 = vsel %vm1627, %v7368, 0.0
    %v7438 = vadd.f32 %v7366, %v7437
    %7439 = vadd.xlane.f32.xlu0 %v7438
    %v7440 = vpop.xlane.xlu0 %7439
    %v7441 = vsel %vm1627, %v7372, 0.0
    %v7442 = vadd.f32 %v7370, %v7441
    %7443 = vadd.xlane.f32.xlu0 %v7442
    %v7444 = vpop.xlane.xlu0 %7443
    %v7445 = vsel %vm1627, %v7376, 0.0
    %v7446 = vadd.f32 %v7374, %v7445
    %7447 = vadd.xlane.f32.xlu0 %v7446
    %v7448 = vpop.xlane.xlu0 %7447
    %v7449 = vsel %vm1627, %v7380, 0.0
    %v7450 = vadd.f32 %v7378, %v7449
    %7451 = vadd.xlane.f32.xlu0 %v7450
    %v7452 = vpop.xlane.xlu0 %7451
    %v7453 = vsel %vm1627, %v7384, 0.0
    %v7454 = vadd.f32 %v7382, %v7453
    %7455 = vadd.xlane.f32.xlu0 %v7454
    %v7456 = vpop.xlane.xlu0 %7455
    %v7457 = vsel %vm1627, %v7388, 0.0
    %v7458 = vadd.f32 %v7386, %v7457
    %7459 = vadd.xlane.f32.xlu0 %v7458
    %v7460 = vpop.xlane.xlu0 %7459
    %v7461 = vsel %vm1627, %v7392, 0.0
    %v7462 = vadd.f32 %v7390, %v7461
    %7463 = vadd.xlane.f32.xlu0 %v7462
    %v7464 = vpop.xlane.xlu0 %7463
    %v7465 = vsel %vm1627, %v7396, 0.0
    %v7466 = vadd.f32 %v7394, %v7465
    %7467 = vadd.xlane.f32.xlu0 %v7466
    %v7468 = vpop.xlane.xlu0 %7467
    %v7469 = vsel %vm1627, %v7400, 0.0
    %v7470 = vadd.f32 %v7398, %v7469
    %7471 = vadd.xlane.f32.xlu0 %v7470
    %v7472 = vpop.xlane.xlu0 %7471
    %v7473 = vsel %vm1627, %v7404, 0.0
    %v7474 = vadd.f32 %v7402, %v7473
    %7475 = vadd.xlane.f32.xlu0 %v7474
    %v7476 = vpop.xlane.xlu0 %7475
    %v7477 = vsel %vm1627, %v7408, 0.0
    %v7478 = vadd.f32 %v7406, %v7477
    %7479 = vadd.xlane.f32.xlu0 %v7478
    %v7480 = vpop.xlane.xlu0 %7479
    %v7481 = vsel %vm1627, %v7412, 0.0
    %v7482 = vadd.f32 %v7410, %v7481
    %7483 = vadd.xlane.f32.xlu0 %v7482
    %v7484 = vpop.xlane.xlu0 %7483
    %v7485 = vsel %vm1627, %v7416, 0.0
    %v7486 = vadd.f32 %v7414, %v7485
    %7487 = vadd.xlane.f32.xlu0 %v7486
    %v7488 = vpop.xlane.xlu0 %7487
    %v7489 = vsel %vm1627, %v7420, 0.0
    %v7490 = vadd.f32 %v7418, %v7489
    %7491 = vadd.xlane.f32.xlu0 %v7490
    %v7492 = vpop.xlane.xlu0 %7491
    %v7493 = vrcp.pop %v7424
    %v7494 = vmul.f32 %v7350, %v7493
    %v7495 = vmul.f32 %v7352, %v7493
    %v7496 = vrcp.pop %v7428
    %v7497 = vmul.f32 %v7354, %v7496
    %v7498 = vmul.f32 %v7356, %v7496
    %v7499 = vrcp.pop %v7432
    %v7500 = vmul.f32 %v7358, %v7499
    %v7501 = vmul.f32 %v7360, %v7499
    %v7502 = vrcp.pop %v7436
    %v7503 = vmul.f32 %v7362, %v7502
    %v7504 = vmul.f32 %v7364, %v7502
    %v7505 = vrcp.pop %v7440
    %v7506 = vmul.f32 %v7366, %v7505
    %v7507 = vmul.f32 %v7368, %v7505
    %v7508 = vrcp.pop %v7444
    %v7509 = vmul.f32 %v7370, %v7508
    %v7510 = vmul.f32 %v7372, %v7508
    %v7511 = vrcp.pop %v7448
    %v7512 = vmul.f32 %v7374, %v7511
    %v7513 = vmul.f32 %v7376, %v7511
    %v7514 = vrcp.pop %v7452
    %v7515 = vmul.f32 %v7378, %v7514
    %v7516 = vmul.f32 %v7380, %v7514
    %v7517 = vrcp.pop %v7456
    %v7518 = vmul.f32 %v7382, %v7517
    %v7519 = vmul.f32 %v7384, %v7517
    %v7520 = vrcp.pop %v7460
    %v7521 = vmul.f32 %v7386, %v7520
    %v7522 = vmul.f32 %v7388, %v7520
    %v7523 = vrcp.pop %v7464
    %v7524 = vmul.f32 %v7390, %v7523
    %v7525 = vmul.f32 %v7392, %v7523
    %v7526 = vrcp.pop %v7468
    %v7527 = vmul.f32 %v7394, %v7526
    %v7528 = vmul.f32 %v7396, %v7526
    %v7529 = vrcp.pop %v7472
    %v7530 = vmul.f32 %v7398, %v7529
    %v7531 = vmul.f32 %v7400, %v7529
    %v7532 = vrcp.pop %v7476
    %v7533 = vmul.f32 %v7402, %v7532
    %v7534 = vmul.f32 %v7404, %v7532
    %v7535 = vrcp.pop %v7480
    %v7536 = vmul.f32 %v7406, %v7535
    %v7537 = vmul.f32 %v7408, %v7535
    %v7538 = vrcp.pop %v7484
    %v7539 = vmul.f32 %v7410, %v7538
    %v7540 = vmul.f32 %v7412, %v7538
    %v7541 = vrcp.pop %v7488
    %v7542 = vmul.f32 %v7414, %v7541
    %v7543 = vmul.f32 %v7416, %v7541
    %v7544 = vrcp.pop %v7492
    %v7545 = vmul.f32 %v7418, %v7544
    %v7546 = vmul.f32 %v7420, %v7544
    %7547 = vrot.lane.b32.xlu0 %v5555, 48
    %v7548 = vpop.permute.xlu0 %7547
    %7549 = vrot.lane.b32.xlu0 %v5560, 48
    %v7550 = vpop.permute.xlu0 %7549
    %7551 = vrot.lane.b32.xlu0 %v5565, 48
    %v7552 = vpop.permute.xlu0 %7551
    %7553 = vrot.lane.b32.xlu0 %v5570, 48
    %v7554 = vpop.permute.xlu0 %7553
    %7555 = vrot.lane.b32.xlu0 %v5575, 48
    %v7556 = vpop.permute.xlu0 %7555
    %7557 = vrot.lane.b32.xlu0 %v5580, 48
    %v7558 = vpop.permute.xlu0 %7557
    %7559 = vrot.lane.b32.xlu0 %v5585, 48
    %v7560 = vpop.permute.xlu0 %7559
    %7561 = vrot.lane.b32.xlu0 %v5590, 48
    %v7562 = vpop.permute.xlu0 %7561
    %7563 = vrot.lane.b32.xlu0 %v5595, 48
    %v7564 = vpop.permute.xlu0 %7563
    %7565 = vrot.lane.b32.xlu0 %v5600, 48
    %v7566 = vpop.permute.xlu0 %7565
    %7567 = vrot.lane.b32.xlu0 %v5605, 48
    %v7568 = vpop.permute.xlu0 %7567
    %7569 = vrot.lane.b32.xlu0 %v5610, 48
    %v7570 = vpop.permute.xlu0 %7569
    %7571 = vrot.lane.b32.xlu0 %v5615, 48
    %v7572 = vpop.permute.xlu0 %7571
    %7573 = vrot.lane.b32.xlu0 %v5620, 48
    %v7574 = vpop.permute.xlu0 %7573
    %7575 = vrot.lane.b32.xlu0 %v5625, 48
    %v7576 = vpop.permute.xlu0 %7575
    %7577 = vrot.lane.b32.xlu0 %v5630, 48
    %v7578 = vpop.permute.xlu0 %7577
    %7579 = vrot.lane.b32.xlu0 %v5635, 48
    %v7580 = vpop.permute.xlu0 %7579
    %7581 = vrot.lane.b32.xlu0 %v5640, 48
    %v7582 = vpop.permute.xlu0 %7581
    %v7602 = vsel %vm1627, %v7495, 0
    %v7605 = vsel %vm1627, %v7498, 0
    %v7608 = vsel %vm1627, %v7501, 0
    %v7611 = vsel %vm1627, %v7504, 0
    %v7614 = vsel %vm1627, %v7507, 0
    %v7617 = vsel %vm1627, %v7510, 0
    %v7620 = vsel %vm1627, %v7513, 0
    %v7623 = vsel %vm1627, %v7516, 0
    %v7626 = vsel %vm1627, %v7519, 0
    %v7629 = vsel %vm1627, %v7522, 0
    %v7632 = vsel %vm1627, %v7525, 0
    %v7635 = vsel %vm1627, %v7528, 0
    %v7638 = vsel %vm1627, %v7531, 0
    %v7641 = vsel %vm1627, %v7534, 0
    %v7644 = vsel %vm1627, %v7537, 0
    %v7647 = vsel %vm1627, %v7540, 0
    %v7650 = vsel %vm1627, %v7543, 0
    %v7653 = vsel %vm1627, %v7546, 0
    %7655 = vmatprep.subr.mxu0 0.0
    %7656 = vmatpush1.msra.mxu0 %v7548
    %7657 = vmatprep.subr.mxu0 0.0
    %7658 = vmatpush1.msra.mxu0 %v7550
    %7659 = vmatprep.subr.mxu0 0.0
    %7660 = vmatpush1.msra.mxu0 %v7552
    %7661 = vmatprep.subr.mxu0 0.0
    %7662 = vmatpush1.msra.mxu0 %v7554
    %7663 = vmatprep.subr.mxu0 0.0
    %7664 = vmatpush1.msra.mxu0 %v7556
    %7665 = vmatprep.subr.mxu0 0.0
    %7666 = vmatpush1.msra.mxu0 %v7558
    %7667 = vmatprep.subr.mxu0 0.0
    %7668 = vmatpush1.msra.mxu0 %v7560
    %7669 = vmatprep.subr.mxu0 0.0
    %7670 = vmatpush1.msra.mxu0 %v7562
    %7671 = vmatprep.subr.mxu0 0.0
    %7672 = vmatpush1.msra.mxu0 %v7564
    %7673 = vmatprep.subr.mxu0 0.0
    %7674 = vmatpush1.msra.mxu0 %v7566
    %7675 = vmatprep.subr.mxu0 0.0
    %7676 = vmatpush1.msra.mxu0 %v7568
    %7677 = vmatprep.subr.mxu0 0.0
    %7678 = vmatpush1.msra.mxu0 %v7570
    %7679 = vmatprep.subr.mxu0 0.0
    %7680 = vmatpush1.msra.mxu0 %v7572
    %7681 = vmatprep.subr.mxu0 0.0
    %7682 = vmatpush1.msra.mxu0 %v7574
    %7683 = vmatprep.subr.mxu0 0.0
    %7684 = vmatpush1.msra.mxu0 %v7576
    %7685 = vmatprep.subr.mxu0 0.0
    %7686 = vmatpush1.msra.mxu0 %v7578
    %7687 = vmatprep.subr.mxu0 0.0
    %7688 = vmatpush1.msra.mxu0 %v7580
    %7689 = vmatprep.subr.mxu0 0.0
    %7690 = vmatpush1.msra.mxu0 %v7582
    %7691 = vmatprep.subr.mxu0 0.0
    %7692 = vmatpush1.msra.mxu0 0.0
    %7693 = vmatprep.subr.mxu0 0.0
    %7694 = vmatpush1.msra.mxu0 0.0
    %7695 = vmatprep.subr.mxu0 0.0
    %7696 = vmatpush1.msra.mxu0 0.0
    %7697 = vmatprep.subr.mxu0 0.0
    %7698 = vmatpush1.msra.mxu0 0.0
    %7699 = vmatprep.subr.mxu0 0.0
    %7700 = vmatpush1.msra.mxu0 0.0
    %7701 = vmatprep.subr.mxu0 0.0
    %7702 = vmatpush1.msra.mxu0 0.0
    %7703 = vmatprep.subr.mxu0 0.0
    %7704 = vmatpush1.msra.mxu0 0.0
    %7705 = vmatprep.subr.mxu0 0.0
    %7706 = vmatpush1.msra.mxu0 0.0
    %7707 = vmatprep.subr.mxu0 0.0
    %7708 = vmatpush1.msra.mxu0 0.0
    %7709 = vmatprep.subr.mxu0 0.0
    %7710 = vmatpush1.msra.mxu0 0.0
    %7711 = vmatprep.subr.mxu0 0.0
    %7712 = vmatpush1.msra.mxu0 0.0
    %7713 = vmatprep.subr.mxu0 0.0
    %7714 = vmatpush1.msra.mxu0 0.0
    %7715 = vmatprep.subr.mxu0 0.0
    %7716 = vmatpush1.msra.mxu0 0.0
    %7717 = vmatprep.subr.mxu0 0.0
    %7718 = vmatpush1.msra.mxu0 0.0
    %7719 = vmatprep.mubr.f32.mxu0 %v7602
    %7720 = vmatmul.mubr.f32.gmra.mrb[0].mxu0 %v7494
    %v7721 = vpop.f32.mrb[0].mxu0
    %v7722 = vadd.f32 0.0, %v7721
    %v7723 = vpop.f32.mrb[0].mxu0
    %7724 = vmatprep.mubr.f32.mxu0 %v7605
    %7725 = vmatmul.mubr.f32.gmra.mrb[0].mxu0 %v7497
    %v7726 = vpop.f32.mrb[0].mxu0
    %v7727 = vadd.f32 0.0, %v7726
    %v7728 = vpop.f32.mrb[0].mxu0
    %7729 = vmatprep.mubr.f32.mxu0 %v7608
    %7730 = vmatmul.mubr.f32.gmra.mrb[0].mxu0 %v7500
    %v7731 = vpop.f32.mrb[0].mxu0
    %v7732 = vadd.f32 0.0, %v7731
    %v7733 = vpop.f32.mrb[0].mxu0
    %7734 = vmatprep.mubr.f32.mxu0 %v7611
    %7735 = vmatmul.mubr.f32.gmra.mrb[0].mxu0 %v7503
    %v7736 = vpop.f32.mrb[0].mxu0
    %v7737 = vadd.f32 0.0, %v7736
    %v7738 = vpop.f32.mrb[0].mxu0
    %7739 = vmatprep.mubr.f32.mxu0 %v7614
    %7740 = vmatmul.mubr.f32.gmra.mrb[0].mxu0 %v7506
    %v7741 = vpop.f32.mrb[0].mxu0
    %v7742 = vadd.f32 0.0, %v7741
    %v7743 = vpop.f32.mrb[0].mxu0
    %7744 = vmatprep.mubr.f32.mxu0 %v7617
    %7745 = vmatmul.mubr.f32.gmra.mrb[0].mxu0 %v7509
    %v7746 = vpop.f32.mrb[0].mxu0
    %v7747 = vadd.f32 0.0, %v7746
    %v7748 = vpop.f32.mrb[0].mxu0
    %7749 = vmatprep.mubr.f32.mxu0 %v7620
    %7750 = vmatmul.mubr.f32.gmra.mrb[0].mxu0 %v7512
    %v7751 = vpop.f32.mrb[0].mxu0
    %v7752 = vadd.f32 0.0, %v7751
    %v7753 = vpop.f32.mrb[0].mxu0
    %7754 = vmatprep.mubr.f32.mxu0 %v7623
    %7755 = vmatmul.mubr.f32.gmra.mrb[0].mxu0 %v7515
    %v7756 = vpop.f32.mrb[0].mxu0
    %v7757 = vadd.f32 0.0, %v7756
    %v7758 = vpop.f32.mrb[0].mxu0
    %7759 = vmatprep.mubr.f32.mxu0 %v7626
    %7760 = vmatmul.mubr.f32.gmra.mrb[0].mxu0 %v7518
    %v7761 = vpop.f32.mrb[0].mxu0
    %v7762 = vadd.f32 0.0, %v7761
    %v7763 = vpop.f32.mrb[0].mxu0
    %7764 = vmatprep.mubr.f32.mxu0 %v7629
    %7765 = vmatmul.mubr.f32.gmra.mrb[0].mxu0 %v7521
    %v7766 = vpop.f32.mrb[0].mxu0
    %v7767 = vadd.f32 0.0, %v7766
    %v7768 = vpop.f32.mrb[0].mxu0
    %7769 = vmatprep.mubr.f32.mxu0 %v7632
    %7770 = vmatmul.mubr.f32.gmra.mrb[0].mxu0 %v7524
    %v7771 = vpop.f32.mrb[0].mxu0
    %v7772 = vadd.f32 0.0, %v7771
    %v7773 = vpop.f32.mrb[0].mxu0
    %7774 = vmatprep.mubr.f32.mxu0 %v7635
    %7775 = vmatmul.mubr.f32.gmra.mrb[0].mxu0 %v7527
    %v7776 = vpop.f32.mrb[0].mxu0
    %v7777 = vadd.f32 0.0, %v7776
    %v7778 = vpop.f32.mrb[0].mxu0
    %7779 = vmatprep.mubr.f32.mxu0 %v7638
    %7780 = vmatmul.mubr.f32.gmra.mrb[0].mxu0 %v7530
    %v7781 = vpop.f32.mrb[0].mxu0
    %v7782 = vadd.f32 0.0, %v7781
    %v7783 = vpop.f32.mrb[0].mxu0
    %7784 = vmatprep.mubr.f32.mxu0 %v7641
    %7785 = vmatmul.mubr.f32.gmra.mrb[0].mxu0 %v7533
    %v7786 = vpop.f32.mrb[0].mxu0
    %v7787 = vadd.f32 0.0, %v7786
    %v7788 = vpop.f32.mrb[0].mxu0
    %7789 = vmatprep.mubr.f32.mxu0 %v7644
    %7790 = vmatmul.mubr.f32.gmra.mrb[0].mxu0 %v7536
    %v7791 = vpop.f32.mrb[0].mxu0
    %v7792 = vadd.f32 0.0, %v7791
    %v7793 = vpop.f32.mrb[0].mxu0
    %7794 = vmatprep.mubr.f32.mxu0 %v7647
    %7795 = vmatmul.mubr.f32.gmra.mrb[0].mxu0 %v7539
    %v7796 = vpop.f32.mrb[0].mxu0
    %v7797 = vadd.f32 0.0, %v7796
    %v7798 = vpop.f32.mrb[0].mxu0
    %7799 = vmatprep.mubr.f32.mxu0 %v7650
    %7800 = vmatmul.mubr.f32.gmra.mrb[0].mxu0 %v7542
    %v7801 = vpop.f32.mrb[0].mxu0
    %v7802 = vadd.f32 0.0, %v7801
    %v7803 = vpop.f32.mrb[0].mxu0
    %7804 = vmatprep.mubr.f32.mxu0 %v7653
    %7805 = vmatmul.mubr.f32.gmra.mrb[0].mxu0 %v7545
    %v7806 = vpop.f32.mrb[0].mxu0
    %v7807 = vadd.f32 0.0, %v7806
    %v7808 = vpop.f32.mrb[0].mxu0
    %7809 = vdwg.mxu0
    %v7811 = vsel %vm1627, %v7722, 0
    %v7814 = vsel %vm1627, %v7727, 0
    %v7817 = vsel %vm1627, %v7732, 0
    %v7820 = vsel %vm1627, %v7737, 0
    %v7823 = vsel %vm1627, %v7742, 0
    %v7826 = vsel %vm1627, %v7747, 0
    %v7829 = vsel %vm1627, %v7752, 0
    %v7832 = vsel %vm1627, %v7757, 0
    %v7835 = vsel %vm1627, %v7762, 0
    %v7838 = vsel %vm1627, %v7767, 0
    %v7841 = vsel %vm1627, %v7772, 0
    %v7844 = vsel %vm1627, %v7777, 0
    %v7847 = vsel %vm1627, %v7782, 0
    %v7850 = vsel %vm1627, %v7787, 0
    %v7853 = vsel %vm1627, %v7792, 0
    %v7856 = vsel %vm1627, %v7797, 0
    %v7859 = vsel %vm1627, %v7802, 0
    %v7862 = vsel %vm1627, %v7807, 0
    %7864 = vmatprep.subr.mxu0 0.0
    %7865 = vmatpush1.msra.mxu0 %v459
    %7866 = vmatprep.subr.mxu0 0.0
    %7867 = vmatpush1.msra.mxu0 %v460
    %7868 = vmatprep.subr.mxu0 0.0
    %7869 = vmatpush1.msra.mxu0 0.0
    %7870 = vmatprep.subr.mxu0 0.0
    %7871 = vmatpush1.msra.mxu0 0.0
    %7872 = vmatprep.subr.mxu0 0.0
    %7873 = vmatpush1.msra.mxu0 0.0
    %7874 = vmatprep.subr.mxu0 0.0
    %7875 = vmatpush1.msra.mxu0 0.0
    %7876 = vmatprep.subr.mxu0 0.0
    %7877 = vmatpush1.msra.mxu0 0.0
    %7878 = vmatprep.subr.mxu0 0.0
    %7879 = vmatpush1.msra.mxu0 0.0
    %7880 = vmatprep.subr.mxu0 0.0
    %7881 = vmatpush1.msra.mxu0 0.0
    %7882 = vmatprep.subr.mxu0 0.0
    %7883 = vmatpush1.msra.mxu0 0.0
    %7884 = vmatprep.subr.mxu0 0.0
    %7885 = vmatpush1.msra.mxu0 0.0
    %7886 = vmatprep.subr.mxu0 0.0
    %7887 = vmatpush1.msra.mxu0 0.0
    %7888 = vmatprep.subr.mxu0 0.0
    %7889 = vmatpush1.msra.mxu0 0.0
    %7890 = vmatprep.subr.mxu0 0.0
    %7891 = vmatpush1.msra.mxu0 0.0
    %7892 = vmatprep.subr.mxu0 0.0
    %7893 = vmatpush1.msra.mxu0 0.0
    %7894 = vmatprep.subr.mxu0 0.0
    %7895 = vmatpush1.msra.mxu0 0.0
    %7896 = vmatprep.subr.mxu0 0.0
    %7897 = vmatpush1.msra.mxu0 0.0
    %7898 = vmatprep.subr.mxu0 0.0
    %7899 = vmatpush1.msra.mxu0 0.0
    %7900 = vmatprep.subr.mxu0 0.0
    %7901 = vmatpush1.msra.mxu0 0.0
    %7902 = vmatprep.subr.mxu0 0.0
    %7903 = vmatpush1.msra.mxu0 0.0
    %7904 = vmatprep.subr.mxu0 0.0
    %7905 = vmatpush1.msra.mxu0 0.0
    %7906 = vmatprep.subr.mxu0 0.0
    %7907 = vmatpush1.msra.mxu0 0.0
    %7908 = vmatprep.subr.mxu0 0.0
    %7909 = vmatpush1.msra.mxu0 0.0
    %7910 = vmatprep.subr.mxu0 0.0
    %7911 = vmatpush1.msra.mxu0 0.0
    %7912 = vmatprep.subr.mxu0 0.0
    %7913 = vmatpush1.msra.mxu0 0.0
    %7914 = vmatprep.subr.mxu0 0.0
    %7915 = vmatpush1.msra.mxu0 0.0
    %7916 = vmatprep.subr.mxu0 0.0
    %7917 = vmatpush1.msra.mxu0 0.0
    %7918 = vmatprep.subr.mxu0 0.0
    %7919 = vmatpush1.msra.mxu0 0.0
    %7920 = vmatprep.subr.mxu0 0.0
    %7921 = vmatpush1.msra.mxu0 0.0
    %7922 = vmatprep.subr.mxu0 0.0
    %7923 = vmatpush1.msra.mxu0 0.0
    %7924 = vmatprep.subr.mxu0 0.0
    %7925 = vmatpush1.msra.mxu0 0.0
    %7926 = vmatprep.subr.mxu0 0.0
    %7927 = vmatpush1.msra.mxu0 0.0
    %7928 = vmatprep.mubr.f32.mxu0 0.0
    %7929 = vmatmul.mubr.f32.gmra.mrb[0].mxu0 %v7811
    %v7930 = vpop.f32.mrb[0].mxu0
    %v7931 = vadd.f32 0.0, %v7930
    %v7932 = vpop.f32.mrb[0].mxu0
    %7933 = vmatprep.mubr.f32.mxu0 0.0
    %7934 = vmatmul.mubr.f32.gmra.mrb[0].mxu0 %v7814
    %v7935 = vpop.f32.mrb[0].mxu0
    %v7936 = vadd.f32 0.0, %v7935
    %v7937 = vpop.f32.mrb[0].mxu0
    %7938 = vmatprep.mubr.f32.mxu0 0.0
    %7939 = vmatmul.mubr.f32.gmra.mrb[0].mxu0 %v7817
    %v7940 = vpop.f32.mrb[0].mxu0
    %v7941 = vadd.f32 0.0, %v7940
    %v7942 = vpop.f32.mrb[0].mxu0
    %7943 = vmatprep.mubr.f32.mxu0 0.0
    %7944 = vmatmul.mubr.f32.gmra.mrb[0].mxu0 %v7820
    %v7945 = vpop.f32.mrb[0].mxu0
    %v7946 = vadd.f32 0.0, %v7945
    %v7947 = vpop.f32.mrb[0].mxu0
    %7948 = vmatprep.mubr.f32.mxu0 0.0
    %7949 = vmatmul.mubr.f32.gmra.mrb[0].mxu0 %v7823
    %v7950 = vpop.f32.mrb[0].mxu0
    %v7951 = vadd.f32 0.0, %v7950
    %v7952 = vpop.f32.mrb[0].mxu0
    %7953 = vmatprep.mubr.f32.mxu0 0.0
    %7954 = vmatmul.mubr.f32.gmra.mrb[0].mxu0 %v7826
    %v7955 = vpop.f32.mrb[0].mxu0
    %v7956 = vadd.f32 0.0, %v7955
    %v7957 = vpop.f32.mrb[0].mxu0
    %7958 = vmatprep.mubr.f32.mxu0 0.0
    %7959 = vmatmul.mubr.f32.gmra.mrb[0].mxu0 %v7829
    %v7960 = vpop.f32.mrb[0].mxu0
    %v7961 = vadd.f32 0.0, %v7960
    %v7962 = vpop.f32.mrb[0].mxu0
    %7963 = vmatprep.mubr.f32.mxu0 0.0
    %7964 = vmatmul.mubr.f32.gmra.mrb[0].mxu0 %v7832
    %v7965 = vpop.f32.mrb[0].mxu0
    %v7966 = vadd.f32 0.0, %v7965
    %v7967 = vpop.f32.mrb[0].mxu0
    %7968 = vmatprep.mubr.f32.mxu0 0.0
    %7969 = vmatmul.mubr.f32.gmra.mrb[0].mxu0 %v7835
    %v7970 = vpop.f32.mrb[0].mxu0
    %v7971 = vadd.f32 0.0, %v7970
    %v7972 = vpop.f32.mrb[0].mxu0
    %7973 = vmatprep.mubr.f32.mxu0 0.0
    %7974 = vmatmul.mubr.f32.gmra.mrb[0].mxu0 %v7838
    %v7975 = vpop.f32.mrb[0].mxu0
    %v7976 = vadd.f32 0.0, %v7975
    %v7977 = vpop.f32.mrb[0].mxu0
    %7978 = vmatprep.mubr.f32.mxu0 0.0
    %7979 = vmatmul.mubr.f32.gmra.mrb[0].mxu0 %v7841
    %v7980 = vpop.f32.mrb[0].mxu0
    %v7981 = vadd.f32 0.0, %v7980
    %v7982 = vpop.f32.mrb[0].mxu0
    %7983 = vmatprep.mubr.f32.mxu0 0.0
    %7984 = vmatmul.mubr.f32.gmra.mrb[0].mxu0 %v7844
    %v7985 = vpop.f32.mrb[0].mxu0
    %v7986 = vadd.f32 0.0, %v7985
    %v7987 = vpop.f32.mrb[0].mxu0
    %7988 = vmatprep.mubr.f32.mxu0 0.0
    %7989 = vmatmul.mubr.f32.gmra.mrb[0].mxu0 %v7847
    %v7990 = vpop.f32.mrb[0].mxu0
    %v7991 = vadd.f32 0.0, %v7990
    %v7992 = vpop.f32.mrb[0].mxu0
    %7993 = vmatprep.mubr.f32.mxu0 0.0
    %7994 = vmatmul.mubr.f32.gmra.mrb[0].mxu0 %v7850
    %v7995 = vpop.f32.mrb[0].mxu0
    %v7996 = vadd.f32 0.0, %v7995
    %v7997 = vpop.f32.mrb[0].mxu0
    %7998 = vmatprep.mubr.f32.mxu0 0.0
    %7999 = vmatmul.mubr.f32.gmra.mrb[0].mxu0 %v7853
    %v8000 = vpop.f32.mrb[0].mxu0
    %v8001 = vadd.f32 0.0, %v8000
    %v8002 = vpop.f32.mrb[0].mxu0
    %8003 = vmatprep.mubr.f32.mxu0 0.0
    %8004 = vmatmul.mubr.f32.gmra.mrb[0].mxu0 %v7856
    %v8005 = vpop.f32.mrb[0].mxu0
    %v8006 = vadd.f32 0.0, %v8005
    %v8007 = vpop.f32.mrb[0].mxu0
    %8008 = vmatprep.mubr.f32.mxu0 0.0
    %8009 = vmatmul.mubr.f32.gmra.mrb[0].mxu0 %v7859
    %v8010 = vpop.f32.mrb[0].mxu0
    %v8011 = vadd.f32 0.0, %v8010
    %v8012 = vpop.f32.mrb[0].mxu0
    %8013 = vmatprep.mubr.f32.mxu0 0.0
    %8014 = vmatmul.mubr.f32.gmra.mrb[0].mxu0 %v7862
    %v8015 = vpop.f32.mrb[0].mxu0
    %v8016 = vadd.f32 0.0, %v8015
    %v8017 = vpop.f32.mrb[0].mxu0
    %8018 = vdwg.mxu0
    %v8019 = vadd.f32 %v6834, %v7931
    %v8020 = vadd.f32 %v6835, %v7936
    %v8021 = vadd.f32 %v6836, %v7941
    %v8022 = vadd.f32 %v6837, %v7946
    %v8023 = vadd.f32 %v6838, %v7951
    %v8024 = vadd.f32 %v6839, %v7956
    %v8025 = vadd.f32 %v6840, %v7961
    %v8026 = vadd.f32 %v6841, %v7966
    %v8027 = vadd.f32 %v6842, %v7971
    %v8028 = vadd.f32 %v6843, %v7976
    %v8029 = vadd.f32 %v6844, %v7981
    %v8030 = vadd.f32 %v6845, %v7986
    %v8031 = vadd.f32 %v6846, %v7991
    %v8032 = vadd.f32 %v6847, %v7996
    %v8033 = vadd.f32 %v6848, %v8001
    %v8034 = vadd.f32 %v6849, %v8006
    %v8035 = vadd.f32 %v6850, %v8011
    %v8036 = vadd.f32 %v6851, %v8016
    %v8037 = vadd.f32 %v5134, %v8019
    %v8038 = vadd.f32 %v5135, %v8020
    %v8039 = vadd.f32 %v5136, %v8021
    %v8040 = vadd.f32 %v5137, %v8022
    %v8041 = vadd.f32 %v5138, %v8023
    %v8042 = vadd.f32 %v5139, %v8024
    %v8043 = vadd.f32 %v5140, %v8025
    %v8044 = vadd.f32 %v5141, %v8026
    %v8045 = vadd.f32 %v5142, %v8027
    %v8046 = vadd.f32 %v5143, %v8028
    %v8047 = vadd.f32 %v5144, %v8029
    %v8048 = vadd.f32 %v5145, %v8030
    %v8049 = vadd.f32 %v5146, %v8031
    %v8050 = vadd.f32 %v5147, %v8032
    %v8051 = vadd.f32 %v5148, %v8033
    %v8052 = vadd.f32 %v5149, %v8034
    %v8053 = vadd.f32 %v5150, %v8035
    %v8054 = vadd.f32 %v5151, %v8036
    %v8055 = vsel %vm1074, %v8037, 0.0
    %8056 = vadd.xlane.f32.xlu0 %v8055
    %v8057 = vpop.xlane.xlu0 %8056
    %v8058 = vsel %vm1074, %v8038, 0.0
    %8059 = vadd.xlane.f32.xlu0 %v8058
    %v8060 = vpop.xlane.xlu0 %8059
    %v8061 = vsel %vm1074, %v8039, 0.0
    %8062 = vadd.xlane.f32.xlu0 %v8061
    %v8063 = vpop.xlane.xlu0 %8062
    %v8064 = vsel %vm1074, %v8040, 0.0
    %8065 = vadd.xlane.f32.xlu0 %v8064
    %v8066 = vpop.xlane.xlu0 %8065
    %v8067 = vsel %vm1074, %v8041, 0.0
    %8068 = vadd.xlane.f32.xlu0 %v8067
    %v8069 = vpop.xlane.xlu0 %8068
    %v8070 = vsel %vm1074, %v8042, 0.0
    %8071 = vadd.xlane.f32.xlu0 %v8070
    %v8072 = vpop.xlane.xlu0 %8071
    %v8073 = vsel %vm1074, %v8043, 0.0
    %8074 = vadd.xlane.f32.xlu0 %v8073
    %v8075 = vpop.xlane.xlu0 %8074
    %v8076 = vsel %vm1074, %v8044, 0.0
    %8077 = vadd.xlane.f32.xlu0 %v8076
    %v8078 = vpop.xlane.xlu0 %8077
    %v8079 = vsel %vm1074, %v8045, 0.0
    %8080 = vadd.xlane.f32.xlu0 %v8079
    %v8081 = vpop.xlane.xlu0 %8080
    %v8082 = vsel %vm1074, %v8046, 0.0
    %8083 = vadd.xlane.f32.xlu0 %v8082
    %v8084 = vpop.xlane.xlu0 %8083
    %v8085 = vsel %vm1074, %v8047, 0.0
    %8086 = vadd.xlane.f32.xlu0 %v8085
    %v8087 = vpop.xlane.xlu0 %8086
    %v8088 = vsel %vm1074, %v8048, 0.0
    %8089 = vadd.xlane.f32.xlu0 %v8088
    %v8090 = vpop.xlane.xlu0 %8089
    %v8091 = vsel %vm1074, %v8049, 0.0
    %8092 = vadd.xlane.f32.xlu0 %v8091
    %v8093 = vpop.xlane.xlu0 %8092
    %v8094 = vsel %vm1074, %v8050, 0.0
    %8095 = vadd.xlane.f32.xlu0 %v8094
    %v8096 = vpop.xlane.xlu0 %8095
    %v8097 = vsel %vm1074, %v8051, 0.0
    %8098 = vadd.xlane.f32.xlu0 %v8097
    %v8099 = vpop.xlane.xlu0 %8098
    %v8100 = vsel %vm1074, %v8052, 0.0
    %8101 = vadd.xlane.f32.xlu0 %v8100
    %v8102 = vpop.xlane.xlu0 %8101
    %v8103 = vsel %vm1074, %v8053, 0.0
    %8104 = vadd.xlane.f32.xlu0 %v8103
    %v8105 = vpop.xlane.xlu0 %8104
    %v8106 = vsel %vm1074, %v8054, 0.0
    %8107 = vadd.xlane.f32.xlu0 %v8106
    %v8108 = vpop.xlane.xlu0 %8107
    %v8109 = vmul.f32 %v8057, %v1129
    %v8110 = vmul.f32 %v8060, %v1129
    %v8111 = vmul.f32 %v8063, %v1129
    %v8112 = vmul.f32 %v8066, %v1129
    %v8113 = vmul.f32 %v8069, %v1129
    %v8114 = vmul.f32 %v8072, %v1129
    %v8115 = vmul.f32 %v8075, %v1129
    %v8116 = vmul.f32 %v8078, %v1129
    %v8117 = vmul.f32 %v8081, %v1129
    %v8118 = vmul.f32 %v8084, %v1129
    %v8119 = vmul.f32 %v8087, %v1129
    %v8120 = vmul.f32 %v8090, %v1129
    %v8121 = vmul.f32 %v8093, %v1129
    %v8122 = vmul.f32 %v8096, %v1129
    %v8123 = vmul.f32 %v8099, %v1129
    %v8124 = vmul.f32 %v8102, %v1129
    %v8125 = vmul.f32 %v8105, %v1129
    %v8126 = vmul.f32 %v8108, %v1129
    %v8127 = vsub.f32 %v8037, %v8109
    %v8128 = vsub.f32 %v8038, %v8110
    %v8129 = vsub.f32 %v8039, %v8111
    %v8130 = vsub.f32 %v8040, %v8112
    %v8131 = vsub.f32 %v8041, %v8113
    %v8132 = vsub.f32 %v8042, %v8114
    %v8133 = vsub.f32 %v8043, %v8115
    %v8134 = vsub.f32 %v8044, %v8116
    %v8135 = vsub.f32 %v8045, %v8117
    %v8136 = vsub.f32 %v8046, %v8118
    %v8137 = vsub.f32 %v8047, %v8119
    %v8138 = vsub.f32 %v8048, %v8120
    %v8139 = vsub.f32 %v8049, %v8121
    %v8140 = vsub.f32 %v8050, %v8122
    %v8141 = vsub.f32 %v8051, %v8123
    %v8142 = vsub.f32 %v8052, %v8124
    %v8143 = vsub.f32 %v8053, %v8125
    %v8144 = vsub.f32 %v8054, %v8126
    %v8145 = vmul.f32 %v8127, %v8127
    %v8146 = vmul.f32 %v8128, %v8128
    %v8147 = vmul.f32 %v8129, %v8129
    %v8148 = vmul.f32 %v8130, %v8130
    %v8149 = vmul.f32 %v8131, %v8131
    %v8150 = vmul.f32 %v8132, %v8132
    %v8151 = vmul.f32 %v8133, %v8133
    %v8152 = vmul.f32 %v8134, %v8134
    %v8153 = vmul.f32 %v8135, %v8135
    %v8154 = vmul.f32 %v8136, %v8136
    %v8155 = vmul.f32 %v8137, %v8137
    %v8156 = vmul.f32 %v8138, %v8138
    %v8157 = vmul.f32 %v8139, %v8139
    %v8158 = vmul.f32 %v8140, %v8140
    %v8159 = vmul.f32 %v8141, %v8141
    %v8160 = vmul.f32 %v8142, %v8142
    %v8161 = vmul.f32 %v8143, %v8143
    %v8162 = vmul.f32 %v8144, %v8144
    %v8163 = vsel %vm1074, %v8145, 0.0
    %8164 = vadd.xlane.f32.xlu0 %v8163
    %v8165 = vpop.xlane.xlu0 %8164
    %v8166 = vsel %vm1074, %v8146, 0.0
    %8167 = vadd.xlane.f32.xlu0 %v8166
    %v8168 = vpop.xlane.xlu0 %8167
    %v8169 = vsel %vm1074, %v8147, 0.0
    %8170 = vadd.xlane.f32.xlu0 %v8169
    %v8171 = vpop.xlane.xlu0 %8170
    %v8172 = vsel %vm1074, %v8148, 0.0
    %8173 = vadd.xlane.f32.xlu0 %v8172
    %v8174 = vpop.xlane.xlu0 %8173
    %v8175 = vsel %vm1074, %v8149, 0.0
    %8176 = vadd.xlane.f32.xlu0 %v8175
    %v8177 = vpop.xlane.xlu0 %8176
    %v8178 = vsel %vm1074, %v8150, 0.0
    %8179 = vadd.xlane.f32.xlu0 %v8178
    %v8180 = vpop.xlane.xlu0 %8179
    %v8181 = vsel %vm1074, %v8151, 0.0
    %8182 = vadd.xlane.f32.xlu0 %v8181
    %v8183 = vpop.xlane.xlu0 %8182
    %v8184 = vsel %vm1074, %v8152, 0.0
    %8185 = vadd.xlane.f32.xlu0 %v8184
    %v8186 = vpop.xlane.xlu0 %8185
    %v8187 = vsel %vm1074, %v8153, 0.0
    %8188 = vadd.xlane.f32.xlu0 %v8187
    %v8189 = vpop.xlane.xlu0 %8188
    %v8190 = vsel %vm1074, %v8154, 0.0
    %8191 = vadd.xlane.f32.xlu0 %v8190
    %v8192 = vpop.xlane.xlu0 %8191
    %v8193 = vsel %vm1074, %v8155, 0.0
    %8194 = vadd.xlane.f32.xlu0 %v8193
    %v8195 = vpop.xlane.xlu0 %8194
    %v8196 = vsel %vm1074, %v8156, 0.0
    %8197 = vadd.xlane.f32.xlu0 %v8196
    %v8198 = vpop.xlane.xlu0 %8197
    %v8199 = vsel %vm1074, %v8157, 0.0
    %8200 = vadd.xlane.f32.xlu0 %v8199
    %v8201 = vpop.xlane.xlu0 %8200
    %v8202 = vsel %vm1074, %v8158, 0.0
    %8203 = vadd.xlane.f32.xlu0 %v8202
    %v8204 = vpop.xlane.xlu0 %8203
    %v8205 = vsel %vm1074, %v8159, 0.0
    %8206 = vadd.xlane.f32.xlu0 %v8205
    %v8207 = vpop.xlane.xlu0 %8206
    %v8208 = vsel %vm1074, %v8160, 0.0
    %8209 = vadd.xlane.f32.xlu0 %v8208
    %v8210 = vpop.xlane.xlu0 %8209
    %v8211 = vsel %vm1074, %v8161, 0.0
    %8212 = vadd.xlane.f32.xlu0 %v8211
    %v8213 = vpop.xlane.xlu0 %8212
    %v8214 = vsel %vm1074, %v8162, 0.0
    %8215 = vadd.xlane.f32.xlu0 %v8214
    %v8216 = vpop.xlane.xlu0 %8215
    %v8217 = vmul.f32 %v8165, %v1129
    %v8218 = vmul.f32 %v8168, %v1129
    %v8219 = vmul.f32 %v8171, %v1129
    %v8220 = vmul.f32 %v8174, %v1129
    %v8221 = vmul.f32 %v8177, %v1129
    %v8222 = vmul.f32 %v8180, %v1129
    %v8223 = vmul.f32 %v8183, %v1129
    %v8224 = vmul.f32 %v8186, %v1129
    %v8225 = vmul.f32 %v8189, %v1129
    %v8226 = vmul.f32 %v8192, %v1129
    %v8227 = vmul.f32 %v8195, %v1129
    %v8228 = vmul.f32 %v8198, %v1129
    %v8229 = vmul.f32 %v8201, %v1129
    %v8230 = vmul.f32 %v8204, %v1129
    %v8231 = vmul.f32 %v8207, %v1129
    %v8232 = vmul.f32 %v8210, %v1129
    %v8233 = vmul.f32 %v8213, %v1129
    %v8234 = vmul.f32 %v8216, %v1129
    %v8235 = vadd.f32 %v8217, 1e-05
    %v8236 = vadd.f32 %v8218, 1e-05
    %v8237 = vadd.f32 %v8219, 1e-05
    %v8238 = vadd.f32 %v8220, 1e-05
    %v8239 = vadd.f32 %v8221, 1e-05
    %v8240 = vadd.f32 %v8222, 1e-05
    %v8241 = vadd.f32 %v8223, 1e-05
    %v8242 = vadd.f32 %v8224, 1e-05
    %v8243 = vadd.f32 %v8225, 1e-05
    %v8244 = vadd.f32 %v8226, 1e-05
    %v8245 = vadd.f32 %v8227, 1e-05
    %v8246 = vadd.f32 %v8228, 1e-05
    %v8247 = vadd.f32 %v8229, 1e-05
    %v8248 = vadd.f32 %v8230, 1e-05
    %v8249 = vadd.f32 %v8231, 1e-05
    %v8250 = vadd.f32 %v8232, 1e-05
    %v8251 = vadd.f32 %v8233, 1e-05
    %v8252 = vadd.f32 %v8234, 1e-05
    %v8253 = vrsqrt.pop %v8235
    %v8254 = vrsqrt.pop %v8236
    %v8255 = vrsqrt.pop %v8237
    %v8256 = vrsqrt.pop %v8238
    %v8257 = vrsqrt.pop %v8239
    %v8258 = vrsqrt.pop %v8240
    %v8259 = vrsqrt.pop %v8241
    %v8260 = vrsqrt.pop %v8242
    %v8261 = vrsqrt.pop %v8243
    %v8262 = vrsqrt.pop %v8244
    %v8263 = vrsqrt.pop %v8245
    %v8264 = vrsqrt.pop %v8246
    %v8265 = vrsqrt.pop %v8247
    %v8266 = vrsqrt.pop %v8248
    %v8267 = vrsqrt.pop %v8249
    %v8268 = vrsqrt.pop %v8250
    %v8269 = vrsqrt.pop %v8251
    %v8270 = vrsqrt.pop %v8252
    %v8271 = vmul.f32 %v8127, %v8253
    %v8272 = vmul.f32 %v8128, %v8254
    %v8273 = vmul.f32 %v8129, %v8255
    %v8274 = vmul.f32 %v8130, %v8256
    %v8275 = vmul.f32 %v8131, %v8257
    %v8276 = vmul.f32 %v8132, %v8258
    %v8277 = vmul.f32 %v8133, %v8259
    %v8278 = vmul.f32 %v8134, %v8260
    %v8279 = vmul.f32 %v8135, %v8261
    %v8280 = vmul.f32 %v8136, %v8262
    %v8281 = vmul.f32 %v8137, %v8263
    %v8282 = vmul.f32 %v8138, %v8264
    %v8283 = vmul.f32 %v8139, %v8265
    %v8284 = vmul.f32 %v8140, %v8266
    %v8285 = vmul.f32 %v8141, %v8267
    %v8286 = vmul.f32 %v8142, %v8268
    %v8287 = vmul.f32 %v8143, %v8269
    %v8288 = vmul.f32 %v8144, %v8270
    %v8290 = vlaneseq
    %v8291 = vshrl.u32 %v8290, 7
    %v8292 = vsub.s32 0, %v8291
    %v8293 = vrot.slane %v462, %v8292
    %v8295 = vmul.f32 %v8271, %v8293
    %v8296 = vmul.f32 %v8272, %v8293
    %v8297 = vmul.f32 %v8273, %v8293
    %v8298 = vmul.f32 %v8274, %v8293
    %v8299 = vmul.f32 %v8275, %v8293
    %v8300 = vmul.f32 %v8276, %v8293
    %v8301 = vmul.f32 %v8277, %v8293
    %v8302 = vmul.f32 %v8278, %v8293
    %v8303 = vmul.f32 %v8279, %v8293
    %v8304 = vmul.f32 %v8280, %v8293
    %v8305 = vmul.f32 %v8281, %v8293
    %v8306 = vmul.f32 %v8282, %v8293
    %v8307 = vmul.f32 %v8283, %v8293
    %v8308 = vmul.f32 %v8284, %v8293
    %v8309 = vmul.f32 %v8285, %v8293
    %v8310 = vmul.f32 %v8286, %v8293
    %v8311 = vmul.f32 %v8287, %v8293
    %v8312 = vmul.f32 %v8288, %v8293
    %v8314 = vlaneseq
    %v8315 = vshrl.u32 %v8314, 7
    %v8316 = vsub.s32 0, %v8315
    %v8317 = vrot.slane %v463, %v8316
    %v8319 = vadd.f32 %v8295, %v8317
    %v8320 = vadd.f32 %v8296, %v8317
    %v8321 = vadd.f32 %v8297, %v8317
    %v8322 = vadd.f32 %v8298, %v8317
    %v8323 = vadd.f32 %v8299, %v8317
    %v8324 = vadd.f32 %v8300, %v8317
    %v8325 = vadd.f32 %v8301, %v8317
    %v8326 = vadd.f32 %v8302, %v8317
    %v8327 = vadd.f32 %v8303, %v8317
    %v8328 = vadd.f32 %v8304, %v8317
    %v8329 = vadd.f32 %v8305, %v8317
    %v8330 = vadd.f32 %v8306, %v8317
    %v8331 = vadd.f32 %v8307, %v8317
    %v8332 = vadd.f32 %v8308, %v8317
    %v8333 = vadd.f32 %v8309, %v8317
    %v8334 = vadd.f32 %v8310, %v8317
    %v8335 = vadd.f32 %v8311, %v8317
    %v8336 = vadd.f32 %v8312, %v8317
    %v8338 = vlaneseq
    %v8339 = vshrl.u32 %v8338, 7
    %v8340 = vsub.s32 0, %v8339
    %v8341 = vrot.slane %v468, %v8340
    %v8344 = vsel %vm1074, %v8319, 0
    %v8347 = vsel %vm1074, %v8320, 0
    %v8350 = vsel %vm1074, %v8321, 0
    %v8353 = vsel %vm1074, %v8322, 0
    %v8356 = vsel %vm1074, %v8323, 0
    %v8359 = vsel %vm1074, %v8324, 0
    %v8362 = vsel %vm1074, %v8325, 0
    %v8365 = vsel %vm1074, %v8326, 0
    %v8368 = vsel %vm1074, %v8327, 0
    %v8371 = vsel %vm1074, %v8328, 0
    %v8374 = vsel %vm1074, %v8329, 0
    %v8377 = vsel %vm1074, %v8330, 0
    %v8380 = vsel %vm1074, %v8331, 0
    %v8383 = vsel %vm1074, %v8332, 0
    %v8386 = vsel %vm1074, %v8333, 0
    %v8389 = vsel %vm1074, %v8334, 0
    %v8392 = vsel %vm1074, %v8335, 0
    %v8395 = vsel %vm1074, %v8336, 0
    %8397 = vmatprep.subr.mxu0 0.0
    %8398 = vmatpush1.msra.mxu0 %v464
    %8399 = vmatprep.subr.mxu0 0.0
    %8400 = vmatpush1.msra.mxu0 %v465
    %8401 = vmatprep.subr.mxu0 0.0
    %8402 = vmatpush1.msra.mxu0 %v466
    %8403 = vmatprep.subr.mxu0 0.0
    %8404 = vmatpush1.msra.mxu0 %v467
    %8405 = vmatprep.subr.mxu0 0.0
    %8406 = vmatpush1.msra.mxu0 0.0
    %8407 = vmatprep.subr.mxu0 0.0
    %8408 = vmatpush1.msra.mxu0 0.0
    %8409 = vmatprep.subr.mxu0 0.0
    %8410 = vmatpush1.msra.mxu0 0.0
    %8411 = vmatprep.subr.mxu0 0.0
    %8412 = vmatpush1.msra.mxu0 0.0
    %8413 = vmatprep.subr.mxu0 0.0
    %8414 = vmatpush1.msra.mxu0 0.0
    %8415 = vmatprep.subr.mxu0 0.0
    %8416 = vmatpush1.msra.mxu0 0.0
    %8417 = vmatprep.subr.mxu0 0.0
    %8418 = vmatpush1.msra.mxu0 0.0
    %8419 = vmatprep.subr.mxu0 0.0
    %8420 = vmatpush1.msra.mxu0 0.0
    %8421 = vmatprep.subr.mxu0 0.0
    %8422 = vmatpush1.msra.mxu0 0.0
    %8423 = vmatprep.subr.mxu0 0.0
    %8424 = vmatpush1.msra.mxu0 0.0
    %8425 = vmatprep.subr.mxu0 0.0
    %8426 = vmatpush1.msra.mxu0 0.0
    %8427 = vmatprep.subr.mxu0 0.0
    %8428 = vmatpush1.msra.mxu0 0.0
    %8429 = vmatprep.subr.mxu0 0.0
    %8430 = vmatpush1.msra.mxu0 0.0
    %8431 = vmatprep.subr.mxu0 0.0
    %8432 = vmatpush1.msra.mxu0 0.0
    %8433 = vmatprep.subr.mxu0 0.0
    %8434 = vmatpush1.msra.mxu0 0.0
    %8435 = vmatprep.subr.mxu0 0.0
    %8436 = vmatpush1.msra.mxu0 0.0
    %8437 = vmatprep.subr.mxu0 0.0
    %8438 = vmatpush1.msra.mxu0 0.0
    %8439 = vmatprep.subr.mxu0 0.0
    %8440 = vmatpush1.msra.mxu0 0.0
    %8441 = vmatprep.subr.mxu0 0.0
    %8442 = vmatpush1.msra.mxu0 0.0
    %8443 = vmatprep.subr.mxu0 0.0
    %8444 = vmatpush1.msra.mxu0 0.0
    %8445 = vmatprep.subr.mxu0 0.0
    %8446 = vmatpush1.msra.mxu0 0.0
    %8447 = vmatprep.subr.mxu0 0.0
    %8448 = vmatpush1.msra.mxu0 0.0
    %8449 = vmatprep.subr.mxu0 0.0
    %8450 = vmatpush1.msra.mxu0 0.0
    %8451 = vmatprep.subr.mxu0 0.0
    %8452 = vmatpush1.msra.mxu0 0.0
    %8453 = vmatprep.subr.mxu0 0.0
    %8454 = vmatpush1.msra.mxu0 0.0
    %8455 = vmatprep.subr.mxu0 0.0
    %8456 = vmatpush1.msra.mxu0 0.0
    %8457 = vmatprep.subr.mxu0 0.0
    %8458 = vmatpush1.msra.mxu0 0.0
    %8459 = vmatprep.subr.mxu0 0.0
    %8460 = vmatpush1.msra.mxu0 0.0
    %8461 = vmatprep.mubr.f32.mxu0 0.0
    %8462 = vmatmul.mubr.f32.gmra.mrb[0].mxu0 %v8344
    %v8463 = vpop.f32.mrb[0].mxu0
    %v8464 = vadd.f32 %v8341, %v8463
    %v8465 = vpop.f32.mrb[0].mxu0
    %8466 = vmatprep.mubr.f32.mxu0 0.0
    %8467 = vmatmul.mubr.f32.gmra.mrb[0].mxu0 %v8347
    %v8468 = vpop.f32.mrb[0].mxu0
    %v8469 = vadd.f32 %v8341, %v8468
    %v8470 = vpop.f32.mrb[0].mxu0
    %8471 = vmatprep.mubr.f32.mxu0 0.0
    %8472 = vmatmul.mubr.f32.gmra.mrb[0].mxu0 %v8350
    %v8473 = vpop.f32.mrb[0].mxu0
    %v8474 = vadd.f32 %v8341, %v8473
    %v8475 = vpop.f32.mrb[0].mxu0
    %8476 = vmatprep.mubr.f32.mxu0 0.0
    %8477 = vmatmul.mubr.f32.gmra.mrb[0].mxu0 %v8353
    %v8478 = vpop.f32.mrb[0].mxu0
    %v8479 = vadd.f32 %v8341, %v8478
    %v8480 = vpop.f32.mrb[0].mxu0
    %8481 = vmatprep.mubr.f32.mxu0 0.0
    %8482 = vmatmul.mubr.f32.gmra.mrb[0].mxu0 %v8356
    %v8483 = vpop.f32.mrb[0].mxu0
    %v8484 = vadd.f32 %v8341, %v8483
    %v8485 = vpop.f32.mrb[0].mxu0
    %8486 = vmatprep.mubr.f32.mxu0 0.0
    %8487 = vmatmul.mubr.f32.gmra.mrb[0].mxu0 %v8359
    %v8488 = vpop.f32.mrb[0].mxu0
    %v8489 = vadd.f32 %v8341, %v8488
    %v8490 = vpop.f32.mrb[0].mxu0
    %8491 = vmatprep.mubr.f32.mxu0 0.0
    %8492 = vmatmul.mubr.f32.gmra.mrb[0].mxu0 %v8362
    %v8493 = vpop.f32.mrb[0].mxu0
    %v8494 = vadd.f32 %v8341, %v8493
    %v8495 = vpop.f32.mrb[0].mxu0
    %8496 = vmatprep.mubr.f32.mxu0 0.0
    %8497 = vmatmul.mubr.f32.gmra.mrb[0].mxu0 %v8365
    %v8498 = vpop.f32.mrb[0].mxu0
    %v8499 = vadd.f32 %v8341, %v8498
    %v8500 = vpop.f32.mrb[0].mxu0
    %8501 = vmatprep.mubr.f32.mxu0 0.0
    %8502 = vmatmul.mubr.f32.gmra.mrb[0].mxu0 %v8368
    %v8503 = vpop.f32.mrb[0].mxu0
    %v8504 = vadd.f32 %v8341, %v8503
    %v8505 = vpop.f32.mrb[0].mxu0
    %8506 = vmatprep.mubr.f32.mxu0 0.0
    %8507 = vmatmul.mubr.f32.gmra.mrb[0].mxu0 %v8371
    %v8508 = vpop.f32.mrb[0].mxu0
    %v8509 = vadd.f32 %v8341, %v8508
    %v8510 = vpop.f32.mrb[0].mxu0
    %8511 = vmatprep.mubr.f32.mxu0 0.0
    %8512 = vmatmul.mubr.f32.gmra.mrb[0].mxu0 %v8374
    %v8513 = vpop.f32.mrb[0].mxu0
    %v8514 = vadd.f32 %v8341, %v8513
    %v8515 = vpop.f32.mrb[0].mxu0
    %8516 = vmatprep.mubr.f32.mxu0 0.0
    %8517 = vmatmul.mubr.f32.gmra.mrb[0].mxu0 %v8377
    %v8518 = vpop.f32.mrb[0].mxu0
    %v8519 = vadd.f32 %v8341, %v8518
    %v8520 = vpop.f32.mrb[0].mxu0
    %8521 = vmatprep.mubr.f32.mxu0 0.0
    %8522 = vmatmul.mubr.f32.gmra.mrb[0].mxu0 %v8380
    %v8523 = vpop.f32.mrb[0].mxu0
    %v8524 = vadd.f32 %v8341, %v8523
    %v8525 = vpop.f32.mrb[0].mxu0
    %8526 = vmatprep.mubr.f32.mxu0 0.0
    %8527 = vmatmul.mubr.f32.gmra.mrb[0].mxu0 %v8383
    %v8528 = vpop.f32.mrb[0].mxu0
    %v8529 = vadd.f32 %v8341, %v8528
    %v8530 = vpop.f32.mrb[0].mxu0
    %8531 = vmatprep.mubr.f32.mxu0 0.0
    %8532 = vmatmul.mubr.f32.gmra.mrb[0].mxu0 %v8386
    %v8533 = vpop.f32.mrb[0].mxu0
    %v8534 = vadd.f32 %v8341, %v8533
    %v8535 = vpop.f32.mrb[0].mxu0
    %8536 = vmatprep.mubr.f32.mxu0 0.0
    %8537 = vmatmul.mubr.f32.gmra.mrb[0].mxu0 %v8389
    %v8538 = vpop.f32.mrb[0].mxu0
    %v8539 = vadd.f32 %v8341, %v8538
    %v8540 = vpop.f32.mrb[0].mxu0
    %8541 = vmatprep.mubr.f32.mxu0 0.0
    %8542 = vmatmul.mubr.f32.gmra.mrb[0].mxu0 %v8392
    %v8543 = vpop.f32.mrb[0].mxu0
    %v8544 = vadd.f32 %v8341, %v8543
    %v8545 = vpop.f32.mrb[0].mxu0
    %8546 = vmatprep.mubr.f32.mxu0 0.0
    %8547 = vmatmul.mubr.f32.gmra.mrb[0].mxu0 %v8395
    %v8548 = vpop.f32.mrb[0].mxu0
    %v8549 = vadd.f32 %v8341, %v8548
    %v8550 = vpop.f32.mrb[0].mxu0
    %8551 = vdwg.mxu0
    %v8552 = vmul.f32 %v8464, 0.5
    %v8553 = vmul.f32 %v8469, 0.5
    %v8554 = vmul.f32 %v8474, 0.5
    %v8555 = vmul.f32 %v8479, 0.5
    %v8556 = vmul.f32 %v8484, 0.5
    %v8557 = vmul.f32 %v8489, 0.5
    %v8558 = vmul.f32 %v8494, 0.5
    %v8559 = vmul.f32 %v8499, 0.5
    %v8560 = vmul.f32 %v8504, 0.5
    %v8561 = vmul.f32 %v8509, 0.5
    %v8562 = vmul.f32 %v8514, 0.5
    %v8563 = vmul.f32 %v8519, 0.5
    %v8564 = vmul.f32 %v8524, 0.5
    %v8565 = vmul.f32 %v8529, 0.5
    %v8566 = vmul.f32 %v8534, 0.5
    %v8567 = vmul.f32 %v8539, 0.5
    %v8568 = vmul.f32 %v8544, 0.5
    %v8569 = vmul.f32 %v8549, 0.5
    %v8570 = vmul.f32 %v8464, 0.70710677
    %v8571 = vmul.f32 %v8469, 0.70710677
    %v8572 = vmul.f32 %v8474, 0.70710677
    %v8573 = vmul.f32 %v8479, 0.70710677
    %v8574 = vmul.f32 %v8484, 0.70710677
    %v8575 = vmul.f32 %v8489, 0.70710677
    %v8576 = vmul.f32 %v8494, 0.70710677
    %v8577 = vmul.f32 %v8499, 0.70710677
    %v8578 = vmul.f32 %v8504, 0.70710677
    %v8579 = vmul.f32 %v8509, 0.70710677
    %v8580 = vmul.f32 %v8514, 0.70710677
    %v8581 = vmul.f32 %v8519, 0.70710677
    %v8582 = vmul.f32 %v8524, 0.70710677
    %v8583 = vmul.f32 %v8529, 0.70710677
    %v8584 = vmul.f32 %v8534, 0.70710677
    %v8585 = vmul.f32 %v8539, 0.70710677
    %v8586 = vmul.f32 %v8544, 0.70710677
    %v8587 = vmul.f32 %v8549, 0.70710677
    %v8588 = verf.f32.pop %v8570
    %v8589 = verf.f32.pop %v8571
    %v8590 = verf.f32.pop %v8572
    %v8591 = verf.f32.pop %v8573
    %v8592 = verf.f32.pop %v8574
    %v8593 = verf.f32.pop %v8575
    %v8594 = verf.f32.pop %v8576
    %v8595 = verf.f32.pop %v8577
    %v8596 = verf.f32.pop %v8578
    %v8597 = verf.f32.pop %v8579
    %v8598 = verf.f32.pop %v8580
    %v8599 = verf.f32.pop %v8581
    %v8600 = verf.f32.pop %v8582
    %v8601 = verf.f32.pop %v8583
    %v8602 = verf.f32.pop %v8584
    %v8603 = verf.f32.pop %v8585
    %v8604 = verf.f32.pop %v8586
    %v8605 = verf.f32.pop %v8587
    %v8606 = vadd.f32 %v8588, 1.0
    %v8607 = vadd.f32 %v8589, 1.0
    %v8608 = vadd.f32 %v8590, 1.0
    %v8609 = vadd.f32 %v8591, 1.0
    %v8610 = vadd.f32 %v8592, 1.0
    %v8611 = vadd.f32 %v8593, 1.0
    %v8612 = vadd.f32 %v8594, 1.0
    %v8613 = vadd.f32 %v8595, 1.0
    %v8614 = vadd.f32 %v8596, 1.0
    %v8615 = vadd.f32 %v8597, 1.0
    %v8616 = vadd.f32 %v8598, 1.0
    %v8617 = vadd.f32 %v8599, 1.0
    %v8618 = vadd.f32 %v8600, 1.0
    %v8619 = vadd.f32 %v8601, 1.0
    %v8620 = vadd.f32 %v8602, 1.0
    %v8621 = vadd.f32 %v8603, 1.0
    %v8622 = vadd.f32 %v8604, 1.0
    %v8623 = vadd.f32 %v8605, 1.0
    %v8624 = vmul.f32 %v8552, %v8606
    %v8625 = vmul.f32 %v8553, %v8607
    %v8626 = vmul.f32 %v8554, %v8608
    %v8627 = vmul.f32 %v8555, %v8609
    %v8628 = vmul.f32 %v8556, %v8610
    %v8629 = vmul.f32 %v8557, %v8611
    %v8630 = vmul.f32 %v8558, %v8612
    %v8631 = vmul.f32 %v8559, %v8613
    %v8632 = vmul.f32 %v8560, %v8614
    %v8633 = vmul.f32 %v8561, %v8615
    %v8634 = vmul.f32 %v8562, %v8616
    %v8635 = vmul.f32 %v8563, %v8617
    %v8636 = vmul.f32 %v8564, %v8618
    %v8637 = vmul.f32 %v8565, %v8619
    %v8638 = vmul.f32 %v8566, %v8620
    %v8639 = vmul.f32 %v8567, %v8621
    %v8640 = vmul.f32 %v8568, %v8622
    %v8641 = vmul.f32 %v8569, %v8623
    %v8643 = vsel %vm4567, %v8624, 0
    %v8646 = vsel %vm4567, %v8625, 0
    %v8649 = vsel %vm4567, %v8626, 0
    %v8652 = vsel %vm4567, %v8627, 0
    %v8655 = vsel %vm4567, %v8628, 0
    %v8658 = vsel %vm4567, %v8629, 0
    %v8661 = vsel %vm4567, %v8630, 0
    %v8664 = vsel %vm4567, %v8631, 0
    %v8667 = vsel %vm4567, %v8632, 0
    %v8670 = vsel %vm4567, %v8633, 0
    %v8673 = vsel %vm4567, %v8634, 0
    %v8676 = vsel %vm4567, %v8635, 0
    %v8679 = vsel %vm4567, %v8636, 0
    %v8682 = vsel %vm4567, %v8637, 0
    %v8685 = vsel %vm4567, %v8638, 0
    %v8688 = vsel %vm4567, %v8639, 0
    %v8691 = vsel %vm4567, %v8640, 0
    %v8694 = vsel %vm4567, %v8641, 0
    %8696 = vmatprep.subr.mxu0 0.0
    %8697 = vmatpush1.msra.mxu0 %v469
    %8698 = vmatprep.subr.mxu0 0.0
    %8699 = vmatpush1.msra.mxu0 %v470
    %8700 = vmatprep.subr.mxu0 0.0
    %8701 = vmatpush1.msra.mxu0 %v471
    %8702 = vmatprep.subr.mxu0 0.0
    %8703 = vmatpush1.msra.mxu0 %v472
    %8704 = vmatprep.subr.mxu0 0.0
    %8705 = vmatpush1.msra.mxu0 %v473
    %8706 = vmatprep.subr.mxu0 0.0
    %8707 = vmatpush1.msra.mxu0 %v474
    %8708 = vmatprep.subr.mxu0 0.0
    %8709 = vmatpush1.msra.mxu0 %v475
    %8710 = vmatprep.subr.mxu0 0.0
    %8711 = vmatpush1.msra.mxu0 %v476
    %8712 = vmatprep.subr.mxu0 0.0
    %8713 = vmatpush1.msra.mxu0 0.0
    %8714 = vmatprep.subr.mxu0 0.0
    %8715 = vmatpush1.msra.mxu0 0.0
    %8716 = vmatprep.subr.mxu0 0.0
    %8717 = vmatpush1.msra.mxu0 0.0
    %8718 = vmatprep.subr.mxu0 0.0
    %8719 = vmatpush1.msra.mxu0 0.0
    %8720 = vmatprep.subr.mxu0 0.0
    %8721 = vmatpush1.msra.mxu0 0.0
    %8722 = vmatprep.subr.mxu0 0.0
    %8723 = vmatpush1.msra.mxu0 0.0
    %8724 = vmatprep.subr.mxu0 0.0
    %8725 = vmatpush1.msra.mxu0 0.0
    %8726 = vmatprep.subr.mxu0 0.0
    %8727 = vmatpush1.msra.mxu0 0.0
    %8728 = vmatprep.subr.mxu0 0.0
    %8729 = vmatpush1.msra.mxu0 0.0
    %8730 = vmatprep.subr.mxu0 0.0
    %8731 = vmatpush1.msra.mxu0 0.0
    %8732 = vmatprep.subr.mxu0 0.0
    %8733 = vmatpush1.msra.mxu0 0.0
    %8734 = vmatprep.subr.mxu0 0.0
    %8735 = vmatpush1.msra.mxu0 0.0
    %8736 = vmatprep.subr.mxu0 0.0
    %8737 = vmatpush1.msra.mxu0 0.0
    %8738 = vmatprep.subr.mxu0 0.0
    %8739 = vmatpush1.msra.mxu0 0.0
    %8740 = vmatprep.subr.mxu0 0.0
    %8741 = vmatpush1.msra.mxu0 0.0
    %8742 = vmatprep.subr.mxu0 0.0
    %8743 = vmatpush1.msra.mxu0 0.0
    %8744 = vmatprep.subr.mxu0 0.0
    %8745 = vmatpush1.msra.mxu0 0.0
    %8746 = vmatprep.subr.mxu0 0.0
    %8747 = vmatpush1.msra.mxu0 0.0
    %8748 = vmatprep.subr.mxu0 0.0
    %8749 = vmatpush1.msra.mxu0 0.0
    %8750 = vmatprep.subr.mxu0 0.0
    %8751 = vmatpush1.msra.mxu0 0.0
    %8752 = vmatprep.subr.mxu0 0.0
    %8753 = vmatpush1.msra.mxu0 0.0
    %8754 = vmatprep.subr.mxu0 0.0
    %8755 = vmatpush1.msra.mxu0 0.0
    %8756 = vmatprep.subr.mxu0 0.0
    %8757 = vmatpush1.msra.mxu0 0.0
    %8758 = vmatprep.subr.mxu0 0.0
    %8759 = vmatpush1.msra.mxu0 0.0
    %8760 = vmatprep.mubr.f32.mxu0 0.0
    %8761 = vmatmul.mubr.f32.gmra.mrb[0].mxu0 %v8643
    %v8762 = vpop.f32.mrb[0].mxu0
    %v8763 = vadd.f32 0.0, %v8762
    %v8764 = vpop.f32.mrb[0].mxu0
    %8765 = vmatprep.mubr.f32.mxu0 0.0
    %8766 = vmatmul.mubr.f32.gmra.mrb[0].mxu0 %v8646
    %v8767 = vpop.f32.mrb[0].mxu0
    %v8768 = vadd.f32 0.0, %v8767
    %v8769 = vpop.f32.mrb[0].mxu0
    %8770 = vmatprep.mubr.f32.mxu0 0.0
    %8771 = vmatmul.mubr.f32.gmra.mrb[0].mxu0 %v8649
    %v8772 = vpop.f32.mrb[0].mxu0
    %v8773 = vadd.f32 0.0, %v8772
    %v8774 = vpop.f32.mrb[0].mxu0
    %8775 = vmatprep.mubr.f32.mxu0 0.0
    %8776 = vmatmul.mubr.f32.gmra.mrb[0].mxu0 %v8652
    %v8777 = vpop.f32.mrb[0].mxu0
    %v8778 = vadd.f32 0.0, %v8777
    %v8779 = vpop.f32.mrb[0].mxu0
    %8780 = vmatprep.mubr.f32.mxu0 0.0
    %8781 = vmatmul.mubr.f32.gmra.mrb[0].mxu0 %v8655
    %v8782 = vpop.f32.mrb[0].mxu0
    %v8783 = vadd.f32 0.0, %v8782
    %v8784 = vpop.f32.mrb[0].mxu0
    %8785 = vmatprep.mubr.f32.mxu0 0.0
    %8786 = vmatmul.mubr.f32.gmra.mrb[0].mxu0 %v8658
    %v8787 = vpop.f32.mrb[0].mxu0
    %v8788 = vadd.f32 0.0, %v8787
    %v8789 = vpop.f32.mrb[0].mxu0
    %8790 = vmatprep.mubr.f32.mxu0 0.0
    %8791 = vmatmul.mubr.f32.gmra.mrb[0].mxu0 %v8661
    %v8792 = vpop.f32.mrb[0].mxu0
    %v8793 = vadd.f32 0.0, %v8792
    %v8794 = vpop.f32.mrb[0].mxu0
    %8795 = vmatprep.mubr.f32.mxu0 0.0
    %8796 = vmatmul.mubr.f32.gmra.mrb[0].mxu0 %v8664
    %v8797 = vpop.f32.mrb[0].mxu0
    %v8798 = vadd.f32 0.0, %v8797
    %v8799 = vpop.f32.mrb[0].mxu0
    %8800 = vmatprep.mubr.f32.mxu0 0.0
    %8801 = vmatmul.mubr.f32.gmra.mrb[0].mxu0 %v8667
    %v8802 = vpop.f32.mrb[0].mxu0
    %v8803 = vadd.f32 0.0, %v8802
    %v8804 = vpop.f32.mrb[0].mxu0
    %8805 = vmatprep.mubr.f32.mxu0 0.0
    %8806 = vmatmul.mubr.f32.gmra.mrb[0].mxu0 %v8670
    %v8807 = vpop.f32.mrb[0].mxu0
    %v8808 = vadd.f32 0.0, %v8807
    %v8809 = vpop.f32.mrb[0].mxu0
    %8810 = vmatprep.mubr.f32.mxu0 0.0
    %8811 = vmatmul.mubr.f32.gmra.mrb[0].mxu0 %v8673
    %v8812 = vpop.f32.mrb[0].mxu0
    %v8813 = vadd.f32 0.0, %v8812
    %v8814 = vpop.f32.mrb[0].mxu0
    %8815 = vmatprep.mubr.f32.mxu0 0.0
    %8816 = vmatmul.mubr.f32.gmra.mrb[0].mxu0 %v8676
    %v8817 = vpop.f32.mrb[0].mxu0
    %v8818 = vadd.f32 0.0, %v8817
    %v8819 = vpop.f32.mrb[0].mxu0
    %8820 = vmatprep.mubr.f32.mxu0 0.0
    %8821 = vmatmul.mubr.f32.gmra.mrb[0].mxu0 %v8679
    %v8822 = vpop.f32.mrb[0].mxu0
    %v8823 = vadd.f32 0.0, %v8822
    %v8824 = vpop.f32.mrb[0].mxu0
    %8825 = vmatprep.mubr.f32.mxu0 0.0
    %8826 = vmatmul.mubr.f32.gmra.mrb[0].mxu0 %v8682
    %v8827 = vpop.f32.mrb[0].mxu0
    %v8828 = vadd.f32 0.0, %v8827
    %v8829 = vpop.f32.mrb[0].mxu0
    %8830 = vmatprep.mubr.f32.mxu0 0.0
    %8831 = vmatmul.mubr.f32.gmra.mrb[0].mxu0 %v8685
    %v8832 = vpop.f32.mrb[0].mxu0
    %v8833 = vadd.f32 0.0, %v8832
    %v8834 = vpop.f32.mrb[0].mxu0
    %8835 = vmatprep.mubr.f32.mxu0 0.0
    %8836 = vmatmul.mubr.f32.gmra.mrb[0].mxu0 %v8688
    %v8837 = vpop.f32.mrb[0].mxu0
    %v8838 = vadd.f32 0.0, %v8837
    %v8839 = vpop.f32.mrb[0].mxu0
    %8840 = vmatprep.mubr.f32.mxu0 0.0
    %8841 = vmatmul.mubr.f32.gmra.mrb[0].mxu0 %v8691
    %v8842 = vpop.f32.mrb[0].mxu0
    %v8843 = vadd.f32 0.0, %v8842
    %v8844 = vpop.f32.mrb[0].mxu0
    %8845 = vmatprep.mubr.f32.mxu0 0.0
    %8846 = vmatmul.mubr.f32.gmra.mrb[0].mxu0 %v8694
    %v8847 = vpop.f32.mrb[0].mxu0
    %v8848 = vadd.f32 0.0, %v8847
    %v8849 = vpop.f32.mrb[0].mxu0
    %8850 = vdwg.mxu0
    %v8851 = vadd.f32 %v8037, %v8763
    %v8852 = vadd.f32 %v8038, %v8768
    %v8853 = vadd.f32 %v8039, %v8773
    %v8854 = vadd.f32 %v8040, %v8778
    %v8855 = vadd.f32 %v8041, %v8783
    %v8856 = vadd.f32 %v8042, %v8788
    %v8857 = vadd.f32 %v8043, %v8793
    %v8858 = vadd.f32 %v8044, %v8798
    %v8859 = vadd.f32 %v8045, %v8803
    %v8860 = vadd.f32 %v8046, %v8808
    %v8861 = vadd.f32 %v8047, %v8813
    %v8862 = vadd.f32 %v8048, %v8818
    %v8863 = vadd.f32 %v8049, %v8823
    %v8864 = vadd.f32 %v8050, %v8828
    %v8865 = vadd.f32 %v8051, %v8833
    %v8866 = vadd.f32 %v8052, %v8838
    %v8867 = vadd.f32 %v8053, %v8843
    %v8868 = vadd.f32 %v8054, %v8848
    %v8870 = vlaneseq
    %v8871 = vshrl.u32 %v8870, 7
    %v8872 = vsub.s32 0, %v8871
    %v8873 = vrot.slane %v477, %v8872
    %v8875 = vadd.f32 %v8851, %v8873
    %v8876 = vadd.f32 %v8852, %v8873
    %v8877 = vadd.f32 %v8853, %v8873
    %v8878 = vadd.f32 %v8854, %v8873
    %v8879 = vadd.f32 %v8855, %v8873
    %v8880 = vadd.f32 %v8856, %v8873
    %v8881 = vadd.f32 %v8857, %v8873
    %v8882 = vadd.f32 %v8858, %v8873
    %v8883 = vadd.f32 %v8859, %v8873
    %v8884 = vadd.f32 %v8860, %v8873
    %v8885 = vadd.f32 %v8861, %v8873
    %v8886 = vadd.f32 %v8862, %v8873
    %v8887 = vadd.f32 %v8863, %v8873
    %v8888 = vadd.f32 %v8864, %v8873
    %v8889 = vadd.f32 %v8865, %v8873
    %v8890 = vadd.f32 %v8866, %v8873
    %v8891 = vadd.f32 %v8867, %v8873
    %v8892 = vadd.f32 %v8868, %v8873
    %v8893 = vld [vmem:[#allocation8] sm:$0xff]
    %v8894 = vld [vmem:[#allocation8 + $0x8] sm:$0xff]
    %v8895 = vld [vmem:[#allocation8 + $0x10] sm:$0xff]
    %v8896 = vld [vmem:[#allocation8 + $0x18] sm:$0xff]
    %v8898 = vsel %vm1074, %v8893, 0
    %v8901 = vsel %vm1074, %v8894, 0
    %v8904 = vsel %vm1074, %v8895, 0
    %v8907 = vsel %vm1074, %v8896, 0
    %v8910 = vsel %vm1074, %v8877, 0
    %v8913 = vsel %vm1074, %v8878, 0
    %v8916 = vsel %vm1074, %v8879, 0
    %v8919 = vsel %vm1074, %v8880, 0
    %v8922 = vsel %vm1074, %v8881, 0
    %v8925 = vsel %vm1074, %v8882, 0
    %v8928 = vsel %vm1074, %v8883, 0
    %v8931 = vsel %vm1074, %v8884, 0
    %8933 = vmatprep.subr.mxu0 0.0
    %8934 = vmatpush1.xpose.msra.mxu0 %v8910
    %8935 = vmatprep.subr.mxu0 0.0
    %8936 = vmatpush1.xpose.msra.mxu0 %v8913
    %8937 = vmatprep.subr.mxu0 0.0
    %8938 = vmatpush1.xpose.msra.mxu0 %v8916
    %8939 = vmatprep.subr.mxu0 0.0
    %8940 = vmatpush1.xpose.msra.mxu0 %v8919
    %8941 = vmatprep.subr.mxu0 0.0
    %8942 = vmatpush1.xpose.msra.mxu0 %v8922
    %8943 = vmatprep.subr.mxu0 0.0
    %8944 = vmatpush1.xpose.msra.mxu0 %v8925
    %8945 = vmatprep.subr.mxu0 0.0
    %8946 = vmatpush1.xpose.msra.mxu0 %v8928
    %8947 = vmatprep.subr.mxu0 0.0
    %8948 = vmatpush1.xpose.msra.mxu0 %v8931
    %8949 = vmatprep.subr.mxu0 0.0
    %8950 = vmatpush1.xpose.msra.mxu0 0.0
    %8951 = vmatprep.subr.mxu0 0.0
    %8952 = vmatpush1.xpose.msra.mxu0 0.0
    %8953 = vmatprep.subr.mxu0 0.0
    %8954 = vmatpush1.xpose.msra.mxu0 0.0
    %8955 = vmatprep.subr.mxu0 0.0
    %8956 = vmatpush1.xpose.msra.mxu0 0.0
    %8957 = vmatprep.subr.mxu0 0.0
    %8958 = vmatpush1.xpose.msra.mxu0 0.0
    %8959 = vmatprep.subr.mxu0 0.0
    %8960 = vmatpush1.xpose.msra.mxu0 0.0
    %8961 = vmatprep.subr.mxu0 0.0
    %8962 = vmatpush1.xpose.msra.mxu0 0.0
    %8963 = vmatprep.subr.mxu0 0.0
    %8964 = vmatpush1.xpose.msra.mxu0 0.0
    %8965 = vmatprep.subr.mxu0 0.0
    %8966 = vmatpush1.xpose.msra.mxu0 0.0
    %8967 = vmatprep.subr.mxu0 0.0
    %8968 = vmatpush1.xpose.msra.mxu0 0.0
    %8969 = vmatprep.subr.mxu0 0.0
    %8970 = vmatpush1.xpose.msra.mxu0 0.0
    %8971 = vmatprep.subr.mxu0 0.0
    %8972 = vmatpush1.xpose.msra.mxu0 0.0
    %8973 = vmatprep.subr.mxu0 0.0
    %8974 = vmatpush1.xpose.msra.mxu0 0.0
    %8975 = vmatprep.subr.mxu0 0.0
    %8976 = vmatpush1.xpose.msra.mxu0 0.0
    %8977 = vmatprep.subr.mxu0 0.0
    %8978 = vmatpush1.xpose.msra.mxu0 0.0
    %8979 = vmatprep.subr.mxu0 0.0
    %8980 = vmatpush1.xpose.msra.mxu0 0.0
    %8981 = vmatprep.subr.mxu0 0.0
    %8982 = vmatpush1.xpose.msra.mxu0 0.0
    %8983 = vmatprep.subr.mxu0 0.0
    %8984 = vmatpush1.xpose.msra.mxu0 0.0
    %8985 = vmatprep.subr.mxu0 0.0
    %8986 = vmatpush1.xpose.msra.mxu0 0.0
    %8987 = vmatprep.subr.mxu0 0.0
    %8988 = vmatpush1.xpose.msra.mxu0 0.0
    %8989 = vmatprep.subr.mxu0 0.0
    %8990 = vmatpush1.xpose.msra.mxu0 0.0
    %8991 = vmatprep.subr.mxu0 0.0
    %8992 = vmatpush1.xpose.msra.mxu0 0.0
    %8993 = vmatprep.subr.mxu0 0.0
    %8994 = vmatpush1.xpose.msra.mxu0 0.0
    %8995 = vmatprep.subr.mxu0 0.0
    %8996 = vmatpush1.xpose.msra.mxu0 0.0
    %8997 = vmatprep.mubr.f32.mxu0 0.0
    %8998 = vmatmul.mubr.f32.gmra.mrb[0].mxu0 %v8898
    %v8999 = vpop.f32.mrb[0].mxu0
    %v9000 = vadd.f32 0.0, %v8999
    %v9001 = vpop.f32.mrb[0].mxu0
    %9002 = vmatprep.mubr.f32.mxu0 0.0
    %9003 = vmatmul.mubr.f32.gmra.mrb[0].mxu0 %v8901
    %v9004 = vpop.f32.mrb[0].mxu0
    %v9005 = vadd.f32 0.0, %v9004
    %v9006 = vpop.f32.mrb[0].mxu0
    %9007 = vmatprep.mubr.f32.mxu0 0.0
    %9008 = vmatmul.mubr.f32.gmra.mrb[0].mxu0 %v8904
    %v9009 = vpop.f32.mrb[0].mxu0
    %v9010 = vadd.f32 0.0, %v9009
    %v9011 = vpop.f32.mrb[0].mxu0
    %9012 = vmatprep.mubr.f32.mxu0 0.0
    %9013 = vmatmul.mubr.f32.gmra.mrb[0].mxu0 %v8907
    %v9014 = vpop.f32.mrb[0].mxu0
    %v9015 = vadd.f32 0.0, %v9014
    %v9016 = vpop.f32.mrb[0].mxu0
    %9017 = vdwg.mxu0
    %9018 = vst.msk [vmem:[%s71] sm:$0xff] %vm4567, %v9000
    %9019 = vst.msk [vmem:[%s71 + $0x8] sm:$0xff] %vm4567, %v9005
    %9020 = vst.msk [vmem:[%s71 + $0x10] sm:$0xff] %vm4567, %v9010
    %9021 = vst.msk [vmem:[%s71 + $0x18] sm:$0xff] %vm4567, %v9015
    %v9023 = vsel %vm1074, %v8885, 0
    %v9026 = vsel %vm1074, %v8886, 0
    %v9029 = vsel %vm1074, %v8887, 0
    %v9032 = vsel %vm1074, %v8888, 0
    %v9035 = vsel %vm1074, %v8889, 0
    %v9038 = vsel %vm1074, %v8890, 0
    %v9041 = vsel %vm1074, %v8891, 0
    %v9044 = vsel %vm1074, %v8892, 0
    %9046 = vmatprep.subr.mxu0 0.0
    %9047 = vmatpush1.xpose.msra.mxu0 %v9023
    %9048 = vmatprep.subr.mxu0 0.0
    %9049 = vmatpush1.xpose.msra.mxu0 %v9026
    %9050 = vmatprep.subr.mxu0 0.0
    %9051 = vmatpush1.xpose.msra.mxu0 %v9029
    %9052 = vmatprep.subr.mxu0 0.0
    %9053 = vmatpush1.xpose.msra.mxu0 %v9032
    %9054 = vmatprep.subr.mxu0 0.0
    %9055 = vmatpush1.xpose.msra.mxu0 %v9035
    %9056 = vmatprep.subr.mxu0 0.0
    %9057 = vmatpush1.xpose.msra.mxu0 %v9038
    %9058 = vmatprep.subr.mxu0 0.0
    %9059 = vmatpush1.xpose.msra.mxu0 %v9041
    %9060 = vmatprep.subr.mxu0 0.0
    %9061 = vmatpush1.xpose.msra.mxu0 %v9044
    %9062 = vmatprep.subr.mxu0 0.0
    %9063 = vmatpush1.xpose.msra.mxu0 0.0
    %9064 = vmatprep.subr.mxu0 0.0
    %9065 = vmatpush1.xpose.msra.mxu0 0.0
    %9066 = vmatprep.subr.mxu0 0.0
    %9067 = vmatpush1.xpose.msra.mxu0 0.0
    %9068 = vmatprep.subr.mxu0 0.0
    %9069 = vmatpush1.xpose.msra.mxu0 0.0
    %9070 = vmatprep.subr.mxu0 0.0
    %9071 = vmatpush1.xpose.msra.mxu0 0.0
    %9072 = vmatprep.subr.mxu0 0.0
    %9073 = vmatpush1.xpose.msra.mxu0 0.0
    %9074 = vmatprep.subr.mxu0 0.0
    %9075 = vmatpush1.xpose.msra.mxu0 0.0
    %9076 = vmatprep.subr.mxu0 0.0
    %9077 = vmatpush1.xpose.msra.mxu0 0.0
    %9078 = vmatprep.subr.mxu0 0.0
    %9079 = vmatpush1.xpose.msra.mxu0 0.0
    %9080 = vmatprep.subr.mxu0 0.0
    %9081 = vmatpush1.xpose.msra.mxu0 0.0
    %9082 = vmatprep.subr.mxu0 0.0
    %9083 = vmatpush1.xpose.msra.mxu0 0.0
    %9084 = vmatprep.subr.mxu0 0.0
    %9085 = vmatpush1.xpose.msra.mxu0 0.0
    %9086 = vmatprep.subr.mxu0 0.0
    %9087 = vmatpush1.xpose.msra.mxu0 0.0
    %9088 = vmatprep.subr.mxu0 0.0
    %9089 = vmatpush1.xpose.msra.mxu0 0.0
    %9090 = vmatprep.subr.mxu0 0.0
    %9091 = vmatpush1.xpose.msra.mxu0 0.0
    %9092 = vmatprep.subr.mxu0 0.0
    %9093 = vmatpush1.xpose.msra.mxu0 0.0
    %9094 = vmatprep.subr.mxu0 0.0
    %9095 = vmatpush1.xpose.msra.mxu0 0.0
    %9096 = vmatprep.subr.mxu0 0.0
    %9097 = vmatpush1.xpose.msra.mxu0 0.0
    %9098 = vmatprep.subr.mxu0 0.0
    %9099 = vmatpush1.xpose.msra.mxu0 0.0
    %9100 = vmatprep.subr.mxu0 0.0
    %9101 = vmatpush1.xpose.msra.mxu0 0.0
    %9102 = vmatprep.subr.mxu0 0.0
    %9103 = vmatpush1.xpose.msra.mxu0 0.0
    %9104 = vmatprep.subr.mxu0 0.0
    %9105 = vmatpush1.xpose.msra.mxu0 0.0
    %9106 = vmatprep.subr.mxu0 0.0
    %9107 = vmatpush1.xpose.msra.mxu0 0.0
    %9108 = vmatprep.subr.mxu0 0.0
    %9109 = vmatpush1.xpose.msra.mxu0 0.0
    %9110 = vmatprep.mubr.f32.mxu0 0.0
    %9111 = vmatmul.mubr.f32.gmra.mrb[0].mxu0 %v8898
    %v9112 = vpop.f32.mrb[0].mxu0
    %v9113 = vadd.f32 0.0, %v9112
    %v9114 = vpop.f32.mrb[0].mxu0
    %9115 = vmatprep.mubr.f32.mxu0 0.0
    %9116 = vmatmul.mubr.f32.gmra.mrb[0].mxu0 %v8901
    %v9117 = vpop.f32.mrb[0].mxu0
    %v9118 = vadd.f32 0.0, %v9117
    %v9119 = vpop.f32.mrb[0].mxu0
    %9120 = vmatprep.mubr.f32.mxu0 0.0
    %9121 = vmatmul.mubr.f32.gmra.mrb[0].mxu0 %v8904
    %v9122 = vpop.f32.mrb[0].mxu0
    %v9123 = vadd.f32 0.0, %v9122
    %v9124 = vpop.f32.mrb[0].mxu0
    %9125 = vmatprep.mubr.f32.mxu0 0.0
    %9126 = vmatmul.mubr.f32.gmra.mrb[0].mxu0 %v8907
    %v9127 = vpop.f32.mrb[0].mxu0
    %v9128 = vadd.f32 0.0, %v9127
    %v9129 = vpop.f32.mrb[0].mxu0
    %9130 = vdwg.mxu0
    %9131 = vst.msk [vmem:[%s71 + $0x20] sm:$0xff] %vm4567, %v9113
    %9132 = vst.msk [vmem:[%s71 + $0x28] sm:$0xff] %vm4567, %v9118
    %9133 = vst.msk [vmem:[%s71 + $0x30] sm:$0xff] %vm4567, %v9123
    %9134 = vst.msk [vmem:[%s71 + $0x38] sm:$0xff] %vm4567, %v9128
    %v9135 = vld [vmem:[%s23] sm:$0x3]
    %v9137 = vsel %vm1627, %v9135, 0
    %9139 = vmatprep.subr.mxu0 0.0
    %9140 = vmatpush1.msra.mxu0 %v8875
    %9141 = vmatprep.subr.mxu0 0.0
    %9142 = vmatpush1.msra.mxu0 %v8876
    %9143 = vmatprep.subr.mxu0 0.0
    %9144 = vmatpush1.msra.mxu0 0.0
    %9145 = vmatprep.subr.mxu0 0.0
    %9146 = vmatpush1.msra.mxu0 0.0
    %9147 = vmatprep.subr.mxu0 0.0
    %9148 = vmatpush1.msra.mxu0 0.0
    %9149 = vmatprep.subr.mxu0 0.0
    %9150 = vmatpush1.msra.mxu0 0.0
    %9151 = vmatprep.subr.mxu0 0.0
    %9152 = vmatpush1.msra.mxu0 0.0
    %9153 = vmatprep.subr.mxu0 0.0
    %9154 = vmatpush1.msra.mxu0 0.0
    %9155 = vmatprep.subr.mxu0 0.0
    %9156 = vmatpush1.msra.mxu0 0.0
    %9157 = vmatprep.subr.mxu0 0.0
    %9158 = vmatpush1.msra.mxu0 0.0
    %9159 = vmatprep.subr.mxu0 0.0
    %9160 = vmatpush1.msra.mxu0 0.0
    %9161 = vmatprep.subr.mxu0 0.0
    %9162 = vmatpush1.msra.mxu0 0.0
    %9163 = vmatprep.subr.mxu0 0.0
    %9164 = vmatpush1.msra.mxu0 0.0
    %9165 = vmatprep.subr.mxu0 0.0
    %9166 = vmatpush1.msra.mxu0 0.0
    %9167 = vmatprep.subr.mxu0 0.0
    %9168 = vmatpush1.msra.mxu0 0.0
    %9169 = vmatprep.subr.mxu0 0.0
    %9170 = vmatpush1.msra.mxu0 0.0
    %9171 = vmatprep.subr.mxu0 0.0
    %9172 = vmatpush1.msra.mxu0 0.0
    %9173 = vmatprep.subr.mxu0 0.0
    %9174 = vmatpush1.msra.mxu0 0.0
    %9175 = vmatprep.subr.mxu0 0.0
    %9176 = vmatpush1.msra.mxu0 0.0
    %9177 = vmatprep.subr.mxu0 0.0
    %9178 = vmatpush1.msra.mxu0 0.0
    %9179 = vmatprep.subr.mxu0 0.0
    %9180 = vmatpush1.msra.mxu0 0.0
    %9181 = vmatprep.subr.mxu0 0.0
    %9182 = vmatpush1.msra.mxu0 0.0
    %9183 = vmatprep.subr.mxu0 0.0
    %9184 = vmatpush1.msra.mxu0 0.0
    %9185 = vmatprep.subr.mxu0 0.0
    %9186 = vmatpush1.msra.mxu0 0.0
    %9187 = vmatprep.subr.mxu0 0.0
    %9188 = vmatpush1.msra.mxu0 0.0
    %9189 = vmatprep.subr.mxu0 0.0
    %9190 = vmatpush1.msra.mxu0 0.0
    %9191 = vmatprep.subr.mxu0 0.0
    %9192 = vmatpush1.msra.mxu0 0.0
    %9193 = vmatprep.subr.mxu0 0.0
    %9194 = vmatpush1.msra.mxu0 0.0
    %9195 = vmatprep.subr.mxu0 0.0
    %9196 = vmatpush1.msra.mxu0 0.0
    %9197 = vmatprep.subr.mxu0 0.0
    %9198 = vmatpush1.msra.mxu0 0.0
    %9199 = vmatprep.subr.mxu0 0.0
    %9200 = vmatpush1.msra.mxu0 0.0
    %9201 = vmatprep.subr.mxu0 0.0
    %9202 = vmatpush1.msra.mxu0 0.0
    %9203 = vmatprep.mubr.f32.mxu0 0.0
    %9204 = vmatmul.mubr.f32.gmra.mrb[0].mxu0 %v9137
    %v9205 = vpop.f32.mrb[0].mxu0
    %v9206 = vadd.f32 0.0, %v9205
    %v9207 = vpop.f32.mrb[0].mxu0
    %9208 = vdwg.mxu0
    %vm9209 = vcmask 254976
    %9210 = vst.msk [vmem:[#allocation37] sm:$0x3] %vm9209, %v9206
    // Predicated region
    $region230: #{septr_block_forward.1} parent=1 // pred_check
      _
    $region231: #{septr_block_forward.1} parent=1 // pred_check_branch
      %9212 = sbr.rel (0) target = $region233
    $region232: #{septr_block_forward.1} parent=1 // pred_region
      _
    $region233: #{septr_block_forward.1} parent=1 // pred_fallthru
      _
    // Predicated region
    $region234: #{septr_block_forward.1} parent=1 // pred_check
      _
    $region235: #{septr_block_forward.1} parent=1 // pred_check_branch
      %9214 = sbr.rel (0) target = $region237
    $region236: #{septr_block_forward.1} parent=1 // pred_region
      %s9216 = ssub.s32 32, 32
      %9217 = vsyncadd [#allocation4], %s9216
      %s9219 = sshll.u32 [#allocation37], 4
      %s9220 = int_to_ptr.vmem [resolvable:$true] %s9219
      %9222 = dma.vmem_to_hbm [thread:$0]  %s9220, 32, %s73, [#allocation4]
    $region237: #{septr_block_forward.1} parent=1 // pred_fallthru
      _
    // Predicated region
    $region238: #{septr_block_forward.1} parent=1 // pred_check
      _
    $region239: #{septr_block_forward.1} parent=1 // pred_check_branch
      %9224 = sbr.rel (0) target = $region241
    $region240: #{septr_block_forward.1} parent=1 // pred_region
      _
    $region241: #{septr_block_forward.1} parent=1 // pred_fallthru
      _
    // Predicated region
    $region242: #{septr_block_forward.1} parent=1 // pred_check
      _
    $region243: #{septr_block_forward.1} parent=1 // pred_check_branch
      %9226 = sbr.rel (0) target = $region245
    $region244: #{septr_block_forward.1} parent=1 // pred_region
      %9227 = dma.done [#allocation4], 32
    $region245: #{septr_block_forward.1} parent=1 // pred_fallthru
      _
    %9228 = vsyncpa [#allocation3], 1
    %9229 = vsyncpa [#allocation6], 1
    %9230 = vsyncpa [#allocation9], 1
    %9231 = vsyncpa [#allocation12], 1
    %9232 = vsyncpa [#allocation15], 1
    %9233 = vsyncpa [#allocation18], 1
    %9234 = vsyncpa [#allocation21], 1
    %9235 = vsyncpa [#allocation24], 1
    %9236 = vsyncpa [#allocation27], 1
    %9237 = vsyncpa [#allocation30], 1
    %9238 = vsyncpa [#allocation33], 1
    %9239 = vsyncpa [#allocation36], 1
    %9240 = vsyncpa [#allocation4], 1

</llo_original>
